<compile_context>
chip_gen: v7x
topology: tpu7x:2x2x1
jax: 0.10.0
libtpu: 0.0.40
codegen_flags: <defaults>
</compile_context>

<pallas_src>
import functools

import jax
import jax.numpy as jnp
import numpy as np
from jax.experimental import pallas as pl
from jax.experimental.pallas import tpu as pltpu

EPS = 1e-5                 # torch.nn.BatchNorm2d default eps
LANE = 128                 # channel padding granularity (MXU lane width)
SUB = 16                   # bf16 sublane packing; output width padded to this
MAX_GEMM_ROWS = 512        # target rows per pass-A (GEMM + stats) tile
MAX_BN_ROWS = 1024         # target rows per pass-B (BN apply) tile


def _round_up(x, m):
    return (x + m - 1) // m * m


def _vmem_limit_bytes():
    # ~96 MiB on v5e/v6e (128 MiB physical), ~48 MiB on v7x (64 MiB physical).
    try:
        cap = int(pltpu.get_tpu_info().vmem_capacity_bytes)
        return max(32 * 1024 * 1024, cap * 3 // 4)
    except Exception:
        return 48 * 1024 * 1024


_VMEM_LIMIT = _vmem_limit_bytes()


def _cparams(semantics):
    return pltpu.CompilerParams(dimension_semantics=semantics,
                                vmem_limit_bytes=_VMEM_LIMIT)


# ----------------------------- Pallas kernels ------------------------------ #

def _conv_stats_kernel(x_ref, w_ref, y_ref, s_ref, acc_ref, *, tap_offsets):
    """Tap-decomposed conv GEMM (bf16 operands, f32 accumulation) + streaming
    per-channel sum / sum-of-squares into a resident (8, coutp) accumulator
    (row 0 = sum, row 1 = sumsq).

    x_ref : (in_rows, ck)           bf16, kw-taps pre-expanded along channels
    w_ref : (len(taps)*ck, coutp)   bf16, rows in (kh, kw, ci) order
    """
    out_rows = y_ref.shape[0]
    ck = x_ref.shape[1]
    for t, off in enumerate(tap_offsets):
        contrib = jnp.dot(x_ref[off:off + out_rows, :],
                          w_ref[t * ck:(t + 1) * ck, :],
                          preferred_element_type=jnp.float32)
        if t == 0:
            acc_ref[...] = contrib
        else:
            acc_ref[...] += contrib
    acc = acc_ref[...]
    y_ref[...] = acc.astype(y_ref.dtype)

    @pl.when(pl.program_id(1) == 0)
    def _():
        s_ref[...] = jnp.zeros_like(s_ref)

    cp = acc.shape[1]
    s_ref[...] += jnp.concatenate(
        [jnp.sum(acc, axis=0, keepdims=True),
         jnp.sum(acc * acc, axis=0, keepdims=True),
         jnp.zeros((6, cp), jnp.float32)], axis=0)


def _conv_ds_stats_kernel(x_ref, w_ref, xd_ref, wd_ref, y_ref, s_ref, acc_ref,
                          *, tap_offsets):
    """conv2 tap GEMM (stored as bf16) + fused 1x1 downsample GEMM (stats only).
    Stats rows: 0/1 = conv2 sum/sumsq, 2/3 = downsample sum/sumsq."""
    out_rows = y_ref.shape[0]
    ck = x_ref.shape[1]
    for t, off in enumerate(tap_offsets):
        contrib = jnp.dot(x_ref[off:off + out_rows, :],
                          w_ref[t * ck:(t + 1) * ck, :],
                          preferred_element_type=jnp.float32)
        if t == 0:
            acc_ref[...] = contrib
        else:
            acc_ref[...] += contrib
    acc = acc_ref[...]
    yd = jnp.dot(xd_ref[...], wd_ref[...], preferred_element_type=jnp.float32)
    y_ref[...] = acc.astype(y_ref.dtype)

    @pl.when(pl.program_id(1) == 0)
    def _():
        s_ref[...] = jnp.zeros_like(s_ref)

    cp = acc.shape[1]
    s_ref[...] += jnp.concatenate(
        [jnp.sum(acc, axis=0, keepdims=True),
         jnp.sum(acc * acc, axis=0, keepdims=True),
         jnp.sum(yd, axis=0, keepdims=True),
         jnp.sum(yd * yd, axis=0, keepdims=True),
         jnp.zeros((4, cp), jnp.float32)], axis=0)


def _bn_act_kernel(y_ref, a_ref, o_ref, *, relu):
    a = a_ref[...]
    out = y_ref[...].astype(jnp.float32) * a[0:1, :] + a[1:2, :]
    if relu:
        out = jnp.maximum(out, 0.0)
    o_ref[...] = out.astype(o_ref.dtype)


def _bn_res_relu_kernel(y_ref, xd_ref, wd_ref, a_ref, o_ref):
    """Normalize conv2, recompute + normalize the tiny-K downsample GEMM in
    place of an HBM round trip of the residual, add, final ReLU."""
    a = a_ref[...]
    yd = jnp.dot(xd_ref[...], wd_ref[...], preferred_element_type=jnp.float32)
    out = (y_ref[...].astype(jnp.float32) * a[0:1, :] + a[1:2, :]
           + yd * a[2:3, :] + a[3:4, :])
    o_ref[...] = jnp.maximum(out, 0.0).astype(o_ref.dtype)


# ----------------------------- pallas_call wrappers ------------------------- #

def conv_stats(x_tiles, w_mat, *, tap_offsets, out_rows, n_par, t_inner):
    T, in_rows, xcols = x_tiles.shape
    coutp = w_mat.shape[1]
    return pl.pallas_call(
        functools.partial(_conv_stats_kernel, tap_offsets=tap_offsets),
        out_shape=(jax.ShapeDtypeStruct((T * out_rows, coutp), jnp.bfloat16),
                   jax.ShapeDtypeStruct((n_par * 8, coutp), jnp.float32)),
        grid=(n_par, t_inner),
        in_specs=[pl.BlockSpec((None, in_rows, xcols),
                               lambda i, j: (i * t_inner + j, 0, 0)),
                  pl.BlockSpec(w_mat.shape, lambda i, j: (0, 0))],
        out_specs=(pl.BlockSpec((out_rows, coutp),
                                lambda i, j: (i * t_inner + j, 0)),
                   pl.BlockSpec((8, coutp), lambda i, j: (i, 0))),
        scratch_shapes=[pltpu.VMEM((out_rows, coutp), jnp.float32)],
        compiler_params=_cparams(("parallel", "arbitrary")),
    )(x_tiles, w_mat)


def conv_ds_stats(x_tiles, w_mat, xd_rows, wd_mat, *, tap_offsets, out_rows,
                  n_par, t_inner):
    T, in_rows, xcols = x_tiles.shape
    coutp = w_mat.shape[1]
    cdp = xd_rows.shape[1]
    return pl.pallas_call(
        functools.partial(_conv_ds_stats_kernel, tap_offsets=tap_offsets),
        out_shape=(jax.ShapeDtypeStruct((T * out_rows, coutp), jnp.bfloat16),
                   jax.ShapeDtypeStruct((n_par * 8, coutp), jnp.float32)),
        grid=(n_par, t_inner),
        in_specs=[pl.BlockSpec((None, in_rows, xcols),
                               lambda i, j: (i * t_inner + j, 0, 0)),
                  pl.BlockSpec(w_mat.shape, lambda i, j: (0, 0)),
                  pl.BlockSpec((out_rows, cdp),
                               lambda i, j: (i * t_inner + j, 0)),
                  pl.BlockSpec(wd_mat.shape, lambda i, j: (0, 0))],
        out_specs=(pl.BlockSpec((out_rows, coutp),
                                lambda i, j: (i * t_inner + j, 0)),
                   pl.BlockSpec((8, coutp), lambda i, j: (i, 0))),
        scratch_shapes=[pltpu.VMEM((out_rows, coutp), jnp.float32)],
        compiler_params=_cparams(("parallel", "arbitrary")),
    )(x_tiles, w_mat, xd_rows, wd_mat)


def bn_act(y_raw, affine, *, rows_per_tile, out_dtype, relu):
    total, cp = y_raw.shape
    return pl.pallas_call(
        functools.partial(_bn_act_kernel, relu=relu),
        out_shape=jax.ShapeDtypeStruct((total, cp), out_dtype),
        grid=(total // rows_per_tile,),
        in_specs=[pl.BlockSpec((rows_per_tile, cp), lambda i: (i, 0)),
                  pl.BlockSpec((8, cp), lambda i: (0, 0))],
        out_specs=pl.BlockSpec((rows_per_tile, cp), lambda i: (i, 0)),
        compiler_params=_cparams(("parallel",)),
    )(y_raw, affine)


def bn_res_relu(y_raw, xd_rows, wd_mat, affine, *, rows_per_tile):
    total, cp = y_raw.shape
    cdp = xd_rows.shape[1]
    return pl.pallas_call(
        _bn_res_relu_kernel,
        out_shape=jax.ShapeDtypeStruct((total, cp), jnp.float32),
        grid=(total // rows_per_tile,),
        in_specs=[pl.BlockSpec((rows_per_tile, cp), lambda i: (i, 0)),
                  pl.BlockSpec((rows_per_tile, cdp), lambda i: (i, 0)),
                  pl.BlockSpec(wd_mat.shape, lambda i: (0, 0)),
                  pl.BlockSpec((8, cp), lambda i: (0, 0))],
        out_specs=pl.BlockSpec((rows_per_tile, cp), lambda i: (i, 0)),
        compiler_params=_cparams(("parallel",)),
    )(y_raw, xd_rows, wd_mat, affine)


# ------------------------------- JAX glue ---------------------------------- #

def _pick_tile_h(oh, owp, target_rows):
    """Largest divisor of OH whose row tile (th*owp) stays <= target_rows."""
    th = 1
    for t in range(1, oh + 1):
        if oh % t == 0 and t * owp <= max(target_rows, owp):
            th = t
    return th


def _pick_bn_rows(T, out_rows, target_rows):
    """Row tile for the mem-bound pass-B kernels: group whole pass-A tiles."""
    gb = 1
    for g in range(1, T + 1):
        if T % g == 0 and g * out_rows <= max(target_rows, out_rows):
            gb = g
    return gb * out_rows


def _tap_row_tiles(x, ow, owp, th):
    """Stride-1 3x3 input layout: pre-expand the three horizontal taps along
    channels (bf16, lane-dense), zero-pad H by 1, and gather overlapping
    row tiles (halo of 2 rows) flattened into matmul-ready row blocks.

    x: (N, H, W, C)  ->  (N*(H//th), (th+2)*owp, 3*C)
    """
    N, H, W, C = x.shape
    xp = jnp.pad(x, ((0, 0), (0, 0), (1, 1), (0, 0)))
    xw = jnp.concatenate([xp[:, :, kw:kw + ow, :] for kw in range(3)], axis=-1)
    xw = jnp.pad(xw, ((0, 0), (1, 1), (0, owp - ow), (0, 0)))
    nt = H // th
    idx = jnp.arange(nt)[:, None] * th + jnp.arange(th + 2)[None, :]
    tiles = xw[:, idx]                                   # (N, nt, th+2, owp, 3C)
    return tiles.reshape(N * nt, (th + 2) * owp, 3 * C)


def _im2col_tiles(x, k, stride, pad, owp, th):
    """stride>1 fallback: full (bf16) im2col reorganized into the single-tap
    row-tile layout consumed by the conv kernels."""
    N, H, W, C = x.shape
    xp = jnp.pad(x, ((0, 0), (pad, pad), (pad, pad), (0, 0)))
    OH = (H + 2 * pad - k) // stride + 1
    OW = (W + 2 * pad - k) // stride + 1
    taps = [xp[:, kh:kh + (OH - 1) * stride + 1:stride,
               kw:kw + (OW - 1) * stride + 1:stride, :]
            for kh in range(k) for kw in range(k)]
    p = jnp.concatenate(taps, axis=-1)                   # (N, OH, OW, k*k*C)
    p = jnp.pad(p, ((0, 0), (0, 0), (0, owp - OW), (0, 0)))
    return p.reshape(N * (OH // th), th * owp, k * k * C)


def _flat_rows(x_nhwc, owp):
    """(N, OH, OW, C) -> (N*OH*owp, C), rows in the same order as the conv
    output tiles (OW zero-padded to owp)."""
    N, OH, OW, C = x_nhwc.shape
    x_nhwc = jnp.pad(x_nhwc, ((0, 0), (0, 0), (0, owp - OW), (0, 0)))
    return x_nhwc.reshape(N * OH * owp, C)


def _w_mat(weight, cin, cin_pad, cout_pad):
    """Torch (Cout, Cin_max, k, k) -> (k*k*cin_pad, cout_pad) bf16, rows in
    (kh, kw, ci) order — matching the kw-tap / im2col column order."""
    w = weight[:, :cin]                                  # channel slicing like the module
    cout, _, k, _ = w.shape
    w = jnp.pad(w, ((0, 0), (0, cin_pad - cin), (0, 0), (0, 0)))
    w = jnp.transpose(w, (2, 3, 1, 0)).reshape(k * k * cin_pad, cout)
    return jnp.pad(w, ((0, 0), (0, cout_pad - cout))).astype(jnp.bfloat16)


def _affine(ssum, ssq, gamma, beta, count, cp):
    """Fold training-mode batch-stats BN into y*scale + bias (cp lanes)."""
    mean = ssum / count
    var = jnp.maximum(ssq / count - mean * mean, 0.0)    # guard cancellation < 0
    g = jnp.pad(gamma.astype(jnp.float32), (0, cp - gamma.shape[0]))
    b = jnp.pad(beta.astype(jnp.float32), (0, cp - beta.shape[0]))
    scale = g * jax.lax.rsqrt(var + EPS)
    bias = b - mean * scale
    return scale, bias


def _pack_affine(rows, cp):
    pad_rows = [jnp.zeros((cp,), jnp.float32)] * (8 - len(rows))
    return jnp.stack(list(rows) + pad_rows, axis=0)      # (8, cp)


def basic_block_forward(x_nchw, params, mid_channel, out_channel, stride=1):
    """Matches BasicBlock.forward(x, mid_channel, out_channel) (NCHW in/out),
    BatchNorm in training mode (batch statistics), like the PyTorch module."""
    N, cin, H, W = x_nchw.shape
    p1 = params["conv1"][str(mid_channel)]
    p2 = params["conv2"][str(out_channel)]
    pd = params["down"][str(out_channel)]

    OH = (H - 1) // stride + 1        # 3x3, pad 1
    OW = (W - 1) // stride + 1
    OWp = _round_up(OW, SUB)
    th = _pick_tile_h(OH, OWp, MAX_GEMM_ROWS)
    out_rows = th * OWp
    T = N * (OH // th)
    n_par = 2 if T % 2 == 0 else 1    # per-slice stats slots (megacore-safe)
    t_inner = T // n_par
    R = N * OH * OW                   # true pixel count for the BN statistics

    cin_p = _round_up(cin, LANE)
    cmid_p = _round_up(mid_channel, LANE)
    cout_p = _round_up(out_channel, LANE)

    # NHWC, lane-padded channels, bf16: all HBM traffic below is bf16.
    x = jnp.transpose(x_nchw, (0, 2, 3, 1)).astype(jnp.bfloat16)
    x = jnp.pad(x, ((0, 0), (0, 0), (0, 0), (0, cin_p - cin)))

    rows_bn = _pick_bn_rows(T, out_rows, MAX_BN_ROWS)

    # ---- conv1: 3x3 / stride / pad 1 -> BN -> ReLU ----------------------- #
    w1 = _w_mat(p1["w"], cin, cin_p, cmid_p)
    if stride == 1:
        x1_tiles = _tap_row_tiles(x, OW, OWp, th)        # (T, (th+2)*OWp, 3*cin_p)
        taps1 = (0, OWp, 2 * OWp)
    else:
        # TODO(synk): strided 3x3 still materializes a (bf16) im2col in HBM.
        x1_tiles = _im2col_tiles(x, 3, stride, 1, OWp, th)
        taps1 = (0,)

    y1_raw, s1 = conv_stats(x1_tiles, w1, tap_offsets=taps1, out_rows=out_rows,
                            n_par=n_par, t_inner=t_inner)
    s1 = s1.reshape(n_par, 8, cmid_p).sum(axis=0)
    sc1, bi1 = _affine(s1[0], s1[1], p1["gamma"], p1["beta"], float(R), cmid_p)
    y1n = bn_act(y1_raw, _pack_affine([sc1, bi1], cmid_p),
                 rows_per_tile=rows_bn, out_dtype=jnp.bfloat16, relu=True)

    # conv1 activation back to NHWC, keeping the lane-padded cmid_p layout.
    y1_nhwc = y1n.reshape(N, OH, OWp, cmid_p)[:, :, :OW, :]

    # ---- conv2 (3x3 / 1 / pad 1) + fused downsample (1x1 / stride) ------- #
    w2 = _w_mat(p2["w"], mid_channel, cmid_p, cout_p)
    wd = _w_mat(pd["w"], cin, cin_p, cout_p)

    x2_tiles = _tap_row_tiles(y1_nhwc, OW, OWp, th)      # (T, (th+2)*OWp, 3*cmid_p)
    xd_rows = _flat_rows(x[:, ::stride, ::stride, :], OWp)   # (T*out_rows, cin_p)

    y2_raw, s2 = conv_ds_stats(x2_tiles, w2, xd_rows, wd,
                               tap_offsets=(0, OWp, 2 * OWp),
                               out_rows=out_rows, n_par=n_par, t_inner=t_inner)
    s2 = s2.reshape(n_par, 8, cout_p).sum(axis=0)
    sc2, bi2 = _affine(s2[0], s2[1], p2["gamma"], p2["beta"], float(R), cout_p)
    scd, bid = _affine(s2[2], s2[3], pd["gamma"], pd["beta"], float(R), cout_p)

    out_flat = bn_res_relu(y2_raw, xd_rows, wd,
                           _pack_affine([sc2, bi2, scd, bid], cout_p),
                           rows_per_tile=rows_bn)

    out = out_flat.reshape(N, OH, OWp, cout_p)[:, :, :OW, :out_channel]
    return jnp.transpose(out, (0, 3, 1, 2))              # back to NCHW


# ---------------------------- pure-JAX reference ---------------------------- #

def ref_conv_bn(x, w, gamma, beta, stride, padding, relu):
    y = jax.lax.conv_general_dilated(
        x, w, (stride, stride), [(padding, padding)] * 2,
        dimension_numbers=("NCHW", "OIHW", "NCHW"))
    mean = y.mean(axis=(0, 2, 3), keepdims=True)
    var = jnp.square(y - mean).mean(axis=(0, 2, 3), keepdims=True)
    out = (y - mean) * jax.lax.rsqrt(var + EPS)
    out = out * gamma.reshape(1, -1, 1, 1) + beta.reshape(1, -1, 1, 1)
    return jnp.maximum(out, 0.0) if relu else out


def ref_basic_block(x, params, mid_channel, out_channel, stride=1):
    cin = x.shape[1]
    p1 = params["conv1"][str(mid_channel)]
    pd = params["down"][str(out_channel)]
    p2 = params["conv2"][str(out_channel)]
    out = ref_conv_bn(x, p1["w"][:, :cin], p1["gamma"], p1["beta"], stride, 1, True)
    res = ref_conv_bn(x, pd["w"][:, :cin], pd["gamma"], pd["beta"], stride, 0, False)
    out = ref_conv_bn(out, p2["w"][:, :mid_channel], p2["gamma"], p2["beta"], 1, 1, False)
    return jnp.maximum(out + res, 0.0)


# ------------------------------ parameter init ------------------------------ #

def make_params(key, in_choices, mid_choices, out_choices):
    max_in, max_mid = max(in_choices), max(mid_choices)
    params = {"conv1": {}, "conv2": {}, "down": {}}

    def conv_bn_params(k, cout, cin, ks):
        kw, kg, kb = jax.random.split(k, 3)
        return {
            "w": jax.random.normal(kw, (cout, cin, ks, ks), jnp.float32) * 0.1,
            "gamma": 1.0 + 0.1 * jax.random.normal(kg, (cout,), jnp.float32),
            "beta": 0.1 * jax.random.normal(kb, (cout,), jnp.float32),
        }

    keys = jax.random.split(key, len(mid_choices) + 2 * len(out_choices))
    ki = 0
    for m in mid_choices:
        params["conv1"][str(m)] = conv_bn_params(keys[ki], m, max_in, 3); ki += 1
    for o in out_choices:
        params["conv2"][str(o)] = conv_bn_params(keys[ki], o, max_mid, 3); ki += 1
        params["down"][str(o)] = conv_bn_params(keys[ki], o, max_in, 1); ki += 1
    return params


# ----------------------------------- main ----------------------------------- #

if __name__ == "__main__":
    in_choices, mid_choices, out_choices = [3, 4], [6, 8], [8]
    stride = 1
    mid_channel, out_channel = 6, 8

    key = jax.random.PRNGKey(0)
    kx, kp = jax.random.split(key)
    x = jax.random.normal(kx, (2, 3, 16, 16), jnp.float32)   # NCHW, in_channel=3
    params = make_params(kp, in_choices, mid_choices, out_choices)

    fwd = jax.jit(basic_block_forward, static_argnums=(2, 3, 4))
    out = jax.block_until_ready(fwd(x, params, mid_channel, out_channel, stride))

    ref = jax.block_until_ready(
        ref_basic_block(x, params, mid_channel, out_channel, stride=stride))

    # bf16 MXU operands + bf16 HBM intermediates (f32 accumulation / BN math)
    # vs the f32 XLA reference: loosened tolerance.
    np.testing.assert_allclose(np.asarray(out), np.asarray(ref), rtol=3e-2, atol=3e-2)
    assert out.shape == (2, out_channel, 16, 16)
    print("KERNEL_OK")
</pallas_src>

<mosaic_0001>
module attributes {stable_mosaic.version = 11 : i64} {
  func.func @_conv_stats_kernel(%arg0: i32, %arg1: i32, %arg2: memref<1x288x384xbf16, #tpu.memory_space<vmem>>, %arg3: memref<1152x128xbf16, #tpu.memory_space<vmem>>, %arg4: memref<256x128xbf16, #tpu.memory_space<vmem>>, %arg5: memref<8x128xf32, #tpu.memory_space<vmem>>, %arg6: memref<256x128xf32, #tpu.memory_space<vmem>>) attributes {dimension_semantics = [#tpu.dimension_semantics<parallel>, #tpu.dimension_semantics<arbitrary>], iteration_bounds = array<i64: 2, 1>, scalar_prefetch = 0 : i64, scratch_operands = 1 : i64, tpu.core_type = #tpu.core_type<tc>, window_params = [{transform_indices = @transform_0, window_bounds = array<i64: 1, 288, 384>}, {pipeline_mode = #tpu.pipeline_mode<synchronous>, transform_indices = @transform_1, window_bounds = array<i64: 1152, 128>}, {transform_indices = @transform_2, window_bounds = array<i64: 256, 128>}, {transform_indices = @transform_3, window_bounds = array<i64: 8, 128>}]} {
    %c0 = arith.constant 0 : index
    %c0_0 = arith.constant 0 : index
    %c0_1 = arith.constant 0 : index
    %0 = vector.load %arg2[%c0, %c0_0, %c0_1] : memref<1x288x384xbf16, #tpu.memory_space<vmem>>, vector<1x256x384xbf16>
    %1 = vector.shape_cast %0 : vector<1x256x384xbf16> to vector<256x384xbf16>
    %c0_2 = arith.constant 0 : index
    %c0_3 = arith.constant 0 : index
    %2 = vector.load %arg3[%c0_2, %c0_3] : memref<1152x128xbf16, #tpu.memory_space<vmem>>, vector<384x128xbf16>
    %cst = arith.constant dense<0.000000e+00> : vector<256x128xf32>
    %3 = tpu.matmul %1, %2, %cst {dimension_numbers = #tpu.dot_dimension_numbers<[1], [0], [0], [1], [0, 0, 1, 1], [], []>} : vector<256x384xbf16>, vector<384x128xbf16>, vector<256x128xf32> -> vector<256x128xf32>
    %c0_4 = arith.constant 0 : index
    %c0_5 = arith.constant 0 : index
    %4 = vector.load %arg6[%c0_4, %c0_5] : memref<256x128xf32, #tpu.memory_space<vmem>>, vector<256x128xf32>
    tpu.vector_store %arg6[%c0_4, %c0_5], %3 {strides = array<i32>} : memref<256x128xf32, #tpu.memory_space<vmem>>, vector<256x128xf32>,
    %c0_6 = arith.constant 0 : index
    %c16 = arith.constant 16 : index
    %c0_7 = arith.constant 0 : index
    %5 = vector.load %arg2[%c0_6, %c16, %c0_7] : memref<1x288x384xbf16, #tpu.memory_space<vmem>>, vector<1x256x384xbf16>
    %6 = vector.shape_cast %5 : vector<1x256x384xbf16> to vector<256x384xbf16>
    %c384 = arith.constant 384 : index
    %c0_8 = arith.constant 0 : index
    %7 = vector.load %arg3[%c384, %c0_8] : memref<1152x128xbf16, #tpu.memory_space<vmem>>, vector<384x128xbf16>
    %cst_9 = arith.constant dense<0.000000e+00> : vector<256x128xf32>
    %8 = tpu.matmul %6, %7, %cst_9 {dimension_numbers = #tpu.dot_dimension_numbers<[1], [0], [0], [1], [0, 0, 1, 1], [], []>} : vector<256x384xbf16>, vector<384x128xbf16>, vector<256x128xf32> -> vector<256x128xf32>
    %c0_10 = arith.constant 0 : index
    %c0_11 = arith.constant 0 : index
    %9 = vector.load %arg6[%c0_10, %c0_11] : memref<256x128xf32, #tpu.memory_space<vmem>>, vector<256x128xf32>
    %10 = arith.addf %9, %8 : vector<256x128xf32>
    %c0_12 = arith.constant 0 : index
    %c0_13 = arith.constant 0 : index
    %11 = vector.load %arg6[%c0_12, %c0_13] : memref<256x128xf32, #tpu.memory_space<vmem>>, vector<256x128xf32>
    tpu.vector_store %arg6[%c0_12, %c0_13], %10 {strides = array<i32>} : memref<256x128xf32, #tpu.memory_space<vmem>>, vector<256x128xf32>,
    %c0_14 = arith.constant 0 : index
    %c32 = arith.constant 32 : index
    %c0_15 = arith.constant 0 : index
    %12 = vector.load %arg2[%c0_14, %c32, %c0_15] : memref<1x288x384xbf16, #tpu.memory_space<vmem>>, vector<1x256x384xbf16>
    %13 = vector.shape_cast %12 : vector<1x256x384xbf16> to vector<256x384xbf16>
    %c768 = arith.constant 768 : index
    %c0_16 = arith.constant 0 : index
    %14 = vector.load %arg3[%c768, %c0_16] : memref<1152x128xbf16, #tpu.memory_space<vmem>>, vector<384x128xbf16>
    %cst_17 = arith.constant dense<0.000000e+00> : vector<256x128xf32>
    %15 = tpu.matmul %13, %14, %cst_17 {dimension_numbers = #tpu.dot_dimension_numbers<[1], [0], [0], [1], [0, 0, 1, 1], [], []>} : vector<256x384xbf16>, vector<384x128xbf16>, vector<256x128xf32> -> vector<256x128xf32>
    %c0_18 = arith.constant 0 : index
    %c0_19 = arith.constant 0 : index
    %16 = vector.load %arg6[%c0_18, %c0_19] : memref<256x128xf32, #tpu.memory_space<vmem>>, vector<256x128xf32>
    %17 = arith.addf %16, %15 : vector<256x128xf32>
    %c0_20 = arith.constant 0 : index
    %c0_21 = arith.constant 0 : index
    %18 = vector.load %arg6[%c0_20, %c0_21] : memref<256x128xf32, #tpu.memory_space<vmem>>, vector<256x128xf32>
    tpu.vector_store %arg6[%c0_20, %c0_21], %17 {strides = array<i32>} : memref<256x128xf32, #tpu.memory_space<vmem>>, vector<256x128xf32>,
    %c0_22 = arith.constant 0 : index
    %c0_23 = arith.constant 0 : index
    %19 = vector.load %arg6[%c0_22, %c0_23] : memref<256x128xf32, #tpu.memory_space<vmem>>, vector<256x128xf32>
    %20 = arith.truncf %19 : vector<256x128xf32> to vector<256x128xbf16>
    %c0_24 = arith.constant 0 : index
    %c0_25 = arith.constant 0 : index
    %21 = vector.load %arg4[%c0_24, %c0_25] : memref<256x128xbf16, #tpu.memory_space<vmem>>, vector<256x128xbf16>
    tpu.vector_store %arg4[%c0_24, %c0_25], %20 {strides = array<i32>} : memref<256x128xbf16, #tpu.memory_space<vmem>>, vector<256x128xbf16>,
    %c0_i32 = arith.constant 0 : i32
    %22 = arith.cmpi eq, %arg1, %c0_i32 : i32
    %23 = arith.extui %22 : i1 to i32
    %c0_i32_26 = arith.constant 0 : i32
    %24 = arith.cmpi ne, %23, %c0_i32_26 : i32
    scf.if %24 {
      %cst_34 = arith.constant 0.000000e+00 : f32
      %35 = vector.broadcast %cst_34 : f32 to vector<8x128xf32>
      %c0_35 = arith.constant 0 : index
      %c0_36 = arith.constant 0 : index
      %36 = vector.load %arg5[%c0_35, %c0_36] : memref<8x128xf32, #tpu.memory_space<vmem>>, vector<8x128xf32>
      tpu.vector_store %arg5[%c0_35, %c0_36], %35 {strides = array<i32>} : memref<8x128xf32, #tpu.memory_space<vmem>>, vector<8x128xf32>,
    } else {
    }
    %c0_27 = arith.constant 0 : index
    %c0_28 = arith.constant 0 : index
    %25 = vector.load %arg5[%c0_27, %c0_28] : memref<8x128xf32, #tpu.memory_space<vmem>>, vector<8x128xf32>
    %cst_29 = arith.constant dense<0.000000e+00> : vector<128xf32>
    %26 = vector.multi_reduction <add>, %19, %cst_29 [0] : vector<256x128xf32> to vector<128xf32>
    %27 = vector.shape_cast %26 : vector<128xf32> to vector<1x128xf32>
    %28 = arith.mulf %19, %19 : vector<256x128xf32>
    %cst_30 = arith.constant dense<0.000000e+00> : vector<128xf32>
    %29 = vector.multi_reduction <add>, %28, %cst_30 [0] : vector<256x128xf32> to vector<128xf32>
    %30 = vector.shape_cast %29 : vector<128xf32> to vector<1x128xf32>
    %cst_31 = arith.constant 0.000000e+00 : f32
    %31 = vector.broadcast %cst_31 : f32 to vector<6x128xf32>
    %32 = tpu.concatenate %27, %30, %31 in 0 : vector<1x128xf32>, vector<1x128xf32>, vector<6x128xf32> -> vector<8x128xf32>
    %33 = arith.addf %25, %32 : vector<8x128xf32>
    %c0_32 = arith.constant 0 : index
    %c0_33 = arith.constant 0 : index
    %34 = vector.load %arg5[%c0_32, %c0_33] : memref<8x128xf32, #tpu.memory_space<vmem>>, vector<8x128xf32>
    tpu.vector_store %arg5[%c0_32, %c0_33], %33 {strides = array<i32>} : memref<8x128xf32, #tpu.memory_space<vmem>>, vector<8x128xf32>,
    return
  }
  func.func @transform_0(%arg0: i32, %arg1: i32) -> (i32, i32, i32) {
    %c1_i32 = arith.constant 1 : i32
    %0 = arith.muli %arg0, %c1_i32 : i32
    %1 = arith.addi %0, %arg1 : i32
    %c0_i32 = arith.constant 0 : i32
    %c0_i32_0 = arith.constant 0 : i32
    %c0_i32_1 = arith.constant 0 : i32
    return %1, %c0_i32, %c0_i32_0 : i32, i32, i32
  }
  func.func @transform_1(%arg0: i32, %arg1: i32) -> (i32, i32) {
    %c0_i32 = arith.constant 0 : i32
    %c0_i32_0 = arith.constant 0 : i32
    %c0_i32_1 = arith.constant 0 : i32
    return %c0_i32, %c0_i32_0 : i32, i32
  }
  func.func @transform_2(%arg0: i32, %arg1: i32) -> (i32, i32) {
    %c1_i32 = arith.constant 1 : i32
    %0 = arith.muli %arg0, %c1_i32 : i32
    %1 = arith.addi %0, %arg1 : i32
    %c0_i32 = arith.constant 0 : i32
    %c0_i32_0 = arith.constant 0 : i32
    return %1, %c0_i32 : i32, i32
  }
  func.func @transform_3(%arg0: i32, %arg1: i32) -> (i32, i32) {
    %c0_i32 = arith.constant 0 : i32
    %c0_i32_0 = arith.constant 0 : i32
    return %arg0, %c0_i32 : i32, i32
  }
}

module attributes {stable_mosaic.version = 11 : i64} {
  func.func @_bn_act_kernel(%arg0: i32, %arg1: memref<512x128xbf16, #tpu.memory_space<vmem>>, %arg2: memref<8x128xf32, #tpu.memory_space<vmem>>, %arg3: memref<512x128xbf16, #tpu.memory_space<vmem>>) attributes {dimension_semantics = [#tpu.dimension_semantics<parallel>], iteration_bounds = array<i64: 1>, scalar_prefetch = 0 : i64, scratch_operands = 0 : i64, tpu.core_type = #tpu.core_type<tc>, window_params = [{transform_indices = @transform_0, window_bounds = array<i64: 512, 128>}, {pipeline_mode = #tpu.pipeline_mode<synchronous>, transform_indices = @transform_1, window_bounds = array<i64: 8, 128>}, {transform_indices = @transform_2, window_bounds = array<i64: 512, 128>}]} {
    %c0 = arith.constant 0 : index
    %c0_0 = arith.constant 0 : index
    %0 = vector.load %arg2[%c0, %c0_0] : memref<8x128xf32, #tpu.memory_space<vmem>>, vector<8x128xf32>
    %c0_1 = arith.constant 0 : index
    %c0_2 = arith.constant 0 : index
    %1 = vector.load %arg1[%c0_1, %c0_2] : memref<512x128xbf16, #tpu.memory_space<vmem>>, vector<512x128xbf16>
    %2 = arith.extf %1 : vector<512x128xbf16> to vector<512x128xf32>
    %3 = vector.extract_strided_slice %0 {offsets = [0, 0], sizes = [1, 128], strides = [1, 1]} : vector<8x128xf32> to vector<1x128xf32>
    %4 = vector.broadcast %3 : vector<1x128xf32> to vector<512x128xf32>
    %5 = arith.mulf %2, %4 : vector<512x128xf32>
    %6 = vector.extract_strided_slice %0 {offsets = [1, 0], sizes = [1, 128], strides = [1, 1]} : vector<8x128xf32> to vector<1x128xf32>
    %7 = vector.broadcast %6 : vector<1x128xf32> to vector<512x128xf32>
    %8 = arith.addf %5, %7 : vector<512x128xf32>
    %cst = arith.constant 0.000000e+00 : f32
    %9 = vector.broadcast %cst : f32 to vector<512x128xf32>
    %10 = arith.maximumf %8, %9 : vector<512x128xf32>
    %11 = arith.truncf %10 : vector<512x128xf32> to vector<512x128xbf16>
    %c0_3 = arith.constant 0 : index
    %c0_4 = arith.constant 0 : index
    %12 = vector.load %arg3[%c0_3, %c0_4] : memref<512x128xbf16, #tpu.memory_space<vmem>>, vector<512x128xbf16>
    tpu.vector_store %arg3[%c0_3, %c0_4], %11 {strides = array<i32>} : memref<512x128xbf16, #tpu.memory_space<vmem>>, vector<512x128xbf16>,
    return
  }
  func.func @transform_0(%arg0: i32) -> (i32, i32) {
    %c0_i32 = arith.constant 0 : i32
    %c0_i32_0 = arith.constant 0 : i32
    return %arg0, %c0_i32 : i32, i32
  }
  func.func @transform_1(%arg0: i32) -> (i32, i32) {
    %c0_i32 = arith.constant 0 : i32
    %c0_i32_0 = arith.constant 0 : i32
    %c0_i32_1 = arith.constant 0 : i32
    return %c0_i32, %c0_i32_0 : i32, i32
  }
  func.func @transform_2(%arg0: i32) -> (i32, i32) {
    %c0_i32 = arith.constant 0 : i32
    %c0_i32_0 = arith.constant 0 : i32
    return %arg0, %c0_i32 : i32, i32
  }
}

module attributes {stable_mosaic.version = 11 : i64} {
  func.func @_conv_ds_stats_kernel(%arg0: i32, %arg1: i32, %arg2: memref<1x288x384xbf16, #tpu.memory_space<vmem>>, %arg3: memref<1152x128xbf16, #tpu.memory_space<vmem>>, %arg4: memref<256x128xbf16, #tpu.memory_space<vmem>>, %arg5: memref<128x128xbf16, #tpu.memory_space<vmem>>, %arg6: memref<256x128xbf16, #tpu.memory_space<vmem>>, %arg7: memref<8x128xf32, #tpu.memory_space<vmem>>, %arg8: memref<256x128xf32, #tpu.memory_space<vmem>>) attributes {dimension_semantics = [#tpu.dimension_semantics<parallel>, #tpu.dimension_semantics<arbitrary>], iteration_bounds = array<i64: 2, 1>, scalar_prefetch = 0 : i64, scratch_operands = 1 : i64, tpu.core_type = #tpu.core_type<tc>, window_params = [{transform_indices = @transform_0, window_bounds = array<i64: 1, 288, 384>}, {pipeline_mode = #tpu.pipeline_mode<synchronous>, transform_indices = @transform_1, window_bounds = array<i64: 1152, 128>}, {transform_indices = @transform_2, window_bounds = array<i64: 256, 128>}, {pipeline_mode = #tpu.pipeline_mode<synchronous>, transform_indices = @transform_3, window_bounds = array<i64: 128, 128>}, {transform_indices = @transform_4, window_bounds = array<i64: 256, 128>}, {transform_indices = @transform_5, window_bounds = array<i64: 8, 128>}]} {
    %c0 = arith.constant 0 : index
    %c0_0 = arith.constant 0 : index
    %c0_1 = arith.constant 0 : index
    %0 = vector.load %arg2[%c0, %c0_0, %c0_1] : memref<1x288x384xbf16, #tpu.memory_space<vmem>>, vector<1x256x384xbf16>
    %1 = vector.shape_cast %0 : vector<1x256x384xbf16> to vector<256x384xbf16>
    %c0_2 = arith.constant 0 : index
    %c0_3 = arith.constant 0 : index
    %2 = vector.load %arg3[%c0_2, %c0_3] : memref<1152x128xbf16, #tpu.memory_space<vmem>>, vector<384x128xbf16>
    %cst = arith.constant dense<0.000000e+00> : vector<256x128xf32>
    %3 = tpu.matmul %1, %2, %cst {dimension_numbers = #tpu.dot_dimension_numbers<[1], [0], [0], [1], [0, 0, 1, 1], [], []>} : vector<256x384xbf16>, vector<384x128xbf16>, vector<256x128xf32> -> vector<256x128xf32>
    %c0_4 = arith.constant 0 : index
    %c0_5 = arith.constant 0 : index
    %4 = vector.load %arg8[%c0_4, %c0_5] : memref<256x128xf32, #tpu.memory_space<vmem>>, vector<256x128xf32>
    tpu.vector_store %arg8[%c0_4, %c0_5], %3 {strides = array<i32>} : memref<256x128xf32, #tpu.memory_space<vmem>>, vector<256x128xf32>,
    %c0_6 = arith.constant 0 : index
    %c16 = arith.constant 16 : index
    %c0_7 = arith.constant 0 : index
    %5 = vector.load %arg2[%c0_6, %c16, %c0_7] : memref<1x288x384xbf16, #tpu.memory_space<vmem>>, vector<1x256x384xbf16>
    %6 = vector.shape_cast %5 : vector<1x256x384xbf16> to vector<256x384xbf16>
    %c384 = arith.constant 384 : index
    %c0_8 = arith.constant 0 : index
    %7 = vector.load %arg3[%c384, %c0_8] : memref<1152x128xbf16, #tpu.memory_space<vmem>>, vector<384x128xbf16>
    %cst_9 = arith.constant dense<0.000000e+00> : vector<256x128xf32>
    %8 = tpu.matmul %6, %7, %cst_9 {dimension_numbers = #tpu.dot_dimension_numbers<[1], [0], [0], [1], [0, 0, 1, 1], [], []>} : vector<256x384xbf16>, vector<384x128xbf16>, vector<256x128xf32> -> vector<256x128xf32>
    %c0_10 = arith.constant 0 : index
    %c0_11 = arith.constant 0 : index
    %9 = vector.load %arg8[%c0_10, %c0_11] : memref<256x128xf32, #tpu.memory_space<vmem>>, vector<256x128xf32>
    %10 = arith.addf %9, %8 : vector<256x128xf32>
    %c0_12 = arith.constant 0 : index
    %c0_13 = arith.constant 0 : index
    %11 = vector.load %arg8[%c0_12, %c0_13] : memref<256x128xf32, #tpu.memory_space<vmem>>, vector<256x128xf32>
    tpu.vector_store %arg8[%c0_12, %c0_13], %10 {strides = array<i32>} : memref<256x128xf32, #tpu.memory_space<vmem>>, vector<256x128xf32>,
    %c0_14 = arith.constant 0 : index
    %c32 = arith.constant 32 : index
    %c0_15 = arith.constant 0 : index
    %12 = vector.load %arg2[%c0_14, %c32, %c0_15] : memref<1x288x384xbf16, #tpu.memory_space<vmem>>, vector<1x256x384xbf16>
    %13 = vector.shape_cast %12 : vector<1x256x384xbf16> to vector<256x384xbf16>
    %c768 = arith.constant 768 : index
    %c0_16 = arith.constant 0 : index
    %14 = vector.load %arg3[%c768, %c0_16] : memref<1152x128xbf16, #tpu.memory_space<vmem>>, vector<384x128xbf16>
    %cst_17 = arith.constant dense<0.000000e+00> : vector<256x128xf32>
    %15 = tpu.matmul %13, %14, %cst_17 {dimension_numbers = #tpu.dot_dimension_numbers<[1], [0], [0], [1], [0, 0, 1, 1], [], []>} : vector<256x384xbf16>, vector<384x128xbf16>, vector<256x128xf32> -> vector<256x128xf32>
    %c0_18 = arith.constant 0 : index
    %c0_19 = arith.constant 0 : index
    %16 = vector.load %arg8[%c0_18, %c0_19] : memref<256x128xf32, #tpu.memory_space<vmem>>, vector<256x128xf32>
    %17 = arith.addf %16, %15 : vector<256x128xf32>
    %c0_20 = arith.constant 0 : index
    %c0_21 = arith.constant 0 : index
    %18 = vector.load %arg8[%c0_20, %c0_21] : memref<256x128xf32, #tpu.memory_space<vmem>>, vector<256x128xf32>
    tpu.vector_store %arg8[%c0_20, %c0_21], %17 {strides = array<i32>} : memref<256x128xf32, #tpu.memory_space<vmem>>, vector<256x128xf32>,
    %c0_22 = arith.constant 0 : index
    %c0_23 = arith.constant 0 : index
    %19 = vector.load %arg8[%c0_22, %c0_23] : memref<256x128xf32, #tpu.memory_space<vmem>>, vector<256x128xf32>
    %c0_24 = arith.constant 0 : index
    %c0_25 = arith.constant 0 : index
    %20 = vector.load %arg4[%c0_24, %c0_25] : memref<256x128xbf16, #tpu.memory_space<vmem>>, vector<256x128xbf16>
    %c0_26 = arith.constant 0 : index
    %c0_27 = arith.constant 0 : index
    %21 = vector.load %arg5[%c0_26, %c0_27] : memref<128x128xbf16, #tpu.memory_space<vmem>>, vector<128x128xbf16>
    %cst_28 = arith.constant dense<0.000000e+00> : vector<256x128xf32>
    %22 = tpu.matmul %20, %21, %cst_28 {dimension_numbers = #tpu.dot_dimension_numbers<[1], [0], [0], [1], [0, 0, 1, 1], [], []>} : vector<256x128xbf16>, vector<128x128xbf16>, vector<256x128xf32> -> vector<256x128xf32>
    %23 = arith.truncf %19 : vector<256x128xf32> to vector<256x128xbf16>
    %c0_29 = arith.constant 0 : index
    %c0_30 = arith.constant 0 : index
    %24 = vector.load %arg6[%c0_29, %c0_30] : memref<256x128xbf16, #tpu.memory_space<vmem>>, vector<256x128xbf16>
    tpu.vector_store %arg6[%c0_29, %c0_30], %23 {strides = array<i32>} : memref<256x128xbf16, #tpu.memory_space<vmem>>, vector<256x128xbf16>,
    %c0_i32 = arith.constant 0 : i32
    %25 = arith.cmpi eq, %arg1, %c0_i32 : i32
    %26 = arith.extui %25 : i1 to i32
    %c0_i32_31 = arith.constant 0 : i32
    %27 = arith.cmpi ne, %26, %c0_i32_31 : i32
    scf.if %27 {
      %cst_41 = arith.constant 0.000000e+00 : f32
      %43 = vector.broadcast %cst_41 : f32 to vector<8x128xf32>
      %c0_42 = arith.constant 0 : index
      %c0_43 = arith.constant 0 : index
      %44 = vector.load %arg7[%c0_42, %c0_43] : memref<8x128xf32, #tpu.memory_space<vmem>>, vector<8x128xf32>
      tpu.vector_store %arg7[%c0_42, %c0_43], %43 {strides = array<i32>} : memref<8x128xf32, #tpu.memory_space<vmem>>, vector<8x128xf32>,
    } else {
    }
    %c0_32 = arith.constant 0 : index
    %c0_33 = arith.constant 0 : index
    %28 = vector.load %arg7[%c0_32, %c0_33] : memref<8x128xf32, #tpu.memory_space<vmem>>, vector<8x128xf32>
    %cst_34 = arith.constant dense<0.000000e+00> : vector<128xf32>
    %29 = vector.multi_reduction <add>, %19, %cst_34 [0] : vector<256x128xf32> to vector<128xf32>
    %30 = vector.shape_cast %29 : vector<128xf32> to vector<1x128xf32>
    %31 = arith.mulf %19, %19 : vector<256x128xf32>
    %cst_35 = arith.constant dense<0.000000e+00> : vector<128xf32>
    %32 = vector.multi_reduction <add>, %31, %cst_35 [0] : vector<256x128xf32> to vector<128xf32>
    %33 = vector.shape_cast %32 : vector<128xf32> to vector<1x128xf32>
    %cst_36 = arith.constant dense<0.000000e+00> : vector<128xf32>
    %34 = vector.multi_reduction <add>, %22, %cst_36 [0] : vector<256x128xf32> to vector<128xf32>
    %35 = vector.shape_cast %34 : vector<128xf32> to vector<1x128xf32>
    %36 = arith.mulf %22, %22 : vector<256x128xf32>
    %cst_37 = arith.constant dense<0.000000e+00> : vector<128xf32>
    %37 = vector.multi_reduction <add>, %36, %cst_37 [0] : vector<256x128xf32> to vector<128xf32>
    %38 = vector.shape_cast %37 : vector<128xf32> to vector<1x128xf32>
    %cst_38 = arith.constant 0.000000e+00 : f32
    %39 = vector.broadcast %cst_38 : f32 to vector<4x128xf32>
    %40 = tpu.concatenate %30, %33, %35, %38, %39 in 0 : vector<1x128xf32>, vector<1x128xf32>, vector<1x128xf32>, vector<1x128xf32>, vector<4x128xf32> -> vector<8x128xf32>
    %41 = arith.addf %28, %40 : vector<8x128xf32>
    %c0_39 = arith.constant 0 : index
    %c0_40 = arith.constant 0 : index
    %42 = vector.load %arg7[%c0_39, %c0_40] : memref<8x128xf32, #tpu.memory_space<vmem>>, vector<8x128xf32>
    tpu.vector_store %arg7[%c0_39, %c0_40], %41 {strides = array<i32>} : memref<8x128xf32, #tpu.memory_space<vmem>>, vector<8x128xf32>,
    return
  }
  func.func @transform_0(%arg0: i32, %arg1: i32) -> (i32, i32, i32) {
    %c1_i32 = arith.constant 1 : i32
    %0 = arith.muli %arg0, %c1_i32 : i32
    %1 = arith.addi %0, %arg1 : i32
    %c0_i32 = arith.constant 0 : i32
    %c0_i32_0 = arith.constant 0 : i32
    %c0_i32_1 = arith.constant 0 : i32
    return %1, %c0_i32, %c0_i32_0 : i32, i32, i32
  }
  func.func @transform_1(%arg0: i32, %arg1: i32) -> (i32, i32) {
    %c0_i32 = arith.constant 0 : i32
    %c0_i32_0 = arith.constant 0 : i32
    %c0_i32_1 = arith.constant 0 : i32
    return %c0_i32, %c0_i32_0 : i32, i32
  }
  func.func @transform_2(%arg0: i32, %arg1: i32) -> (i32, i32) {
    %c1_i32 = arith.constant 1 : i32
    %0 = arith.muli %arg0, %c1_i32 : i32
    %1 = arith.addi %0, %arg1 : i32
    %c0_i32 = arith.constant 0 : i32
    %c0_i32_0 = arith.constant 0 : i32
    return %1, %c0_i32 : i32, i32
  }
  func.func @transform_3(%arg0: i32, %arg1: i32) -> (i32, i32) {
    %c0_i32 = arith.constant 0 : i32
    %c0_i32_0 = arith.constant 0 : i32
    %c0_i32_1 = arith.constant 0 : i32
    return %c0_i32, %c0_i32_0 : i32, i32
  }
  func.func @transform_4(%arg0: i32, %arg1: i32) -> (i32, i32) {
    %c1_i32 = arith.constant 1 : i32
    %0 = arith.muli %arg0, %c1_i32 : i32
    %1 = arith.addi %0, %arg1 : i32
    %c0_i32 = arith.constant 0 : i32
    %c0_i32_0 = arith.constant 0 : i32
    return %1, %c0_i32 : i32, i32
  }
  func.func @transform_5(%arg0: i32, %arg1: i32) -> (i32, i32) {
    %c0_i32 = arith.constant 0 : i32
    %c0_i32_0 = arith.constant 0 : i32
    return %arg0, %c0_i32 : i32, i32
  }
}

module attributes {stable_mosaic.version = 11 : i64} {
  func.func @_bn_res_relu_kernel(%arg0: i32, %arg1: memref<512x128xbf16, #tpu.memory_space<vmem>>, %arg2: memref<512x128xbf16, #tpu.memory_space<vmem>>, %arg3: memref<128x128xbf16, #tpu.memory_space<vmem>>, %arg4: memref<8x128xf32, #tpu.memory_space<vmem>>, %arg5: memref<512x128xf32, #tpu.memory_space<vmem>>) attributes {dimension_semantics = [#tpu.dimension_semantics<parallel>], iteration_bounds = array<i64: 1>, scalar_prefetch = 0 : i64, scratch_operands = 0 : i64, tpu.core_type = #tpu.core_type<tc>, window_params = [{transform_indices = @transform_0, window_bounds = array<i64: 512, 128>}, {transform_indices = @transform_1, window_bounds = array<i64: 512, 128>}, {pipeline_mode = #tpu.pipeline_mode<synchronous>, transform_indices = @transform_2, window_bounds = array<i64: 128, 128>}, {pipeline_mode = #tpu.pipeline_mode<synchronous>, transform_indices = @transform_3, window_bounds = array<i64: 8, 128>}, {transform_indices = @transform_4, window_bounds = array<i64: 512, 128>}]} {
    %c0 = arith.constant 0 : index
    %c0_0 = arith.constant 0 : index
    %0 = vector.load %arg4[%c0, %c0_0] : memref<8x128xf32, #tpu.memory_space<vmem>>, vector<8x128xf32>
    %c0_1 = arith.constant 0 : index
    %c0_2 = arith.constant 0 : index
    %1 = vector.load %arg2[%c0_1, %c0_2] : memref<512x128xbf16, #tpu.memory_space<vmem>>, vector<512x128xbf16>
    %c0_3 = arith.constant 0 : index
    %c0_4 = arith.constant 0 : index
    %2 = vector.load %arg3[%c0_3, %c0_4] : memref<128x128xbf16, #tpu.memory_space<vmem>>, vector<128x128xbf16>
    %cst = arith.constant dense<0.000000e+00> : vector<512x128xf32>
    %3 = tpu.matmul %1, %2, %cst {dimension_numbers = #tpu.dot_dimension_numbers<[1], [0], [0], [1], [0, 0, 1, 1], [], []>} : vector<512x128xbf16>, vector<128x128xbf16>, vector<512x128xf32> -> vector<512x128xf32>
    %c0_5 = arith.constant 0 : index
    %c0_6 = arith.constant 0 : index
    %4 = vector.load %arg1[%c0_5, %c0_6] : memref<512x128xbf16, #tpu.memory_space<vmem>>, vector<512x128xbf16>
    %5 = arith.extf %4 : vector<512x128xbf16> to vector<512x128xf32>
    %6 = vector.extract_strided_slice %0 {offsets = [0, 0], sizes = [1, 128], strides = [1, 1]} : vector<8x128xf32> to vector<1x128xf32>
    %7 = vector.broadcast %6 : vector<1x128xf32> to vector<512x128xf32>
    %8 = arith.mulf %5, %7 : vector<512x128xf32>
    %9 = vector.extract_strided_slice %0 {offsets = [1, 0], sizes = [1, 128], strides = [1, 1]} : vector<8x128xf32> to vector<1x128xf32>
    %10 = vector.broadcast %9 : vector<1x128xf32> to vector<512x128xf32>
    %11 = arith.addf %8, %10 : vector<512x128xf32>
    %12 = vector.extract_strided_slice %0 {offsets = [2, 0], sizes = [1, 128], strides = [1, 1]} : vector<8x128xf32> to vector<1x128xf32>
    %13 = vector.broadcast %12 : vector<1x128xf32> to vector<512x128xf32>
    %14 = arith.mulf %3, %13 : vector<512x128xf32>
    %15 = arith.addf %11, %14 : vector<512x128xf32>
    %16 = vector.extract_strided_slice %0 {offsets = [3, 0], sizes = [1, 128], strides = [1, 1]} : vector<8x128xf32> to vector<1x128xf32>
    %17 = vector.broadcast %16 : vector<1x128xf32> to vector<512x128xf32>
    %18 = arith.addf %15, %17 : vector<512x128xf32>
    %cst_7 = arith.constant 0.000000e+00 : f32
    %19 = vector.broadcast %cst_7 : f32 to vector<512x128xf32>
    %20 = arith.maximumf %18, %19 : vector<512x128xf32>
    %c0_8 = arith.constant 0 : index
    %c0_9 = arith.constant 0 : index
    %21 = vector.load %arg5[%c0_8, %c0_9] : memref<512x128xf32, #tpu.memory_space<vmem>>, vector<512x128xf32>
    tpu.vector_store %arg5[%c0_8, %c0_9], %20 {strides = array<i32>} : memref<512x128xf32, #tpu.memory_space<vmem>>, vector<512x128xf32>,
    return
  }
  func.func @transform_0(%arg0: i32) -> (i32, i32) {
    %c0_i32 = arith.constant 0 : i32
    %c0_i32_0 = arith.constant 0 : i32
    return %arg0, %c0_i32 : i32, i32
  }
  func.func @transform_1(%arg0: i32) -> (i32, i32) {
    %c0_i32 = arith.constant 0 : i32
    %c0_i32_0 = arith.constant 0 : i32
    return %arg0, %c0_i32 : i32, i32
  }
  func.func @transform_2(%arg0: i32) -> (i32, i32) {
    %c0_i32 = arith.constant 0 : i32
    %c0_i32_0 = arith.constant 0 : i32
    %c0_i32_1 = arith.constant 0 : i32
    return %c0_i32, %c0_i32_0 : i32, i32
  }
  func.func @transform_3(%arg0: i32) -> (i32, i32) {
    %c0_i32 = arith.constant 0 : i32
    %c0_i32_0 = arith.constant 0 : i32
    %c0_i32_1 = arith.constant 0 : i32
    return %c0_i32, %c0_i32_0 : i32, i32
  }
  func.func @transform_4(%arg0: i32) -> (i32, i32) {
    %c0_i32 = arith.constant 0 : i32
    %c0_i32_0 = arith.constant 0 : i32
    return %arg0, %c0_i32 : i32, i32
  }
}

</mosaic_0001>

<llo_original>
// kernel: basic_block_forward.5
$region0: #{basic_block_forward.5}
  #allocation0 [shape = 'u32[]', space=smem, size = 0x4, offset = 0x4, fixed_abs, tag = 'smem constant byte address 0x4 - core index']
  #allocation1 [shape = 'u32[144,128]{1,0:T(1,128)}', space=vmem, size = 0x12000, scoped, tag = 'internal scratch']
  %s0 = inlined_call_operand.vmem [shape: bf16[512,128], index: 0, kind: input, shape index: {}]
  %s1 = inlined_call_operand.vmem [shape: f32[8,128], index: 1, kind: input, shape index: {}]
  %s2 = inlined_call_operand.vmem [shape: bf16[512,128], index: 2, kind: output, shape index: {}]
  %s3 = sld [smem:[#allocation0]]
  $region18: #{basic_block_forward.5} parent=0
    _
  %s5 = ssub.s32 1, %s3
  %s6 = scalar_select 0, %s5, %s3
  // Predicated region
  $region2: #{basic_block_forward.5} parent=0 // pred_check
    _
  $region3: #{basic_block_forward.5} parent=0 // pred_check_branch
    %8 = sbr.rel (0) target = $region5
  $region4: #{basic_block_forward.5} parent=0 // pred_region
    _
  $region5: #{basic_block_forward.5} parent=0 // pred_fallthru
    _
  // Predicated region
  $region6: #{basic_block_forward.5} parent=0 // pred_check
    _
  $region7: #{basic_block_forward.5} parent=0 // pred_check_branch
    %10 = sbr.rel (0) target = $region9
  $region8: #{basic_block_forward.5} parent=0 // pred_region
    _
  $region9: #{basic_block_forward.5} parent=0 // pred_fallthru
    _
  %v11 = vld [vmem:[%s1] sm:$0xff]
  %v12 = vld [vmem:[%s0] sm:$0xf]
  %v13 = vld [vmem:[%s0 + $0x4] sm:$0xf]
  %v14 = vld [vmem:[%s0 + $0x8] sm:$0xf]
  %v15 = vld [vmem:[%s0 + $0xc] sm:$0xf]
  %v16 = vld [vmem:[%s0 + $0x10] sm:$0xf]
  %v17 = vld [vmem:[%s0 + $0x14] sm:$0xf]
  %v18 = vld [vmem:[%s0 + $0x18] sm:$0xf]
  %v19 = vld [vmem:[%s0 + $0x1c] sm:$0xf]
  %v20 = vld [vmem:[%s0 + $0x20] sm:$0xf]
  %v21 = vld [vmem:[%s0 + $0x24] sm:$0xf]
  %v22 = vld [vmem:[%s0 + $0x28] sm:$0xf]
  %v23 = vld [vmem:[%s0 + $0x2c] sm:$0xf]
  %v24 = vld [vmem:[%s0 + $0x30] sm:$0xf]
  %v25 = vld [vmem:[%s0 + $0x34] sm:$0xf]
  %v26 = vld [vmem:[%s0 + $0x38] sm:$0xf]
  %v27 = vld [vmem:[%s0 + $0x3c] sm:$0xf]
  %v28 = vld [vmem:[%s0 + $0x40] sm:$0xf]
  %v29 = vld [vmem:[%s0 + $0x44] sm:$0xf]
  %v30 = vld [vmem:[%s0 + $0x48] sm:$0xf]
  %v31 = vld [vmem:[%s0 + $0x4c] sm:$0xf]
  %v32 = vld [vmem:[%s0 + $0x50] sm:$0xf]
  %v33 = vld [vmem:[%s0 + $0x54] sm:$0xf]
  %v34 = vld [vmem:[%s0 + $0x58] sm:$0xf]
  %v35 = vld [vmem:[%s0 + $0x5c] sm:$0xf]
  %v36 = vld [vmem:[%s0 + $0x60] sm:$0xf]
  %v37 = vld [vmem:[%s0 + $0x64] sm:$0xf]
  %v38 = vld [vmem:[%s0 + $0x68] sm:$0xf]
  %v39 = vld [vmem:[%s0 + $0x6c] sm:$0xf]
  %v40 = vld [vmem:[%s0 + $0x70] sm:$0xf]
  %v41 = vld [vmem:[%s0 + $0x74] sm:$0xf]
  %v42 = vld [vmem:[%s0 + $0x78] sm:$0xf]
  %v43 = vld [vmem:[%s0 + $0x7c] sm:$0xf]
  %v44 = vld [vmem:[%s0 + $0x80] sm:$0xf]
  %v45 = vld [vmem:[%s0 + $0x84] sm:$0xf]
  %v46 = vld [vmem:[%s0 + $0x88] sm:$0xf]
  %v47 = vld [vmem:[%s0 + $0x8c] sm:$0xf]
  %v48 = vld [vmem:[%s0 + $0x90] sm:$0xf]
  %v49 = vld [vmem:[%s0 + $0x94] sm:$0xf]
  %v50 = vld [vmem:[%s0 + $0x98] sm:$0xf]
  %v51 = vld [vmem:[%s0 + $0x9c] sm:$0xf]
  %v52 = vld [vmem:[%s0 + $0xa0] sm:$0xf]
  %v53 = vld [vmem:[%s0 + $0xa4] sm:$0xf]
  %v54 = vld [vmem:[%s0 + $0xa8] sm:$0xf]
  %v55 = vld [vmem:[%s0 + $0xac] sm:$0xf]
  %v56 = vld [vmem:[%s0 + $0xb0] sm:$0xf]
  %v57 = vld [vmem:[%s0 + $0xb4] sm:$0xf]
  %v58 = vld [vmem:[%s0 + $0xb8] sm:$0xf]
  %v59 = vld [vmem:[%s0 + $0xbc] sm:$0xf]
  %v60 = vld [vmem:[%s0 + $0xc0] sm:$0xf]
  %v61 = vld [vmem:[%s0 + $0xc4] sm:$0xf]
  %v62 = vld [vmem:[%s0 + $0xc8] sm:$0xf]
  %v63 = vld [vmem:[%s0 + $0xcc] sm:$0xf]
  %v64 = vld [vmem:[%s0 + $0xd0] sm:$0xf]
  %v65 = vld [vmem:[%s0 + $0xd4] sm:$0xf]
  %v66 = vld [vmem:[%s0 + $0xd8] sm:$0xf]
  %v67 = vld [vmem:[%s0 + $0xdc] sm:$0xf]
  %v68 = vld [vmem:[%s0 + $0xe0] sm:$0xf]
  %v69 = vld [vmem:[%s0 + $0xe4] sm:$0xf]
  %v70 = vld [vmem:[%s0 + $0xe8] sm:$0xf]
  %v71 = vld [vmem:[%s0 + $0xec] sm:$0xf]
  %v72 = vld [vmem:[%s0 + $0xf0] sm:$0xf]
  %v73 = vld [vmem:[%s0 + $0xf4] sm:$0xf]
  %v74 = vld [vmem:[%s0 + $0xf8] sm:$0xf]
  %v75 = vld [vmem:[%s0 + $0xfc] sm:$0xf]
  %v76 = vunpack.c.l.bf16 %v12
  %v77 = vunpack.c.l.bf16 %v13
  %v78 = vunpack.c.l.bf16 %v14
  %v79 = vunpack.c.l.bf16 %v15
  %v80 = vunpack.c.l.bf16 %v16
  %v81 = vunpack.c.l.bf16 %v17
  %v82 = vunpack.c.l.bf16 %v18
  %v83 = vunpack.c.l.bf16 %v19
  %v84 = vunpack.c.l.bf16 %v20
  %v85 = vunpack.c.l.bf16 %v21
  %v86 = vunpack.c.l.bf16 %v22
  %v87 = vunpack.c.l.bf16 %v23
  %v88 = vunpack.c.l.bf16 %v24
  %v89 = vunpack.c.l.bf16 %v25
  %v90 = vunpack.c.l.bf16 %v26
  %v91 = vunpack.c.l.bf16 %v27
  %v92 = vunpack.c.l.bf16 %v28
  %v93 = vunpack.c.l.bf16 %v29
  %v94 = vunpack.c.l.bf16 %v30
  %v95 = vunpack.c.l.bf16 %v31
  %v96 = vunpack.c.l.bf16 %v32
  %v97 = vunpack.c.l.bf16 %v33
  %v98 = vunpack.c.l.bf16 %v34
  %v99 = vunpack.c.l.bf16 %v35
  %v100 = vunpack.c.l.bf16 %v36
  %v101 = vunpack.c.l.bf16 %v37
  %v102 = vunpack.c.l.bf16 %v38
  %v103 = vunpack.c.l.bf16 %v39
  %v104 = vunpack.c.l.bf16 %v40
  %v105 = vunpack.c.l.bf16 %v41
  %v106 = vunpack.c.l.bf16 %v42
  %v107 = vunpack.c.l.bf16 %v43
  %v108 = vunpack.c.l.bf16 %v44
  %v109 = vunpack.c.l.bf16 %v45
  %v110 = vunpack.c.l.bf16 %v46
  %v111 = vunpack.c.l.bf16 %v47
  %v112 = vunpack.c.l.bf16 %v48
  %v113 = vunpack.c.l.bf16 %v49
  %v114 = vunpack.c.l.bf16 %v50
  %v115 = vunpack.c.l.bf16 %v51
  %v116 = vunpack.c.l.bf16 %v52
  %v117 = vunpack.c.l.bf16 %v53
  %v118 = vunpack.c.l.bf16 %v54
  %v119 = vunpack.c.l.bf16 %v55
  %v120 = vunpack.c.l.bf16 %v56
  %v121 = vunpack.c.l.bf16 %v57
  %v122 = vunpack.c.l.bf16 %v58
  %v123 = vunpack.c.l.bf16 %v59
  %v124 = vunpack.c.l.bf16 %v60
  %v125 = vunpack.c.l.bf16 %v61
  %v126 = vunpack.c.l.bf16 %v62
  %v127 = vunpack.c.l.bf16 %v63
  %v128 = vunpack.c.l.bf16 %v64
  %v129 = vunpack.c.l.bf16 %v65
  %v130 = vunpack.c.l.bf16 %v66
  %v131 = vunpack.c.l.bf16 %v67
  %v132 = vunpack.c.l.bf16 %v68
  %v133 = vunpack.c.l.bf16 %v69
  %v134 = vunpack.c.l.bf16 %v70
  %v135 = vunpack.c.l.bf16 %v71
  %v136 = vunpack.c.l.bf16 %v72
  %v137 = vunpack.c.l.bf16 %v73
  %v138 = vunpack.c.l.bf16 %v74
  %v139 = vunpack.c.l.bf16 %v75
  %v140 = vlaneseq
  %v141 = vshrl.u32 %v140, 7
  %v142 = vsub.s32 0, %v141
  %v143 = vrot.slane %v11, %v142
  %v144 = vmul.f32 %v76, %v143
  %v145 = vmul.f32 %v77, %v143
  %v146 = vmul.f32 %v78, %v143
  %v147 = vmul.f32 %v79, %v143
  %v148 = vmul.f32 %v80, %v143
  %v149 = vmul.f32 %v81, %v143
  %v150 = vmul.f32 %v82, %v143
  %v151 = vmul.f32 %v83, %v143
  %v152 = vmul.f32 %v84, %v143
  %v153 = vmul.f32 %v85, %v143
  %v154 = vmul.f32 %v86, %v143
  %v155 = vmul.f32 %v87, %v143
  %v156 = vmul.f32 %v88, %v143
  %v157 = vmul.f32 %v89, %v143
  %v158 = vmul.f32 %v90, %v143
  %v159 = vmul.f32 %v91, %v143
  %v160 = vmul.f32 %v92, %v143
  %v161 = vmul.f32 %v93, %v143
  %v162 = vmul.f32 %v94, %v143
  %v163 = vmul.f32 %v95, %v143
  %v164 = vmul.f32 %v96, %v143
  %v165 = vmul.f32 %v97, %v143
  %v166 = vmul.f32 %v98, %v143
  %v167 = vmul.f32 %v99, %v143
  %v168 = vmul.f32 %v100, %v143
  %v169 = vmul.f32 %v101, %v143
  %v170 = vmul.f32 %v102, %v143
  %v171 = vmul.f32 %v103, %v143
  %v172 = vmul.f32 %v104, %v143
  %v173 = vmul.f32 %v105, %v143
  %v174 = vmul.f32 %v106, %v143
  %v175 = vmul.f32 %v107, %v143
  %v176 = vmul.f32 %v108, %v143
  %v177 = vmul.f32 %v109, %v143
  %v178 = vmul.f32 %v110, %v143
  %v179 = vmul.f32 %v111, %v143
  %v180 = vmul.f32 %v112, %v143
  %v181 = vmul.f32 %v113, %v143
  %v182 = vmul.f32 %v114, %v143
  %v183 = vmul.f32 %v115, %v143
  %v184 = vmul.f32 %v116, %v143
  %v185 = vmul.f32 %v117, %v143
  %v186 = vmul.f32 %v118, %v143
  %v187 = vmul.f32 %v119, %v143
  %v188 = vmul.f32 %v120, %v143
  %v189 = vmul.f32 %v121, %v143
  %v190 = vmul.f32 %v122, %v143
  %v191 = vmul.f32 %v123, %v143
  %v192 = vmul.f32 %v124, %v143
  %v193 = vmul.f32 %v125, %v143
  %v194 = vmul.f32 %v126, %v143
  %v195 = vmul.f32 %v127, %v143
  %v196 = vmul.f32 %v128, %v143
  %v197 = vmul.f32 %v129, %v143
  %v198 = vmul.f32 %v130, %v143
  %v199 = vmul.f32 %v131, %v143
  %v200 = vmul.f32 %v132, %v143
  %v201 = vmul.f32 %v133, %v143
  %v202 = vmul.f32 %v134, %v143
  %v203 = vmul.f32 %v135, %v143
  %v204 = vmul.f32 %v136, %v143
  %v205 = vmul.f32 %v137, %v143
  %v206 = vmul.f32 %v138, %v143
  %v207 = vmul.f32 %v139, %v143
  %v208 = vlaneseq
  %v209 = vshrl.u32 %v208, 7
  %v210 = vsub.s32 1, %v209
  %v211 = vrot.slane %v11, %v210
  %v212 = vadd.f32 %v144, %v211
  %v213 = vadd.f32 %v145, %v211
  %v214 = vadd.f32 %v146, %v211
  %v215 = vadd.f32 %v147, %v211
  %v216 = vadd.f32 %v148, %v211
  %v217 = vadd.f32 %v149, %v211
  %v218 = vadd.f32 %v150, %v211
  %v219 = vadd.f32 %v151, %v211
  %v220 = vadd.f32 %v152, %v211
  %v221 = vadd.f32 %v153, %v211
  %v222 = vadd.f32 %v154, %v211
  %v223 = vadd.f32 %v155, %v211
  %v224 = vadd.f32 %v156, %v211
  %v225 = vadd.f32 %v157, %v211
  %v226 = vadd.f32 %v158, %v211
  %v227 = vadd.f32 %v159, %v211
  %v228 = vadd.f32 %v160, %v211
  %v229 = vadd.f32 %v161, %v211
  %v230 = vadd.f32 %v162, %v211
  %v231 = vadd.f32 %v163, %v211
  %v232 = vadd.f32 %v164, %v211
  %v233 = vadd.f32 %v165, %v211
  %v234 = vadd.f32 %v166, %v211
  %v235 = vadd.f32 %v167, %v211
  %v236 = vadd.f32 %v168, %v211
  %v237 = vadd.f32 %v169, %v211
  %v238 = vadd.f32 %v170, %v211
  %v239 = vadd.f32 %v171, %v211
  %v240 = vadd.f32 %v172, %v211
  %v241 = vadd.f32 %v173, %v211
  %v242 = vadd.f32 %v174, %v211
  %v243 = vadd.f32 %v175, %v211
  %v244 = vadd.f32 %v176, %v211
  %v245 = vadd.f32 %v177, %v211
  %v246 = vadd.f32 %v178, %v211
  %v247 = vadd.f32 %v179, %v211
  %v248 = vadd.f32 %v180, %v211
  %v249 = vadd.f32 %v181, %v211
  %v250 = vadd.f32 %v182, %v211
  %v251 = vadd.f32 %v183, %v211
  %v252 = vadd.f32 %v184, %v211
  %v253 = vadd.f32 %v185, %v211
  %v254 = vadd.f32 %v186, %v211
  %v255 = vadd.f32 %v187, %v211
  %v256 = vadd.f32 %v188, %v211
  %v257 = vadd.f32 %v189, %v211
  %v258 = vadd.f32 %v190, %v211
  %v259 = vadd.f32 %v191, %v211
  %v260 = vadd.f32 %v192, %v211
  %v261 = vadd.f32 %v193, %v211
  %v262 = vadd.f32 %v194, %v211
  %v263 = vadd.f32 %v195, %v211
  %v264 = vadd.f32 %v196, %v211
  %v265 = vadd.f32 %v197, %v211
  %v266 = vadd.f32 %v198, %v211
  %v267 = vadd.f32 %v199, %v211
  %v268 = vadd.f32 %v200, %v211
  %v269 = vadd.f32 %v201, %v211
  %v270 = vadd.f32 %v202, %v211
  %v271 = vadd.f32 %v203, %v211
  %v272 = vadd.f32 %v204, %v211
  %v273 = vadd.f32 %v205, %v211
  %v274 = vadd.f32 %v206, %v211
  %v275 = vadd.f32 %v207, %v211
  %v276 = vmax.f32 %v212, 0.0
  %v277 = vmax.f32 %v213, 0.0
  %v278 = vmax.f32 %v214, 0.0
  %v279 = vmax.f32 %v215, 0.0
  %v280 = vmax.f32 %v216, 0.0
  %v281 = vmax.f32 %v217, 0.0
  %v282 = vmax.f32 %v218, 0.0
  %v283 = vmax.f32 %v219, 0.0
  %v284 = vmax.f32 %v220, 0.0
  %v285 = vmax.f32 %v221, 0.0
  %v286 = vmax.f32 %v222, 0.0
  %v287 = vmax.f32 %v223, 0.0
  %v288 = vmax.f32 %v224, 0.0
  %v289 = vmax.f32 %v225, 0.0
  %v290 = vmax.f32 %v226, 0.0
  %v291 = vmax.f32 %v227, 0.0
  %v292 = vmax.f32 %v228, 0.0
  %v293 = vmax.f32 %v229, 0.0
  %v294 = vmax.f32 %v230, 0.0
  %v295 = vmax.f32 %v231, 0.0
  %v296 = vmax.f32 %v232, 0.0
  %v297 = vmax.f32 %v233, 0.0
  %v298 = vmax.f32 %v234, 0.0
  %v299 = vmax.f32 %v235, 0.0
  %v300 = vmax.f32 %v236, 0.0
  %v301 = vmax.f32 %v237, 0.0
  %v302 = vmax.f32 %v238, 0.0
  %v303 = vmax.f32 %v239, 0.0
  %v304 = vmax.f32 %v240, 0.0
  %v305 = vmax.f32 %v241, 0.0
  %v306 = vmax.f32 %v242, 0.0
  %v307 = vmax.f32 %v243, 0.0
  %v308 = vmax.f32 %v244, 0.0
  %v309 = vmax.f32 %v245, 0.0
  %v310 = vmax.f32 %v246, 0.0
  %v311 = vmax.f32 %v247, 0.0
  %v312 = vmax.f32 %v248, 0.0
  %v313 = vmax.f32 %v249, 0.0
  %v314 = vmax.f32 %v250, 0.0
  %v315 = vmax.f32 %v251, 0.0
  %v316 = vmax.f32 %v252, 0.0
  %v317 = vmax.f32 %v253, 0.0
  %v318 = vmax.f32 %v254, 0.0
  %v319 = vmax.f32 %v255, 0.0
  %v320 = vmax.f32 %v256, 0.0
  %v321 = vmax.f32 %v257, 0.0
  %v322 = vmax.f32 %v258, 0.0
  %v323 = vmax.f32 %v259, 0.0
  %v324 = vmax.f32 %v260, 0.0
  %v325 = vmax.f32 %v261, 0.0
  %v326 = vmax.f32 %v262, 0.0
  %v327 = vmax.f32 %v263, 0.0
  %v328 = vmax.f32 %v264, 0.0
  %v329 = vmax.f32 %v265, 0.0
  %v330 = vmax.f32 %v266, 0.0
  %v331 = vmax.f32 %v267, 0.0
  %v332 = vmax.f32 %v268, 0.0
  %v333 = vmax.f32 %v269, 0.0
  %v334 = vmax.f32 %v270, 0.0
  %v335 = vmax.f32 %v271, 0.0
  %v336 = vmax.f32 %v272, 0.0
  %v337 = vmax.f32 %v273, 0.0
  %v338 = vmax.f32 %v274, 0.0
  %v339 = vmax.f32 %v275, 0.0
  %v340 = vpack.c.bf16 %v277, %v276
  %v341 = vpack.c.bf16 %v279, %v278
  %v342 = vpack.c.bf16 %v281, %v280
  %v343 = vpack.c.bf16 %v283, %v282
  %v344 = vpack.c.bf16 %v285, %v284
  %v345 = vpack.c.bf16 %v287, %v286
  %v346 = vpack.c.bf16 %v289, %v288
  %v347 = vpack.c.bf16 %v291, %v290
  %v348 = vpack.c.bf16 %v293, %v292
  %v349 = vpack.c.bf16 %v295, %v294
  %v350 = vpack.c.bf16 %v297, %v296
  %v351 = vpack.c.bf16 %v299, %v298
  %v352 = vpack.c.bf16 %v301, %v300
  %v353 = vpack.c.bf16 %v303, %v302
  %v354 = vpack.c.bf16 %v305, %v304
  %v355 = vpack.c.bf16 %v307, %v306
  %v356 = vpack.c.bf16 %v309, %v308
  %v357 = vpack.c.bf16 %v311, %v310
  %v358 = vpack.c.bf16 %v313, %v312
  %v359 = vpack.c.bf16 %v315, %v314
  %v360 = vpack.c.bf16 %v317, %v316
  %v361 = vpack.c.bf16 %v319, %v318
  %v362 = vpack.c.bf16 %v321, %v320
  %v363 = vpack.c.bf16 %v323, %v322
  %v364 = vpack.c.bf16 %v325, %v324
  %v365 = vpack.c.bf16 %v327, %v326
  %v366 = vpack.c.bf16 %v329, %v328
  %v367 = vpack.c.bf16 %v331, %v330
  %v368 = vpack.c.bf16 %v333, %v332
  %v369 = vpack.c.bf16 %v335, %v334
  %v370 = vpack.c.bf16 %v337, %v336
  %v371 = vpack.c.bf16 %v339, %v338
  %v404 = vunpack.c.l.b16 %v340
  %v405 = vunpack.c.h.b16 %v340
  %v406 = vunpack.c.l.b16 %v341
  %v407 = vunpack.c.h.b16 %v341
  %v408 = vunpack.c.l.b16 %v342
  %v409 = vunpack.c.h.b16 %v342
  %v410 = vunpack.c.l.b16 %v343
  %v411 = vunpack.c.h.b16 %v343
  %v412 = vunpack.c.l.b16 %v344
  %v413 = vunpack.c.h.b16 %v344
  %v414 = vunpack.c.l.b16 %v345
  %v415 = vunpack.c.h.b16 %v345
  %v416 = vunpack.c.l.b16 %v346
  %v417 = vunpack.c.h.b16 %v346
  %v418 = vunpack.c.l.b16 %v347
  %v419 = vunpack.c.h.b16 %v347
  %v420 = vunpack.c.l.b16 %v348
  %v421 = vunpack.c.h.b16 %v348
  %v422 = vunpack.c.l.b16 %v349
  %v423 = vunpack.c.h.b16 %v349
  %v424 = vunpack.c.l.b16 %v350
  %v425 = vunpack.c.h.b16 %v350
  %v426 = vunpack.c.l.b16 %v351
  %v427 = vunpack.c.h.b16 %v351
  %v428 = vunpack.c.l.b16 %v352
  %v429 = vunpack.c.h.b16 %v352
  %v430 = vunpack.c.l.b16 %v353
  %v431 = vunpack.c.h.b16 %v353
  %v432 = vunpack.c.l.b16 %v354
  %v433 = vunpack.c.h.b16 %v354
  %v434 = vunpack.c.l.b16 %v355
  %v435 = vunpack.c.h.b16 %v355
  %v436 = vunpack.c.l.b16 %v356
  %v437 = vunpack.c.h.b16 %v356
  %v438 = vunpack.c.l.b16 %v357
  %v439 = vunpack.c.h.b16 %v357
  %v440 = vunpack.c.l.b16 %v358
  %v441 = vunpack.c.h.b16 %v358
  %v442 = vunpack.c.l.b16 %v359
  %v443 = vunpack.c.h.b16 %v359
  %v444 = vunpack.c.l.b16 %v360
  %v445 = vunpack.c.h.b16 %v360
  %v446 = vunpack.c.l.b16 %v361
  %v447 = vunpack.c.h.b16 %v361
  %v448 = vunpack.c.l.b16 %v362
  %v449 = vunpack.c.h.b16 %v362
  %v450 = vunpack.c.l.b16 %v363
  %v451 = vunpack.c.h.b16 %v363
  %v452 = vunpack.c.l.b16 %v364
  %v453 = vunpack.c.h.b16 %v364
  %v454 = vunpack.c.l.b16 %v365
  %v455 = vunpack.c.h.b16 %v365
  %v456 = vunpack.c.l.b16 %v366
  %v457 = vunpack.c.h.b16 %v366
  %v458 = vunpack.c.l.b16 %v367
  %v459 = vunpack.c.h.b16 %v367
  %v460 = vunpack.c.l.b16 %v368
  %v461 = vunpack.c.h.b16 %v368
  %v462 = vunpack.c.l.b16 %v369
  %v463 = vunpack.c.h.b16 %v369
  %v464 = vunpack.c.l.b16 %v370
  %v465 = vunpack.c.h.b16 %v370
  %v466 = vunpack.c.l.b16 %v371
  %v467 = vunpack.c.h.b16 %v371
  %v468 = vpack.c.b16 %v404, %v404
  %v469 = vpack.c.b16 %v405, %v405
  %v470 = vpack.c.b16 %v406, %v406
  %v471 = vpack.c.b16 %v407, %v407
  %v472 = vpack.c.b16 %v408, %v408
  %v473 = vpack.c.b16 %v409, %v409
  %v474 = vpack.c.b16 %v410, %v410
  %v475 = vpack.c.b16 %v411, %v411
  %v476 = vpack.c.b16 %v412, %v412
  %v477 = vpack.c.b16 %v413, %v413
  %v478 = vpack.c.b16 %v414, %v414
  %v479 = vpack.c.b16 %v415, %v415
  %v480 = vpack.c.b16 %v416, %v416
  %v481 = vpack.c.b16 %v417, %v417
  %v482 = vpack.c.b16 %v418, %v418
  %v483 = vpack.c.b16 %v419, %v419
  %v484 = vpack.c.b16 %v420, %v420
  %v485 = vpack.c.b16 %v421, %v421
  %v486 = vpack.c.b16 %v422, %v422
  %v487 = vpack.c.b16 %v423, %v423
  %v488 = vpack.c.b16 %v424, %v424
  %v489 = vpack.c.b16 %v425, %v425
  %v490 = vpack.c.b16 %v426, %v426
  %v491 = vpack.c.b16 %v427, %v427
  %v492 = vpack.c.b16 %v428, %v428
  %v493 = vpack.c.b16 %v429, %v429
  %v494 = vpack.c.b16 %v430, %v430
  %v495 = vpack.c.b16 %v431, %v431
  %v496 = vpack.c.b16 %v432, %v432
  %v497 = vpack.c.b16 %v433, %v433
  %v498 = vpack.c.b16 %v434, %v434
  %v499 = vpack.c.b16 %v435, %v435
  %v500 = vpack.c.b16 %v436, %v436
  %v501 = vpack.c.b16 %v437, %v437
  %v502 = vpack.c.b16 %v438, %v438
  %v503 = vpack.c.b16 %v439, %v439
  %v504 = vpack.c.b16 %v440, %v440
  %v505 = vpack.c.b16 %v441, %v441
  %v506 = vpack.c.b16 %v442, %v442
  %v507 = vpack.c.b16 %v443, %v443
  %v508 = vpack.c.b16 %v444, %v444
  %v509 = vpack.c.b16 %v445, %v445
  %v510 = vpack.c.b16 %v446, %v446
  %v511 = vpack.c.b16 %v447, %v447
  %v512 = vpack.c.b16 %v448, %v448
  %v513 = vpack.c.b16 %v449, %v449
  %v514 = vpack.c.b16 %v450, %v450
  %v515 = vpack.c.b16 %v451, %v451
  %v516 = vpack.c.b16 %v452, %v452
  %v517 = vpack.c.b16 %v453, %v453
  %v518 = vpack.c.b16 %v454, %v454
  %v519 = vpack.c.b16 %v455, %v455
  %v520 = vpack.c.b16 %v456, %v456
  %v521 = vpack.c.b16 %v457, %v457
  %v522 = vpack.c.b16 %v458, %v458
  %v523 = vpack.c.b16 %v459, %v459
  %v524 = vpack.c.b16 %v460, %v460
  %v525 = vpack.c.b16 %v461, %v461
  %v526 = vpack.c.b16 %v462, %v462
  %v527 = vpack.c.b16 %v463, %v463
  %v528 = vpack.c.b16 %v464, %v464
  %v529 = vpack.c.b16 %v465, %v465
  %v530 = vpack.c.b16 %v466, %v466
  %v531 = vpack.c.b16 %v467, %v467
  %596 = vst [vmem:[%s2] sm:$0xf] %v468
  %597 = vst [vmem:[%s2 + $0x4] sm:$0xf] %v469
  %598 = vst [vmem:[%s2 + $0x8] sm:$0xf] %v470
  %599 = vst [vmem:[%s2 + $0xc] sm:$0xf] %v471
  %600 = vst [vmem:[%s2 + $0x10] sm:$0xf] %v472
  %601 = vst [vmem:[%s2 + $0x14] sm:$0xf] %v473
  %602 = vst [vmem:[%s2 + $0x18] sm:$0xf] %v474
  %603 = vst [vmem:[%s2 + $0x1c] sm:$0xf] %v475
  %604 = vst [vmem:[%s2 + $0x20] sm:$0xf] %v476
  %605 = vst [vmem:[%s2 + $0x24] sm:$0xf] %v477
  %606 = vst [vmem:[%s2 + $0x28] sm:$0xf] %v478
  %607 = vst [vmem:[%s2 + $0x2c] sm:$0xf] %v479
  %608 = vst [vmem:[%s2 + $0x30] sm:$0xf] %v480
  %609 = vst [vmem:[%s2 + $0x34] sm:$0xf] %v481
  %610 = vst [vmem:[%s2 + $0x38] sm:$0xf] %v482
  %611 = vst [vmem:[%s2 + $0x3c] sm:$0xf] %v483
  %612 = vst [vmem:[%s2 + $0x40] sm:$0xf] %v484
  %613 = vst [vmem:[%s2 + $0x44] sm:$0xf] %v485
  %614 = vst [vmem:[%s2 + $0x48] sm:$0xf] %v486
  %615 = vst [vmem:[%s2 + $0x4c] sm:$0xf] %v487
  %616 = vst [vmem:[%s2 + $0x50] sm:$0xf] %v488
  %617 = vst [vmem:[%s2 + $0x54] sm:$0xf] %v489
  %618 = vst [vmem:[%s2 + $0x58] sm:$0xf] %v490
  %619 = vst [vmem:[%s2 + $0x5c] sm:$0xf] %v491
  %620 = vst [vmem:[%s2 + $0x60] sm:$0xf] %v492
  %621 = vst [vmem:[%s2 + $0x64] sm:$0xf] %v493
  %622 = vst [vmem:[%s2 + $0x68] sm:$0xf] %v494
  %623 = vst [vmem:[%s2 + $0x6c] sm:$0xf] %v495
  %624 = vst [vmem:[%s2 + $0x70] sm:$0xf] %v496
  %625 = vst [vmem:[%s2 + $0x74] sm:$0xf] %v497
  %626 = vst [vmem:[%s2 + $0x78] sm:$0xf] %v498
  %627 = vst [vmem:[%s2 + $0x7c] sm:$0xf] %v499
  %628 = vst [vmem:[%s2 + $0x80] sm:$0xf] %v500
  %629 = vst [vmem:[%s2 + $0x84] sm:$0xf] %v501
  %630 = vst [vmem:[%s2 + $0x88] sm:$0xf] %v502
  %631 = vst [vmem:[%s2 + $0x8c] sm:$0xf] %v503
  %632 = vst [vmem:[%s2 + $0x90] sm:$0xf] %v504
  %633 = vst [vmem:[%s2 + $0x94] sm:$0xf] %v505
  %634 = vst [vmem:[%s2 + $0x98] sm:$0xf] %v506
  %635 = vst [vmem:[%s2 + $0x9c] sm:$0xf] %v507
  %636 = vst [vmem:[%s2 + $0xa0] sm:$0xf] %v508
  %637 = vst [vmem:[%s2 + $0xa4] sm:$0xf] %v509
  %638 = vst [vmem:[%s2 + $0xa8] sm:$0xf] %v510
  %639 = vst [vmem:[%s2 + $0xac] sm:$0xf] %v511
  %640 = vst [vmem:[%s2 + $0xb0] sm:$0xf] %v512
  %641 = vst [vmem:[%s2 + $0xb4] sm:$0xf] %v513
  %642 = vst [vmem:[%s2 + $0xb8] sm:$0xf] %v514
  %643 = vst [vmem:[%s2 + $0xbc] sm:$0xf] %v515
  %644 = vst [vmem:[%s2 + $0xc0] sm:$0xf] %v516
  %645 = vst [vmem:[%s2 + $0xc4] sm:$0xf] %v517
  %646 = vst [vmem:[%s2 + $0xc8] sm:$0xf] %v518
  %647 = vst [vmem:[%s2 + $0xcc] sm:$0xf] %v519
  %648 = vst [vmem:[%s2 + $0xd0] sm:$0xf] %v520
  %649 = vst [vmem:[%s2 + $0xd4] sm:$0xf] %v521
  %650 = vst [vmem:[%s2 + $0xd8] sm:$0xf] %v522
  %651 = vst [vmem:[%s2 + $0xdc] sm:$0xf] %v523
  %652 = vst [vmem:[%s2 + $0xe0] sm:$0xf] %v524
  %653 = vst [vmem:[%s2 + $0xe4] sm:$0xf] %v525
  %654 = vst [vmem:[%s2 + $0xe8] sm:$0xf] %v526
  %655 = vst [vmem:[%s2 + $0xec] sm:$0xf] %v527
  %656 = vst [vmem:[%s2 + $0xf0] sm:$0xf] %v528
  %657 = vst [vmem:[%s2 + $0xf4] sm:$0xf] %v529
  %658 = vst [vmem:[%s2 + $0xf8] sm:$0xf] %v530
  %659 = vst [vmem:[%s2 + $0xfc] sm:$0xf] %v531
  // Predicated region
  $region10: #{basic_block_forward.5} parent=0 // pred_check
    _
  $region11: #{basic_block_forward.5} parent=0 // pred_check_branch
    %661 = sbr.rel (0) target = $region13
  $region12: #{basic_block_forward.5} parent=0 // pred_region
    _
  $region13: #{basic_block_forward.5} parent=0 // pred_fallthru
    _
  // Predicated region
  $region14: #{basic_block_forward.5} parent=0 // pred_check
    _
  $region15: #{basic_block_forward.5} parent=0 // pred_check_branch
    %663 = sbr.rel (0) target = $region17
  $region16: #{basic_block_forward.5} parent=0 // pred_region
    _
  $region17: #{basic_block_forward.5} parent=0 // pred_fallthru
    _

// kernel: basic_block_forward.4
$region0: #{basic_block_forward.4}
  #allocation0 [shape = 'u32[]', space=smem, size = 0x4, offset = 0x4, fixed_abs, tag = 'smem constant byte address 0x4 - core index']
  #allocation1 [shape = 'u32[144,128]{1,0:T(1,128)}', space=vmem, size = 0x12000, scoped, tag = 'internal scratch']
  #allocation2 [shape = 'f32[256,128]{1,0:T(8,128)}', space=vmem, size = 0x20000, scoped, tag = 'scratch operand']
  %s0 = inlined_call_operand.vmem [shape: bf16[2,288,384], index: 0, kind: input, shape index: {}]
  %s1 = inlined_call_operand.vmem [shape: bf16[1152,128], index: 1, kind: input, shape index: {}]
  %s2 = inlined_call_operand.vmem [shape: bf16[512,128], index: 2, kind: output, shape index: {0}]
  %s3 = inlined_call_operand.vmem [shape: f32[16,128], index: 3, kind: output, shape index: {1}]
  %4 = xla_tuple %s2, %s3
  %s5 = sld [smem:[#allocation0]]
  $region53: #{basic_block_forward.4} parent=0
    _
  %s7 = ssub.s32 1, %s5
  %s8 = scalar_select 0, %s7, %s5
  loop: start=0, step=1, limit=4
  $region2: #{basic_block_forward.4} parent=0 // loop_pre_header
    _
  $region3: #{basic_block_forward.4} parent=0 // loop_header
    %s10 = sphi 0, %s14
    %p11 = scmp.ge.s32.totalorder %s10, 4
    %s17 = sphi 0, %s29
    %s18 = sphi 0, %s25
    %s19 = sphi 0, %s17
    %s20 = sphi 0, %s18
    %s21 = sphi 0, %s19
    %s22 = sphi 0, %s20
    %s34 = sphi 0, %s36
    %s37 = sphi 0, %s34
    %s38 = sphi 0, %s37
    %s54 = sphi 0, %s38
    %s58 = sphi 0, %s58
    %s60 = sphi 0, %s58
    %s61 = sphi 0, %s60
    %s75 = sphi 0, %s61
    %s83 = sphi 0, %s85
    %s86 = sphi 0, %s83
    %s87 = sphi 0, %s86
    %s103 = sphi 0, %s87
    %s109 = sphi 0, %s111
    %s112 = sphi 0, %s109
    %s113 = sphi 0, %s112
    %s129 = sphi 0, %s113
  $region4: #{basic_block_forward.4} parent=0 // loop_header_branch
    %13 = sbr.rel (%p11) target = $region8
  $region5: #{basic_block_forward.4} parent=0 // loop_body
    %s15 = ssub.s32 %s10, 1
    %s16 = ssub.s32 %s10, 2
    %s23 = sadd.s32 1, %s18
    %p24 = scmp.ge.s32.totalorder %s23, 1
    %s25 = scalar_select %p24, 0, %s23
    %s26 = sadd.s32 1, %s17
    %s27 = scalar_select %p24, %s26, %s17
    %p28 = scmp.ge.s32.totalorder %s27, 2
    %s29 = scalar_select %p28, 0, %s27
    %s30 = sadd.s32 %s17, %s18
    %s31 = sadd.s32 %s29, %s25
    %s32 = ssub.s32 %s30, %s31
    %p33 = scmp.eq.s32.totalorder %s32, 0
    %s35 = sadd.s32 %s34, 1
    %s36 = scalar_select %p33, %s34, %s35
    %p39 = pneg %p33
    %p40 = scmp.eq.s32.totalorder %s10, 1
    %p41 = por %p39, %p40
    %p42 = scmp.ne.s32.totalorder %s34, %s37
    %p43 = scmp.eq.s32.totalorder %s10, 0
    %p44 = por %p42, %p43
    %p45 = scmp.ne.s32.totalorder %s34, %s37
    %p46 = scmp.eq.s32.totalorder %s15, 1
    %p47 = por %p45, %p46
    %p48 = scmp.ne.s32.totalorder %s37, %s38
    %p49 = scmp.eq.s32.totalorder %s15, 0
    %p50 = por %p48, %p49
    %p51 = scmp.ne.s32.totalorder %s37, %s38
    %p52 = scmp.eq.s32.totalorder %s16, 1
    %p53 = por %p51, %p52
    %p55 = scmp.ne.s32.totalorder %s38, %s54
    %p56 = scmp.eq.s32.totalorder %s16, 0
    %p57 = por %p55, %p56
    %s59 = sadd.s32 %s58, 1
    %p62 = scmp.eq.s32.totalorder %s10, 1
    %p63 = scmp.ne.s32.totalorder %s58, %s60
    %p64 = scmp.eq.s32.totalorder %s10, 0
    %p65 = por %p63, %p64
    %p66 = scmp.ne.s32.totalorder %s58, %s60
    %p67 = scmp.eq.s32.totalorder %s15, 1
    %p68 = por %p66, %p67
    %p69 = scmp.ne.s32.totalorder %s60, %s61
    %p70 = scmp.eq.s32.totalorder %s15, 0
    %p71 = por %p69, %p70
    %p72 = scmp.ne.s32.totalorder %s60, %s61
    %p73 = scmp.eq.s32.totalorder %s16, 1
    %p74 = por %p72, %p73
    %p76 = scmp.ne.s32.totalorder %s61, %s75
    %p77 = scmp.eq.s32.totalorder %s16, 0
    %p78 = por %p76, %p77
    %s79 = sadd.s32 %s17, %s18
    %s80 = sadd.s32 %s29, %s25
    %s81 = ssub.s32 %s79, %s80
    %p82 = scmp.eq.s32.totalorder %s81, 0
    %s84 = sadd.s32 %s83, 1
    %s85 = scalar_select %p82, %s83, %s84
    %p88 = pneg %p82
    %p89 = scmp.eq.s32.totalorder %s10, 1
    %p90 = por %p88, %p89
    %p91 = scmp.ne.s32.totalorder %s83, %s86
    %p92 = scmp.eq.s32.totalorder %s10, 0
    %p93 = por %p91, %p92
    %p94 = scmp.ne.s32.totalorder %s83, %s86
    %p95 = scmp.eq.s32.totalorder %s15, 1
    %p96 = por %p94, %p95
    %p97 = scmp.ne.s32.totalorder %s86, %s87
    %p98 = scmp.eq.s32.totalorder %s15, 0
    %p99 = por %p97, %p98
    %p100 = scmp.ne.s32.totalorder %s86, %s87
    %p101 = scmp.eq.s32.totalorder %s16, 1
    %p102 = por %p100, %p101
    %p104 = scmp.ne.s32.totalorder %s87, %s103
    %p105 = scmp.eq.s32.totalorder %s16, 0
    %p106 = por %p104, %p105
    %s107 = ssub.s32 %s17, %s29
    %p108 = scmp.eq.s32.totalorder %s107, 0
    %s110 = sadd.s32 %s109, 1
    %s111 = scalar_select %p108, %s109, %s110
    %p114 = pneg %p108
    %p115 = scmp.eq.s32.totalorder %s10, 1
    %p116 = por %p114, %p115
    %p117 = scmp.ne.s32.totalorder %s109, %s112
    %p118 = scmp.eq.s32.totalorder %s10, 0
    %p119 = por %p117, %p118
    %p120 = scmp.ne.s32.totalorder %s109, %s112
    %p121 = scmp.eq.s32.totalorder %s15, 1
    %p122 = por %p120, %p121
    %p123 = scmp.ne.s32.totalorder %s112, %s113
    %p124 = scmp.eq.s32.totalorder %s15, 0
    %p125 = por %p123, %p124
    %p126 = scmp.ne.s32.totalorder %s112, %s113
    %p127 = scmp.eq.s32.totalorder %s16, 1
    %p128 = por %p126, %p127
    %p130 = scmp.ne.s32.totalorder %s113, %s129
    %p131 = scmp.eq.s32.totalorder %s16, 0
    %p132 = por %p130, %p131
    %p133 = scmp.le.s32.totalorder 1, %s10
    %p134 = scmp.lt.s32.totalorder %s10, 3
    %p135 = pnand %p133, %p134
    %p136 = pneg %p135
    // Predicated region
    $region9: #{basic_block_forward.4} parent=5 // pred_check
      _
    $region10: #{basic_block_forward.4} parent=5 // pred_check_branch
      %138 = sbr.rel (%p135) target = $region12
    $region11: #{basic_block_forward.4} parent=5 // pred_region
      %s139 = ssub.s32 %s10, 1
      // Predicated region
      $region13: #{basic_block_forward.4} parent=11 // pred_check
        %p140 = pneg %p71
      $region14: #{basic_block_forward.4} parent=11 // pred_check_branch
        %142 = sbr.rel (%p140) target = $region16
      $region15: #{basic_block_forward.4} parent=11 // pred_region
        _
      $region16: #{basic_block_forward.4} parent=11 // pred_fallthru
        _
    $region12: #{basic_block_forward.4} parent=5 // pred_fallthru
      _
    %p143 = scmp.lt.s32.totalorder %s10, 2
    // Predicated region
    $region17: #{basic_block_forward.4} parent=5 // pred_check
      %p144 = pneg %p143
    $region18: #{basic_block_forward.4} parent=5 // pred_check_branch
      %146 = sbr.rel (%p144) target = $region20
    $region19: #{basic_block_forward.4} parent=5 // pred_region
      // Predicated region
      $region21: #{basic_block_forward.4} parent=19 // pred_check
        %p147 = pneg %p44
      $region22: #{basic_block_forward.4} parent=19 // pred_check_branch
        %149 = sbr.rel (%p147) target = $region24
      $region23: #{basic_block_forward.4} parent=19 // pred_region
        %s150 = sadd.s32 %s17, %s18
        %p151 = scmp.lt.s32.totalorder %s150, 1
        %s152 = scalar_select %p151, %s150, 1
        %s153 = smul.addr %s152, 108
        %s154 = smul.addr %s153, 4
        %s155 = scalar_lea.vmem %s0, %s154
        %s156 = sadd.s32 %s17, %s18
      $region24: #{basic_block_forward.4} parent=19 // pred_fallthru
        _
    $region20: #{basic_block_forward.4} parent=5 // pred_fallthru
      _
    %p157 = scmp.le.s32.totalorder 1, %s10
    %p158 = scmp.lt.s32.totalorder %s10, 3
    %p159 = pnand %p157, %p158
    %p160 = pneg %p159
    // Predicated region
    $region25: #{basic_block_forward.4} parent=5 // pred_check
      _
    $region26: #{basic_block_forward.4} parent=5 // pred_check_branch
      %162 = sbr.rel (%p159) target = $region28
    $region27: #{basic_block_forward.4} parent=5 // pred_region
      %s163 = ssub.s32 %s10, 1
      %s164 = sadd.s32 %s19, %s20
      %p165 = scmp.lt.s32.totalorder %s164, 1
      %s166 = scalar_select %p165, %s164, 1
      %s167 = smul.addr %s166, 108
      %s168 = smul.addr %s167, 4
      %s169 = scalar_lea.vmem %s0, %s168
      %p170 = pneg %p50
      %p171 = pneg %p47
      %p172 = pneg %p71
      %p173 = pneg %p68
      %p174 = pneg %p99
      %p175 = pneg %p96
      %s176 = sadd.s32 %s19, %s20
      %s177 = smul.u32 32, %s176
      %p178 = scmp.lt.s32.totalorder %s177, 63
      %s179 = scalar_select %p178, %s177, 63
      %s180 = smul.addr %s179, 4
      %s181 = scalar_lea.vmem %s2, %s180
      %p182 = pneg %p125
      %p183 = pneg %p122
      %p184 = scmp.lt.s32.totalorder %s19, 1
      %s185 = scalar_select %p184, %s19, 1
      %s186 = smul.addr %s185, 8
      %s187 = scalar_lea.vmem %s3, %s186
      %s188 = sadd.s32 %s19, %s20
      %p189 = scmp.lt.s32.totalorder %s188, 1
      %s190 = scalar_select %p189, %s188, 1
      %s191 = smul.addr %s190, 108
      %s192 = smul.addr %s191, 4
      %s193 = scalar_lea.vmem %s0, %s192
      %s194 = sadd.s32 %s19, %s20
      %s195 = sadd.s32 %s19, %s20
      %s196 = smul.u32 32, %s195
      %p197 = scmp.lt.s32.totalorder %s196, 63
      %s198 = scalar_select %p197, %s196, 63
      %s199 = smul.addr %s198, 4
      %s200 = scalar_lea.vmem %s2, %s199
      %s201 = sadd.s32 %s19, %s20
      %s202 = smul.u32 32, %s201
      %p203 = scmp.lt.s32.totalorder %s19, 1
      %s204 = scalar_select %p203, %s19, 1
      %s205 = smul.addr %s204, 8
      %s206 = scalar_lea.vmem %s3, %s205
      %v208 = vld [vmem:[%s193] sm:$0xff]
      %v209 = vld [vmem:[%s193 + $0x8] sm:$0xf]
      %v210 = vld [vmem:[%s193 + $0xc] sm:$0xff]
      %v211 = vld [vmem:[%s193 + $0x14] sm:$0xf]
      %v212 = vld [vmem:[%s193 + $0x18] sm:$0xff]
      %v213 = vld [vmem:[%s193 + $0x20] sm:$0xf]
      %v214 = vld [vmem:[%s193 + $0x24] sm:$0xff]
      %v215 = vld [vmem:[%s193 + $0x2c] sm:$0xf]
      %v216 = vld [vmem:[%s193 + $0x30] sm:$0xff]
      %v217 = vld [vmem:[%s193 + $0x38] sm:$0xf]
      %v218 = vld [vmem:[%s193 + $0x3c] sm:$0xff]
      %v219 = vld [vmem:[%s193 + $0x44] sm:$0xf]
      %v220 = vld [vmem:[%s193 + $0x48] sm:$0xff]
      %v221 = vld [vmem:[%s193 + $0x50] sm:$0xf]
      %v222 = vld [vmem:[%s193 + $0x54] sm:$0xff]
      %v223 = vld [vmem:[%s193 + $0x5c] sm:$0xf]
      %v224 = vld [vmem:[%s193 + $0x60] sm:$0xff]
      %v225 = vld [vmem:[%s193 + $0x68] sm:$0xf]
      %v226 = vld [vmem:[%s193 + $0x6c] sm:$0xff]
      %v227 = vld [vmem:[%s193 + $0x74] sm:$0xf]
      %v228 = vld [vmem:[%s193 + $0x78] sm:$0xff]
      %v229 = vld [vmem:[%s193 + $0x80] sm:$0xf]
      %v230 = vld [vmem:[%s193 + $0x84] sm:$0xff]
      %v231 = vld [vmem:[%s193 + $0x8c] sm:$0xf]
      %v232 = vld [vmem:[%s193 + $0x90] sm:$0xff]
      %v233 = vld [vmem:[%s193 + $0x98] sm:$0xf]
      %v234 = vld [vmem:[%s193 + $0x9c] sm:$0xff]
      %v235 = vld [vmem:[%s193 + $0xa4] sm:$0xf]
      %v236 = vld [vmem:[%s193 + $0xa8] sm:$0xff]
      %v237 = vld [vmem:[%s193 + $0xb0] sm:$0xf]
      %v238 = vld [vmem:[%s193 + $0xb4] sm:$0xff]
      %v239 = vld [vmem:[%s193 + $0xbc] sm:$0xf]
      %v240 = vld [vmem:[%s193 + $0xc0] sm:$0xff]
      %v241 = vld [vmem:[%s193 + $0xc8] sm:$0xf]
      %v242 = vld [vmem:[%s193 + $0xcc] sm:$0xff]
      %v243 = vld [vmem:[%s193 + $0xd4] sm:$0xf]
      %v244 = vld [vmem:[%s193 + $0xd8] sm:$0xff]
      %v245 = vld [vmem:[%s193 + $0xe0] sm:$0xf]
      %v246 = vld [vmem:[%s193 + $0xe4] sm:$0xff]
      %v247 = vld [vmem:[%s193 + $0xec] sm:$0xf]
      %v248 = vld [vmem:[%s193 + $0xf0] sm:$0xff]
      %v249 = vld [vmem:[%s193 + $0xf8] sm:$0xf]
      %v250 = vld [vmem:[%s193 + $0xfc] sm:$0xff]
      %v251 = vld [vmem:[%s193 + $0x104] sm:$0xf]
      %v252 = vld [vmem:[%s193 + $0x108] sm:$0xff]
      %v253 = vld [vmem:[%s193 + $0x110] sm:$0xf]
      %v254 = vld [vmem:[%s193 + $0x114] sm:$0xff]
      %v255 = vld [vmem:[%s193 + $0x11c] sm:$0xf]
      %v256 = vld [vmem:[%s193 + $0x120] sm:$0xff]
      %v257 = vld [vmem:[%s193 + $0x128] sm:$0xf]
      %v258 = vld [vmem:[%s193 + $0x12c] sm:$0xff]
      %v259 = vld [vmem:[%s193 + $0x134] sm:$0xf]
      %v260 = vld [vmem:[%s193 + $0x138] sm:$0xff]
      %v261 = vld [vmem:[%s193 + $0x140] sm:$0xf]
      %v262 = vld [vmem:[%s193 + $0x144] sm:$0xff]
      %v263 = vld [vmem:[%s193 + $0x14c] sm:$0xf]
      %v264 = vld [vmem:[%s193 + $0x150] sm:$0xff]
      %v265 = vld [vmem:[%s193 + $0x158] sm:$0xf]
      %v266 = vld [vmem:[%s193 + $0x15c] sm:$0xff]
      %v267 = vld [vmem:[%s193 + $0x164] sm:$0xf]
      %v268 = vld [vmem:[%s193 + $0x168] sm:$0xff]
      %v269 = vld [vmem:[%s193 + $0x170] sm:$0xf]
      %v270 = vld [vmem:[%s193 + $0x174] sm:$0xff]
      %v271 = vld [vmem:[%s193 + $0x17c] sm:$0xf]
      %v272 = vld [vmem:[%s1] sm:$0xf]
      %v273 = vld [vmem:[%s1 + $0x4] sm:$0xf]
      %v274 = vld [vmem:[%s1 + $0x8] sm:$0xf]
      %v275 = vld [vmem:[%s1 + $0xc] sm:$0xf]
      %v276 = vld [vmem:[%s1 + $0x10] sm:$0xf]
      %v277 = vld [vmem:[%s1 + $0x14] sm:$0xf]
      %v278 = vld [vmem:[%s1 + $0x18] sm:$0xf]
      %v279 = vld [vmem:[%s1 + $0x1c] sm:$0xf]
      %v280 = vld [vmem:[%s1 + $0x20] sm:$0xf]
      %v281 = vld [vmem:[%s1 + $0x24] sm:$0xf]
      %v282 = vld [vmem:[%s1 + $0x28] sm:$0xf]
      %v283 = vld [vmem:[%s1 + $0x2c] sm:$0xf]
      %v284 = vld [vmem:[%s1 + $0x30] sm:$0xf]
      %v285 = vld [vmem:[%s1 + $0x34] sm:$0xf]
      %v286 = vld [vmem:[%s1 + $0x38] sm:$0xf]
      %v287 = vld [vmem:[%s1 + $0x3c] sm:$0xf]
      %v288 = vld [vmem:[%s1 + $0x40] sm:$0xf]
      %v289 = vld [vmem:[%s1 + $0x44] sm:$0xf]
      %v290 = vld [vmem:[%s1 + $0x48] sm:$0xf]
      %v291 = vld [vmem:[%s1 + $0x4c] sm:$0xf]
      %v292 = vld [vmem:[%s1 + $0x50] sm:$0xf]
      %v293 = vld [vmem:[%s1 + $0x54] sm:$0xf]
      %v294 = vld [vmem:[%s1 + $0x58] sm:$0xf]
      %v295 = vld [vmem:[%s1 + $0x5c] sm:$0xf]
      %v296 = vld [vmem:[%s1 + $0x60] sm:$0xf]
      %v297 = vld [vmem:[%s1 + $0x64] sm:$0xf]
      %v298 = vld [vmem:[%s1 + $0x68] sm:$0xf]
      %v299 = vld [vmem:[%s1 + $0x6c] sm:$0xf]
      %v300 = vld [vmem:[%s1 + $0x70] sm:$0xf]
      %v301 = vld [vmem:[%s1 + $0x74] sm:$0xf]
      %v302 = vld [vmem:[%s1 + $0x78] sm:$0xf]
      %v303 = vld [vmem:[%s1 + $0x7c] sm:$0xf]
      %v304 = vld [vmem:[%s1 + $0x80] sm:$0xf]
      %v305 = vld [vmem:[%s1 + $0x84] sm:$0xf]
      %v306 = vld [vmem:[%s1 + $0x88] sm:$0xf]
      %v307 = vld [vmem:[%s1 + $0x8c] sm:$0xf]
      %v308 = vld [vmem:[%s1 + $0x90] sm:$0xf]
      %v309 = vld [vmem:[%s1 + $0x94] sm:$0xf]
      %v310 = vld [vmem:[%s1 + $0x98] sm:$0xf]
      %v311 = vld [vmem:[%s1 + $0x9c] sm:$0xf]
      %v312 = vld [vmem:[%s1 + $0xa0] sm:$0xf]
      %v313 = vld [vmem:[%s1 + $0xa4] sm:$0xf]
      %v314 = vld [vmem:[%s1 + $0xa8] sm:$0xf]
      %v315 = vld [vmem:[%s1 + $0xac] sm:$0xf]
      %v316 = vld [vmem:[%s1 + $0xb0] sm:$0xf]
      %v317 = vld [vmem:[%s1 + $0xb4] sm:$0xf]
      %v318 = vld [vmem:[%s1 + $0xb8] sm:$0xf]
      %v319 = vld [vmem:[%s1 + $0xbc] sm:$0xf]
      %v384 = vunpack.c.l.b16 %v208
      %v385 = vunpack.c.h.b16 %v208
      %v386 = vunpack.c.l.b16 %v209
      %v387 = vunpack.c.l.b16 %v210
      %v388 = vunpack.c.h.b16 %v210
      %v389 = vunpack.c.l.b16 %v211
      %v390 = vunpack.c.l.b16 %v212
      %v391 = vunpack.c.h.b16 %v212
      %v392 = vunpack.c.l.b16 %v213
      %v393 = vunpack.c.l.b16 %v214
      %v394 = vunpack.c.h.b16 %v214
      %v395 = vunpack.c.l.b16 %v215
      %v396 = vunpack.c.l.b16 %v216
      %v397 = vunpack.c.h.b16 %v216
      %v398 = vunpack.c.l.b16 %v217
      %v399 = vunpack.c.l.b16 %v218
      %v400 = vunpack.c.h.b16 %v218
      %v401 = vunpack.c.l.b16 %v219
      %v402 = vunpack.c.l.b16 %v220
      %v403 = vunpack.c.h.b16 %v220
      %v404 = vunpack.c.l.b16 %v221
      %v405 = vunpack.c.l.b16 %v222
      %v406 = vunpack.c.h.b16 %v222
      %v407 = vunpack.c.l.b16 %v223
      %v408 = vunpack.c.l.b16 %v224
      %v409 = vunpack.c.h.b16 %v224
      %v410 = vunpack.c.l.b16 %v225
      %v411 = vunpack.c.l.b16 %v226
      %v412 = vunpack.c.h.b16 %v226
      %v413 = vunpack.c.l.b16 %v227
      %v414 = vunpack.c.l.b16 %v228
      %v415 = vunpack.c.h.b16 %v228
      %v416 = vunpack.c.l.b16 %v229
      %v417 = vunpack.c.l.b16 %v230
      %v418 = vunpack.c.h.b16 %v230
      %v419 = vunpack.c.l.b16 %v231
      %v420 = vunpack.c.l.b16 %v232
      %v421 = vunpack.c.h.b16 %v232
      %v422 = vunpack.c.l.b16 %v233
      %v423 = vunpack.c.l.b16 %v234
      %v424 = vunpack.c.h.b16 %v234
      %v425 = vunpack.c.l.b16 %v235
      %v426 = vunpack.c.l.b16 %v236
      %v427 = vunpack.c.h.b16 %v236
      %v428 = vunpack.c.l.b16 %v237
      %v429 = vunpack.c.l.b16 %v238
      %v430 = vunpack.c.h.b16 %v238
      %v431 = vunpack.c.l.b16 %v239
      %v432 = vunpack.c.l.b16 %v240
      %v433 = vunpack.c.h.b16 %v240
      %v434 = vunpack.c.l.b16 %v241
      %v435 = vunpack.c.l.b16 %v242
      %v436 = vunpack.c.h.b16 %v242
      %v437 = vunpack.c.l.b16 %v243
      %v438 = vunpack.c.l.b16 %v244
      %v439 = vunpack.c.h.b16 %v244
      %v440 = vunpack.c.l.b16 %v245
      %v441 = vunpack.c.l.b16 %v246
      %v442 = vunpack.c.h.b16 %v246
      %v443 = vunpack.c.l.b16 %v247
      %v444 = vunpack.c.l.b16 %v248
      %v445 = vunpack.c.h.b16 %v248
      %v446 = vunpack.c.l.b16 %v249
      %v447 = vunpack.c.l.b16 %v250
      %v448 = vunpack.c.h.b16 %v250
      %v449 = vunpack.c.l.b16 %v251
      %v450 = vunpack.c.l.b16 %v252
      %v451 = vunpack.c.h.b16 %v252
      %v452 = vunpack.c.l.b16 %v253
      %v453 = vunpack.c.l.b16 %v254
      %v454 = vunpack.c.h.b16 %v254
      %v455 = vunpack.c.l.b16 %v255
      %v456 = vunpack.c.l.b16 %v256
      %v457 = vunpack.c.h.b16 %v256
      %v458 = vunpack.c.l.b16 %v257
      %v459 = vunpack.c.l.b16 %v258
      %v460 = vunpack.c.h.b16 %v258
      %v461 = vunpack.c.l.b16 %v259
      %v462 = vunpack.c.l.b16 %v260
      %v463 = vunpack.c.h.b16 %v260
      %v464 = vunpack.c.l.b16 %v261
      %v465 = vunpack.c.l.b16 %v262
      %v466 = vunpack.c.h.b16 %v262
      %v467 = vunpack.c.l.b16 %v263
      %v468 = vunpack.c.l.b16 %v264
      %v469 = vunpack.c.h.b16 %v264
      %v470 = vunpack.c.l.b16 %v265
      %v471 = vunpack.c.l.b16 %v266
      %v472 = vunpack.c.h.b16 %v266
      %v473 = vunpack.c.l.b16 %v267
      %v474 = vunpack.c.l.b16 %v268
      %v475 = vunpack.c.h.b16 %v268
      %v476 = vunpack.c.l.b16 %v269
      %v477 = vunpack.c.l.b16 %v270
      %v478 = vunpack.c.h.b16 %v270
      %v479 = vunpack.c.l.b16 %v271
      %v480 = vpack.c.b16 %v387, %v384
      %v481 = vpack.c.b16 %v388, %v385
      %v482 = vpack.c.b16 %v389, %v386
      %v483 = vpack.c.b16 %v393, %v390
      %v484 = vpack.c.b16 %v394, %v391
      %v485 = vpack.c.b16 %v395, %v392
      %v486 = vpack.c.b16 %v399, %v396
      %v487 = vpack.c.b16 %v400, %v397
      %v488 = vpack.c.b16 %v401, %v398
      %v489 = vpack.c.b16 %v405, %v402
      %v490 = vpack.c.b16 %v406, %v403
      %v491 = vpack.c.b16 %v407, %v404
      %v492 = vpack.c.b16 %v411, %v408
      %v493 = vpack.c.b16 %v412, %v409
      %v494 = vpack.c.b16 %v413, %v410
      %v495 = vpack.c.b16 %v417, %v414
      %v496 = vpack.c.b16 %v418, %v415
      %v497 = vpack.c.b16 %v419, %v416
      %v498 = vpack.c.b16 %v423, %v420
      %v499 = vpack.c.b16 %v424, %v421
      %v500 = vpack.c.b16 %v425, %v422
      %v501 = vpack.c.b16 %v429, %v426
      %v502 = vpack.c.b16 %v430, %v427
      %v503 = vpack.c.b16 %v431, %v428
      %v504 = vpack.c.b16 %v435, %v432
      %v505 = vpack.c.b16 %v436, %v433
      %v506 = vpack.c.b16 %v437, %v434
      %v507 = vpack.c.b16 %v441, %v438
      %v508 = vpack.c.b16 %v442, %v439
      %v509 = vpack.c.b16 %v443, %v440
      %v510 = vpack.c.b16 %v447, %v444
      %v511 = vpack.c.b16 %v448, %v445
      %v512 = vpack.c.b16 %v449, %v446
      %v513 = vpack.c.b16 %v453, %v450
      %v514 = vpack.c.b16 %v454, %v451
      %v515 = vpack.c.b16 %v455, %v452
      %v516 = vpack.c.b16 %v459, %v456
      %v517 = vpack.c.b16 %v460, %v457
      %v518 = vpack.c.b16 %v461, %v458
      %v519 = vpack.c.b16 %v465, %v462
      %v520 = vpack.c.b16 %v466, %v463
      %v521 = vpack.c.b16 %v467, %v464
      %v522 = vpack.c.b16 %v471, %v468
      %v523 = vpack.c.b16 %v472, %v469
      %v524 = vpack.c.b16 %v473, %v470
      %v525 = vpack.c.b16 %v477, %v474
      %v526 = vpack.c.b16 %v478, %v475
      %v527 = vpack.c.b16 %v479, %v476
      %v624 = vunpack.c.l.b16 %v272
      %v625 = vunpack.c.l.b16 %v273
      %v626 = vunpack.c.l.b16 %v274
      %v627 = vunpack.c.l.b16 %v275
      %v628 = vunpack.c.l.b16 %v276
      %v629 = vunpack.c.l.b16 %v277
      %v630 = vunpack.c.l.b16 %v278
      %v631 = vunpack.c.l.b16 %v279
      %v632 = vunpack.c.l.b16 %v280
      %v633 = vunpack.c.l.b16 %v281
      %v634 = vunpack.c.l.b16 %v282
      %v635 = vunpack.c.l.b16 %v283
      %v636 = vunpack.c.l.b16 %v284
      %v637 = vunpack.c.l.b16 %v285
      %v638 = vunpack.c.l.b16 %v286
      %v639 = vunpack.c.l.b16 %v287
      %v640 = vunpack.c.l.b16 %v288
      %v641 = vunpack.c.l.b16 %v289
      %v642 = vunpack.c.l.b16 %v290
      %v643 = vunpack.c.l.b16 %v291
      %v644 = vunpack.c.l.b16 %v292
      %v645 = vunpack.c.l.b16 %v293
      %v646 = vunpack.c.l.b16 %v294
      %v647 = vunpack.c.l.b16 %v295
      %v648 = vunpack.c.l.b16 %v296
      %v649 = vunpack.c.l.b16 %v297
      %v650 = vunpack.c.l.b16 %v298
      %v651 = vunpack.c.l.b16 %v299
      %v652 = vunpack.c.l.b16 %v300
      %v653 = vunpack.c.l.b16 %v301
      %v654 = vunpack.c.l.b16 %v302
      %v655 = vunpack.c.l.b16 %v303
      %v656 = vunpack.c.l.b16 %v304
      %v657 = vunpack.c.l.b16 %v305
      %v658 = vunpack.c.l.b16 %v306
      %v659 = vunpack.c.l.b16 %v307
      %v660 = vunpack.c.l.b16 %v308
      %v661 = vunpack.c.l.b16 %v309
      %v662 = vunpack.c.l.b16 %v310
      %v663 = vunpack.c.l.b16 %v311
      %v664 = vunpack.c.l.b16 %v312
      %v665 = vunpack.c.l.b16 %v313
      %v666 = vunpack.c.l.b16 %v314
      %v667 = vunpack.c.l.b16 %v315
      %v668 = vunpack.c.l.b16 %v316
      %v669 = vunpack.c.l.b16 %v317
      %v670 = vunpack.c.l.b16 %v318
      %v671 = vunpack.c.l.b16 %v319
      %v672 = vpack.c.b16 %v625, %v624
      %v673 = vpack.c.b16 %v627, %v626
      %v674 = vpack.c.b16 %v629, %v628
      %v675 = vpack.c.b16 %v631, %v630
      %v676 = vpack.c.b16 %v633, %v632
      %v677 = vpack.c.b16 %v635, %v634
      %v678 = vpack.c.b16 %v637, %v636
      %v679 = vpack.c.b16 %v639, %v638
      %v680 = vpack.c.b16 %v641, %v640
      %v681 = vpack.c.b16 %v643, %v642
      %v682 = vpack.c.b16 %v645, %v644
      %v683 = vpack.c.b16 %v647, %v646
      %v684 = vpack.c.b16 %v649, %v648
      %v685 = vpack.c.b16 %v651, %v650
      %v686 = vpack.c.b16 %v653, %v652
      %v687 = vpack.c.b16 %v655, %v654
      %v688 = vpack.c.b16 %v657, %v656
      %v689 = vpack.c.b16 %v659, %v658
      %v690 = vpack.c.b16 %v661, %v660
      %v691 = vpack.c.b16 %v663, %v662
      %v692 = vpack.c.b16 %v665, %v664
      %v693 = vpack.c.b16 %v667, %v666
      %v694 = vpack.c.b16 %v669, %v668
      %v695 = vpack.c.b16 %v671, %v670
      %720 = vmatprep.subr.bf16.mxu0 0
      %721 = vmatpush1.bf16.msra.mxu0 %v672
      %722 = vmatprep.subr.bf16.mxu0 0
      %723 = vmatpush1.bf16.msra.mxu0 %v673
      %724 = vmatprep.subr.bf16.mxu0 0
      %725 = vmatpush1.bf16.msra.mxu0 %v674
      %726 = vmatprep.subr.bf16.mxu0 0
      %727 = vmatpush1.bf16.msra.mxu0 %v675
      %728 = vmatprep.subr.bf16.mxu0 0
      %729 = vmatpush1.bf16.msra.mxu0 %v676
      %730 = vmatprep.subr.bf16.mxu0 0
      %731 = vmatpush1.bf16.msra.mxu0 %v677
      %732 = vmatprep.subr.bf16.mxu0 0
      %733 = vmatpush1.bf16.msra.mxu0 %v678
      %734 = vmatprep.subr.bf16.mxu0 0
      %735 = vmatpush1.bf16.msra.mxu0 %v679
      %736 = vmatprep.subr.bf16.mxu0 0
      %737 = vmatpush1.bf16.msra.mxu0 %v680
      %738 = vmatprep.subr.bf16.mxu0 0
      %739 = vmatpush1.bf16.msra.mxu0 %v681
      %740 = vmatprep.subr.bf16.mxu0 0
      %741 = vmatpush1.bf16.msra.mxu0 %v682
      %742 = vmatprep.subr.bf16.mxu0 0
      %743 = vmatpush1.bf16.msra.mxu0 %v683
      %744 = vmatprep.subr.bf16.mxu0 0
      %745 = vmatpush1.bf16.msra.mxu0 %v684
      %746 = vmatprep.subr.bf16.mxu0 0
      %747 = vmatpush1.bf16.msra.mxu0 %v685
      %748 = vmatprep.subr.bf16.mxu0 0
      %749 = vmatpush1.bf16.msra.mxu0 %v686
      %750 = vmatprep.subr.bf16.mxu0 0
      %751 = vmatpush1.bf16.msra.mxu0 %v687
      %752 = vmatprep.mubr.bf16.mxu0 %v481
      %753 = vmatmul.mubr.bf16.gmra.mrb[0].mxu0 %v480
      %v754 = vpop.f32.mrb[0].mxu0
      %v755 = vadd.f32 0.0, %v754
      %v756 = vpop.f32.mrb[0].mxu0
      %v757 = vpop.f32.mrb[0].mxu0
      %v758 = vadd.f32 0.0, %v757
      %v759 = vpop.f32.mrb[0].mxu0
      %760 = vmatprep.mubr.bf16.mxu0 %v484
      %761 = vmatmul.mubr.bf16.gmra.mrb[0].mxu0 %v483
      %v762 = vpop.f32.mrb[0].mxu0
      %v763 = vadd.f32 0.0, %v762
      %v764 = vpop.f32.mrb[0].mxu0
      %v765 = vpop.f32.mrb[0].mxu0
      %v766 = vadd.f32 0.0, %v765
      %v767 = vpop.f32.mrb[0].mxu0
      %768 = vmatprep.mubr.bf16.mxu0 %v487
      %769 = vmatmul.mubr.bf16.gmra.mrb[0].mxu0 %v486
      %v770 = vpop.f32.mrb[0].mxu0
      %v771 = vadd.f32 0.0, %v770
      %v772 = vpop.f32.mrb[0].mxu0
      %v773 = vpop.f32.mrb[0].mxu0
      %v774 = vadd.f32 0.0, %v773
      %v775 = vpop.f32.mrb[0].mxu0
      %776 = vmatprep.mubr.bf16.mxu0 %v490
      %777 = vmatmul.mubr.bf16.gmra.mrb[0].mxu0 %v489
      %v778 = vpop.f32.mrb[0].mxu0
      %v779 = vadd.f32 0.0, %v778
      %v780 = vpop.f32.mrb[0].mxu0
      %v781 = vpop.f32.mrb[0].mxu0
      %v782 = vadd.f32 0.0, %v781
      %v783 = vpop.f32.mrb[0].mxu0
      %784 = vmatprep.mubr.bf16.mxu0 %v493
      %785 = vmatmul.mubr.bf16.gmra.mrb[0].mxu0 %v492
      %v786 = vpop.f32.mrb[0].mxu0
      %v787 = vadd.f32 0.0, %v786
      %v788 = vpop.f32.mrb[0].mxu0
      %v789 = vpop.f32.mrb[0].mxu0
      %v790 = vadd.f32 0.0, %v789
      %v791 = vpop.f32.mrb[0].mxu0
      %792 = vmatprep.mubr.bf16.mxu0 %v496
      %793 = vmatmul.mubr.bf16.gmra.mrb[0].mxu0 %v495
      %v794 = vpop.f32.mrb[0].mxu0
      %v795 = vadd.f32 0.0, %v794
      %v796 = vpop.f32.mrb[0].mxu0
      %v797 = vpop.f32.mrb[0].mxu0
      %v798 = vadd.f32 0.0, %v797
      %v799 = vpop.f32.mrb[0].mxu0
      %800 = vmatprep.mubr.bf16.mxu0 %v499
      %801 = vmatmul.mubr.bf16.gmra.mrb[0].mxu0 %v498
      %v802 = vpop.f32.mrb[0].mxu0
      %v803 = vadd.f32 0.0, %v802
      %v804 = vpop.f32.mrb[0].mxu0
      %v805 = vpop.f32.mrb[0].mxu0
      %v806 = vadd.f32 0.0, %v805
      %v807 = vpop.f32.mrb[0].mxu0
      %808 = vmatprep.mubr.bf16.mxu0 %v502
      %809 = vmatmul.mubr.bf16.gmra.mrb[0].mxu0 %v501
      %v810 = vpop.f32.mrb[0].mxu0
      %v811 = vadd.f32 0.0, %v810
      %v812 = vpop.f32.mrb[0].mxu0
      %v813 = vpop.f32.mrb[0].mxu0
      %v814 = vadd.f32 0.0, %v813
      %v815 = vpop.f32.mrb[0].mxu0
      %816 = vmatprep.mubr.bf16.mxu0 %v505
      %817 = vmatmul.mubr.bf16.gmra.mrb[0].mxu0 %v504
      %v818 = vpop.f32.mrb[0].mxu0
      %v819 = vadd.f32 0.0, %v818
      %v820 = vpop.f32.mrb[0].mxu0
      %v821 = vpop.f32.mrb[0].mxu0
      %v822 = vadd.f32 0.0, %v821
      %v823 = vpop.f32.mrb[0].mxu0
      %824 = vmatprep.mubr.bf16.mxu0 %v508
      %825 = vmatmul.mubr.bf16.gmra.mrb[0].mxu0 %v507
      %v826 = vpop.f32.mrb[0].mxu0
      %v827 = vadd.f32 0.0, %v826
      %v828 = vpop.f32.mrb[0].mxu0
      %v829 = vpop.f32.mrb[0].mxu0
      %v830 = vadd.f32 0.0, %v829
      %v831 = vpop.f32.mrb[0].mxu0
      %832 = vmatprep.mubr.bf16.mxu0 %v511
      %833 = vmatmul.mubr.bf16.gmra.mrb[0].mxu0 %v510
      %v834 = vpop.f32.mrb[0].mxu0
      %v835 = vadd.f32 0.0, %v834
      %v836 = vpop.f32.mrb[0].mxu0
      %v837 = vpop.f32.mrb[0].mxu0
      %v838 = vadd.f32 0.0, %v837
      %v839 = vpop.f32.mrb[0].mxu0
      %840 = vmatprep.mubr.bf16.mxu0 %v514
      %841 = vmatmul.mubr.bf16.gmra.mrb[0].mxu0 %v513
      %v842 = vpop.f32.mrb[0].mxu0
      %v843 = vadd.f32 0.0, %v842
      %v844 = vpop.f32.mrb[0].mxu0
      %v845 = vpop.f32.mrb[0].mxu0
      %v846 = vadd.f32 0.0, %v845
      %v847 = vpop.f32.mrb[0].mxu0
      %848 = vmatprep.mubr.bf16.mxu0 %v517
      %849 = vmatmul.mubr.bf16.gmra.mrb[0].mxu0 %v516
      %v850 = vpop.f32.mrb[0].mxu0
      %v851 = vadd.f32 0.0, %v850
      %v852 = vpop.f32.mrb[0].mxu0
      %v853 = vpop.f32.mrb[0].mxu0
      %v854 = vadd.f32 0.0, %v853
      %v855 = vpop.f32.mrb[0].mxu0
      %856 = vmatprep.mubr.bf16.mxu0 %v520
      %857 = vmatmul.mubr.bf16.gmra.mrb[0].mxu0 %v519
      %v858 = vpop.f32.mrb[0].mxu0
      %v859 = vadd.f32 0.0, %v858
      %v860 = vpop.f32.mrb[0].mxu0
      %v861 = vpop.f32.mrb[0].mxu0
      %v862 = vadd.f32 0.0, %v861
      %v863 = vpop.f32.mrb[0].mxu0
      %864 = vmatprep.mubr.bf16.mxu0 %v523
      %865 = vmatmul.mubr.bf16.gmra.mrb[0].mxu0 %v522
      %v866 = vpop.f32.mrb[0].mxu0
      %v867 = vadd.f32 0.0, %v866
      %v868 = vpop.f32.mrb[0].mxu0
      %v869 = vpop.f32.mrb[0].mxu0
      %v870 = vadd.f32 0.0, %v869
      %v871 = vpop.f32.mrb[0].mxu0
      %872 = vmatprep.mubr.bf16.mxu0 %v526
      %873 = vmatmul.mubr.bf16.gmra.mrb[0].mxu0 %v525
      %v874 = vpop.f32.mrb[0].mxu0
      %v875 = vadd.f32 0.0, %v874
      %v876 = vpop.f32.mrb[0].mxu0
      %v877 = vpop.f32.mrb[0].mxu0
      %v878 = vadd.f32 0.0, %v877
      %v879 = vpop.f32.mrb[0].mxu0
      %880 = vdwg.mxu0
      %881 = vmatprep.subr.bf16.mxu0 0
      %882 = vmatpush1.bf16.msra.mxu0 %v688
      %883 = vmatprep.subr.bf16.mxu0 0
      %884 = vmatpush1.bf16.msra.mxu0 %v689
      %885 = vmatprep.subr.bf16.mxu0 0
      %886 = vmatpush1.bf16.msra.mxu0 %v690
      %887 = vmatprep.subr.bf16.mxu0 0
      %888 = vmatpush1.bf16.msra.mxu0 %v691
      %889 = vmatprep.subr.bf16.mxu0 0
      %890 = vmatpush1.bf16.msra.mxu0 %v692
      %891 = vmatprep.subr.bf16.mxu0 0
      %892 = vmatpush1.bf16.msra.mxu0 %v693
      %893 = vmatprep.subr.bf16.mxu0 0
      %894 = vmatpush1.bf16.msra.mxu0 %v694
      %895 = vmatprep.subr.bf16.mxu0 0
      %896 = vmatpush1.bf16.msra.mxu0 %v695
      %897 = vmatprep.subr.bf16.mxu0 0
      %898 = vmatpush1.bf16.msra.mxu0 0
      %899 = vmatprep.subr.bf16.mxu0 0
      %900 = vmatpush1.bf16.msra.mxu0 0
      %901 = vmatprep.subr.bf16.mxu0 0
      %902 = vmatpush1.bf16.msra.mxu0 0
      %903 = vmatprep.subr.bf16.mxu0 0
      %904 = vmatpush1.bf16.msra.mxu0 0
      %905 = vmatprep.subr.bf16.mxu0 0
      %906 = vmatpush1.bf16.msra.mxu0 0
      %907 = vmatprep.subr.bf16.mxu0 0
      %908 = vmatpush1.bf16.msra.mxu0 0
      %909 = vmatprep.subr.bf16.mxu0 0
      %910 = vmatpush1.bf16.msra.mxu0 0
      %911 = vmatprep.subr.bf16.mxu0 0
      %912 = vmatpush1.bf16.msra.mxu0 0
      %913 = vmatprep.mubr.bf16.mxu0 0
      %914 = vmatmul.mubr.bf16.gmra.mrb[0].mxu0 %v482
      %v915 = vpop.f32.mrb[0].mxu0
      %v916 = vadd.f32 %v755, %v915
      %v917 = vpop.f32.mrb[0].mxu0
      %v918 = vpop.f32.mrb[0].mxu0
      %v919 = vadd.f32 %v758, %v918
      %v920 = vpop.f32.mrb[0].mxu0
      %921 = vmatprep.mubr.bf16.mxu0 0
      %922 = vmatmul.mubr.bf16.gmra.mrb[0].mxu0 %v485
      %v923 = vpop.f32.mrb[0].mxu0
      %v924 = vadd.f32 %v763, %v923
      %v925 = vpop.f32.mrb[0].mxu0
      %v926 = vpop.f32.mrb[0].mxu0
      %v927 = vadd.f32 %v766, %v926
      %v928 = vpop.f32.mrb[0].mxu0
      %929 = vmatprep.mubr.bf16.mxu0 0
      %930 = vmatmul.mubr.bf16.gmra.mrb[0].mxu0 %v488
      %v931 = vpop.f32.mrb[0].mxu0
      %v932 = vadd.f32 %v771, %v931
      %v933 = vpop.f32.mrb[0].mxu0
      %v934 = vpop.f32.mrb[0].mxu0
      %v935 = vadd.f32 %v774, %v934
      %v936 = vpop.f32.mrb[0].mxu0
      %937 = vmatprep.mubr.bf16.mxu0 0
      %938 = vmatmul.mubr.bf16.gmra.mrb[0].mxu0 %v491
      %v939 = vpop.f32.mrb[0].mxu0
      %v940 = vadd.f32 %v779, %v939
      %v941 = vpop.f32.mrb[0].mxu0
      %v942 = vpop.f32.mrb[0].mxu0
      %v943 = vadd.f32 %v782, %v942
      %v944 = vpop.f32.mrb[0].mxu0
      %945 = vmatprep.mubr.bf16.mxu0 0
      %946 = vmatmul.mubr.bf16.gmra.mrb[0].mxu0 %v494
      %v947 = vpop.f32.mrb[0].mxu0
      %v948 = vadd.f32 %v787, %v947
      %v949 = vpop.f32.mrb[0].mxu0
      %v950 = vpop.f32.mrb[0].mxu0
      %v951 = vadd.f32 %v790, %v950
      %v952 = vpop.f32.mrb[0].mxu0
      %953 = vmatprep.mubr.bf16.mxu0 0
      %954 = vmatmul.mubr.bf16.gmra.mrb[0].mxu0 %v497
      %v955 = vpop.f32.mrb[0].mxu0
      %v956 = vadd.f32 %v795, %v955
      %v957 = vpop.f32.mrb[0].mxu0
      %v958 = vpop.f32.mrb[0].mxu0
      %v959 = vadd.f32 %v798, %v958
      %v960 = vpop.f32.mrb[0].mxu0
      %961 = vmatprep.mubr.bf16.mxu0 0
      %962 = vmatmul.mubr.bf16.gmra.mrb[0].mxu0 %v500
      %v963 = vpop.f32.mrb[0].mxu0
      %v964 = vadd.f32 %v803, %v963
      %v965 = vpop.f32.mrb[0].mxu0
      %v966 = vpop.f32.mrb[0].mxu0
      %v967 = vadd.f32 %v806, %v966
      %v968 = vpop.f32.mrb[0].mxu0
      %969 = vmatprep.mubr.bf16.mxu0 0
      %970 = vmatmul.mubr.bf16.gmra.mrb[0].mxu0 %v503
      %v971 = vpop.f32.mrb[0].mxu0
      %v972 = vadd.f32 %v811, %v971
      %v973 = vpop.f32.mrb[0].mxu0
      %v974 = vpop.f32.mrb[0].mxu0
      %v975 = vadd.f32 %v814, %v974
      %v976 = vpop.f32.mrb[0].mxu0
      %977 = vmatprep.mubr.bf16.mxu0 0
      %978 = vmatmul.mubr.bf16.gmra.mrb[0].mxu0 %v506
      %v979 = vpop.f32.mrb[0].mxu0
      %v980 = vadd.f32 %v819, %v979
      %v981 = vpop.f32.mrb[0].mxu0
      %v982 = vpop.f32.mrb[0].mxu0
      %v983 = vadd.f32 %v822, %v982
      %v984 = vpop.f32.mrb[0].mxu0
      %985 = vmatprep.mubr.bf16.mxu0 0
      %986 = vmatmul.mubr.bf16.gmra.mrb[0].mxu0 %v509
      %v987 = vpop.f32.mrb[0].mxu0
      %v988 = vadd.f32 %v827, %v987
      %v989 = vpop.f32.mrb[0].mxu0
      %v990 = vpop.f32.mrb[0].mxu0
      %v991 = vadd.f32 %v830, %v990
      %v992 = vpop.f32.mrb[0].mxu0
      %993 = vmatprep.mubr.bf16.mxu0 0
      %994 = vmatmul.mubr.bf16.gmra.mrb[0].mxu0 %v512
      %v995 = vpop.f32.mrb[0].mxu0
      %v996 = vadd.f32 %v835, %v995
      %v997 = vpop.f32.mrb[0].mxu0
      %v998 = vpop.f32.mrb[0].mxu0
      %v999 = vadd.f32 %v838, %v998
      %v1000 = vpop.f32.mrb[0].mxu0
      %1001 = vmatprep.mubr.bf16.mxu0 0
      %1002 = vmatmul.mubr.bf16.gmra.mrb[0].mxu0 %v515
      %v1003 = vpop.f32.mrb[0].mxu0
      %v1004 = vadd.f32 %v843, %v1003
      %v1005 = vpop.f32.mrb[0].mxu0
      %v1006 = vpop.f32.mrb[0].mxu0
      %v1007 = vadd.f32 %v846, %v1006
      %v1008 = vpop.f32.mrb[0].mxu0
      %1009 = vmatprep.mubr.bf16.mxu0 0
      %1010 = vmatmul.mubr.bf16.gmra.mrb[0].mxu0 %v518
      %v1011 = vpop.f32.mrb[0].mxu0
      %v1012 = vadd.f32 %v851, %v1011
      %v1013 = vpop.f32.mrb[0].mxu0
      %v1014 = vpop.f32.mrb[0].mxu0
      %v1015 = vadd.f32 %v854, %v1014
      %v1016 = vpop.f32.mrb[0].mxu0
      %1017 = vmatprep.mubr.bf16.mxu0 0
      %1018 = vmatmul.mubr.bf16.gmra.mrb[0].mxu0 %v521
      %v1019 = vpop.f32.mrb[0].mxu0
      %v1020 = vadd.f32 %v859, %v1019
      %v1021 = vpop.f32.mrb[0].mxu0
      %v1022 = vpop.f32.mrb[0].mxu0
      %v1023 = vadd.f32 %v862, %v1022
      %v1024 = vpop.f32.mrb[0].mxu0
      %1025 = vmatprep.mubr.bf16.mxu0 0
      %1026 = vmatmul.mubr.bf16.gmra.mrb[0].mxu0 %v524
      %v1027 = vpop.f32.mrb[0].mxu0
      %v1028 = vadd.f32 %v867, %v1027
      %v1029 = vpop.f32.mrb[0].mxu0
      %v1030 = vpop.f32.mrb[0].mxu0
      %v1031 = vadd.f32 %v870, %v1030
      %v1032 = vpop.f32.mrb[0].mxu0
      %1033 = vmatprep.mubr.bf16.mxu0 0
      %1034 = vmatmul.mubr.bf16.gmra.mrb[0].mxu0 %v527
      %v1035 = vpop.f32.mrb[0].mxu0
      %v1036 = vadd.f32 %v875, %v1035
      %v1037 = vpop.f32.mrb[0].mxu0
      %v1038 = vpop.f32.mrb[0].mxu0
      %v1039 = vadd.f32 %v878, %v1038
      %v1040 = vpop.f32.mrb[0].mxu0
      %1041 = vdwg.mxu0
      %1042 = vst [vmem:[#allocation2] sm:$0xff] %v916
      %1043 = vst [vmem:[#allocation2 + $0x8] sm:$0xff] %v919
      %1044 = vst [vmem:[#allocation2 + $0x10] sm:$0xff] %v924
      %1045 = vst [vmem:[#allocation2 + $0x18] sm:$0xff] %v927
      %1046 = vst [vmem:[#allocation2 + $0x20] sm:$0xff] %v932
      %1047 = vst [vmem:[#allocation2 + $0x28] sm:$0xff] %v935
      %1048 = vst [vmem:[#allocation2 + $0x30] sm:$0xff] %v940
      %1049 = vst [vmem:[#allocation2 + $0x38] sm:$0xff] %v943
      %1050 = vst [vmem:[#allocation2 + $0x40] sm:$0xff] %v948
      %1051 = vst [vmem:[#allocation2 + $0x48] sm:$0xff] %v951
      %1052 = vst [vmem:[#allocation2 + $0x50] sm:$0xff] %v956
      %1053 = vst [vmem:[#allocation2 + $0x58] sm:$0xff] %v959
      %1054 = vst [vmem:[#allocation2 + $0x60] sm:$0xff] %v964
      %1055 = vst [vmem:[#allocation2 + $0x68] sm:$0xff] %v967
      %1056 = vst [vmem:[#allocation2 + $0x70] sm:$0xff] %v972
      %1057 = vst [vmem:[#allocation2 + $0x78] sm:$0xff] %v975
      %1058 = vst [vmem:[#allocation2 + $0x80] sm:$0xff] %v980
      %1059 = vst [vmem:[#allocation2 + $0x88] sm:$0xff] %v983
      %1060 = vst [vmem:[#allocation2 + $0x90] sm:$0xff] %v988
      %1061 = vst [vmem:[#allocation2 + $0x98] sm:$0xff] %v991
      %1062 = vst [vmem:[#allocation2 + $0xa0] sm:$0xff] %v996
      %1063 = vst [vmem:[#allocation2 + $0xa8] sm:$0xff] %v999
      %1064 = vst [vmem:[#allocation2 + $0xb0] sm:$0xff] %v1004
      %1065 = vst [vmem:[#allocation2 + $0xb8] sm:$0xff] %v1007
      %1066 = vst [vmem:[#allocation2 + $0xc0] sm:$0xff] %v1012
      %1067 = vst [vmem:[#allocation2 + $0xc8] sm:$0xff] %v1015
      %1068 = vst [vmem:[#allocation2 + $0xd0] sm:$0xff] %v1020
      %1069 = vst [vmem:[#allocation2 + $0xd8] sm:$0xff] %v1023
      %1070 = vst [vmem:[#allocation2 + $0xe0] sm:$0xff] %v1028
      %1071 = vst [vmem:[#allocation2 + $0xe8] sm:$0xff] %v1031
      %1072 = vst [vmem:[#allocation2 + $0xf0] sm:$0xff] %v1036
      %1073 = vst [vmem:[#allocation2 + $0xf8] sm:$0xff] %v1039
      %v1074 = vld [vmem:[%s193 + $0x18] sm:$0xff]
      %v1075 = vld [vmem:[%s193 + $0x20] sm:$0xf]
      %v1076 = vld [vmem:[%s193 + $0x24] sm:$0xff]
      %v1077 = vld [vmem:[%s193 + $0x2c] sm:$0xf]
      %v1078 = vld [vmem:[%s193 + $0x30] sm:$0xff]
      %v1079 = vld [vmem:[%s193 + $0x38] sm:$0xf]
      %v1080 = vld [vmem:[%s193 + $0x3c] sm:$0xff]
      %v1081 = vld [vmem:[%s193 + $0x44] sm:$0xf]
      %v1082 = vld [vmem:[%s193 + $0x48] sm:$0xff]
      %v1083 = vld [vmem:[%s193 + $0x50] sm:$0xf]
      %v1084 = vld [vmem:[%s193 + $0x54] sm:$0xff]
      %v1085 = vld [vmem:[%s193 + $0x5c] sm:$0xf]
      %v1086 = vld [vmem:[%s193 + $0x60] sm:$0xff]
      %v1087 = vld [vmem:[%s193 + $0x68] sm:$0xf]
      %v1088 = vld [vmem:[%s193 + $0x6c] sm:$0xff]
      %v1089 = vld [vmem:[%s193 + $0x74] sm:$0xf]
      %v1090 = vld [vmem:[%s193 + $0x78] sm:$0xff]
      %v1091 = vld [vmem:[%s193 + $0x80] sm:$0xf]
      %v1092 = vld [vmem:[%s193 + $0x84] sm:$0xff]
      %v1093 = vld [vmem:[%s193 + $0x8c] sm:$0xf]
      %v1094 = vld [vmem:[%s193 + $0x90] sm:$0xff]
      %v1095 = vld [vmem:[%s193 + $0x98] sm:$0xf]
      %v1096 = vld [vmem:[%s193 + $0x9c] sm:$0xff]
      %v1097 = vld [vmem:[%s193 + $0xa4] sm:$0xf]
      %v1098 = vld [vmem:[%s193 + $0xa8] sm:$0xff]
      %v1099 = vld [vmem:[%s193 + $0xb0] sm:$0xf]
      %v1100 = vld [vmem:[%s193 + $0xb4] sm:$0xff]
      %v1101 = vld [vmem:[%s193 + $0xbc] sm:$0xf]
      %v1102 = vld [vmem:[%s193 + $0xc0] sm:$0xff]
      %v1103 = vld [vmem:[%s193 + $0xc8] sm:$0xf]
      %v1104 = vld [vmem:[%s193 + $0xcc] sm:$0xff]
      %v1105 = vld [vmem:[%s193 + $0xd4] sm:$0xf]
      %v1106 = vld [vmem:[%s193 + $0xd8] sm:$0xff]
      %v1107 = vld [vmem:[%s193 + $0xe0] sm:$0xf]
      %v1108 = vld [vmem:[%s193 + $0xe4] sm:$0xff]
      %v1109 = vld [vmem:[%s193 + $0xec] sm:$0xf]
      %v1110 = vld [vmem:[%s193 + $0xf0] sm:$0xff]
      %v1111 = vld [vmem:[%s193 + $0xf8] sm:$0xf]
      %v1112 = vld [vmem:[%s193 + $0xfc] sm:$0xff]
      %v1113 = vld [vmem:[%s193 + $0x104] sm:$0xf]
      %v1114 = vld [vmem:[%s193 + $0x108] sm:$0xff]
      %v1115 = vld [vmem:[%s193 + $0x110] sm:$0xf]
      %v1116 = vld [vmem:[%s193 + $0x114] sm:$0xff]
      %v1117 = vld [vmem:[%s193 + $0x11c] sm:$0xf]
      %v1118 = vld [vmem:[%s193 + $0x120] sm:$0xff]
      %v1119 = vld [vmem:[%s193 + $0x128] sm:$0xf]
      %v1120 = vld [vmem:[%s193 + $0x12c] sm:$0xff]
      %v1121 = vld [vmem:[%s193 + $0x134] sm:$0xf]
      %v1122 = vld [vmem:[%s193 + $0x138] sm:$0xff]
      %v1123 = vld [vmem:[%s193 + $0x140] sm:$0xf]
      %v1124 = vld [vmem:[%s193 + $0x144] sm:$0xff]
      %v1125 = vld [vmem:[%s193 + $0x14c] sm:$0xf]
      %v1126 = vld [vmem:[%s193 + $0x150] sm:$0xff]
      %v1127 = vld [vmem:[%s193 + $0x158] sm:$0xf]
      %v1128 = vld [vmem:[%s193 + $0x15c] sm:$0xff]
      %v1129 = vld [vmem:[%s193 + $0x164] sm:$0xf]
      %v1130 = vld [vmem:[%s193 + $0x168] sm:$0xff]
      %v1131 = vld [vmem:[%s193 + $0x170] sm:$0xf]
      %v1132 = vld [vmem:[%s193 + $0x174] sm:$0xff]
      %v1133 = vld [vmem:[%s193 + $0x17c] sm:$0xf]
      %v1134 = vld [vmem:[%s193 + $0x180] sm:$0xff]
      %v1135 = vld [vmem:[%s193 + $0x188] sm:$0xf]
      %v1136 = vld [vmem:[%s193 + $0x18c] sm:$0xff]
      %v1137 = vld [vmem:[%s193 + $0x194] sm:$0xf]
      %v1138 = vld [vmem:[%s1 + $0xc0] sm:$0xf]
      %v1139 = vld [vmem:[%s1 + $0xc4] sm:$0xf]
      %v1140 = vld [vmem:[%s1 + $0xc8] sm:$0xf]
      %v1141 = vld [vmem:[%s1 + $0xcc] sm:$0xf]
      %v1142 = vld [vmem:[%s1 + $0xd0] sm:$0xf]
      %v1143 = vld [vmem:[%s1 + $0xd4] sm:$0xf]
      %v1144 = vld [vmem:[%s1 + $0xd8] sm:$0xf]
      %v1145 = vld [vmem:[%s1 + $0xdc] sm:$0xf]
      %v1146 = vld [vmem:[%s1 + $0xe0] sm:$0xf]
      %v1147 = vld [vmem:[%s1 + $0xe4] sm:$0xf]
      %v1148 = vld [vmem:[%s1 + $0xe8] sm:$0xf]
      %v1149 = vld [vmem:[%s1 + $0xec] sm:$0xf]
      %v1150 = vld [vmem:[%s1 + $0xf0] sm:$0xf]
      %v1151 = vld [vmem:[%s1 + $0xf4] sm:$0xf]
      %v1152 = vld [vmem:[%s1 + $0xf8] sm:$0xf]
      %v1153 = vld [vmem:[%s1 + $0xfc] sm:$0xf]
      %v1154 = vld [vmem:[%s1 + $0x100] sm:$0xf]
      %v1155 = vld [vmem:[%s1 + $0x104] sm:$0xf]
      %v1156 = vld [vmem:[%s1 + $0x108] sm:$0xf]
      %v1157 = vld [vmem:[%s1 + $0x10c] sm:$0xf]
      %v1158 = vld [vmem:[%s1 + $0x110] sm:$0xf]
      %v1159 = vld [vmem:[%s1 + $0x114] sm:$0xf]
      %v1160 = vld [vmem:[%s1 + $0x118] sm:$0xf]
      %v1161 = vld [vmem:[%s1 + $0x11c] sm:$0xf]
      %v1162 = vld [vmem:[%s1 + $0x120] sm:$0xf]
      %v1163 = vld [vmem:[%s1 + $0x124] sm:$0xf]
      %v1164 = vld [vmem:[%s1 + $0x128] sm:$0xf]
      %v1165 = vld [vmem:[%s1 + $0x12c] sm:$0xf]
      %v1166 = vld [vmem:[%s1 + $0x130] sm:$0xf]
      %v1167 = vld [vmem:[%s1 + $0x134] sm:$0xf]
      %v1168 = vld [vmem:[%s1 + $0x138] sm:$0xf]
      %v1169 = vld [vmem:[%s1 + $0x13c] sm:$0xf]
      %v1170 = vld [vmem:[%s1 + $0x140] sm:$0xf]
      %v1171 = vld [vmem:[%s1 + $0x144] sm:$0xf]
      %v1172 = vld [vmem:[%s1 + $0x148] sm:$0xf]
      %v1173 = vld [vmem:[%s1 + $0x14c] sm:$0xf]
      %v1174 = vld [vmem:[%s1 + $0x150] sm:$0xf]
      %v1175 = vld [vmem:[%s1 + $0x154] sm:$0xf]
      %v1176 = vld [vmem:[%s1 + $0x158] sm:$0xf]
      %v1177 = vld [vmem:[%s1 + $0x15c] sm:$0xf]
      %v1178 = vld [vmem:[%s1 + $0x160] sm:$0xf]
      %v1179 = vld [vmem:[%s1 + $0x164] sm:$0xf]
      %v1180 = vld [vmem:[%s1 + $0x168] sm:$0xf]
      %v1181 = vld [vmem:[%s1 + $0x16c] sm:$0xf]
      %v1182 = vld [vmem:[%s1 + $0x170] sm:$0xf]
      %v1183 = vld [vmem:[%s1 + $0x174] sm:$0xf]
      %v1184 = vld [vmem:[%s1 + $0x178] sm:$0xf]
      %v1185 = vld [vmem:[%s1 + $0x17c] sm:$0xf]
      %v1250 = vunpack.c.l.b16 %v1074
      %v1251 = vunpack.c.h.b16 %v1074
      %v1252 = vunpack.c.l.b16 %v1075
      %v1253 = vunpack.c.l.b16 %v1076
      %v1254 = vunpack.c.h.b16 %v1076
      %v1255 = vunpack.c.l.b16 %v1077
      %v1256 = vunpack.c.l.b16 %v1078
      %v1257 = vunpack.c.h.b16 %v1078
      %v1258 = vunpack.c.l.b16 %v1079
      %v1259 = vunpack.c.l.b16 %v1080
      %v1260 = vunpack.c.h.b16 %v1080
      %v1261 = vunpack.c.l.b16 %v1081
      %v1262 = vunpack.c.l.b16 %v1082
      %v1263 = vunpack.c.h.b16 %v1082
      %v1264 = vunpack.c.l.b16 %v1083
      %v1265 = vunpack.c.l.b16 %v1084
      %v1266 = vunpack.c.h.b16 %v1084
      %v1267 = vunpack.c.l.b16 %v1085
      %v1268 = vunpack.c.l.b16 %v1086
      %v1269 = vunpack.c.h.b16 %v1086
      %v1270 = vunpack.c.l.b16 %v1087
      %v1271 = vunpack.c.l.b16 %v1088
      %v1272 = vunpack.c.h.b16 %v1088
      %v1273 = vunpack.c.l.b16 %v1089
      %v1274 = vunpack.c.l.b16 %v1090
      %v1275 = vunpack.c.h.b16 %v1090
      %v1276 = vunpack.c.l.b16 %v1091
      %v1277 = vunpack.c.l.b16 %v1092
      %v1278 = vunpack.c.h.b16 %v1092
      %v1279 = vunpack.c.l.b16 %v1093
      %v1280 = vunpack.c.l.b16 %v1094
      %v1281 = vunpack.c.h.b16 %v1094
      %v1282 = vunpack.c.l.b16 %v1095
      %v1283 = vunpack.c.l.b16 %v1096
      %v1284 = vunpack.c.h.b16 %v1096
      %v1285 = vunpack.c.l.b16 %v1097
      %v1286 = vunpack.c.l.b16 %v1098
      %v1287 = vunpack.c.h.b16 %v1098
      %v1288 = vunpack.c.l.b16 %v1099
      %v1289 = vunpack.c.l.b16 %v1100
      %v1290 = vunpack.c.h.b16 %v1100
      %v1291 = vunpack.c.l.b16 %v1101
      %v1292 = vunpack.c.l.b16 %v1102
      %v1293 = vunpack.c.h.b16 %v1102
      %v1294 = vunpack.c.l.b16 %v1103
      %v1295 = vunpack.c.l.b16 %v1104
      %v1296 = vunpack.c.h.b16 %v1104
      %v1297 = vunpack.c.l.b16 %v1105
      %v1298 = vunpack.c.l.b16 %v1106
      %v1299 = vunpack.c.h.b16 %v1106
      %v1300 = vunpack.c.l.b16 %v1107
      %v1301 = vunpack.c.l.b16 %v1108
      %v1302 = vunpack.c.h.b16 %v1108
      %v1303 = vunpack.c.l.b16 %v1109
      %v1304 = vunpack.c.l.b16 %v1110
      %v1305 = vunpack.c.h.b16 %v1110
      %v1306 = vunpack.c.l.b16 %v1111
      %v1307 = vunpack.c.l.b16 %v1112
      %v1308 = vunpack.c.h.b16 %v1112
      %v1309 = vunpack.c.l.b16 %v1113
      %v1310 = vunpack.c.l.b16 %v1114
      %v1311 = vunpack.c.h.b16 %v1114
      %v1312 = vunpack.c.l.b16 %v1115
      %v1313 = vunpack.c.l.b16 %v1116
      %v1314 = vunpack.c.h.b16 %v1116
      %v1315 = vunpack.c.l.b16 %v1117
      %v1316 = vunpack.c.l.b16 %v1118
      %v1317 = vunpack.c.h.b16 %v1118
      %v1318 = vunpack.c.l.b16 %v1119
      %v1319 = vunpack.c.l.b16 %v1120
      %v1320 = vunpack.c.h.b16 %v1120
      %v1321 = vunpack.c.l.b16 %v1121
      %v1322 = vunpack.c.l.b16 %v1122
      %v1323 = vunpack.c.h.b16 %v1122
      %v1324 = vunpack.c.l.b16 %v1123
      %v1325 = vunpack.c.l.b16 %v1124
      %v1326 = vunpack.c.h.b16 %v1124
      %v1327 = vunpack.c.l.b16 %v1125
      %v1328 = vunpack.c.l.b16 %v1126
      %v1329 = vunpack.c.h.b16 %v1126
      %v1330 = vunpack.c.l.b16 %v1127
      %v1331 = vunpack.c.l.b16 %v1128
      %v1332 = vunpack.c.h.b16 %v1128
      %v1333 = vunpack.c.l.b16 %v1129
      %v1334 = vunpack.c.l.b16 %v1130
      %v1335 = vunpack.c.h.b16 %v1130
      %v1336 = vunpack.c.l.b16 %v1131
      %v1337 = vunpack.c.l.b16 %v1132
      %v1338 = vunpack.c.h.b16 %v1132
      %v1339 = vunpack.c.l.b16 %v1133
      %v1340 = vunpack.c.l.b16 %v1134
      %v1341 = vunpack.c.h.b16 %v1134
      %v1342 = vunpack.c.l.b16 %v1135
      %v1343 = vunpack.c.l.b16 %v1136
      %v1344 = vunpack.c.h.b16 %v1136
      %v1345 = vunpack.c.l.b16 %v1137
      %v1346 = vpack.c.b16 %v1253, %v1250
      %v1347 = vpack.c.b16 %v1254, %v1251
      %v1348 = vpack.c.b16 %v1255, %v1252
      %v1349 = vpack.c.b16 %v1259, %v1256
      %v1350 = vpack.c.b16 %v1260, %v1257
      %v1351 = vpack.c.b16 %v1261, %v1258
      %v1352 = vpack.c.b16 %v1265, %v1262
      %v1353 = vpack.c.b16 %v1266, %v1263
      %v1354 = vpack.c.b16 %v1267, %v1264
      %v1355 = vpack.c.b16 %v1271, %v1268
      %v1356 = vpack.c.b16 %v1272, %v1269
      %v1357 = vpack.c.b16 %v1273, %v1270
      %v1358 = vpack.c.b16 %v1277, %v1274
      %v1359 = vpack.c.b16 %v1278, %v1275
      %v1360 = vpack.c.b16 %v1279, %v1276
      %v1361 = vpack.c.b16 %v1283, %v1280
      %v1362 = vpack.c.b16 %v1284, %v1281
      %v1363 = vpack.c.b16 %v1285, %v1282
      %v1364 = vpack.c.b16 %v1289, %v1286
      %v1365 = vpack.c.b16 %v1290, %v1287
      %v1366 = vpack.c.b16 %v1291, %v1288
      %v1367 = vpack.c.b16 %v1295, %v1292
      %v1368 = vpack.c.b16 %v1296, %v1293
      %v1369 = vpack.c.b16 %v1297, %v1294
      %v1370 = vpack.c.b16 %v1301, %v1298
      %v1371 = vpack.c.b16 %v1302, %v1299
      %v1372 = vpack.c.b16 %v1303, %v1300
      %v1373 = vpack.c.b16 %v1307, %v1304
      %v1374 = vpack.c.b16 %v1308, %v1305
      %v1375 = vpack.c.b16 %v1309, %v1306
      %v1376 = vpack.c.b16 %v1313, %v1310
      %v1377 = vpack.c.b16 %v1314, %v1311
      %v1378 = vpack.c.b16 %v1315, %v1312
      %v1379 = vpack.c.b16 %v1319, %v1316
      %v1380 = vpack.c.b16 %v1320, %v1317
      %v1381 = vpack.c.b16 %v1321, %v1318
      %v1382 = vpack.c.b16 %v1325, %v1322
      %v1383 = vpack.c.b16 %v1326, %v1323
      %v1384 = vpack.c.b16 %v1327, %v1324
      %v1385 = vpack.c.b16 %v1331, %v1328
      %v1386 = vpack.c.b16 %v1332, %v1329
      %v1387 = vpack.c.b16 %v1333, %v1330
      %v1388 = vpack.c.b16 %v1337, %v1334
      %v1389 = vpack.c.b16 %v1338, %v1335
      %v1390 = vpack.c.b16 %v1339, %v1336
      %v1391 = vpack.c.b16 %v1343, %v1340
      %v1392 = vpack.c.b16 %v1344, %v1341
      %v1393 = vpack.c.b16 %v1345, %v1342
      %v1490 = vunpack.c.l.b16 %v1138
      %v1491 = vunpack.c.l.b16 %v1139
      %v1492 = vunpack.c.l.b16 %v1140
      %v1493 = vunpack.c.l.b16 %v1141
      %v1494 = vunpack.c.l.b16 %v1142
      %v1495 = vunpack.c.l.b16 %v1143
      %v1496 = vunpack.c.l.b16 %v1144
      %v1497 = vunpack.c.l.b16 %v1145
      %v1498 = vunpack.c.l.b16 %v1146
      %v1499 = vunpack.c.l.b16 %v1147
      %v1500 = vunpack.c.l.b16 %v1148
      %v1501 = vunpack.c.l.b16 %v1149
      %v1502 = vunpack.c.l.b16 %v1150
      %v1503 = vunpack.c.l.b16 %v1151
      %v1504 = vunpack.c.l.b16 %v1152
      %v1505 = vunpack.c.l.b16 %v1153
      %v1506 = vunpack.c.l.b16 %v1154
      %v1507 = vunpack.c.l.b16 %v1155
      %v1508 = vunpack.c.l.b16 %v1156
      %v1509 = vunpack.c.l.b16 %v1157
      %v1510 = vunpack.c.l.b16 %v1158
      %v1511 = vunpack.c.l.b16 %v1159
      %v1512 = vunpack.c.l.b16 %v1160
      %v1513 = vunpack.c.l.b16 %v1161
      %v1514 = vunpack.c.l.b16 %v1162
      %v1515 = vunpack.c.l.b16 %v1163
      %v1516 = vunpack.c.l.b16 %v1164
      %v1517 = vunpack.c.l.b16 %v1165
      %v1518 = vunpack.c.l.b16 %v1166
      %v1519 = vunpack.c.l.b16 %v1167
      %v1520 = vunpack.c.l.b16 %v1168
      %v1521 = vunpack.c.l.b16 %v1169
      %v1522 = vunpack.c.l.b16 %v1170
      %v1523 = vunpack.c.l.b16 %v1171
      %v1524 = vunpack.c.l.b16 %v1172
      %v1525 = vunpack.c.l.b16 %v1173
      %v1526 = vunpack.c.l.b16 %v1174
      %v1527 = vunpack.c.l.b16 %v1175
      %v1528 = vunpack.c.l.b16 %v1176
      %v1529 = vunpack.c.l.b16 %v1177
      %v1530 = vunpack.c.l.b16 %v1178
      %v1531 = vunpack.c.l.b16 %v1179
      %v1532 = vunpack.c.l.b16 %v1180
      %v1533 = vunpack.c.l.b16 %v1181
      %v1534 = vunpack.c.l.b16 %v1182
      %v1535 = vunpack.c.l.b16 %v1183
      %v1536 = vunpack.c.l.b16 %v1184
      %v1537 = vunpack.c.l.b16 %v1185
      %v1538 = vpack.c.b16 %v1491, %v1490
      %v1539 = vpack.c.b16 %v1493, %v1492
      %v1540 = vpack.c.b16 %v1495, %v1494
      %v1541 = vpack.c.b16 %v1497, %v1496
      %v1542 = vpack.c.b16 %v1499, %v1498
      %v1543 = vpack.c.b16 %v1501, %v1500
      %v1544 = vpack.c.b16 %v1503, %v1502
      %v1545 = vpack.c.b16 %v1505, %v1504
      %v1546 = vpack.c.b16 %v1507, %v1506
      %v1547 = vpack.c.b16 %v1509, %v1508
      %v1548 = vpack.c.b16 %v1511, %v1510
      %v1549 = vpack.c.b16 %v1513, %v1512
      %v1550 = vpack.c.b16 %v1515, %v1514
      %v1551 = vpack.c.b16 %v1517, %v1516
      %v1552 = vpack.c.b16 %v1519, %v1518
      %v1553 = vpack.c.b16 %v1521, %v1520
      %v1554 = vpack.c.b16 %v1523, %v1522
      %v1555 = vpack.c.b16 %v1525, %v1524
      %v1556 = vpack.c.b16 %v1527, %v1526
      %v1557 = vpack.c.b16 %v1529, %v1528
      %v1558 = vpack.c.b16 %v1531, %v1530
      %v1559 = vpack.c.b16 %v1533, %v1532
      %v1560 = vpack.c.b16 %v1535, %v1534
      %v1561 = vpack.c.b16 %v1537, %v1536
      %1586 = vmatprep.subr.bf16.mxu0 0
      %1587 = vmatpush1.bf16.msra.mxu0 %v1538
      %1588 = vmatprep.subr.bf16.mxu0 0
      %1589 = vmatpush1.bf16.msra.mxu0 %v1539
      %1590 = vmatprep.subr.bf16.mxu0 0
      %1591 = vmatpush1.bf16.msra.mxu0 %v1540
      %1592 = vmatprep.subr.bf16.mxu0 0
      %1593 = vmatpush1.bf16.msra.mxu0 %v1541
      %1594 = vmatprep.subr.bf16.mxu0 0
      %1595 = vmatpush1.bf16.msra.mxu0 %v1542
      %1596 = vmatprep.subr.bf16.mxu0 0
      %1597 = vmatpush1.bf16.msra.mxu0 %v1543
      %1598 = vmatprep.subr.bf16.mxu0 0
      %1599 = vmatpush1.bf16.msra.mxu0 %v1544
      %1600 = vmatprep.subr.bf16.mxu0 0
      %1601 = vmatpush1.bf16.msra.mxu0 %v1545
      %1602 = vmatprep.subr.bf16.mxu0 0
      %1603 = vmatpush1.bf16.msra.mxu0 %v1546
      %1604 = vmatprep.subr.bf16.mxu0 0
      %1605 = vmatpush1.bf16.msra.mxu0 %v1547
      %1606 = vmatprep.subr.bf16.mxu0 0
      %1607 = vmatpush1.bf16.msra.mxu0 %v1548
      %1608 = vmatprep.subr.bf16.mxu0 0
      %1609 = vmatpush1.bf16.msra.mxu0 %v1549
      %1610 = vmatprep.subr.bf16.mxu0 0
      %1611 = vmatpush1.bf16.msra.mxu0 %v1550
      %1612 = vmatprep.subr.bf16.mxu0 0
      %1613 = vmatpush1.bf16.msra.mxu0 %v1551
      %1614 = vmatprep.subr.bf16.mxu0 0
      %1615 = vmatpush1.bf16.msra.mxu0 %v1552
      %1616 = vmatprep.subr.bf16.mxu0 0
      %1617 = vmatpush1.bf16.msra.mxu0 %v1553
      %1618 = vmatprep.mubr.bf16.mxu0 %v1347
      %1619 = vmatmul.mubr.bf16.gmra.mrb[0].mxu0 %v1346
      %v1620 = vpop.f32.mrb[0].mxu0
      %v1621 = vadd.f32 0.0, %v1620
      %v1622 = vpop.f32.mrb[0].mxu0
      %v1623 = vpop.f32.mrb[0].mxu0
      %v1624 = vadd.f32 0.0, %v1623
      %v1625 = vpop.f32.mrb[0].mxu0
      %1626 = vmatprep.mubr.bf16.mxu0 %v1350
      %1627 = vmatmul.mubr.bf16.gmra.mrb[0].mxu0 %v1349
      %v1628 = vpop.f32.mrb[0].mxu0
      %v1629 = vadd.f32 0.0, %v1628
      %v1630 = vpop.f32.mrb[0].mxu0
      %v1631 = vpop.f32.mrb[0].mxu0
      %v1632 = vadd.f32 0.0, %v1631
      %v1633 = vpop.f32.mrb[0].mxu0
      %1634 = vmatprep.mubr.bf16.mxu0 %v1353
      %1635 = vmatmul.mubr.bf16.gmra.mrb[0].mxu0 %v1352
      %v1636 = vpop.f32.mrb[0].mxu0
      %v1637 = vadd.f32 0.0, %v1636
      %v1638 = vpop.f32.mrb[0].mxu0
      %v1639 = vpop.f32.mrb[0].mxu0
      %v1640 = vadd.f32 0.0, %v1639
      %v1641 = vpop.f32.mrb[0].mxu0
      %1642 = vmatprep.mubr.bf16.mxu0 %v1356
      %1643 = vmatmul.mubr.bf16.gmra.mrb[0].mxu0 %v1355
      %v1644 = vpop.f32.mrb[0].mxu0
      %v1645 = vadd.f32 0.0, %v1644
      %v1646 = vpop.f32.mrb[0].mxu0
      %v1647 = vpop.f32.mrb[0].mxu0
      %v1648 = vadd.f32 0.0, %v1647
      %v1649 = vpop.f32.mrb[0].mxu0
      %1650 = vmatprep.mubr.bf16.mxu0 %v1359
      %1651 = vmatmul.mubr.bf16.gmra.mrb[0].mxu0 %v1358
      %v1652 = vpop.f32.mrb[0].mxu0
      %v1653 = vadd.f32 0.0, %v1652
      %v1654 = vpop.f32.mrb[0].mxu0
      %v1655 = vpop.f32.mrb[0].mxu0
      %v1656 = vadd.f32 0.0, %v1655
      %v1657 = vpop.f32.mrb[0].mxu0
      %1658 = vmatprep.mubr.bf16.mxu0 %v1362
      %1659 = vmatmul.mubr.bf16.gmra.mrb[0].mxu0 %v1361
      %v1660 = vpop.f32.mrb[0].mxu0
      %v1661 = vadd.f32 0.0, %v1660
      %v1662 = vpop.f32.mrb[0].mxu0
      %v1663 = vpop.f32.mrb[0].mxu0
      %v1664 = vadd.f32 0.0, %v1663
      %v1665 = vpop.f32.mrb[0].mxu0
      %1666 = vmatprep.mubr.bf16.mxu0 %v1365
      %1667 = vmatmul.mubr.bf16.gmra.mrb[0].mxu0 %v1364
      %v1668 = vpop.f32.mrb[0].mxu0
      %v1669 = vadd.f32 0.0, %v1668
      %v1670 = vpop.f32.mrb[0].mxu0
      %v1671 = vpop.f32.mrb[0].mxu0
      %v1672 = vadd.f32 0.0, %v1671
      %v1673 = vpop.f32.mrb[0].mxu0
      %1674 = vmatprep.mubr.bf16.mxu0 %v1368
      %1675 = vmatmul.mubr.bf16.gmra.mrb[0].mxu0 %v1367
      %v1676 = vpop.f32.mrb[0].mxu0
      %v1677 = vadd.f32 0.0, %v1676
      %v1678 = vpop.f32.mrb[0].mxu0
      %v1679 = vpop.f32.mrb[0].mxu0
      %v1680 = vadd.f32 0.0, %v1679
      %v1681 = vpop.f32.mrb[0].mxu0
      %1682 = vmatprep.mubr.bf16.mxu0 %v1371
      %1683 = vmatmul.mubr.bf16.gmra.mrb[0].mxu0 %v1370
      %v1684 = vpop.f32.mrb[0].mxu0
      %v1685 = vadd.f32 0.0, %v1684
      %v1686 = vpop.f32.mrb[0].mxu0
      %v1687 = vpop.f32.mrb[0].mxu0
      %v1688 = vadd.f32 0.0, %v1687
      %v1689 = vpop.f32.mrb[0].mxu0
      %1690 = vmatprep.mubr.bf16.mxu0 %v1374
      %1691 = vmatmul.mubr.bf16.gmra.mrb[0].mxu0 %v1373
      %v1692 = vpop.f32.mrb[0].mxu0
      %v1693 = vadd.f32 0.0, %v1692
      %v1694 = vpop.f32.mrb[0].mxu0
      %v1695 = vpop.f32.mrb[0].mxu0
      %v1696 = vadd.f32 0.0, %v1695
      %v1697 = vpop.f32.mrb[0].mxu0
      %1698 = vmatprep.mubr.bf16.mxu0 %v1377
      %1699 = vmatmul.mubr.bf16.gmra.mrb[0].mxu0 %v1376
      %v1700 = vpop.f32.mrb[0].mxu0
      %v1701 = vadd.f32 0.0, %v1700
      %v1702 = vpop.f32.mrb[0].mxu0
      %v1703 = vpop.f32.mrb[0].mxu0
      %v1704 = vadd.f32 0.0, %v1703
      %v1705 = vpop.f32.mrb[0].mxu0
      %1706 = vmatprep.mubr.bf16.mxu0 %v1380
      %1707 = vmatmul.mubr.bf16.gmra.mrb[0].mxu0 %v1379
      %v1708 = vpop.f32.mrb[0].mxu0
      %v1709 = vadd.f32 0.0, %v1708
      %v1710 = vpop.f32.mrb[0].mxu0
      %v1711 = vpop.f32.mrb[0].mxu0
      %v1712 = vadd.f32 0.0, %v1711
      %v1713 = vpop.f32.mrb[0].mxu0
      %1714 = vmatprep.mubr.bf16.mxu0 %v1383
      %1715 = vmatmul.mubr.bf16.gmra.mrb[0].mxu0 %v1382
      %v1716 = vpop.f32.mrb[0].mxu0
      %v1717 = vadd.f32 0.0, %v1716
      %v1718 = vpop.f32.mrb[0].mxu0
      %v1719 = vpop.f32.mrb[0].mxu0
      %v1720 = vadd.f32 0.0, %v1719
      %v1721 = vpop.f32.mrb[0].mxu0
      %1722 = vmatprep.mubr.bf16.mxu0 %v1386
      %1723 = vmatmul.mubr.bf16.gmra.mrb[0].mxu0 %v1385
      %v1724 = vpop.f32.mrb[0].mxu0
      %v1725 = vadd.f32 0.0, %v1724
      %v1726 = vpop.f32.mrb[0].mxu0
      %v1727 = vpop.f32.mrb[0].mxu0
      %v1728 = vadd.f32 0.0, %v1727
      %v1729 = vpop.f32.mrb[0].mxu0
      %1730 = vmatprep.mubr.bf16.mxu0 %v1389
      %1731 = vmatmul.mubr.bf16.gmra.mrb[0].mxu0 %v1388
      %v1732 = vpop.f32.mrb[0].mxu0
      %v1733 = vadd.f32 0.0, %v1732
      %v1734 = vpop.f32.mrb[0].mxu0
      %v1735 = vpop.f32.mrb[0].mxu0
      %v1736 = vadd.f32 0.0, %v1735
      %v1737 = vpop.f32.mrb[0].mxu0
      %1738 = vmatprep.mubr.bf16.mxu0 %v1392
      %1739 = vmatmul.mubr.bf16.gmra.mrb[0].mxu0 %v1391
      %v1740 = vpop.f32.mrb[0].mxu0
      %v1741 = vadd.f32 0.0, %v1740
      %v1742 = vpop.f32.mrb[0].mxu0
      %v1743 = vpop.f32.mrb[0].mxu0
      %v1744 = vadd.f32 0.0, %v1743
      %v1745 = vpop.f32.mrb[0].mxu0
      %1746 = vdwg.mxu0
      %1747 = vmatprep.subr.bf16.mxu0 0
      %1748 = vmatpush1.bf16.msra.mxu0 %v1554
      %1749 = vmatprep.subr.bf16.mxu0 0
      %1750 = vmatpush1.bf16.msra.mxu0 %v1555
      %1751 = vmatprep.subr.bf16.mxu0 0
      %1752 = vmatpush1.bf16.msra.mxu0 %v1556
      %1753 = vmatprep.subr.bf16.mxu0 0
      %1754 = vmatpush1.bf16.msra.mxu0 %v1557
      %1755 = vmatprep.subr.bf16.mxu0 0
      %1756 = vmatpush1.bf16.msra.mxu0 %v1558
      %1757 = vmatprep.subr.bf16.mxu0 0
      %1758 = vmatpush1.bf16.msra.mxu0 %v1559
      %1759 = vmatprep.subr.bf16.mxu0 0
      %1760 = vmatpush1.bf16.msra.mxu0 %v1560
      %1761 = vmatprep.subr.bf16.mxu0 0
      %1762 = vmatpush1.bf16.msra.mxu0 %v1561
      %1763 = vmatprep.subr.bf16.mxu0 0
      %1764 = vmatpush1.bf16.msra.mxu0 0
      %1765 = vmatprep.subr.bf16.mxu0 0
      %1766 = vmatpush1.bf16.msra.mxu0 0
      %1767 = vmatprep.subr.bf16.mxu0 0
      %1768 = vmatpush1.bf16.msra.mxu0 0
      %1769 = vmatprep.subr.bf16.mxu0 0
      %1770 = vmatpush1.bf16.msra.mxu0 0
      %1771 = vmatprep.subr.bf16.mxu0 0
      %1772 = vmatpush1.bf16.msra.mxu0 0
      %1773 = vmatprep.subr.bf16.mxu0 0
      %1774 = vmatpush1.bf16.msra.mxu0 0
      %1775 = vmatprep.subr.bf16.mxu0 0
      %1776 = vmatpush1.bf16.msra.mxu0 0
      %1777 = vmatprep.subr.bf16.mxu0 0
      %1778 = vmatpush1.bf16.msra.mxu0 0
      %1779 = vmatprep.mubr.bf16.mxu0 0
      %1780 = vmatmul.mubr.bf16.gmra.mrb[0].mxu0 %v1348
      %v1781 = vpop.f32.mrb[0].mxu0
      %v1782 = vadd.f32 %v1621, %v1781
      %v1783 = vpop.f32.mrb[0].mxu0
      %v1784 = vpop.f32.mrb[0].mxu0
      %v1785 = vadd.f32 %v1624, %v1784
      %v1786 = vpop.f32.mrb[0].mxu0
      %1787 = vmatprep.mubr.bf16.mxu0 0
      %1788 = vmatmul.mubr.bf16.gmra.mrb[0].mxu0 %v1351
      %v1789 = vpop.f32.mrb[0].mxu0
      %v1790 = vadd.f32 %v1629, %v1789
      %v1791 = vpop.f32.mrb[0].mxu0
      %v1792 = vpop.f32.mrb[0].mxu0
      %v1793 = vadd.f32 %v1632, %v1792
      %v1794 = vpop.f32.mrb[0].mxu0
      %1795 = vmatprep.mubr.bf16.mxu0 0
      %1796 = vmatmul.mubr.bf16.gmra.mrb[0].mxu0 %v1354
      %v1797 = vpop.f32.mrb[0].mxu0
      %v1798 = vadd.f32 %v1637, %v1797
      %v1799 = vpop.f32.mrb[0].mxu0
      %v1800 = vpop.f32.mrb[0].mxu0
      %v1801 = vadd.f32 %v1640, %v1800
      %v1802 = vpop.f32.mrb[0].mxu0
      %1803 = vmatprep.mubr.bf16.mxu0 0
      %1804 = vmatmul.mubr.bf16.gmra.mrb[0].mxu0 %v1357
      %v1805 = vpop.f32.mrb[0].mxu0
      %v1806 = vadd.f32 %v1645, %v1805
      %v1807 = vpop.f32.mrb[0].mxu0
      %v1808 = vpop.f32.mrb[0].mxu0
      %v1809 = vadd.f32 %v1648, %v1808
      %v1810 = vpop.f32.mrb[0].mxu0
      %1811 = vmatprep.mubr.bf16.mxu0 0
      %1812 = vmatmul.mubr.bf16.gmra.mrb[0].mxu0 %v1360
      %v1813 = vpop.f32.mrb[0].mxu0
      %v1814 = vadd.f32 %v1653, %v1813
      %v1815 = vpop.f32.mrb[0].mxu0
      %v1816 = vpop.f32.mrb[0].mxu0
      %v1817 = vadd.f32 %v1656, %v1816
      %v1818 = vpop.f32.mrb[0].mxu0
      %1819 = vmatprep.mubr.bf16.mxu0 0
      %1820 = vmatmul.mubr.bf16.gmra.mrb[0].mxu0 %v1363
      %v1821 = vpop.f32.mrb[0].mxu0
      %v1822 = vadd.f32 %v1661, %v1821
      %v1823 = vpop.f32.mrb[0].mxu0
      %v1824 = vpop.f32.mrb[0].mxu0
      %v1825 = vadd.f32 %v1664, %v1824
      %v1826 = vpop.f32.mrb[0].mxu0
      %1827 = vmatprep.mubr.bf16.mxu0 0
      %1828 = vmatmul.mubr.bf16.gmra.mrb[0].mxu0 %v1366
      %v1829 = vpop.f32.mrb[0].mxu0
      %v1830 = vadd.f32 %v1669, %v1829
      %v1831 = vpop.f32.mrb[0].mxu0
      %v1832 = vpop.f32.mrb[0].mxu0
      %v1833 = vadd.f32 %v1672, %v1832
      %v1834 = vpop.f32.mrb[0].mxu0
      %1835 = vmatprep.mubr.bf16.mxu0 0
      %1836 = vmatmul.mubr.bf16.gmra.mrb[0].mxu0 %v1369
      %v1837 = vpop.f32.mrb[0].mxu0
      %v1838 = vadd.f32 %v1677, %v1837
      %v1839 = vpop.f32.mrb[0].mxu0
      %v1840 = vpop.f32.mrb[0].mxu0
      %v1841 = vadd.f32 %v1680, %v1840
      %v1842 = vpop.f32.mrb[0].mxu0
      %1843 = vmatprep.mubr.bf16.mxu0 0
      %1844 = vmatmul.mubr.bf16.gmra.mrb[0].mxu0 %v1372
      %v1845 = vpop.f32.mrb[0].mxu0
      %v1846 = vadd.f32 %v1685, %v1845
      %v1847 = vpop.f32.mrb[0].mxu0
      %v1848 = vpop.f32.mrb[0].mxu0
      %v1849 = vadd.f32 %v1688, %v1848
      %v1850 = vpop.f32.mrb[0].mxu0
      %1851 = vmatprep.mubr.bf16.mxu0 0
      %1852 = vmatmul.mubr.bf16.gmra.mrb[0].mxu0 %v1375
      %v1853 = vpop.f32.mrb[0].mxu0
      %v1854 = vadd.f32 %v1693, %v1853
      %v1855 = vpop.f32.mrb[0].mxu0
      %v1856 = vpop.f32.mrb[0].mxu0
      %v1857 = vadd.f32 %v1696, %v1856
      %v1858 = vpop.f32.mrb[0].mxu0
      %1859 = vmatprep.mubr.bf16.mxu0 0
      %1860 = vmatmul.mubr.bf16.gmra.mrb[0].mxu0 %v1378
      %v1861 = vpop.f32.mrb[0].mxu0
      %v1862 = vadd.f32 %v1701, %v1861
      %v1863 = vpop.f32.mrb[0].mxu0
      %v1864 = vpop.f32.mrb[0].mxu0
      %v1865 = vadd.f32 %v1704, %v1864
      %v1866 = vpop.f32.mrb[0].mxu0
      %1867 = vmatprep.mubr.bf16.mxu0 0
      %1868 = vmatmul.mubr.bf16.gmra.mrb[0].mxu0 %v1381
      %v1869 = vpop.f32.mrb[0].mxu0
      %v1870 = vadd.f32 %v1709, %v1869
      %v1871 = vpop.f32.mrb[0].mxu0
      %v1872 = vpop.f32.mrb[0].mxu0
      %v1873 = vadd.f32 %v1712, %v1872
      %v1874 = vpop.f32.mrb[0].mxu0
      %1875 = vmatprep.mubr.bf16.mxu0 0
      %1876 = vmatmul.mubr.bf16.gmra.mrb[0].mxu0 %v1384
      %v1877 = vpop.f32.mrb[0].mxu0
      %v1878 = vadd.f32 %v1717, %v1877
      %v1879 = vpop.f32.mrb[0].mxu0
      %v1880 = vpop.f32.mrb[0].mxu0
      %v1881 = vadd.f32 %v1720, %v1880
      %v1882 = vpop.f32.mrb[0].mxu0
      %1883 = vmatprep.mubr.bf16.mxu0 0
      %1884 = vmatmul.mubr.bf16.gmra.mrb[0].mxu0 %v1387
      %v1885 = vpop.f32.mrb[0].mxu0
      %v1886 = vadd.f32 %v1725, %v1885
      %v1887 = vpop.f32.mrb[0].mxu0
      %v1888 = vpop.f32.mrb[0].mxu0
      %v1889 = vadd.f32 %v1728, %v1888
      %v1890 = vpop.f32.mrb[0].mxu0
      %1891 = vmatprep.mubr.bf16.mxu0 0
      %1892 = vmatmul.mubr.bf16.gmra.mrb[0].mxu0 %v1390
      %v1893 = vpop.f32.mrb[0].mxu0
      %v1894 = vadd.f32 %v1733, %v1893
      %v1895 = vpop.f32.mrb[0].mxu0
      %v1896 = vpop.f32.mrb[0].mxu0
      %v1897 = vadd.f32 %v1736, %v1896
      %v1898 = vpop.f32.mrb[0].mxu0
      %1899 = vmatprep.mubr.bf16.mxu0 0
      %1900 = vmatmul.mubr.bf16.gmra.mrb[0].mxu0 %v1393
      %v1901 = vpop.f32.mrb[0].mxu0
      %v1902 = vadd.f32 %v1741, %v1901
      %v1903 = vpop.f32.mrb[0].mxu0
      %v1904 = vpop.f32.mrb[0].mxu0
      %v1905 = vadd.f32 %v1744, %v1904
      %v1906 = vpop.f32.mrb[0].mxu0
      %1907 = vdwg.mxu0
      %v1908 = vld [vmem:[#allocation2] sm:$0xff]
      %v1909 = vld [vmem:[#allocation2 + $0x8] sm:$0xff]
      %v1910 = vld [vmem:[#allocation2 + $0x10] sm:$0xff]
      %v1911 = vld [vmem:[#allocation2 + $0x18] sm:$0xff]
      %v1912 = vld [vmem:[#allocation2 + $0x20] sm:$0xff]
      %v1913 = vld [vmem:[#allocation2 + $0x28] sm:$0xff]
      %v1914 = vld [vmem:[#allocation2 + $0x30] sm:$0xff]
      %v1915 = vld [vmem:[#allocation2 + $0x38] sm:$0xff]
      %v1916 = vld [vmem:[#allocation2 + $0x40] sm:$0xff]
      %v1917 = vld [vmem:[#allocation2 + $0x48] sm:$0xff]
      %v1918 = vld [vmem:[#allocation2 + $0x50] sm:$0xff]
      %v1919 = vld [vmem:[#allocation2 + $0x58] sm:$0xff]
      %v1920 = vld [vmem:[#allocation2 + $0x60] sm:$0xff]
      %v1921 = vld [vmem:[#allocation2 + $0x68] sm:$0xff]
      %v1922 = vld [vmem:[#allocation2 + $0x70] sm:$0xff]
      %v1923 = vld [vmem:[#allocation2 + $0x78] sm:$0xff]
      %v1924 = vld [vmem:[#allocation2 + $0x80] sm:$0xff]
      %v1925 = vld [vmem:[#allocation2 + $0x88] sm:$0xff]
      %v1926 = vld [vmem:[#allocation2 + $0x90] sm:$0xff]
      %v1927 = vld [vmem:[#allocation2 + $0x98] sm:$0xff]
      %v1928 = vld [vmem:[#allocation2 + $0xa0] sm:$0xff]
      %v1929 = vld [vmem:[#allocation2 + $0xa8] sm:$0xff]
      %v1930 = vld [vmem:[#allocation2 + $0xb0] sm:$0xff]
      %v1931 = vld [vmem:[#allocation2 + $0xb8] sm:$0xff]
      %v1932 = vld [vmem:[#allocation2 + $0xc0] sm:$0xff]
      %v1933 = vld [vmem:[#allocation2 + $0xc8] sm:$0xff]
      %v1934 = vld [vmem:[#allocation2 + $0xd0] sm:$0xff]
      %v1935 = vld [vmem:[#allocation2 + $0xd8] sm:$0xff]
      %v1936 = vld [vmem:[#allocation2 + $0xe0] sm:$0xff]
      %v1937 = vld [vmem:[#allocation2 + $0xe8] sm:$0xff]
      %v1938 = vld [vmem:[#allocation2 + $0xf0] sm:$0xff]
      %v1939 = vld [vmem:[#allocation2 + $0xf8] sm:$0xff]
      %v1940 = vadd.f32 %v1908, %v1782
      %v1941 = vadd.f32 %v1909, %v1785
      %v1942 = vadd.f32 %v1910, %v1790
      %v1943 = vadd.f32 %v1911, %v1793
      %v1944 = vadd.f32 %v1912, %v1798
      %v1945 = vadd.f32 %v1913, %v1801
      %v1946 = vadd.f32 %v1914, %v1806
      %v1947 = vadd.f32 %v1915, %v1809
      %v1948 = vadd.f32 %v1916, %v1814
      %v1949 = vadd.f32 %v1917, %v1817
      %v1950 = vadd.f32 %v1918, %v1822
      %v1951 = vadd.f32 %v1919, %v1825
      %v1952 = vadd.f32 %v1920, %v1830
      %v1953 = vadd.f32 %v1921, %v1833
      %v1954 = vadd.f32 %v1922, %v1838
      %v1955 = vadd.f32 %v1923, %v1841
      %v1956 = vadd.f32 %v1924, %v1846
      %v1957 = vadd.f32 %v1925, %v1849
      %v1958 = vadd.f32 %v1926, %v1854
      %v1959 = vadd.f32 %v1927, %v1857
      %v1960 = vadd.f32 %v1928, %v1862
      %v1961 = vadd.f32 %v1929, %v1865
      %v1962 = vadd.f32 %v1930, %v1870
      %v1963 = vadd.f32 %v1931, %v1873
      %v1964 = vadd.f32 %v1932, %v1878
      %v1965 = vadd.f32 %v1933, %v1881
      %v1966 = vadd.f32 %v1934, %v1886
      %v1967 = vadd.f32 %v1935, %v1889
      %v1968 = vadd.f32 %v1936, %v1894
      %v1969 = vadd.f32 %v1937, %v1897
      %v1970 = vadd.f32 %v1938, %v1902
      %v1971 = vadd.f32 %v1939, %v1905
      %1972 = vst [vmem:[#allocation2] sm:$0xff] %v1940
      %1973 = vst [vmem:[#allocation2 + $0x8] sm:$0xff] %v1941
      %1974 = vst [vmem:[#allocation2 + $0x10] sm:$0xff] %v1942
      %1975 = vst [vmem:[#allocation2 + $0x18] sm:$0xff] %v1943
      %1976 = vst [vmem:[#allocation2 + $0x20] sm:$0xff] %v1944
      %1977 = vst [vmem:[#allocation2 + $0x28] sm:$0xff] %v1945
      %1978 = vst [vmem:[#allocation2 + $0x30] sm:$0xff] %v1946
      %1979 = vst [vmem:[#allocation2 + $0x38] sm:$0xff] %v1947
      %1980 = vst [vmem:[#allocation2 + $0x40] sm:$0xff] %v1948
      %1981 = vst [vmem:[#allocation2 + $0x48] sm:$0xff] %v1949
      %1982 = vst [vmem:[#allocation2 + $0x50] sm:$0xff] %v1950
      %1983 = vst [vmem:[#allocation2 + $0x58] sm:$0xff] %v1951
      %1984 = vst [vmem:[#allocation2 + $0x60] sm:$0xff] %v1952
      %1985 = vst [vmem:[#allocation2 + $0x68] sm:$0xff] %v1953
      %1986 = vst [vmem:[#allocation2 + $0x70] sm:$0xff] %v1954
      %1987 = vst [vmem:[#allocation2 + $0x78] sm:$0xff] %v1955
      %1988 = vst [vmem:[#allocation2 + $0x80] sm:$0xff] %v1956
      %1989 = vst [vmem:[#allocation2 + $0x88] sm:$0xff] %v1957
      %1990 = vst [vmem:[#allocation2 + $0x90] sm:$0xff] %v1958
      %1991 = vst [vmem:[#allocation2 + $0x98] sm:$0xff] %v1959
      %1992 = vst [vmem:[#allocation2 + $0xa0] sm:$0xff] %v1960
      %1993 = vst [vmem:[#allocation2 + $0xa8] sm:$0xff] %v1961
      %1994 = vst [vmem:[#allocation2 + $0xb0] sm:$0xff] %v1962
      %1995 = vst [vmem:[#allocation2 + $0xb8] sm:$0xff] %v1963
      %1996 = vst [vmem:[#allocation2 + $0xc0] sm:$0xff] %v1964
      %1997 = vst [vmem:[#allocation2 + $0xc8] sm:$0xff] %v1965
      %1998 = vst [vmem:[#allocation2 + $0xd0] sm:$0xff] %v1966
      %1999 = vst [vmem:[#allocation2 + $0xd8] sm:$0xff] %v1967
      %2000 = vst [vmem:[#allocation2 + $0xe0] sm:$0xff] %v1968
      %2001 = vst [vmem:[#allocation2 + $0xe8] sm:$0xff] %v1969
      %2002 = vst [vmem:[#allocation2 + $0xf0] sm:$0xff] %v1970
      %2003 = vst [vmem:[#allocation2 + $0xf8] sm:$0xff] %v1971
      %v2004 = vld [vmem:[%s193 + $0x30] sm:$0xff]
      %v2005 = vld [vmem:[%s193 + $0x38] sm:$0xf]
      %v2006 = vld [vmem:[%s193 + $0x3c] sm:$0xff]
      %v2007 = vld [vmem:[%s193 + $0x44] sm:$0xf]
      %v2008 = vld [vmem:[%s193 + $0x48] sm:$0xff]
      %v2009 = vld [vmem:[%s193 + $0x50] sm:$0xf]
      %v2010 = vld [vmem:[%s193 + $0x54] sm:$0xff]
      %v2011 = vld [vmem:[%s193 + $0x5c] sm:$0xf]
      %v2012 = vld [vmem:[%s193 + $0x60] sm:$0xff]
      %v2013 = vld [vmem:[%s193 + $0x68] sm:$0xf]
      %v2014 = vld [vmem:[%s193 + $0x6c] sm:$0xff]
      %v2015 = vld [vmem:[%s193 + $0x74] sm:$0xf]
      %v2016 = vld [vmem:[%s193 + $0x78] sm:$0xff]
      %v2017 = vld [vmem:[%s193 + $0x80] sm:$0xf]
      %v2018 = vld [vmem:[%s193 + $0x84] sm:$0xff]
      %v2019 = vld [vmem:[%s193 + $0x8c] sm:$0xf]
      %v2020 = vld [vmem:[%s193 + $0x90] sm:$0xff]
      %v2021 = vld [vmem:[%s193 + $0x98] sm:$0xf]
      %v2022 = vld [vmem:[%s193 + $0x9c] sm:$0xff]
      %v2023 = vld [vmem:[%s193 + $0xa4] sm:$0xf]
      %v2024 = vld [vmem:[%s193 + $0xa8] sm:$0xff]
      %v2025 = vld [vmem:[%s193 + $0xb0] sm:$0xf]
      %v2026 = vld [vmem:[%s193 + $0xb4] sm:$0xff]
      %v2027 = vld [vmem:[%s193 + $0xbc] sm:$0xf]
      %v2028 = vld [vmem:[%s193 + $0xc0] sm:$0xff]
      %v2029 = vld [vmem:[%s193 + $0xc8] sm:$0xf]
      %v2030 = vld [vmem:[%s193 + $0xcc] sm:$0xff]
      %v2031 = vld [vmem:[%s193 + $0xd4] sm:$0xf]
      %v2032 = vld [vmem:[%s193 + $0xd8] sm:$0xff]
      %v2033 = vld [vmem:[%s193 + $0xe0] sm:$0xf]
      %v2034 = vld [vmem:[%s193 + $0xe4] sm:$0xff]
      %v2035 = vld [vmem:[%s193 + $0xec] sm:$0xf]
      %v2036 = vld [vmem:[%s193 + $0xf0] sm:$0xff]
      %v2037 = vld [vmem:[%s193 + $0xf8] sm:$0xf]
      %v2038 = vld [vmem:[%s193 + $0xfc] sm:$0xff]
      %v2039 = vld [vmem:[%s193 + $0x104] sm:$0xf]
      %v2040 = vld [vmem:[%s193 + $0x108] sm:$0xff]
      %v2041 = vld [vmem:[%s193 + $0x110] sm:$0xf]
      %v2042 = vld [vmem:[%s193 + $0x114] sm:$0xff]
      %v2043 = vld [vmem:[%s193 + $0x11c] sm:$0xf]
      %v2044 = vld [vmem:[%s193 + $0x120] sm:$0xff]
      %v2045 = vld [vmem:[%s193 + $0x128] sm:$0xf]
      %v2046 = vld [vmem:[%s193 + $0x12c] sm:$0xff]
      %v2047 = vld [vmem:[%s193 + $0x134] sm:$0xf]
      %v2048 = vld [vmem:[%s193 + $0x138] sm:$0xff]
      %v2049 = vld [vmem:[%s193 + $0x140] sm:$0xf]
      %v2050 = vld [vmem:[%s193 + $0x144] sm:$0xff]
      %v2051 = vld [vmem:[%s193 + $0x14c] sm:$0xf]
      %v2052 = vld [vmem:[%s193 + $0x150] sm:$0xff]
      %v2053 = vld [vmem:[%s193 + $0x158] sm:$0xf]
      %v2054 = vld [vmem:[%s193 + $0x15c] sm:$0xff]
      %v2055 = vld [vmem:[%s193 + $0x164] sm:$0xf]
      %v2056 = vld [vmem:[%s193 + $0x168] sm:$0xff]
      %v2057 = vld [vmem:[%s193 + $0x170] sm:$0xf]
      %v2058 = vld [vmem:[%s193 + $0x174] sm:$0xff]
      %v2059 = vld [vmem:[%s193 + $0x17c] sm:$0xf]
      %v2060 = vld [vmem:[%s193 + $0x180] sm:$0xff]
      %v2061 = vld [vmem:[%s193 + $0x188] sm:$0xf]
      %v2062 = vld [vmem:[%s193 + $0x18c] sm:$0xff]
      %v2063 = vld [vmem:[%s193 + $0x194] sm:$0xf]
      %v2064 = vld [vmem:[%s193 + $0x198] sm:$0xff]
      %v2065 = vld [vmem:[%s193 + $0x1a0] sm:$0xf]
      %v2066 = vld [vmem:[%s193 + $0x1a4] sm:$0xff]
      %v2067 = vld [vmem:[%s193 + $0x1ac] sm:$0xf]
      %v2068 = vld [vmem:[%s1 + $0x180] sm:$0xf]
      %v2069 = vld [vmem:[%s1 + $0x184] sm:$0xf]
      %v2070 = vld [vmem:[%s1 + $0x188] sm:$0xf]
      %v2071 = vld [vmem:[%s1 + $0x18c] sm:$0xf]
      %v2072 = vld [vmem:[%s1 + $0x190] sm:$0xf]
      %v2073 = vld [vmem:[%s1 + $0x194] sm:$0xf]
      %v2074 = vld [vmem:[%s1 + $0x198] sm:$0xf]
      %v2075 = vld [vmem:[%s1 + $0x19c] sm:$0xf]
      %v2076 = vld [vmem:[%s1 + $0x1a0] sm:$0xf]
      %v2077 = vld [vmem:[%s1 + $0x1a4] sm:$0xf]
      %v2078 = vld [vmem:[%s1 + $0x1a8] sm:$0xf]
      %v2079 = vld [vmem:[%s1 + $0x1ac] sm:$0xf]
      %v2080 = vld [vmem:[%s1 + $0x1b0] sm:$0xf]
      %v2081 = vld [vmem:[%s1 + $0x1b4] sm:$0xf]
      %v2082 = vld [vmem:[%s1 + $0x1b8] sm:$0xf]
      %v2083 = vld [vmem:[%s1 + $0x1bc] sm:$0xf]
      %v2084 = vld [vmem:[%s1 + $0x1c0] sm:$0xf]
      %v2085 = vld [vmem:[%s1 + $0x1c4] sm:$0xf]
      %v2086 = vld [vmem:[%s1 + $0x1c8] sm:$0xf]
      %v2087 = vld [vmem:[%s1 + $0x1cc] sm:$0xf]
      %v2088 = vld [vmem:[%s1 + $0x1d0] sm:$0xf]
      %v2089 = vld [vmem:[%s1 + $0x1d4] sm:$0xf]
      %v2090 = vld [vmem:[%s1 + $0x1d8] sm:$0xf]
      %v2091 = vld [vmem:[%s1 + $0x1dc] sm:$0xf]
      %v2092 = vld [vmem:[%s1 + $0x1e0] sm:$0xf]
      %v2093 = vld [vmem:[%s1 + $0x1e4] sm:$0xf]
      %v2094 = vld [vmem:[%s1 + $0x1e8] sm:$0xf]
      %v2095 = vld [vmem:[%s1 + $0x1ec] sm:$0xf]
      %v2096 = vld [vmem:[%s1 + $0x1f0] sm:$0xf]
      %v2097 = vld [vmem:[%s1 + $0x1f4] sm:$0xf]
      %v2098 = vld [vmem:[%s1 + $0x1f8] sm:$0xf]
      %v2099 = vld [vmem:[%s1 + $0x1fc] sm:$0xf]
      %v2100 = vld [vmem:[%s1 + $0x200] sm:$0xf]
      %v2101 = vld [vmem:[%s1 + $0x204] sm:$0xf]
      %v2102 = vld [vmem:[%s1 + $0x208] sm:$0xf]
      %v2103 = vld [vmem:[%s1 + $0x20c] sm:$0xf]
      %v2104 = vld [vmem:[%s1 + $0x210] sm:$0xf]
      %v2105 = vld [vmem:[%s1 + $0x214] sm:$0xf]
      %v2106 = vld [vmem:[%s1 + $0x218] sm:$0xf]
      %v2107 = vld [vmem:[%s1 + $0x21c] sm:$0xf]
      %v2108 = vld [vmem:[%s1 + $0x220] sm:$0xf]
      %v2109 = vld [vmem:[%s1 + $0x224] sm:$0xf]
      %v2110 = vld [vmem:[%s1 + $0x228] sm:$0xf]
      %v2111 = vld [vmem:[%s1 + $0x22c] sm:$0xf]
      %v2112 = vld [vmem:[%s1 + $0x230] sm:$0xf]
      %v2113 = vld [vmem:[%s1 + $0x234] sm:$0xf]
      %v2114 = vld [vmem:[%s1 + $0x238] sm:$0xf]
      %v2115 = vld [vmem:[%s1 + $0x23c] sm:$0xf]
      %v2180 = vunpack.c.l.b16 %v2004
      %v2181 = vunpack.c.h.b16 %v2004
      %v2182 = vunpack.c.l.b16 %v2005
      %v2183 = vunpack.c.l.b16 %v2006
      %v2184 = vunpack.c.h.b16 %v2006
      %v2185 = vunpack.c.l.b16 %v2007
      %v2186 = vunpack.c.l.b16 %v2008
      %v2187 = vunpack.c.h.b16 %v2008
      %v2188 = vunpack.c.l.b16 %v2009
      %v2189 = vunpack.c.l.b16 %v2010
      %v2190 = vunpack.c.h.b16 %v2010
      %v2191 = vunpack.c.l.b16 %v2011
      %v2192 = vunpack.c.l.b16 %v2012
      %v2193 = vunpack.c.h.b16 %v2012
      %v2194 = vunpack.c.l.b16 %v2013
      %v2195 = vunpack.c.l.b16 %v2014
      %v2196 = vunpack.c.h.b16 %v2014
      %v2197 = vunpack.c.l.b16 %v2015
      %v2198 = vunpack.c.l.b16 %v2016
      %v2199 = vunpack.c.h.b16 %v2016
      %v2200 = vunpack.c.l.b16 %v2017
      %v2201 = vunpack.c.l.b16 %v2018
      %v2202 = vunpack.c.h.b16 %v2018
      %v2203 = vunpack.c.l.b16 %v2019
      %v2204 = vunpack.c.l.b16 %v2020
      %v2205 = vunpack.c.h.b16 %v2020
      %v2206 = vunpack.c.l.b16 %v2021
      %v2207 = vunpack.c.l.b16 %v2022
      %v2208 = vunpack.c.h.b16 %v2022
      %v2209 = vunpack.c.l.b16 %v2023
      %v2210 = vunpack.c.l.b16 %v2024
      %v2211 = vunpack.c.h.b16 %v2024
      %v2212 = vunpack.c.l.b16 %v2025
      %v2213 = vunpack.c.l.b16 %v2026
      %v2214 = vunpack.c.h.b16 %v2026
      %v2215 = vunpack.c.l.b16 %v2027
      %v2216 = vunpack.c.l.b16 %v2028
      %v2217 = vunpack.c.h.b16 %v2028
      %v2218 = vunpack.c.l.b16 %v2029
      %v2219 = vunpack.c.l.b16 %v2030
      %v2220 = vunpack.c.h.b16 %v2030
      %v2221 = vunpack.c.l.b16 %v2031
      %v2222 = vunpack.c.l.b16 %v2032
      %v2223 = vunpack.c.h.b16 %v2032
      %v2224 = vunpack.c.l.b16 %v2033
      %v2225 = vunpack.c.l.b16 %v2034
      %v2226 = vunpack.c.h.b16 %v2034
      %v2227 = vunpack.c.l.b16 %v2035
      %v2228 = vunpack.c.l.b16 %v2036
      %v2229 = vunpack.c.h.b16 %v2036
      %v2230 = vunpack.c.l.b16 %v2037
      %v2231 = vunpack.c.l.b16 %v2038
      %v2232 = vunpack.c.h.b16 %v2038
      %v2233 = vunpack.c.l.b16 %v2039
      %v2234 = vunpack.c.l.b16 %v2040
      %v2235 = vunpack.c.h.b16 %v2040
      %v2236 = vunpack.c.l.b16 %v2041
      %v2237 = vunpack.c.l.b16 %v2042
      %v2238 = vunpack.c.h.b16 %v2042
      %v2239 = vunpack.c.l.b16 %v2043
      %v2240 = vunpack.c.l.b16 %v2044
      %v2241 = vunpack.c.h.b16 %v2044
      %v2242 = vunpack.c.l.b16 %v2045
      %v2243 = vunpack.c.l.b16 %v2046
      %v2244 = vunpack.c.h.b16 %v2046
      %v2245 = vunpack.c.l.b16 %v2047
      %v2246 = vunpack.c.l.b16 %v2048
      %v2247 = vunpack.c.h.b16 %v2048
      %v2248 = vunpack.c.l.b16 %v2049
      %v2249 = vunpack.c.l.b16 %v2050
      %v2250 = vunpack.c.h.b16 %v2050
      %v2251 = vunpack.c.l.b16 %v2051
      %v2252 = vunpack.c.l.b16 %v2052
      %v2253 = vunpack.c.h.b16 %v2052
      %v2254 = vunpack.c.l.b16 %v2053
      %v2255 = vunpack.c.l.b16 %v2054
      %v2256 = vunpack.c.h.b16 %v2054
      %v2257 = vunpack.c.l.b16 %v2055
      %v2258 = vunpack.c.l.b16 %v2056
      %v2259 = vunpack.c.h.b16 %v2056
      %v2260 = vunpack.c.l.b16 %v2057
      %v2261 = vunpack.c.l.b16 %v2058
      %v2262 = vunpack.c.h.b16 %v2058
      %v2263 = vunpack.c.l.b16 %v2059
      %v2264 = vunpack.c.l.b16 %v2060
      %v2265 = vunpack.c.h.b16 %v2060
      %v2266 = vunpack.c.l.b16 %v2061
      %v2267 = vunpack.c.l.b16 %v2062
      %v2268 = vunpack.c.h.b16 %v2062
      %v2269 = vunpack.c.l.b16 %v2063
      %v2270 = vunpack.c.l.b16 %v2064
      %v2271 = vunpack.c.h.b16 %v2064
      %v2272 = vunpack.c.l.b16 %v2065
      %v2273 = vunpack.c.l.b16 %v2066
      %v2274 = vunpack.c.h.b16 %v2066
      %v2275 = vunpack.c.l.b16 %v2067
      %v2276 = vpack.c.b16 %v2183, %v2180
      %v2277 = vpack.c.b16 %v2184, %v2181
      %v2278 = vpack.c.b16 %v2185, %v2182
      %v2279 = vpack.c.b16 %v2189, %v2186
      %v2280 = vpack.c.b16 %v2190, %v2187
      %v2281 = vpack.c.b16 %v2191, %v2188
      %v2282 = vpack.c.b16 %v2195, %v2192
      %v2283 = vpack.c.b16 %v2196, %v2193
      %v2284 = vpack.c.b16 %v2197, %v2194
      %v2285 = vpack.c.b16 %v2201, %v2198
      %v2286 = vpack.c.b16 %v2202, %v2199
      %v2287 = vpack.c.b16 %v2203, %v2200
      %v2288 = vpack.c.b16 %v2207, %v2204
      %v2289 = vpack.c.b16 %v2208, %v2205
      %v2290 = vpack.c.b16 %v2209, %v2206
      %v2291 = vpack.c.b16 %v2213, %v2210
      %v2292 = vpack.c.b16 %v2214, %v2211
      %v2293 = vpack.c.b16 %v2215, %v2212
      %v2294 = vpack.c.b16 %v2219, %v2216
      %v2295 = vpack.c.b16 %v2220, %v2217
      %v2296 = vpack.c.b16 %v2221, %v2218
      %v2297 = vpack.c.b16 %v2225, %v2222
      %v2298 = vpack.c.b16 %v2226, %v2223
      %v2299 = vpack.c.b16 %v2227, %v2224
      %v2300 = vpack.c.b16 %v2231, %v2228
      %v2301 = vpack.c.b16 %v2232, %v2229
      %v2302 = vpack.c.b16 %v2233, %v2230
      %v2303 = vpack.c.b16 %v2237, %v2234
      %v2304 = vpack.c.b16 %v2238, %v2235
      %v2305 = vpack.c.b16 %v2239, %v2236
      %v2306 = vpack.c.b16 %v2243, %v2240
      %v2307 = vpack.c.b16 %v2244, %v2241
      %v2308 = vpack.c.b16 %v2245, %v2242
      %v2309 = vpack.c.b16 %v2249, %v2246
      %v2310 = vpack.c.b16 %v2250, %v2247
      %v2311 = vpack.c.b16 %v2251, %v2248
      %v2312 = vpack.c.b16 %v2255, %v2252
      %v2313 = vpack.c.b16 %v2256, %v2253
      %v2314 = vpack.c.b16 %v2257, %v2254
      %v2315 = vpack.c.b16 %v2261, %v2258
      %v2316 = vpack.c.b16 %v2262, %v2259
      %v2317 = vpack.c.b16 %v2263, %v2260
      %v2318 = vpack.c.b16 %v2267, %v2264
      %v2319 = vpack.c.b16 %v2268, %v2265
      %v2320 = vpack.c.b16 %v2269, %v2266
      %v2321 = vpack.c.b16 %v2273, %v2270
      %v2322 = vpack.c.b16 %v2274, %v2271
      %v2323 = vpack.c.b16 %v2275, %v2272
      %v2420 = vunpack.c.l.b16 %v2068
      %v2421 = vunpack.c.l.b16 %v2069
      %v2422 = vunpack.c.l.b16 %v2070
      %v2423 = vunpack.c.l.b16 %v2071
      %v2424 = vunpack.c.l.b16 %v2072
      %v2425 = vunpack.c.l.b16 %v2073
      %v2426 = vunpack.c.l.b16 %v2074
      %v2427 = vunpack.c.l.b16 %v2075
      %v2428 = vunpack.c.l.b16 %v2076
      %v2429 = vunpack.c.l.b16 %v2077
      %v2430 = vunpack.c.l.b16 %v2078
      %v2431 = vunpack.c.l.b16 %v2079
      %v2432 = vunpack.c.l.b16 %v2080
      %v2433 = vunpack.c.l.b16 %v2081
      %v2434 = vunpack.c.l.b16 %v2082
      %v2435 = vunpack.c.l.b16 %v2083
      %v2436 = vunpack.c.l.b16 %v2084
      %v2437 = vunpack.c.l.b16 %v2085
      %v2438 = vunpack.c.l.b16 %v2086
      %v2439 = vunpack.c.l.b16 %v2087
      %v2440 = vunpack.c.l.b16 %v2088
      %v2441 = vunpack.c.l.b16 %v2089
      %v2442 = vunpack.c.l.b16 %v2090
      %v2443 = vunpack.c.l.b16 %v2091
      %v2444 = vunpack.c.l.b16 %v2092
      %v2445 = vunpack.c.l.b16 %v2093
      %v2446 = vunpack.c.l.b16 %v2094
      %v2447 = vunpack.c.l.b16 %v2095
      %v2448 = vunpack.c.l.b16 %v2096
      %v2449 = vunpack.c.l.b16 %v2097
      %v2450 = vunpack.c.l.b16 %v2098
      %v2451 = vunpack.c.l.b16 %v2099
      %v2452 = vunpack.c.l.b16 %v2100
      %v2453 = vunpack.c.l.b16 %v2101
      %v2454 = vunpack.c.l.b16 %v2102
      %v2455 = vunpack.c.l.b16 %v2103
      %v2456 = vunpack.c.l.b16 %v2104
      %v2457 = vunpack.c.l.b16 %v2105
      %v2458 = vunpack.c.l.b16 %v2106
      %v2459 = vunpack.c.l.b16 %v2107
      %v2460 = vunpack.c.l.b16 %v2108
      %v2461 = vunpack.c.l.b16 %v2109
      %v2462 = vunpack.c.l.b16 %v2110
      %v2463 = vunpack.c.l.b16 %v2111
      %v2464 = vunpack.c.l.b16 %v2112
      %v2465 = vunpack.c.l.b16 %v2113
      %v2466 = vunpack.c.l.b16 %v2114
      %v2467 = vunpack.c.l.b16 %v2115
      %v2468 = vpack.c.b16 %v2421, %v2420
      %v2469 = vpack.c.b16 %v2423, %v2422
      %v2470 = vpack.c.b16 %v2425, %v2424
      %v2471 = vpack.c.b16 %v2427, %v2426
      %v2472 = vpack.c.b16 %v2429, %v2428
      %v2473 = vpack.c.b16 %v2431, %v2430
      %v2474 = vpack.c.b16 %v2433, %v2432
      %v2475 = vpack.c.b16 %v2435, %v2434
      %v2476 = vpack.c.b16 %v2437, %v2436
      %v2477 = vpack.c.b16 %v2439, %v2438
      %v2478 = vpack.c.b16 %v2441, %v2440
      %v2479 = vpack.c.b16 %v2443, %v2442
      %v2480 = vpack.c.b16 %v2445, %v2444
      %v2481 = vpack.c.b16 %v2447, %v2446
      %v2482 = vpack.c.b16 %v2449, %v2448
      %v2483 = vpack.c.b16 %v2451, %v2450
      %v2484 = vpack.c.b16 %v2453, %v2452
      %v2485 = vpack.c.b16 %v2455, %v2454
      %v2486 = vpack.c.b16 %v2457, %v2456
      %v2487 = vpack.c.b16 %v2459, %v2458
      %v2488 = vpack.c.b16 %v2461, %v2460
      %v2489 = vpack.c.b16 %v2463, %v2462
      %v2490 = vpack.c.b16 %v2465, %v2464
      %v2491 = vpack.c.b16 %v2467, %v2466
      %2516 = vmatprep.subr.bf16.mxu0 0
      %2517 = vmatpush1.bf16.msra.mxu0 %v2468
      %2518 = vmatprep.subr.bf16.mxu0 0
      %2519 = vmatpush1.bf16.msra.mxu0 %v2469
      %2520 = vmatprep.subr.bf16.mxu0 0
      %2521 = vmatpush1.bf16.msra.mxu0 %v2470
      %2522 = vmatprep.subr.bf16.mxu0 0
      %2523 = vmatpush1.bf16.msra.mxu0 %v2471
      %2524 = vmatprep.subr.bf16.mxu0 0
      %2525 = vmatpush1.bf16.msra.mxu0 %v2472
      %2526 = vmatprep.subr.bf16.mxu0 0
      %2527 = vmatpush1.bf16.msra.mxu0 %v2473
      %2528 = vmatprep.subr.bf16.mxu0 0
      %2529 = vmatpush1.bf16.msra.mxu0 %v2474
      %2530 = vmatprep.subr.bf16.mxu0 0
      %2531 = vmatpush1.bf16.msra.mxu0 %v2475
      %2532 = vmatprep.subr.bf16.mxu0 0
      %2533 = vmatpush1.bf16.msra.mxu0 %v2476
      %2534 = vmatprep.subr.bf16.mxu0 0
      %2535 = vmatpush1.bf16.msra.mxu0 %v2477
      %2536 = vmatprep.subr.bf16.mxu0 0
      %2537 = vmatpush1.bf16.msra.mxu0 %v2478
      %2538 = vmatprep.subr.bf16.mxu0 0
      %2539 = vmatpush1.bf16.msra.mxu0 %v2479
      %2540 = vmatprep.subr.bf16.mxu0 0
      %2541 = vmatpush1.bf16.msra.mxu0 %v2480
      %2542 = vmatprep.subr.bf16.mxu0 0
      %2543 = vmatpush1.bf16.msra.mxu0 %v2481
      %2544 = vmatprep.subr.bf16.mxu0 0
      %2545 = vmatpush1.bf16.msra.mxu0 %v2482
      %2546 = vmatprep.subr.bf16.mxu0 0
      %2547 = vmatpush1.bf16.msra.mxu0 %v2483
      %2548 = vmatprep.mubr.bf16.mxu0 %v2277
      %2549 = vmatmul.mubr.bf16.gmra.mrb[0].mxu0 %v2276
      %v2550 = vpop.f32.mrb[0].mxu0
      %v2551 = vadd.f32 0.0, %v2550
      %v2552 = vpop.f32.mrb[0].mxu0
      %v2553 = vpop.f32.mrb[0].mxu0
      %v2554 = vadd.f32 0.0, %v2553
      %v2555 = vpop.f32.mrb[0].mxu0
      %2556 = vmatprep.mubr.bf16.mxu0 %v2280
      %2557 = vmatmul.mubr.bf16.gmra.mrb[0].mxu0 %v2279
      %v2558 = vpop.f32.mrb[0].mxu0
      %v2559 = vadd.f32 0.0, %v2558
      %v2560 = vpop.f32.mrb[0].mxu0
      %v2561 = vpop.f32.mrb[0].mxu0
      %v2562 = vadd.f32 0.0, %v2561
      %v2563 = vpop.f32.mrb[0].mxu0
      %2564 = vmatprep.mubr.bf16.mxu0 %v2283
      %2565 = vmatmul.mubr.bf16.gmra.mrb[0].mxu0 %v2282
      %v2566 = vpop.f32.mrb[0].mxu0
      %v2567 = vadd.f32 0.0, %v2566
      %v2568 = vpop.f32.mrb[0].mxu0
      %v2569 = vpop.f32.mrb[0].mxu0
      %v2570 = vadd.f32 0.0, %v2569
      %v2571 = vpop.f32.mrb[0].mxu0
      %2572 = vmatprep.mubr.bf16.mxu0 %v2286
      %2573 = vmatmul.mubr.bf16.gmra.mrb[0].mxu0 %v2285
      %v2574 = vpop.f32.mrb[0].mxu0
      %v2575 = vadd.f32 0.0, %v2574
      %v2576 = vpop.f32.mrb[0].mxu0
      %v2577 = vpop.f32.mrb[0].mxu0
      %v2578 = vadd.f32 0.0, %v2577
      %v2579 = vpop.f32.mrb[0].mxu0
      %2580 = vmatprep.mubr.bf16.mxu0 %v2289
      %2581 = vmatmul.mubr.bf16.gmra.mrb[0].mxu0 %v2288
      %v2582 = vpop.f32.mrb[0].mxu0
      %v2583 = vadd.f32 0.0, %v2582
      %v2584 = vpop.f32.mrb[0].mxu0
      %v2585 = vpop.f32.mrb[0].mxu0
      %v2586 = vadd.f32 0.0, %v2585
      %v2587 = vpop.f32.mrb[0].mxu0
      %2588 = vmatprep.mubr.bf16.mxu0 %v2292
      %2589 = vmatmul.mubr.bf16.gmra.mrb[0].mxu0 %v2291
      %v2590 = vpop.f32.mrb[0].mxu0
      %v2591 = vadd.f32 0.0, %v2590
      %v2592 = vpop.f32.mrb[0].mxu0
      %v2593 = vpop.f32.mrb[0].mxu0
      %v2594 = vadd.f32 0.0, %v2593
      %v2595 = vpop.f32.mrb[0].mxu0
      %2596 = vmatprep.mubr.bf16.mxu0 %v2295
      %2597 = vmatmul.mubr.bf16.gmra.mrb[0].mxu0 %v2294
      %v2598 = vpop.f32.mrb[0].mxu0
      %v2599 = vadd.f32 0.0, %v2598
      %v2600 = vpop.f32.mrb[0].mxu0
      %v2601 = vpop.f32.mrb[0].mxu0
      %v2602 = vadd.f32 0.0, %v2601
      %v2603 = vpop.f32.mrb[0].mxu0
      %2604 = vmatprep.mubr.bf16.mxu0 %v2298
      %2605 = vmatmul.mubr.bf16.gmra.mrb[0].mxu0 %v2297
      %v2606 = vpop.f32.mrb[0].mxu0
      %v2607 = vadd.f32 0.0, %v2606
      %v2608 = vpop.f32.mrb[0].mxu0
      %v2609 = vpop.f32.mrb[0].mxu0
      %v2610 = vadd.f32 0.0, %v2609
      %v2611 = vpop.f32.mrb[0].mxu0
      %2612 = vmatprep.mubr.bf16.mxu0 %v2301
      %2613 = vmatmul.mubr.bf16.gmra.mrb[0].mxu0 %v2300
      %v2614 = vpop.f32.mrb[0].mxu0
      %v2615 = vadd.f32 0.0, %v2614
      %v2616 = vpop.f32.mrb[0].mxu0
      %v2617 = vpop.f32.mrb[0].mxu0
      %v2618 = vadd.f32 0.0, %v2617
      %v2619 = vpop.f32.mrb[0].mxu0
      %2620 = vmatprep.mubr.bf16.mxu0 %v2304
      %2621 = vmatmul.mubr.bf16.gmra.mrb[0].mxu0 %v2303
      %v2622 = vpop.f32.mrb[0].mxu0
      %v2623 = vadd.f32 0.0, %v2622
      %v2624 = vpop.f32.mrb[0].mxu0
      %v2625 = vpop.f32.mrb[0].mxu0
      %v2626 = vadd.f32 0.0, %v2625
      %v2627 = vpop.f32.mrb[0].mxu0
      %2628 = vmatprep.mubr.bf16.mxu0 %v2307
      %2629 = vmatmul.mubr.bf16.gmra.mrb[0].mxu0 %v2306
      %v2630 = vpop.f32.mrb[0].mxu0
      %v2631 = vadd.f32 0.0, %v2630
      %v2632 = vpop.f32.mrb[0].mxu0
      %v2633 = vpop.f32.mrb[0].mxu0
      %v2634 = vadd.f32 0.0, %v2633
      %v2635 = vpop.f32.mrb[0].mxu0
      %2636 = vmatprep.mubr.bf16.mxu0 %v2310
      %2637 = vmatmul.mubr.bf16.gmra.mrb[0].mxu0 %v2309
      %v2638 = vpop.f32.mrb[0].mxu0
      %v2639 = vadd.f32 0.0, %v2638
      %v2640 = vpop.f32.mrb[0].mxu0
      %v2641 = vpop.f32.mrb[0].mxu0
      %v2642 = vadd.f32 0.0, %v2641
      %v2643 = vpop.f32.mrb[0].mxu0
      %2644 = vmatprep.mubr.bf16.mxu0 %v2313
      %2645 = vmatmul.mubr.bf16.gmra.mrb[0].mxu0 %v2312
      %v2646 = vpop.f32.mrb[0].mxu0
      %v2647 = vadd.f32 0.0, %v2646
      %v2648 = vpop.f32.mrb[0].mxu0
      %v2649 = vpop.f32.mrb[0].mxu0
      %v2650 = vadd.f32 0.0, %v2649
      %v2651 = vpop.f32.mrb[0].mxu0
      %2652 = vmatprep.mubr.bf16.mxu0 %v2316
      %2653 = vmatmul.mubr.bf16.gmra.mrb[0].mxu0 %v2315
      %v2654 = vpop.f32.mrb[0].mxu0
      %v2655 = vadd.f32 0.0, %v2654
      %v2656 = vpop.f32.mrb[0].mxu0
      %v2657 = vpop.f32.mrb[0].mxu0
      %v2658 = vadd.f32 0.0, %v2657
      %v2659 = vpop.f32.mrb[0].mxu0
      %2660 = vmatprep.mubr.bf16.mxu0 %v2319
      %2661 = vmatmul.mubr.bf16.gmra.mrb[0].mxu0 %v2318
      %v2662 = vpop.f32.mrb[0].mxu0
      %v2663 = vadd.f32 0.0, %v2662
      %v2664 = vpop.f32.mrb[0].mxu0
      %v2665 = vpop.f32.mrb[0].mxu0
      %v2666 = vadd.f32 0.0, %v2665
      %v2667 = vpop.f32.mrb[0].mxu0
      %2668 = vmatprep.mubr.bf16.mxu0 %v2322
      %2669 = vmatmul.mubr.bf16.gmra.mrb[0].mxu0 %v2321
      %v2670 = vpop.f32.mrb[0].mxu0
      %v2671 = vadd.f32 0.0, %v2670
      %v2672 = vpop.f32.mrb[0].mxu0
      %v2673 = vpop.f32.mrb[0].mxu0
      %v2674 = vadd.f32 0.0, %v2673
      %v2675 = vpop.f32.mrb[0].mxu0
      %2676 = vdwg.mxu0
      %2677 = vmatprep.subr.bf16.mxu0 0
      %2678 = vmatpush1.bf16.msra.mxu0 %v2484
      %2679 = vmatprep.subr.bf16.mxu0 0
      %2680 = vmatpush1.bf16.msra.mxu0 %v2485
      %2681 = vmatprep.subr.bf16.mxu0 0
      %2682 = vmatpush1.bf16.msra.mxu0 %v2486
      %2683 = vmatprep.subr.bf16.mxu0 0
      %2684 = vmatpush1.bf16.msra.mxu0 %v2487
      %2685 = vmatprep.subr.bf16.mxu0 0
      %2686 = vmatpush1.bf16.msra.mxu0 %v2488
      %2687 = vmatprep.subr.bf16.mxu0 0
      %2688 = vmatpush1.bf16.msra.mxu0 %v2489
      %2689 = vmatprep.subr.bf16.mxu0 0
      %2690 = vmatpush1.bf16.msra.mxu0 %v2490
      %2691 = vmatprep.subr.bf16.mxu0 0
      %2692 = vmatpush1.bf16.msra.mxu0 %v2491
      %2693 = vmatprep.subr.bf16.mxu0 0
      %2694 = vmatpush1.bf16.msra.mxu0 0
      %2695 = vmatprep.subr.bf16.mxu0 0
      %2696 = vmatpush1.bf16.msra.mxu0 0
      %2697 = vmatprep.subr.bf16.mxu0 0
      %2698 = vmatpush1.bf16.msra.mxu0 0
      %2699 = vmatprep.subr.bf16.mxu0 0
      %2700 = vmatpush1.bf16.msra.mxu0 0
      %2701 = vmatprep.subr.bf16.mxu0 0
      %2702 = vmatpush1.bf16.msra.mxu0 0
      %2703 = vmatprep.subr.bf16.mxu0 0
      %2704 = vmatpush1.bf16.msra.mxu0 0
      %2705 = vmatprep.subr.bf16.mxu0 0
      %2706 = vmatpush1.bf16.msra.mxu0 0
      %2707 = vmatprep.subr.bf16.mxu0 0
      %2708 = vmatpush1.bf16.msra.mxu0 0
      %2709 = vmatprep.mubr.bf16.mxu0 0
      %2710 = vmatmul.mubr.bf16.gmra.mrb[0].mxu0 %v2278
      %v2711 = vpop.f32.mrb[0].mxu0
      %v2712 = vadd.f32 %v2551, %v2711
      %v2713 = vpop.f32.mrb[0].mxu0
      %v2714 = vpop.f32.mrb[0].mxu0
      %v2715 = vadd.f32 %v2554, %v2714
      %v2716 = vpop.f32.mrb[0].mxu0
      %2717 = vmatprep.mubr.bf16.mxu0 0
      %2718 = vmatmul.mubr.bf16.gmra.mrb[0].mxu0 %v2281
      %v2719 = vpop.f32.mrb[0].mxu0
      %v2720 = vadd.f32 %v2559, %v2719
      %v2721 = vpop.f32.mrb[0].mxu0
      %v2722 = vpop.f32.mrb[0].mxu0
      %v2723 = vadd.f32 %v2562, %v2722
      %v2724 = vpop.f32.mrb[0].mxu0
      %2725 = vmatprep.mubr.bf16.mxu0 0
      %2726 = vmatmul.mubr.bf16.gmra.mrb[0].mxu0 %v2284
      %v2727 = vpop.f32.mrb[0].mxu0
      %v2728 = vadd.f32 %v2567, %v2727
      %v2729 = vpop.f32.mrb[0].mxu0
      %v2730 = vpop.f32.mrb[0].mxu0
      %v2731 = vadd.f32 %v2570, %v2730
      %v2732 = vpop.f32.mrb[0].mxu0
      %2733 = vmatprep.mubr.bf16.mxu0 0
      %2734 = vmatmul.mubr.bf16.gmra.mrb[0].mxu0 %v2287
      %v2735 = vpop.f32.mrb[0].mxu0
      %v2736 = vadd.f32 %v2575, %v2735
      %v2737 = vpop.f32.mrb[0].mxu0
      %v2738 = vpop.f32.mrb[0].mxu0
      %v2739 = vadd.f32 %v2578, %v2738
      %v2740 = vpop.f32.mrb[0].mxu0
      %2741 = vmatprep.mubr.bf16.mxu0 0
      %2742 = vmatmul.mubr.bf16.gmra.mrb[0].mxu0 %v2290
      %v2743 = vpop.f32.mrb[0].mxu0
      %v2744 = vadd.f32 %v2583, %v2743
      %v2745 = vpop.f32.mrb[0].mxu0
      %v2746 = vpop.f32.mrb[0].mxu0
      %v2747 = vadd.f32 %v2586, %v2746
      %v2748 = vpop.f32.mrb[0].mxu0
      %2749 = vmatprep.mubr.bf16.mxu0 0
      %2750 = vmatmul.mubr.bf16.gmra.mrb[0].mxu0 %v2293
      %v2751 = vpop.f32.mrb[0].mxu0
      %v2752 = vadd.f32 %v2591, %v2751
      %v2753 = vpop.f32.mrb[0].mxu0
      %v2754 = vpop.f32.mrb[0].mxu0
      %v2755 = vadd.f32 %v2594, %v2754
      %v2756 = vpop.f32.mrb[0].mxu0
      %2757 = vmatprep.mubr.bf16.mxu0 0
      %2758 = vmatmul.mubr.bf16.gmra.mrb[0].mxu0 %v2296
      %v2759 = vpop.f32.mrb[0].mxu0
      %v2760 = vadd.f32 %v2599, %v2759
      %v2761 = vpop.f32.mrb[0].mxu0
      %v2762 = vpop.f32.mrb[0].mxu0
      %v2763 = vadd.f32 %v2602, %v2762
      %v2764 = vpop.f32.mrb[0].mxu0
      %2765 = vmatprep.mubr.bf16.mxu0 0
      %2766 = vmatmul.mubr.bf16.gmra.mrb[0].mxu0 %v2299
      %v2767 = vpop.f32.mrb[0].mxu0
      %v2768 = vadd.f32 %v2607, %v2767
      %v2769 = vpop.f32.mrb[0].mxu0
      %v2770 = vpop.f32.mrb[0].mxu0
      %v2771 = vadd.f32 %v2610, %v2770
      %v2772 = vpop.f32.mrb[0].mxu0
      %2773 = vmatprep.mubr.bf16.mxu0 0
      %2774 = vmatmul.mubr.bf16.gmra.mrb[0].mxu0 %v2302
      %v2775 = vpop.f32.mrb[0].mxu0
      %v2776 = vadd.f32 %v2615, %v2775
      %v2777 = vpop.f32.mrb[0].mxu0
      %v2778 = vpop.f32.mrb[0].mxu0
      %v2779 = vadd.f32 %v2618, %v2778
      %v2780 = vpop.f32.mrb[0].mxu0
      %2781 = vmatprep.mubr.bf16.mxu0 0
      %2782 = vmatmul.mubr.bf16.gmra.mrb[0].mxu0 %v2305
      %v2783 = vpop.f32.mrb[0].mxu0
      %v2784 = vadd.f32 %v2623, %v2783
      %v2785 = vpop.f32.mrb[0].mxu0
      %v2786 = vpop.f32.mrb[0].mxu0
      %v2787 = vadd.f32 %v2626, %v2786
      %v2788 = vpop.f32.mrb[0].mxu0
      %2789 = vmatprep.mubr.bf16.mxu0 0
      %2790 = vmatmul.mubr.bf16.gmra.mrb[0].mxu0 %v2308
      %v2791 = vpop.f32.mrb[0].mxu0
      %v2792 = vadd.f32 %v2631, %v2791
      %v2793 = vpop.f32.mrb[0].mxu0
      %v2794 = vpop.f32.mrb[0].mxu0
      %v2795 = vadd.f32 %v2634, %v2794
      %v2796 = vpop.f32.mrb[0].mxu0
      %2797 = vmatprep.mubr.bf16.mxu0 0
      %2798 = vmatmul.mubr.bf16.gmra.mrb[0].mxu0 %v2311
      %v2799 = vpop.f32.mrb[0].mxu0
      %v2800 = vadd.f32 %v2639, %v2799
      %v2801 = vpop.f32.mrb[0].mxu0
      %v2802 = vpop.f32.mrb[0].mxu0
      %v2803 = vadd.f32 %v2642, %v2802
      %v2804 = vpop.f32.mrb[0].mxu0
      %2805 = vmatprep.mubr.bf16.mxu0 0
      %2806 = vmatmul.mubr.bf16.gmra.mrb[0].mxu0 %v2314
      %v2807 = vpop.f32.mrb[0].mxu0
      %v2808 = vadd.f32 %v2647, %v2807
      %v2809 = vpop.f32.mrb[0].mxu0
      %v2810 = vpop.f32.mrb[0].mxu0
      %v2811 = vadd.f32 %v2650, %v2810
      %v2812 = vpop.f32.mrb[0].mxu0
      %2813 = vmatprep.mubr.bf16.mxu0 0
      %2814 = vmatmul.mubr.bf16.gmra.mrb[0].mxu0 %v2317
      %v2815 = vpop.f32.mrb[0].mxu0
      %v2816 = vadd.f32 %v2655, %v2815
      %v2817 = vpop.f32.mrb[0].mxu0
      %v2818 = vpop.f32.mrb[0].mxu0
      %v2819 = vadd.f32 %v2658, %v2818
      %v2820 = vpop.f32.mrb[0].mxu0
      %2821 = vmatprep.mubr.bf16.mxu0 0
      %2822 = vmatmul.mubr.bf16.gmra.mrb[0].mxu0 %v2320
      %v2823 = vpop.f32.mrb[0].mxu0
      %v2824 = vadd.f32 %v2663, %v2823
      %v2825 = vpop.f32.mrb[0].mxu0
      %v2826 = vpop.f32.mrb[0].mxu0
      %v2827 = vadd.f32 %v2666, %v2826
      %v2828 = vpop.f32.mrb[0].mxu0
      %2829 = vmatprep.mubr.bf16.mxu0 0
      %2830 = vmatmul.mubr.bf16.gmra.mrb[0].mxu0 %v2323
      %v2831 = vpop.f32.mrb[0].mxu0
      %v2832 = vadd.f32 %v2671, %v2831
      %v2833 = vpop.f32.mrb[0].mxu0
      %v2834 = vpop.f32.mrb[0].mxu0
      %v2835 = vadd.f32 %v2674, %v2834
      %v2836 = vpop.f32.mrb[0].mxu0
      %2837 = vdwg.mxu0
      %v2838 = vld [vmem:[#allocation2] sm:$0xff]
      %v2839 = vld [vmem:[#allocation2 + $0x8] sm:$0xff]
      %v2840 = vld [vmem:[#allocation2 + $0x10] sm:$0xff]
      %v2841 = vld [vmem:[#allocation2 + $0x18] sm:$0xff]
      %v2842 = vld [vmem:[#allocation2 + $0x20] sm:$0xff]
      %v2843 = vld [vmem:[#allocation2 + $0x28] sm:$0xff]
      %v2844 = vld [vmem:[#allocation2 + $0x30] sm:$0xff]
      %v2845 = vld [vmem:[#allocation2 + $0x38] sm:$0xff]
      %v2846 = vld [vmem:[#allocation2 + $0x40] sm:$0xff]
      %v2847 = vld [vmem:[#allocation2 + $0x48] sm:$0xff]
      %v2848 = vld [vmem:[#allocation2 + $0x50] sm:$0xff]
      %v2849 = vld [vmem:[#allocation2 + $0x58] sm:$0xff]
      %v2850 = vld [vmem:[#allocation2 + $0x60] sm:$0xff]
      %v2851 = vld [vmem:[#allocation2 + $0x68] sm:$0xff]
      %v2852 = vld [vmem:[#allocation2 + $0x70] sm:$0xff]
      %v2853 = vld [vmem:[#allocation2 + $0x78] sm:$0xff]
      %v2854 = vld [vmem:[#allocation2 + $0x80] sm:$0xff]
      %v2855 = vld [vmem:[#allocation2 + $0x88] sm:$0xff]
      %v2856 = vld [vmem:[#allocation2 + $0x90] sm:$0xff]
      %v2857 = vld [vmem:[#allocation2 + $0x98] sm:$0xff]
      %v2858 = vld [vmem:[#allocation2 + $0xa0] sm:$0xff]
      %v2859 = vld [vmem:[#allocation2 + $0xa8] sm:$0xff]
      %v2860 = vld [vmem:[#allocation2 + $0xb0] sm:$0xff]
      %v2861 = vld [vmem:[#allocation2 + $0xb8] sm:$0xff]
      %v2862 = vld [vmem:[#allocation2 + $0xc0] sm:$0xff]
      %v2863 = vld [vmem:[#allocation2 + $0xc8] sm:$0xff]
      %v2864 = vld [vmem:[#allocation2 + $0xd0] sm:$0xff]
      %v2865 = vld [vmem:[#allocation2 + $0xd8] sm:$0xff]
      %v2866 = vld [vmem:[#allocation2 + $0xe0] sm:$0xff]
      %v2867 = vld [vmem:[#allocation2 + $0xe8] sm:$0xff]
      %v2868 = vld [vmem:[#allocation2 + $0xf0] sm:$0xff]
      %v2869 = vld [vmem:[#allocation2 + $0xf8] sm:$0xff]
      %v2870 = vadd.f32 %v2838, %v2712
      %v2871 = vadd.f32 %v2839, %v2715
      %v2872 = vadd.f32 %v2840, %v2720
      %v2873 = vadd.f32 %v2841, %v2723
      %v2874 = vadd.f32 %v2842, %v2728
      %v2875 = vadd.f32 %v2843, %v2731
      %v2876 = vadd.f32 %v2844, %v2736
      %v2877 = vadd.f32 %v2845, %v2739
      %v2878 = vadd.f32 %v2846, %v2744
      %v2879 = vadd.f32 %v2847, %v2747
      %v2880 = vadd.f32 %v2848, %v2752
      %v2881 = vadd.f32 %v2849, %v2755
      %v2882 = vadd.f32 %v2850, %v2760
      %v2883 = vadd.f32 %v2851, %v2763
      %v2884 = vadd.f32 %v2852, %v2768
      %v2885 = vadd.f32 %v2853, %v2771
      %v2886 = vadd.f32 %v2854, %v2776
      %v2887 = vadd.f32 %v2855, %v2779
      %v2888 = vadd.f32 %v2856, %v2784
      %v2889 = vadd.f32 %v2857, %v2787
      %v2890 = vadd.f32 %v2858, %v2792
      %v2891 = vadd.f32 %v2859, %v2795
      %v2892 = vadd.f32 %v2860, %v2800
      %v2893 = vadd.f32 %v2861, %v2803
      %v2894 = vadd.f32 %v2862, %v2808
      %v2895 = vadd.f32 %v2863, %v2811
      %v2896 = vadd.f32 %v2864, %v2816
      %v2897 = vadd.f32 %v2865, %v2819
      %v2898 = vadd.f32 %v2866, %v2824
      %v2899 = vadd.f32 %v2867, %v2827
      %v2900 = vadd.f32 %v2868, %v2832
      %v2901 = vadd.f32 %v2869, %v2835
      %2902 = vst [vmem:[#allocation2] sm:$0xff] %v2870
      %2903 = vst [vmem:[#allocation2 + $0x8] sm:$0xff] %v2871
      %2904 = vst [vmem:[#allocation2 + $0x10] sm:$0xff] %v2872
      %2905 = vst [vmem:[#allocation2 + $0x18] sm:$0xff] %v2873
      %2906 = vst [vmem:[#allocation2 + $0x20] sm:$0xff] %v2874
      %2907 = vst [vmem:[#allocation2 + $0x28] sm:$0xff] %v2875
      %2908 = vst [vmem:[#allocation2 + $0x30] sm:$0xff] %v2876
      %2909 = vst [vmem:[#allocation2 + $0x38] sm:$0xff] %v2877
      %2910 = vst [vmem:[#allocation2 + $0x40] sm:$0xff] %v2878
      %2911 = vst [vmem:[#allocation2 + $0x48] sm:$0xff] %v2879
      %2912 = vst [vmem:[#allocation2 + $0x50] sm:$0xff] %v2880
      %2913 = vst [vmem:[#allocation2 + $0x58] sm:$0xff] %v2881
      %2914 = vst [vmem:[#allocation2 + $0x60] sm:$0xff] %v2882
      %2915 = vst [vmem:[#allocation2 + $0x68] sm:$0xff] %v2883
      %2916 = vst [vmem:[#allocation2 + $0x70] sm:$0xff] %v2884
      %2917 = vst [vmem:[#allocation2 + $0x78] sm:$0xff] %v2885
      %2918 = vst [vmem:[#allocation2 + $0x80] sm:$0xff] %v2886
      %2919 = vst [vmem:[#allocation2 + $0x88] sm:$0xff] %v2887
      %2920 = vst [vmem:[#allocation2 + $0x90] sm:$0xff] %v2888
      %2921 = vst [vmem:[#allocation2 + $0x98] sm:$0xff] %v2889
      %2922 = vst [vmem:[#allocation2 + $0xa0] sm:$0xff] %v2890
      %2923 = vst [vmem:[#allocation2 + $0xa8] sm:$0xff] %v2891
      %2924 = vst [vmem:[#allocation2 + $0xb0] sm:$0xff] %v2892
      %2925 = vst [vmem:[#allocation2 + $0xb8] sm:$0xff] %v2893
      %2926 = vst [vmem:[#allocation2 + $0xc0] sm:$0xff] %v2894
      %2927 = vst [vmem:[#allocation2 + $0xc8] sm:$0xff] %v2895
      %2928 = vst [vmem:[#allocation2 + $0xd0] sm:$0xff] %v2896
      %2929 = vst [vmem:[#allocation2 + $0xd8] sm:$0xff] %v2897
      %2930 = vst [vmem:[#allocation2 + $0xe0] sm:$0xff] %v2898
      %2931 = vst [vmem:[#allocation2 + $0xe8] sm:$0xff] %v2899
      %2932 = vst [vmem:[#allocation2 + $0xf0] sm:$0xff] %v2900
      %2933 = vst [vmem:[#allocation2 + $0xf8] sm:$0xff] %v2901
      %v2934 = vld [vmem:[#allocation2] sm:$0xff]
      %v2935 = vld [vmem:[#allocation2 + $0x8] sm:$0xff]
      %v2936 = vld [vmem:[#allocation2 + $0x10] sm:$0xff]
      %v2937 = vld [vmem:[#allocation2 + $0x18] sm:$0xff]
      %v2938 = vld [vmem:[#allocation2 + $0x20] sm:$0xff]
      %v2939 = vld [vmem:[#allocation2 + $0x28] sm:$0xff]
      %v2940 = vld [vmem:[#allocation2 + $0x30] sm:$0xff]
      %v2941 = vld [vmem:[#allocation2 + $0x38] sm:$0xff]
      %v2942 = vld [vmem:[#allocation2 + $0x40] sm:$0xff]
      %v2943 = vld [vmem:[#allocation2 + $0x48] sm:$0xff]
      %v2944 = vld [vmem:[#allocation2 + $0x50] sm:$0xff]
      %v2945 = vld [vmem:[#allocation2 + $0x58] sm:$0xff]
      %v2946 = vld [vmem:[#allocation2 + $0x60] sm:$0xff]
      %v2947 = vld [vmem:[#allocation2 + $0x68] sm:$0xff]
      %v2948 = vld [vmem:[#allocation2 + $0x70] sm:$0xff]
      %v2949 = vld [vmem:[#allocation2 + $0x78] sm:$0xff]
      %v2950 = vld [vmem:[#allocation2 + $0x80] sm:$0xff]
      %v2951 = vld [vmem:[#allocation2 + $0x88] sm:$0xff]
      %v2952 = vld [vmem:[#allocation2 + $0x90] sm:$0xff]
      %v2953 = vld [vmem:[#allocation2 + $0x98] sm:$0xff]
      %v2954 = vld [vmem:[#allocation2 + $0xa0] sm:$0xff]
      %v2955 = vld [vmem:[#allocation2 + $0xa8] sm:$0xff]
      %v2956 = vld [vmem:[#allocation2 + $0xb0] sm:$0xff]
      %v2957 = vld [vmem:[#allocation2 + $0xb8] sm:$0xff]
      %v2958 = vld [vmem:[#allocation2 + $0xc0] sm:$0xff]
      %v2959 = vld [vmem:[#allocation2 + $0xc8] sm:$0xff]
      %v2960 = vld [vmem:[#allocation2 + $0xd0] sm:$0xff]
      %v2961 = vld [vmem:[#allocation2 + $0xd8] sm:$0xff]
      %v2962 = vld [vmem:[#allocation2 + $0xe0] sm:$0xff]
      %v2963 = vld [vmem:[#allocation2 + $0xe8] sm:$0xff]
      %v2964 = vld [vmem:[#allocation2 + $0xf0] sm:$0xff]
      %v2965 = vld [vmem:[#allocation2 + $0xf8] sm:$0xff]
      %v2966 = vpack.c.bf16 %v2935, %v2934
      %v2967 = vpack.c.bf16 %v2937, %v2936
      %v2968 = vpack.c.bf16 %v2939, %v2938
      %v2969 = vpack.c.bf16 %v2941, %v2940
      %v2970 = vpack.c.bf16 %v2943, %v2942
      %v2971 = vpack.c.bf16 %v2945, %v2944
      %v2972 = vpack.c.bf16 %v2947, %v2946
      %v2973 = vpack.c.bf16 %v2949, %v2948
      %v2974 = vpack.c.bf16 %v2951, %v2950
      %v2975 = vpack.c.bf16 %v2953, %v2952
      %v2976 = vpack.c.bf16 %v2955, %v2954
      %v2977 = vpack.c.bf16 %v2957, %v2956
      %v2978 = vpack.c.bf16 %v2959, %v2958
      %v2979 = vpack.c.bf16 %v2961, %v2960
      %v2980 = vpack.c.bf16 %v2963, %v2962
      %v2981 = vpack.c.bf16 %v2965, %v2964
      %v2998 = vunpack.c.l.b16 %v2966
      %v2999 = vunpack.c.h.b16 %v2966
      %v3000 = vunpack.c.l.b16 %v2967
      %v3001 = vunpack.c.h.b16 %v2967
      %v3002 = vunpack.c.l.b16 %v2968
      %v3003 = vunpack.c.h.b16 %v2968
      %v3004 = vunpack.c.l.b16 %v2969
      %v3005 = vunpack.c.h.b16 %v2969
      %v3006 = vunpack.c.l.b16 %v2970
      %v3007 = vunpack.c.h.b16 %v2970
      %v3008 = vunpack.c.l.b16 %v2971
      %v3009 = vunpack.c.h.b16 %v2971
      %v3010 = vunpack.c.l.b16 %v2972
      %v3011 = vunpack.c.h.b16 %v2972
      %v3012 = vunpack.c.l.b16 %v2973
      %v3013 = vunpack.c.h.b16 %v2973
      %v3014 = vunpack.c.l.b16 %v2974
      %v3015 = vunpack.c.h.b16 %v2974
      %v3016 = vunpack.c.l.b16 %v2975
      %v3017 = vunpack.c.h.b16 %v2975
      %v3018 = vunpack.c.l.b16 %v2976
      %v3019 = vunpack.c.h.b16 %v2976
      %v3020 = vunpack.c.l.b16 %v2977
      %v3021 = vunpack.c.h.b16 %v2977
      %v3022 = vunpack.c.l.b16 %v2978
      %v3023 = vunpack.c.h.b16 %v2978
      %v3024 = vunpack.c.l.b16 %v2979
      %v3025 = vunpack.c.h.b16 %v2979
      %v3026 = vunpack.c.l.b16 %v2980
      %v3027 = vunpack.c.h.b16 %v2980
      %v3028 = vunpack.c.l.b16 %v2981
      %v3029 = vunpack.c.h.b16 %v2981
      %v3030 = vpack.c.b16 %v2998, %v2998
      %v3031 = vpack.c.b16 %v2999, %v2999
      %v3032 = vpack.c.b16 %v3000, %v3000
      %v3033 = vpack.c.b16 %v3001, %v3001
      %v3034 = vpack.c.b16 %v3002, %v3002
      %v3035 = vpack.c.b16 %v3003, %v3003
      %v3036 = vpack.c.b16 %v3004, %v3004
      %v3037 = vpack.c.b16 %v3005, %v3005
      %v3038 = vpack.c.b16 %v3006, %v3006
      %v3039 = vpack.c.b16 %v3007, %v3007
      %v3040 = vpack.c.b16 %v3008, %v3008
      %v3041 = vpack.c.b16 %v3009, %v3009
      %v3042 = vpack.c.b16 %v3010, %v3010
      %v3043 = vpack.c.b16 %v3011, %v3011
      %v3044 = vpack.c.b16 %v3012, %v3012
      %v3045 = vpack.c.b16 %v3013, %v3013
      %v3046 = vpack.c.b16 %v3014, %v3014
      %v3047 = vpack.c.b16 %v3015, %v3015
      %v3048 = vpack.c.b16 %v3016, %v3016
      %v3049 = vpack.c.b16 %v3017, %v3017
      %v3050 = vpack.c.b16 %v3018, %v3018
      %v3051 = vpack.c.b16 %v3019, %v3019
      %v3052 = vpack.c.b16 %v3020, %v3020
      %v3053 = vpack.c.b16 %v3021, %v3021
      %v3054 = vpack.c.b16 %v3022, %v3022
      %v3055 = vpack.c.b16 %v3023, %v3023
      %v3056 = vpack.c.b16 %v3024, %v3024
      %v3057 = vpack.c.b16 %v3025, %v3025
      %v3058 = vpack.c.b16 %v3026, %v3026
      %v3059 = vpack.c.b16 %v3027, %v3027
      %v3060 = vpack.c.b16 %v3028, %v3028
      %v3061 = vpack.c.b16 %v3029, %v3029
      %3094 = vst [vmem:[%s200] sm:$0xf] %v3030
      %3095 = vst [vmem:[%s200 + $0x4] sm:$0xf] %v3031
      %3096 = vst [vmem:[%s200 + $0x8] sm:$0xf] %v3032
      %3097 = vst [vmem:[%s200 + $0xc] sm:$0xf] %v3033
      %3098 = vst [vmem:[%s200 + $0x10] sm:$0xf] %v3034
      %3099 = vst [vmem:[%s200 + $0x14] sm:$0xf] %v3035
      %3100 = vst [vmem:[%s200 + $0x18] sm:$0xf] %v3036
      %3101 = vst [vmem:[%s200 + $0x1c] sm:$0xf] %v3037
      %3102 = vst [vmem:[%s200 + $0x20] sm:$0xf] %v3038
      %3103 = vst [vmem:[%s200 + $0x24] sm:$0xf] %v3039
      %3104 = vst [vmem:[%s200 + $0x28] sm:$0xf] %v3040
      %3105 = vst [vmem:[%s200 + $0x2c] sm:$0xf] %v3041
      %3106 = vst [vmem:[%s200 + $0x30] sm:$0xf] %v3042
      %3107 = vst [vmem:[%s200 + $0x34] sm:$0xf] %v3043
      %3108 = vst [vmem:[%s200 + $0x38] sm:$0xf] %v3044
      %3109 = vst [vmem:[%s200 + $0x3c] sm:$0xf] %v3045
      %3110 = vst [vmem:[%s200 + $0x40] sm:$0xf] %v3046
      %3111 = vst [vmem:[%s200 + $0x44] sm:$0xf] %v3047
      %3112 = vst [vmem:[%s200 + $0x48] sm:$0xf] %v3048
      %3113 = vst [vmem:[%s200 + $0x4c] sm:$0xf] %v3049
      %3114 = vst [vmem:[%s200 + $0x50] sm:$0xf] %v3050
      %3115 = vst [vmem:[%s200 + $0x54] sm:$0xf] %v3051
      %3116 = vst [vmem:[%s200 + $0x58] sm:$0xf] %v3052
      %3117 = vst [vmem:[%s200 + $0x5c] sm:$0xf] %v3053
      %3118 = vst [vmem:[%s200 + $0x60] sm:$0xf] %v3054
      %3119 = vst [vmem:[%s200 + $0x64] sm:$0xf] %v3055
      %3120 = vst [vmem:[%s200 + $0x68] sm:$0xf] %v3056
      %3121 = vst [vmem:[%s200 + $0x6c] sm:$0xf] %v3057
      %3122 = vst [vmem:[%s200 + $0x70] sm:$0xf] %v3058
      %3123 = vst [vmem:[%s200 + $0x74] sm:$0xf] %v3059
      %3124 = vst [vmem:[%s200 + $0x78] sm:$0xf] %v3060
      %3125 = vst [vmem:[%s200 + $0x7c] sm:$0xf] %v3061
      %p3126 = scmp.eq.s32.totalorder %s20, 0
      // Predicated region
      $region29: #{basic_block_forward.4} parent=27 // pred_check
        %p3127 = pneg %p3126
      $region30: #{basic_block_forward.4} parent=27 // pred_check_branch
        %3129 = sbr.rel (%p3127) target = $region32
      $region31: #{basic_block_forward.4} parent=27 // pred_region
        %3130 = vst [vmem:[%s206] sm:$0xff] 0.0
      $region32: #{basic_block_forward.4} parent=27 // pred_fallthru
        _
      %v3131 = vld [vmem:[%s206] sm:$0xff]
      %v3132 = vadd.f32 %v2934, %v2935
      %v3133 = vadd.f32 %v3132, %v2936
      %v3134 = vadd.f32 %v3133, %v2937
      %v3135 = vadd.f32 %v3134, %v2938
      %v3136 = vadd.f32 %v3135, %v2939
      %v3137 = vadd.f32 %v3136, %v2940
      %v3138 = vadd.f32 %v3137, %v2941
      %v3139 = vadd.f32 %v3138, %v2942
      %v3140 = vadd.f32 %v3139, %v2943
      %v3141 = vadd.f32 %v3140, %v2944
      %v3142 = vadd.f32 %v3141, %v2945
      %v3143 = vadd.f32 %v3142, %v2946
      %v3144 = vadd.f32 %v3143, %v2947
      %v3145 = vadd.f32 %v3144, %v2948
      %v3146 = vadd.f32 %v3145, %v2949
      %v3147 = vadd.f32 %v3146, %v2950
      %v3148 = vadd.f32 %v3147, %v2951
      %v3149 = vadd.f32 %v3148, %v2952
      %v3150 = vadd.f32 %v3149, %v2953
      %v3151 = vadd.f32 %v3150, %v2954
      %v3152 = vadd.f32 %v3151, %v2955
      %v3153 = vadd.f32 %v3152, %v2956
      %v3154 = vadd.f32 %v3153, %v2957
      %v3155 = vadd.f32 %v3154, %v2958
      %v3156 = vadd.f32 %v3155, %v2959
      %v3157 = vadd.f32 %v3156, %v2960
      %v3158 = vadd.f32 %v3157, %v2961
      %v3159 = vadd.f32 %v3158, %v2962
      %v3160 = vadd.f32 %v3159, %v2963
      %v3161 = vadd.f32 %v3160, %v2964
      %v3162 = vadd.f32 %v3161, %v2965
      %v3163 = vrot.slane %v3162, 4
      %v3164 = vadd.f32 %v3162, %v3163
      %v3165 = vrot.slane %v3164, 2
      %v3166 = vadd.f32 %v3164, %v3165
      %v3167 = vrot.slane %v3166, 1
      %v3168 = vadd.f32 %v3166, %v3167
      %v3169 = vmul.f32 %v2934, %v2934
      %v3170 = vmul.f32 %v2935, %v2935
      %v3171 = vmul.f32 %v2936, %v2936
      %v3172 = vmul.f32 %v2937, %v2937
      %v3173 = vmul.f32 %v2938, %v2938
      %v3174 = vmul.f32 %v2939, %v2939
      %v3175 = vmul.f32 %v2940, %v2940
      %v3176 = vmul.f32 %v2941, %v2941
      %v3177 = vmul.f32 %v2942, %v2942
      %v3178 = vmul.f32 %v2943, %v2943
      %v3179 = vmul.f32 %v2944, %v2944
      %v3180 = vmul.f32 %v2945, %v2945
      %v3181 = vmul.f32 %v2946, %v2946
      %v3182 = vmul.f32 %v2947, %v2947
      %v3183 = vmul.f32 %v2948, %v2948
      %v3184 = vmul.f32 %v2949, %v2949
      %v3185 = vmul.f32 %v2950, %v2950
      %v3186 = vmul.f32 %v2951, %v2951
      %v3187 = vmul.f32 %v2952, %v2952
      %v3188 = vmul.f32 %v2953, %v2953
      %v3189 = vmul.f32 %v2954, %v2954
      %v3190 = vmul.f32 %v2955, %v2955
      %v3191 = vmul.f32 %v2956, %v2956
      %v3192 = vmul.f32 %v2957, %v2957
      %v3193 = vmul.f32 %v2958, %v2958
      %v3194 = vmul.f32 %v2959, %v2959
      %v3195 = vmul.f32 %v2960, %v2960
      %v3196 = vmul.f32 %v2961, %v2961
      %v3197 = vmul.f32 %v2962, %v2962
      %v3198 = vmul.f32 %v2963, %v2963
      %v3199 = vmul.f32 %v2964, %v2964
      %v3200 = vmul.f32 %v2965, %v2965
      %v3201 = vadd.f32 %v3169, %v3170
      %v3202 = vadd.f32 %v3201, %v3171
      %v3203 = vadd.f32 %v3202, %v3172
      %v3204 = vadd.f32 %v3203, %v3173
      %v3205 = vadd.f32 %v3204, %v3174
      %v3206 = vadd.f32 %v3205, %v3175
      %v3207 = vadd.f32 %v3206, %v3176
      %v3208 = vadd.f32 %v3207, %v3177
      %v3209 = vadd.f32 %v3208, %v3178
      %v3210 = vadd.f32 %v3209, %v3179
      %v3211 = vadd.f32 %v3210, %v3180
      %v3212 = vadd.f32 %v3211, %v3181
      %v3213 = vadd.f32 %v3212, %v3182
      %v3214 = vadd.f32 %v3213, %v3183
      %v3215 = vadd.f32 %v3214, %v3184
      %v3216 = vadd.f32 %v3215, %v3185
      %v3217 = vadd.f32 %v3216, %v3186
      %v3218 = vadd.f32 %v3217, %v3187
      %v3219 = vadd.f32 %v3218, %v3188
      %v3220 = vadd.f32 %v3219, %v3189
      %v3221 = vadd.f32 %v3220, %v3190
      %v3222 = vadd.f32 %v3221, %v3191
      %v3223 = vadd.f32 %v3222, %v3192
      %v3224 = vadd.f32 %v3223, %v3193
      %v3225 = vadd.f32 %v3224, %v3194
      %v3226 = vadd.f32 %v3225, %v3195
      %v3227 = vadd.f32 %v3226, %v3196
      %v3228 = vadd.f32 %v3227, %v3197
      %v3229 = vadd.f32 %v3228, %v3198
      %v3230 = vadd.f32 %v3229, %v3199
      %v3231 = vadd.f32 %v3230, %v3200
      %v3232 = vrot.slane %v3231, 4
      %v3233 = vadd.f32 %v3231, %v3232
      %v3234 = vrot.slane %v3233, 2
      %v3235 = vadd.f32 %v3233, %v3234
      %v3236 = vrot.slane %v3235, 1
      %v3237 = vadd.f32 %v3235, %v3236
      %vm3238 = vcmask 1040384
      %v3239 = vsel %vm3238, %v3168, %v3237
      %vm3240 = vcmask 1041408
      %v3241 = vsel %vm3240, %v3239, 0.0
      %v3242 = vadd.f32 %v3131, %v3241
      %3243 = vst [vmem:[%s206] sm:$0xff] %v3242
      %s3244 = sadd.s32 %s19, %s20
      %s3245 = smul.u32 32, %s3244
      %p3246 = scmp.lt.s32.totalorder %s3245, 63
      %s3247 = scalar_select %p3246, %s3245, 63
      %s3248 = smul.addr %s3247, 4
      %s3249 = scalar_lea.vmem %s2, %s3248
      %p3250 = scmp.lt.s32.totalorder %s19, 1
      %s3251 = scalar_select %p3250, %s19, 1
      %s3252 = smul.addr %s3251, 8
      %s3253 = scalar_lea.vmem %s3, %s3252
      // Predicated region
      $region33: #{basic_block_forward.4} parent=27 // pred_check
        %p3254 = pneg %p96
      $region34: #{basic_block_forward.4} parent=27 // pred_check_branch
        %3256 = sbr.rel (%p3254) target = $region36
      $region35: #{basic_block_forward.4} parent=27 // pred_region
        %s3257 = sadd.s32 %s19, %s20
        %s3258 = smul.u32 32, %s3257
      $region36: #{basic_block_forward.4} parent=27 // pred_fallthru
        _
      // Predicated region
      $region37: #{basic_block_forward.4} parent=27 // pred_check
        %p3259 = pneg %p122
      $region38: #{basic_block_forward.4} parent=27 // pred_check_branch
        %3261 = sbr.rel (%p3259) target = $region40
      $region39: #{basic_block_forward.4} parent=27 // pred_region
        _
      $region40: #{basic_block_forward.4} parent=27 // pred_fallthru
        _
    $region28: #{basic_block_forward.4} parent=5 // pred_fallthru
      _
    %p3262 = scmp.le.s32.totalorder 2, %s10
    // Predicated region
    $region41: #{basic_block_forward.4} parent=5 // pred_check
      %p3263 = pneg %p3262
    $region42: #{basic_block_forward.4} parent=5 // pred_check_branch
      %3265 = sbr.rel (%p3263) target = $region44
    $region43: #{basic_block_forward.4} parent=5 // pred_region
      %s3266 = ssub.s32 %s10, 2
      // Predicated region
      $region45: #{basic_block_forward.4} parent=43 // pred_check
        %p3267 = pneg %p102
      $region46: #{basic_block_forward.4} parent=43 // pred_check_branch
        %3269 = sbr.rel (%p3267) target = $region48
      $region47: #{basic_block_forward.4} parent=43 // pred_region
        %s3270 = sadd.s32 %s21, %s22
        %s3271 = smul.u32 32, %s3270
        %p3272 = scmp.lt.s32.totalorder %s3271, 63
        %s3273 = scalar_select %p3272, %s3271, 63
        %s3274 = smul.addr %s3273, 4
        %s3275 = scalar_lea.vmem %s2, %s3274
      $region48: #{basic_block_forward.4} parent=43 // pred_fallthru
        _
      // Predicated region
      $region49: #{basic_block_forward.4} parent=43 // pred_check
        %p3276 = pneg %p128
      $region50: #{basic_block_forward.4} parent=43 // pred_check_branch
        %3278 = sbr.rel (%p3276) target = $region52
      $region51: #{basic_block_forward.4} parent=43 // pred_region
        %p3279 = scmp.lt.s32.totalorder %s21, 1
        %s3280 = scalar_select %p3279, %s21, 1
        %s3281 = smul.addr %s3280, 8
        %s3282 = scalar_lea.vmem %s3, %s3281
      $region52: #{basic_block_forward.4} parent=43 // pred_fallthru
        _
    $region44: #{basic_block_forward.4} parent=5 // pred_fallthru
      _
  $region6: #{basic_block_forward.4} parent=0 // loop_footer
    %s14 = sadd.s32 1, %s10
  $region7: #{basic_block_forward.4} parent=0 // loop_footer_branch
    %9 = sbr.rel target = $region3
  $region8: #{basic_block_forward.4} parent=0 // loop_exit
    _

// kernel: basic_block_forward.7
$region0: #{basic_block_forward.7}
  #allocation0 [shape = 'u32[]', space=smem, size = 0x4, offset = 0x4, fixed_abs, tag = 'smem constant byte address 0x4 - core index']
  #allocation1 [shape = 'u32[144,128]{1,0:T(1,128)}', space=vmem, size = 0x12000, scoped, tag = 'internal scratch']
  %s0 = inlined_call_operand.vmem [shape: bf16[512,128], index: 0, kind: input, shape index: {}]
  %s1 = inlined_call_operand.vmem [shape: bf16[512,128], index: 1, kind: input, shape index: {}]
  %s2 = inlined_call_operand.vmem [shape: bf16[128,128], index: 2, kind: input, shape index: {}]
  %s3 = inlined_call_operand.vmem [shape: f32[8,128], index: 3, kind: input, shape index: {}]
  %s4 = inlined_call_operand.vmem [shape: f32[512,128], index: 4, kind: output, shape index: {}]
  %s5 = sld [smem:[#allocation0]]
  $region26: #{basic_block_forward.7} parent=0
    _
  %s7 = ssub.s32 1, %s5
  %s8 = scalar_select 0, %s7, %s5
  // Predicated region
  $region2: #{basic_block_forward.7} parent=0 // pred_check
    _
  $region3: #{basic_block_forward.7} parent=0 // pred_check_branch
    %10 = sbr.rel (0) target = $region5
  $region4: #{basic_block_forward.7} parent=0 // pred_region
    _
  $region5: #{basic_block_forward.7} parent=0 // pred_fallthru
    _
  // Predicated region
  $region6: #{basic_block_forward.7} parent=0 // pred_check
    _
  $region7: #{basic_block_forward.7} parent=0 // pred_check_branch
    %12 = sbr.rel (0) target = $region9
  $region8: #{basic_block_forward.7} parent=0 // pred_region
    _
  $region9: #{basic_block_forward.7} parent=0 // pred_fallthru
    _
  // Predicated region
  $region10: #{basic_block_forward.7} parent=0 // pred_check
    _
  $region11: #{basic_block_forward.7} parent=0 // pred_check_branch
    %14 = sbr.rel (0) target = $region13
  $region12: #{basic_block_forward.7} parent=0 // pred_region
    _
  $region13: #{basic_block_forward.7} parent=0 // pred_fallthru
    _
  // Predicated region
  $region14: #{basic_block_forward.7} parent=0 // pred_check
    _
  $region15: #{basic_block_forward.7} parent=0 // pred_check_branch
    %16 = sbr.rel (0) target = $region17
  $region16: #{basic_block_forward.7} parent=0 // pred_region
    _
  $region17: #{basic_block_forward.7} parent=0 // pred_fallthru
    _
  %v18 = vld [vmem:[%s3] sm:$0xff]
  %v19 = vld [vmem:[%s1] sm:$0xf]
  %v20 = vld [vmem:[%s1 + $0x4] sm:$0xf]
  %v21 = vld [vmem:[%s1 + $0x8] sm:$0xf]
  %v22 = vld [vmem:[%s1 + $0xc] sm:$0xf]
  %v23 = vld [vmem:[%s1 + $0x10] sm:$0xf]
  %v24 = vld [vmem:[%s1 + $0x14] sm:$0xf]
  %v25 = vld [vmem:[%s1 + $0x18] sm:$0xf]
  %v26 = vld [vmem:[%s1 + $0x1c] sm:$0xf]
  %v27 = vld [vmem:[%s1 + $0x20] sm:$0xf]
  %v28 = vld [vmem:[%s1 + $0x24] sm:$0xf]
  %v29 = vld [vmem:[%s1 + $0x28] sm:$0xf]
  %v30 = vld [vmem:[%s1 + $0x2c] sm:$0xf]
  %v31 = vld [vmem:[%s1 + $0x30] sm:$0xf]
  %v32 = vld [vmem:[%s1 + $0x34] sm:$0xf]
  %v33 = vld [vmem:[%s1 + $0x38] sm:$0xf]
  %v34 = vld [vmem:[%s1 + $0x3c] sm:$0xf]
  %v35 = vld [vmem:[%s1 + $0x40] sm:$0xf]
  %v36 = vld [vmem:[%s1 + $0x44] sm:$0xf]
  %v37 = vld [vmem:[%s1 + $0x48] sm:$0xf]
  %v38 = vld [vmem:[%s1 + $0x4c] sm:$0xf]
  %v39 = vld [vmem:[%s1 + $0x50] sm:$0xf]
  %v40 = vld [vmem:[%s1 + $0x54] sm:$0xf]
  %v41 = vld [vmem:[%s1 + $0x58] sm:$0xf]
  %v42 = vld [vmem:[%s1 + $0x5c] sm:$0xf]
  %v43 = vld [vmem:[%s1 + $0x60] sm:$0xf]
  %v44 = vld [vmem:[%s1 + $0x64] sm:$0xf]
  %v45 = vld [vmem:[%s1 + $0x68] sm:$0xf]
  %v46 = vld [vmem:[%s1 + $0x6c] sm:$0xf]
  %v47 = vld [vmem:[%s1 + $0x70] sm:$0xf]
  %v48 = vld [vmem:[%s1 + $0x74] sm:$0xf]
  %v49 = vld [vmem:[%s1 + $0x78] sm:$0xf]
  %v50 = vld [vmem:[%s1 + $0x7c] sm:$0xf]
  %v51 = vld [vmem:[%s1 + $0x80] sm:$0xf]
  %v52 = vld [vmem:[%s1 + $0x84] sm:$0xf]
  %v53 = vld [vmem:[%s1 + $0x88] sm:$0xf]
  %v54 = vld [vmem:[%s1 + $0x8c] sm:$0xf]
  %v55 = vld [vmem:[%s1 + $0x90] sm:$0xf]
  %v56 = vld [vmem:[%s1 + $0x94] sm:$0xf]
  %v57 = vld [vmem:[%s1 + $0x98] sm:$0xf]
  %v58 = vld [vmem:[%s1 + $0x9c] sm:$0xf]
  %v59 = vld [vmem:[%s1 + $0xa0] sm:$0xf]
  %v60 = vld [vmem:[%s1 + $0xa4] sm:$0xf]
  %v61 = vld [vmem:[%s1 + $0xa8] sm:$0xf]
  %v62 = vld [vmem:[%s1 + $0xac] sm:$0xf]
  %v63 = vld [vmem:[%s1 + $0xb0] sm:$0xf]
  %v64 = vld [vmem:[%s1 + $0xb4] sm:$0xf]
  %v65 = vld [vmem:[%s1 + $0xb8] sm:$0xf]
  %v66 = vld [vmem:[%s1 + $0xbc] sm:$0xf]
  %v67 = vld [vmem:[%s1 + $0xc0] sm:$0xf]
  %v68 = vld [vmem:[%s1 + $0xc4] sm:$0xf]
  %v69 = vld [vmem:[%s1 + $0xc8] sm:$0xf]
  %v70 = vld [vmem:[%s1 + $0xcc] sm:$0xf]
  %v71 = vld [vmem:[%s1 + $0xd0] sm:$0xf]
  %v72 = vld [vmem:[%s1 + $0xd4] sm:$0xf]
  %v73 = vld [vmem:[%s1 + $0xd8] sm:$0xf]
  %v74 = vld [vmem:[%s1 + $0xdc] sm:$0xf]
  %v75 = vld [vmem:[%s1 + $0xe0] sm:$0xf]
  %v76 = vld [vmem:[%s1 + $0xe4] sm:$0xf]
  %v77 = vld [vmem:[%s1 + $0xe8] sm:$0xf]
  %v78 = vld [vmem:[%s1 + $0xec] sm:$0xf]
  %v79 = vld [vmem:[%s1 + $0xf0] sm:$0xf]
  %v80 = vld [vmem:[%s1 + $0xf4] sm:$0xf]
  %v81 = vld [vmem:[%s1 + $0xf8] sm:$0xf]
  %v82 = vld [vmem:[%s1 + $0xfc] sm:$0xf]
  %v83 = vld [vmem:[%s2] sm:$0xf]
  %v84 = vld [vmem:[%s2 + $0x4] sm:$0xf]
  %v85 = vld [vmem:[%s2 + $0x8] sm:$0xf]
  %v86 = vld [vmem:[%s2 + $0xc] sm:$0xf]
  %v87 = vld [vmem:[%s2 + $0x10] sm:$0xf]
  %v88 = vld [vmem:[%s2 + $0x14] sm:$0xf]
  %v89 = vld [vmem:[%s2 + $0x18] sm:$0xf]
  %v90 = vld [vmem:[%s2 + $0x1c] sm:$0xf]
  %v91 = vld [vmem:[%s2 + $0x20] sm:$0xf]
  %v92 = vld [vmem:[%s2 + $0x24] sm:$0xf]
  %v93 = vld [vmem:[%s2 + $0x28] sm:$0xf]
  %v94 = vld [vmem:[%s2 + $0x2c] sm:$0xf]
  %v95 = vld [vmem:[%s2 + $0x30] sm:$0xf]
  %v96 = vld [vmem:[%s2 + $0x34] sm:$0xf]
  %v97 = vld [vmem:[%s2 + $0x38] sm:$0xf]
  %v98 = vld [vmem:[%s2 + $0x3c] sm:$0xf]
  %v163 = vunpack.c.l.b16 %v19
  %v164 = vunpack.c.l.b16 %v20
  %v165 = vunpack.c.l.b16 %v21
  %v166 = vunpack.c.l.b16 %v22
  %v167 = vunpack.c.l.b16 %v23
  %v168 = vunpack.c.l.b16 %v24
  %v169 = vunpack.c.l.b16 %v25
  %v170 = vunpack.c.l.b16 %v26
  %v171 = vunpack.c.l.b16 %v27
  %v172 = vunpack.c.l.b16 %v28
  %v173 = vunpack.c.l.b16 %v29
  %v174 = vunpack.c.l.b16 %v30
  %v175 = vunpack.c.l.b16 %v31
  %v176 = vunpack.c.l.b16 %v32
  %v177 = vunpack.c.l.b16 %v33
  %v178 = vunpack.c.l.b16 %v34
  %v179 = vunpack.c.l.b16 %v35
  %v180 = vunpack.c.l.b16 %v36
  %v181 = vunpack.c.l.b16 %v37
  %v182 = vunpack.c.l.b16 %v38
  %v183 = vunpack.c.l.b16 %v39
  %v184 = vunpack.c.l.b16 %v40
  %v185 = vunpack.c.l.b16 %v41
  %v186 = vunpack.c.l.b16 %v42
  %v187 = vunpack.c.l.b16 %v43
  %v188 = vunpack.c.l.b16 %v44
  %v189 = vunpack.c.l.b16 %v45
  %v190 = vunpack.c.l.b16 %v46
  %v191 = vunpack.c.l.b16 %v47
  %v192 = vunpack.c.l.b16 %v48
  %v193 = vunpack.c.l.b16 %v49
  %v194 = vunpack.c.l.b16 %v50
  %v195 = vunpack.c.l.b16 %v51
  %v196 = vunpack.c.l.b16 %v52
  %v197 = vunpack.c.l.b16 %v53
  %v198 = vunpack.c.l.b16 %v54
  %v199 = vunpack.c.l.b16 %v55
  %v200 = vunpack.c.l.b16 %v56
  %v201 = vunpack.c.l.b16 %v57
  %v202 = vunpack.c.l.b16 %v58
  %v203 = vunpack.c.l.b16 %v59
  %v204 = vunpack.c.l.b16 %v60
  %v205 = vunpack.c.l.b16 %v61
  %v206 = vunpack.c.l.b16 %v62
  %v207 = vunpack.c.l.b16 %v63
  %v208 = vunpack.c.l.b16 %v64
  %v209 = vunpack.c.l.b16 %v65
  %v210 = vunpack.c.l.b16 %v66
  %v211 = vunpack.c.l.b16 %v67
  %v212 = vunpack.c.l.b16 %v68
  %v213 = vunpack.c.l.b16 %v69
  %v214 = vunpack.c.l.b16 %v70
  %v215 = vunpack.c.l.b16 %v71
  %v216 = vunpack.c.l.b16 %v72
  %v217 = vunpack.c.l.b16 %v73
  %v218 = vunpack.c.l.b16 %v74
  %v219 = vunpack.c.l.b16 %v75
  %v220 = vunpack.c.l.b16 %v76
  %v221 = vunpack.c.l.b16 %v77
  %v222 = vunpack.c.l.b16 %v78
  %v223 = vunpack.c.l.b16 %v79
  %v224 = vunpack.c.l.b16 %v80
  %v225 = vunpack.c.l.b16 %v81
  %v226 = vunpack.c.l.b16 %v82
  %v227 = vpack.c.b16 %v164, %v163
  %v228 = vpack.c.b16 %v166, %v165
  %v229 = vpack.c.b16 %v168, %v167
  %v230 = vpack.c.b16 %v170, %v169
  %v231 = vpack.c.b16 %v172, %v171
  %v232 = vpack.c.b16 %v174, %v173
  %v233 = vpack.c.b16 %v176, %v175
  %v234 = vpack.c.b16 %v178, %v177
  %v235 = vpack.c.b16 %v180, %v179
  %v236 = vpack.c.b16 %v182, %v181
  %v237 = vpack.c.b16 %v184, %v183
  %v238 = vpack.c.b16 %v186, %v185
  %v239 = vpack.c.b16 %v188, %v187
  %v240 = vpack.c.b16 %v190, %v189
  %v241 = vpack.c.b16 %v192, %v191
  %v242 = vpack.c.b16 %v194, %v193
  %v243 = vpack.c.b16 %v196, %v195
  %v244 = vpack.c.b16 %v198, %v197
  %v245 = vpack.c.b16 %v200, %v199
  %v246 = vpack.c.b16 %v202, %v201
  %v247 = vpack.c.b16 %v204, %v203
  %v248 = vpack.c.b16 %v206, %v205
  %v249 = vpack.c.b16 %v208, %v207
  %v250 = vpack.c.b16 %v210, %v209
  %v251 = vpack.c.b16 %v212, %v211
  %v252 = vpack.c.b16 %v214, %v213
  %v253 = vpack.c.b16 %v216, %v215
  %v254 = vpack.c.b16 %v218, %v217
  %v255 = vpack.c.b16 %v220, %v219
  %v256 = vpack.c.b16 %v222, %v221
  %v257 = vpack.c.b16 %v224, %v223
  %v258 = vpack.c.b16 %v226, %v225
  %v307 = vunpack.c.l.b16 %v83
  %v308 = vunpack.c.l.b16 %v84
  %v309 = vunpack.c.l.b16 %v85
  %v310 = vunpack.c.l.b16 %v86
  %v311 = vunpack.c.l.b16 %v87
  %v312 = vunpack.c.l.b16 %v88
  %v313 = vunpack.c.l.b16 %v89
  %v314 = vunpack.c.l.b16 %v90
  %v315 = vunpack.c.l.b16 %v91
  %v316 = vunpack.c.l.b16 %v92
  %v317 = vunpack.c.l.b16 %v93
  %v318 = vunpack.c.l.b16 %v94
  %v319 = vunpack.c.l.b16 %v95
  %v320 = vunpack.c.l.b16 %v96
  %v321 = vunpack.c.l.b16 %v97
  %v322 = vunpack.c.l.b16 %v98
  %v323 = vpack.c.b16 %v308, %v307
  %v324 = vpack.c.b16 %v310, %v309
  %v325 = vpack.c.b16 %v312, %v311
  %v326 = vpack.c.b16 %v314, %v313
  %v327 = vpack.c.b16 %v316, %v315
  %v328 = vpack.c.b16 %v318, %v317
  %v329 = vpack.c.b16 %v320, %v319
  %v330 = vpack.c.b16 %v322, %v321
  %339 = vmatprep.subr.bf16.mxu0 0
  %340 = vmatpush1.bf16.msra.mxu0 %v323
  %341 = vmatprep.subr.bf16.mxu0 0
  %342 = vmatpush1.bf16.msra.mxu0 %v324
  %343 = vmatprep.subr.bf16.mxu0 0
  %344 = vmatpush1.bf16.msra.mxu0 %v325
  %345 = vmatprep.subr.bf16.mxu0 0
  %346 = vmatpush1.bf16.msra.mxu0 %v326
  %347 = vmatprep.subr.bf16.mxu0 0
  %348 = vmatpush1.bf16.msra.mxu0 %v327
  %349 = vmatprep.subr.bf16.mxu0 0
  %350 = vmatpush1.bf16.msra.mxu0 %v328
  %351 = vmatprep.subr.bf16.mxu0 0
  %352 = vmatpush1.bf16.msra.mxu0 %v329
  %353 = vmatprep.subr.bf16.mxu0 0
  %354 = vmatpush1.bf16.msra.mxu0 %v330
  %355 = vmatprep.subr.bf16.mxu0 0
  %356 = vmatpush1.bf16.msra.mxu0 0
  %357 = vmatprep.subr.bf16.mxu0 0
  %358 = vmatpush1.bf16.msra.mxu0 0
  %359 = vmatprep.subr.bf16.mxu0 0
  %360 = vmatpush1.bf16.msra.mxu0 0
  %361 = vmatprep.subr.bf16.mxu0 0
  %362 = vmatpush1.bf16.msra.mxu0 0
  %363 = vmatprep.subr.bf16.mxu0 0
  %364 = vmatpush1.bf16.msra.mxu0 0
  %365 = vmatprep.subr.bf16.mxu0 0
  %366 = vmatpush1.bf16.msra.mxu0 0
  %367 = vmatprep.subr.bf16.mxu0 0
  %368 = vmatpush1.bf16.msra.mxu0 0
  %369 = vmatprep.subr.bf16.mxu0 0
  %370 = vmatpush1.bf16.msra.mxu0 0
  %371 = vmatprep.mubr.bf16.mxu0 0
  %372 = vmatmul.mubr.bf16.gmra.mrb[0].mxu0 %v227
  %v373 = vpop.f32.mrb[0].mxu0
  %v374 = vadd.f32 0.0, %v373
  %v375 = vpop.f32.mrb[0].mxu0
  %v376 = vpop.f32.mrb[0].mxu0
  %v377 = vadd.f32 0.0, %v376
  %v378 = vpop.f32.mrb[0].mxu0
  %379 = vmatprep.mubr.bf16.mxu0 0
  %380 = vmatmul.mubr.bf16.gmra.mrb[0].mxu0 %v228
  %v381 = vpop.f32.mrb[0].mxu0
  %v382 = vadd.f32 0.0, %v381
  %v383 = vpop.f32.mrb[0].mxu0
  %v384 = vpop.f32.mrb[0].mxu0
  %v385 = vadd.f32 0.0, %v384
  %v386 = vpop.f32.mrb[0].mxu0
  %387 = vmatprep.mubr.bf16.mxu0 0
  %388 = vmatmul.mubr.bf16.gmra.mrb[0].mxu0 %v229
  %v389 = vpop.f32.mrb[0].mxu0
  %v390 = vadd.f32 0.0, %v389
  %v391 = vpop.f32.mrb[0].mxu0
  %v392 = vpop.f32.mrb[0].mxu0
  %v393 = vadd.f32 0.0, %v392
  %v394 = vpop.f32.mrb[0].mxu0
  %395 = vmatprep.mubr.bf16.mxu0 0
  %396 = vmatmul.mubr.bf16.gmra.mrb[0].mxu0 %v230
  %v397 = vpop.f32.mrb[0].mxu0
  %v398 = vadd.f32 0.0, %v397
  %v399 = vpop.f32.mrb[0].mxu0
  %v400 = vpop.f32.mrb[0].mxu0
  %v401 = vadd.f32 0.0, %v400
  %v402 = vpop.f32.mrb[0].mxu0
  %403 = vmatprep.mubr.bf16.mxu0 0
  %404 = vmatmul.mubr.bf16.gmra.mrb[0].mxu0 %v231
  %v405 = vpop.f32.mrb[0].mxu0
  %v406 = vadd.f32 0.0, %v405
  %v407 = vpop.f32.mrb[0].mxu0
  %v408 = vpop.f32.mrb[0].mxu0
  %v409 = vadd.f32 0.0, %v408
  %v410 = vpop.f32.mrb[0].mxu0
  %411 = vmatprep.mubr.bf16.mxu0 0
  %412 = vmatmul.mubr.bf16.gmra.mrb[0].mxu0 %v232
  %v413 = vpop.f32.mrb[0].mxu0
  %v414 = vadd.f32 0.0, %v413
  %v415 = vpop.f32.mrb[0].mxu0
  %v416 = vpop.f32.mrb[0].mxu0
  %v417 = vadd.f32 0.0, %v416
  %v418 = vpop.f32.mrb[0].mxu0
  %419 = vmatprep.mubr.bf16.mxu0 0
  %420 = vmatmul.mubr.bf16.gmra.mrb[0].mxu0 %v233
  %v421 = vpop.f32.mrb[0].mxu0
  %v422 = vadd.f32 0.0, %v421
  %v423 = vpop.f32.mrb[0].mxu0
  %v424 = vpop.f32.mrb[0].mxu0
  %v425 = vadd.f32 0.0, %v424
  %v426 = vpop.f32.mrb[0].mxu0
  %427 = vmatprep.mubr.bf16.mxu0 0
  %428 = vmatmul.mubr.bf16.gmra.mrb[0].mxu0 %v234
  %v429 = vpop.f32.mrb[0].mxu0
  %v430 = vadd.f32 0.0, %v429
  %v431 = vpop.f32.mrb[0].mxu0
  %v432 = vpop.f32.mrb[0].mxu0
  %v433 = vadd.f32 0.0, %v432
  %v434 = vpop.f32.mrb[0].mxu0
  %435 = vmatprep.mubr.bf16.mxu0 0
  %436 = vmatmul.mubr.bf16.gmra.mrb[0].mxu0 %v235
  %v437 = vpop.f32.mrb[0].mxu0
  %v438 = vadd.f32 0.0, %v437
  %v439 = vpop.f32.mrb[0].mxu0
  %v440 = vpop.f32.mrb[0].mxu0
  %v441 = vadd.f32 0.0, %v440
  %v442 = vpop.f32.mrb[0].mxu0
  %443 = vmatprep.mubr.bf16.mxu0 0
  %444 = vmatmul.mubr.bf16.gmra.mrb[0].mxu0 %v236
  %v445 = vpop.f32.mrb[0].mxu0
  %v446 = vadd.f32 0.0, %v445
  %v447 = vpop.f32.mrb[0].mxu0
  %v448 = vpop.f32.mrb[0].mxu0
  %v449 = vadd.f32 0.0, %v448
  %v450 = vpop.f32.mrb[0].mxu0
  %451 = vmatprep.mubr.bf16.mxu0 0
  %452 = vmatmul.mubr.bf16.gmra.mrb[0].mxu0 %v237
  %v453 = vpop.f32.mrb[0].mxu0
  %v454 = vadd.f32 0.0, %v453
  %v455 = vpop.f32.mrb[0].mxu0
  %v456 = vpop.f32.mrb[0].mxu0
  %v457 = vadd.f32 0.0, %v456
  %v458 = vpop.f32.mrb[0].mxu0
  %459 = vmatprep.mubr.bf16.mxu0 0
  %460 = vmatmul.mubr.bf16.gmra.mrb[0].mxu0 %v238
  %v461 = vpop.f32.mrb[0].mxu0
  %v462 = vadd.f32 0.0, %v461
  %v463 = vpop.f32.mrb[0].mxu0
  %v464 = vpop.f32.mrb[0].mxu0
  %v465 = vadd.f32 0.0, %v464
  %v466 = vpop.f32.mrb[0].mxu0
  %467 = vmatprep.mubr.bf16.mxu0 0
  %468 = vmatmul.mubr.bf16.gmra.mrb[0].mxu0 %v239
  %v469 = vpop.f32.mrb[0].mxu0
  %v470 = vadd.f32 0.0, %v469
  %v471 = vpop.f32.mrb[0].mxu0
  %v472 = vpop.f32.mrb[0].mxu0
  %v473 = vadd.f32 0.0, %v472
  %v474 = vpop.f32.mrb[0].mxu0
  %475 = vmatprep.mubr.bf16.mxu0 0
  %476 = vmatmul.mubr.bf16.gmra.mrb[0].mxu0 %v240
  %v477 = vpop.f32.mrb[0].mxu0
  %v478 = vadd.f32 0.0, %v477
  %v479 = vpop.f32.mrb[0].mxu0
  %v480 = vpop.f32.mrb[0].mxu0
  %v481 = vadd.f32 0.0, %v480
  %v482 = vpop.f32.mrb[0].mxu0
  %483 = vmatprep.mubr.bf16.mxu0 0
  %484 = vmatmul.mubr.bf16.gmra.mrb[0].mxu0 %v241
  %v485 = vpop.f32.mrb[0].mxu0
  %v486 = vadd.f32 0.0, %v485
  %v487 = vpop.f32.mrb[0].mxu0
  %v488 = vpop.f32.mrb[0].mxu0
  %v489 = vadd.f32 0.0, %v488
  %v490 = vpop.f32.mrb[0].mxu0
  %491 = vmatprep.mubr.bf16.mxu0 0
  %492 = vmatmul.mubr.bf16.gmra.mrb[0].mxu0 %v242
  %v493 = vpop.f32.mrb[0].mxu0
  %v494 = vadd.f32 0.0, %v493
  %v495 = vpop.f32.mrb[0].mxu0
  %v496 = vpop.f32.mrb[0].mxu0
  %v497 = vadd.f32 0.0, %v496
  %v498 = vpop.f32.mrb[0].mxu0
  %499 = vmatprep.mubr.bf16.mxu0 0
  %500 = vmatmul.mubr.bf16.gmra.mrb[0].mxu0 %v243
  %v501 = vpop.f32.mrb[0].mxu0
  %v502 = vadd.f32 0.0, %v501
  %v503 = vpop.f32.mrb[0].mxu0
  %v504 = vpop.f32.mrb[0].mxu0
  %v505 = vadd.f32 0.0, %v504
  %v506 = vpop.f32.mrb[0].mxu0
  %507 = vmatprep.mubr.bf16.mxu0 0
  %508 = vmatmul.mubr.bf16.gmra.mrb[0].mxu0 %v244
  %v509 = vpop.f32.mrb[0].mxu0
  %v510 = vadd.f32 0.0, %v509
  %v511 = vpop.f32.mrb[0].mxu0
  %v512 = vpop.f32.mrb[0].mxu0
  %v513 = vadd.f32 0.0, %v512
  %v514 = vpop.f32.mrb[0].mxu0
  %515 = vmatprep.mubr.bf16.mxu0 0
  %516 = vmatmul.mubr.bf16.gmra.mrb[0].mxu0 %v245
  %v517 = vpop.f32.mrb[0].mxu0
  %v518 = vadd.f32 0.0, %v517
  %v519 = vpop.f32.mrb[0].mxu0
  %v520 = vpop.f32.mrb[0].mxu0
  %v521 = vadd.f32 0.0, %v520
  %v522 = vpop.f32.mrb[0].mxu0
  %523 = vmatprep.mubr.bf16.mxu0 0
  %524 = vmatmul.mubr.bf16.gmra.mrb[0].mxu0 %v246
  %v525 = vpop.f32.mrb[0].mxu0
  %v526 = vadd.f32 0.0, %v525
  %v527 = vpop.f32.mrb[0].mxu0
  %v528 = vpop.f32.mrb[0].mxu0
  %v529 = vadd.f32 0.0, %v528
  %v530 = vpop.f32.mrb[0].mxu0
  %531 = vmatprep.mubr.bf16.mxu0 0
  %532 = vmatmul.mubr.bf16.gmra.mrb[0].mxu0 %v247
  %v533 = vpop.f32.mrb[0].mxu0
  %v534 = vadd.f32 0.0, %v533
  %v535 = vpop.f32.mrb[0].mxu0
  %v536 = vpop.f32.mrb[0].mxu0
  %v537 = vadd.f32 0.0, %v536
  %v538 = vpop.f32.mrb[0].mxu0
  %539 = vmatprep.mubr.bf16.mxu0 0
  %540 = vmatmul.mubr.bf16.gmra.mrb[0].mxu0 %v248
  %v541 = vpop.f32.mrb[0].mxu0
  %v542 = vadd.f32 0.0, %v541
  %v543 = vpop.f32.mrb[0].mxu0
  %v544 = vpop.f32.mrb[0].mxu0
  %v545 = vadd.f32 0.0, %v544
  %v546 = vpop.f32.mrb[0].mxu0
  %547 = vmatprep.mubr.bf16.mxu0 0
  %548 = vmatmul.mubr.bf16.gmra.mrb[0].mxu0 %v249
  %v549 = vpop.f32.mrb[0].mxu0
  %v550 = vadd.f32 0.0, %v549
  %v551 = vpop.f32.mrb[0].mxu0
  %v552 = vpop.f32.mrb[0].mxu0
  %v553 = vadd.f32 0.0, %v552
  %v554 = vpop.f32.mrb[0].mxu0
  %555 = vmatprep.mubr.bf16.mxu0 0
  %556 = vmatmul.mubr.bf16.gmra.mrb[0].mxu0 %v250
  %v557 = vpop.f32.mrb[0].mxu0
  %v558 = vadd.f32 0.0, %v557
  %v559 = vpop.f32.mrb[0].mxu0
  %v560 = vpop.f32.mrb[0].mxu0
  %v561 = vadd.f32 0.0, %v560
  %v562 = vpop.f32.mrb[0].mxu0
  %563 = vmatprep.mubr.bf16.mxu0 0
  %564 = vmatmul.mubr.bf16.gmra.mrb[0].mxu0 %v251
  %v565 = vpop.f32.mrb[0].mxu0
  %v566 = vadd.f32 0.0, %v565
  %v567 = vpop.f32.mrb[0].mxu0
  %v568 = vpop.f32.mrb[0].mxu0
  %v569 = vadd.f32 0.0, %v568
  %v570 = vpop.f32.mrb[0].mxu0
  %571 = vmatprep.mubr.bf16.mxu0 0
  %572 = vmatmul.mubr.bf16.gmra.mrb[0].mxu0 %v252
  %v573 = vpop.f32.mrb[0].mxu0
  %v574 = vadd.f32 0.0, %v573
  %v575 = vpop.f32.mrb[0].mxu0
  %v576 = vpop.f32.mrb[0].mxu0
  %v577 = vadd.f32 0.0, %v576
  %v578 = vpop.f32.mrb[0].mxu0
  %579 = vmatprep.mubr.bf16.mxu0 0
  %580 = vmatmul.mubr.bf16.gmra.mrb[0].mxu0 %v253
  %v581 = vpop.f32.mrb[0].mxu0
  %v582 = vadd.f32 0.0, %v581
  %v583 = vpop.f32.mrb[0].mxu0
  %v584 = vpop.f32.mrb[0].mxu0
  %v585 = vadd.f32 0.0, %v584
  %v586 = vpop.f32.mrb[0].mxu0
  %587 = vmatprep.mubr.bf16.mxu0 0
  %588 = vmatmul.mubr.bf16.gmra.mrb[0].mxu0 %v254
  %v589 = vpop.f32.mrb[0].mxu0
  %v590 = vadd.f32 0.0, %v589
  %v591 = vpop.f32.mrb[0].mxu0
  %v592 = vpop.f32.mrb[0].mxu0
  %v593 = vadd.f32 0.0, %v592
  %v594 = vpop.f32.mrb[0].mxu0
  %595 = vmatprep.mubr.bf16.mxu0 0
  %596 = vmatmul.mubr.bf16.gmra.mrb[0].mxu0 %v255
  %v597 = vpop.f32.mrb[0].mxu0
  %v598 = vadd.f32 0.0, %v597
  %v599 = vpop.f32.mrb[0].mxu0
  %v600 = vpop.f32.mrb[0].mxu0
  %v601 = vadd.f32 0.0, %v600
  %v602 = vpop.f32.mrb[0].mxu0
  %603 = vmatprep.mubr.bf16.mxu0 0
  %604 = vmatmul.mubr.bf16.gmra.mrb[0].mxu0 %v256
  %v605 = vpop.f32.mrb[0].mxu0
  %v606 = vadd.f32 0.0, %v605
  %v607 = vpop.f32.mrb[0].mxu0
  %v608 = vpop.f32.mrb[0].mxu0
  %v609 = vadd.f32 0.0, %v608
  %v610 = vpop.f32.mrb[0].mxu0
  %611 = vmatprep.mubr.bf16.mxu0 0
  %612 = vmatmul.mubr.bf16.gmra.mrb[0].mxu0 %v257
  %v613 = vpop.f32.mrb[0].mxu0
  %v614 = vadd.f32 0.0, %v613
  %v615 = vpop.f32.mrb[0].mxu0
  %v616 = vpop.f32.mrb[0].mxu0
  %v617 = vadd.f32 0.0, %v616
  %v618 = vpop.f32.mrb[0].mxu0
  %619 = vmatprep.mubr.bf16.mxu0 0
  %620 = vmatmul.mubr.bf16.gmra.mrb[0].mxu0 %v258
  %v621 = vpop.f32.mrb[0].mxu0
  %v622 = vadd.f32 0.0, %v621
  %v623 = vpop.f32.mrb[0].mxu0
  %v624 = vpop.f32.mrb[0].mxu0
  %v625 = vadd.f32 0.0, %v624
  %v626 = vpop.f32.mrb[0].mxu0
  %627 = vdwg.mxu0
  %v628 = vld [vmem:[%s0] sm:$0xf]
  %v629 = vld [vmem:[%s0 + $0x4] sm:$0xf]
  %v630 = vld [vmem:[%s0 + $0x8] sm:$0xf]
  %v631 = vld [vmem:[%s0 + $0xc] sm:$0xf]
  %v632 = vld [vmem:[%s0 + $0x10] sm:$0xf]
  %v633 = vld [vmem:[%s0 + $0x14] sm:$0xf]
  %v634 = vld [vmem:[%s0 + $0x18] sm:$0xf]
  %v635 = vld [vmem:[%s0 + $0x1c] sm:$0xf]
  %v636 = vld [vmem:[%s0 + $0x20] sm:$0xf]
  %v637 = vld [vmem:[%s0 + $0x24] sm:$0xf]
  %v638 = vld [vmem:[%s0 + $0x28] sm:$0xf]
  %v639 = vld [vmem:[%s0 + $0x2c] sm:$0xf]
  %v640 = vld [vmem:[%s0 + $0x30] sm:$0xf]
  %v641 = vld [vmem:[%s0 + $0x34] sm:$0xf]
  %v642 = vld [vmem:[%s0 + $0x38] sm:$0xf]
  %v643 = vld [vmem:[%s0 + $0x3c] sm:$0xf]
  %v644 = vld [vmem:[%s0 + $0x40] sm:$0xf]
  %v645 = vld [vmem:[%s0 + $0x44] sm:$0xf]
  %v646 = vld [vmem:[%s0 + $0x48] sm:$0xf]
  %v647 = vld [vmem:[%s0 + $0x4c] sm:$0xf]
  %v648 = vld [vmem:[%s0 + $0x50] sm:$0xf]
  %v649 = vld [vmem:[%s0 + $0x54] sm:$0xf]
  %v650 = vld [vmem:[%s0 + $0x58] sm:$0xf]
  %v651 = vld [vmem:[%s0 + $0x5c] sm:$0xf]
  %v652 = vld [vmem:[%s0 + $0x60] sm:$0xf]
  %v653 = vld [vmem:[%s0 + $0x64] sm:$0xf]
  %v654 = vld [vmem:[%s0 + $0x68] sm:$0xf]
  %v655 = vld [vmem:[%s0 + $0x6c] sm:$0xf]
  %v656 = vld [vmem:[%s0 + $0x70] sm:$0xf]
  %v657 = vld [vmem:[%s0 + $0x74] sm:$0xf]
  %v658 = vld [vmem:[%s0 + $0x78] sm:$0xf]
  %v659 = vld [vmem:[%s0 + $0x7c] sm:$0xf]
  %v660 = vld [vmem:[%s0 + $0x80] sm:$0xf]
  %v661 = vld [vmem:[%s0 + $0x84] sm:$0xf]
  %v662 = vld [vmem:[%s0 + $0x88] sm:$0xf]
  %v663 = vld [vmem:[%s0 + $0x8c] sm:$0xf]
  %v664 = vld [vmem:[%s0 + $0x90] sm:$0xf]
  %v665 = vld [vmem:[%s0 + $0x94] sm:$0xf]
  %v666 = vld [vmem:[%s0 + $0x98] sm:$0xf]
  %v667 = vld [vmem:[%s0 + $0x9c] sm:$0xf]
  %v668 = vld [vmem:[%s0 + $0xa0] sm:$0xf]
  %v669 = vld [vmem:[%s0 + $0xa4] sm:$0xf]
  %v670 = vld [vmem:[%s0 + $0xa8] sm:$0xf]
  %v671 = vld [vmem:[%s0 + $0xac] sm:$0xf]
  %v672 = vld [vmem:[%s0 + $0xb0] sm:$0xf]
  %v673 = vld [vmem:[%s0 + $0xb4] sm:$0xf]
  %v674 = vld [vmem:[%s0 + $0xb8] sm:$0xf]
  %v675 = vld [vmem:[%s0 + $0xbc] sm:$0xf]
  %v676 = vld [vmem:[%s0 + $0xc0] sm:$0xf]
  %v677 = vld [vmem:[%s0 + $0xc4] sm:$0xf]
  %v678 = vld [vmem:[%s0 + $0xc8] sm:$0xf]
  %v679 = vld [vmem:[%s0 + $0xcc] sm:$0xf]
  %v680 = vld [vmem:[%s0 + $0xd0] sm:$0xf]
  %v681 = vld [vmem:[%s0 + $0xd4] sm:$0xf]
  %v682 = vld [vmem:[%s0 + $0xd8] sm:$0xf]
  %v683 = vld [vmem:[%s0 + $0xdc] sm:$0xf]
  %v684 = vld [vmem:[%s0 + $0xe0] sm:$0xf]
  %v685 = vld [vmem:[%s0 + $0xe4] sm:$0xf]
  %v686 = vld [vmem:[%s0 + $0xe8] sm:$0xf]
  %v687 = vld [vmem:[%s0 + $0xec] sm:$0xf]
  %v688 = vld [vmem:[%s0 + $0xf0] sm:$0xf]
  %v689 = vld [vmem:[%s0 + $0xf4] sm:$0xf]
  %v690 = vld [vmem:[%s0 + $0xf8] sm:$0xf]
  %v691 = vld [vmem:[%s0 + $0xfc] sm:$0xf]
  %v692 = vunpack.c.l.bf16 %v628
  %v693 = vunpack.c.l.bf16 %v629
  %v694 = vunpack.c.l.bf16 %v630
  %v695 = vunpack.c.l.bf16 %v631
  %v696 = vunpack.c.l.bf16 %v632
  %v697 = vunpack.c.l.bf16 %v633
  %v698 = vunpack.c.l.bf16 %v634
  %v699 = vunpack.c.l.bf16 %v635
  %v700 = vunpack.c.l.bf16 %v636
  %v701 = vunpack.c.l.bf16 %v637
  %v702 = vunpack.c.l.bf16 %v638
  %v703 = vunpack.c.l.bf16 %v639
  %v704 = vunpack.c.l.bf16 %v640
  %v705 = vunpack.c.l.bf16 %v641
  %v706 = vunpack.c.l.bf16 %v642
  %v707 = vunpack.c.l.bf16 %v643
  %v708 = vunpack.c.l.bf16 %v644
  %v709 = vunpack.c.l.bf16 %v645
  %v710 = vunpack.c.l.bf16 %v646
  %v711 = vunpack.c.l.bf16 %v647
  %v712 = vunpack.c.l.bf16 %v648
  %v713 = vunpack.c.l.bf16 %v649
  %v714 = vunpack.c.l.bf16 %v650
  %v715 = vunpack.c.l.bf16 %v651
  %v716 = vunpack.c.l.bf16 %v652
  %v717 = vunpack.c.l.bf16 %v653
  %v718 = vunpack.c.l.bf16 %v654
  %v719 = vunpack.c.l.bf16 %v655
  %v720 = vunpack.c.l.bf16 %v656
  %v721 = vunpack.c.l.bf16 %v657
  %v722 = vunpack.c.l.bf16 %v658
  %v723 = vunpack.c.l.bf16 %v659
  %v724 = vunpack.c.l.bf16 %v660
  %v725 = vunpack.c.l.bf16 %v661
  %v726 = vunpack.c.l.bf16 %v662
  %v727 = vunpack.c.l.bf16 %v663
  %v728 = vunpack.c.l.bf16 %v664
  %v729 = vunpack.c.l.bf16 %v665
  %v730 = vunpack.c.l.bf16 %v666
  %v731 = vunpack.c.l.bf16 %v667
  %v732 = vunpack.c.l.bf16 %v668
  %v733 = vunpack.c.l.bf16 %v669
  %v734 = vunpack.c.l.bf16 %v670
  %v735 = vunpack.c.l.bf16 %v671
  %v736 = vunpack.c.l.bf16 %v672
  %v737 = vunpack.c.l.bf16 %v673
  %v738 = vunpack.c.l.bf16 %v674
  %v739 = vunpack.c.l.bf16 %v675
  %v740 = vunpack.c.l.bf16 %v676
  %v741 = vunpack.c.l.bf16 %v677
  %v742 = vunpack.c.l.bf16 %v678
  %v743 = vunpack.c.l.bf16 %v679
  %v744 = vunpack.c.l.bf16 %v680
  %v745 = vunpack.c.l.bf16 %v681
  %v746 = vunpack.c.l.bf16 %v682
  %v747 = vunpack.c.l.bf16 %v683
  %v748 = vunpack.c.l.bf16 %v684
  %v749 = vunpack.c.l.bf16 %v685
  %v750 = vunpack.c.l.bf16 %v686
  %v751 = vunpack.c.l.bf16 %v687
  %v752 = vunpack.c.l.bf16 %v688
  %v753 = vunpack.c.l.bf16 %v689
  %v754 = vunpack.c.l.bf16 %v690
  %v755 = vunpack.c.l.bf16 %v691
  %v756 = vlaneseq
  %v757 = vshrl.u32 %v756, 7
  %v758 = vsub.s32 0, %v757
  %v759 = vrot.slane %v18, %v758
  %v760 = vmul.f32 %v692, %v759
  %v761 = vmul.f32 %v693, %v759
  %v762 = vmul.f32 %v694, %v759
  %v763 = vmul.f32 %v695, %v759
  %v764 = vmul.f32 %v696, %v759
  %v765 = vmul.f32 %v697, %v759
  %v766 = vmul.f32 %v698, %v759
  %v767 = vmul.f32 %v699, %v759
  %v768 = vmul.f32 %v700, %v759
  %v769 = vmul.f32 %v701, %v759
  %v770 = vmul.f32 %v702, %v759
  %v771 = vmul.f32 %v703, %v759
  %v772 = vmul.f32 %v704, %v759
  %v773 = vmul.f32 %v705, %v759
  %v774 = vmul.f32 %v706, %v759
  %v775 = vmul.f32 %v707, %v759
  %v776 = vmul.f32 %v708, %v759
  %v777 = vmul.f32 %v709, %v759
  %v778 = vmul.f32 %v710, %v759
  %v779 = vmul.f32 %v711, %v759
  %v780 = vmul.f32 %v712, %v759
  %v781 = vmul.f32 %v713, %v759
  %v782 = vmul.f32 %v714, %v759
  %v783 = vmul.f32 %v715, %v759
  %v784 = vmul.f32 %v716, %v759
  %v785 = vmul.f32 %v717, %v759
  %v786 = vmul.f32 %v718, %v759
  %v787 = vmul.f32 %v719, %v759
  %v788 = vmul.f32 %v720, %v759
  %v789 = vmul.f32 %v721, %v759
  %v790 = vmul.f32 %v722, %v759
  %v791 = vmul.f32 %v723, %v759
  %v792 = vmul.f32 %v724, %v759
  %v793 = vmul.f32 %v725, %v759
  %v794 = vmul.f32 %v726, %v759
  %v795 = vmul.f32 %v727, %v759
  %v796 = vmul.f32 %v728, %v759
  %v797 = vmul.f32 %v729, %v759
  %v798 = vmul.f32 %v730, %v759
  %v799 = vmul.f32 %v731, %v759
  %v800 = vmul.f32 %v732, %v759
  %v801 = vmul.f32 %v733, %v759
  %v802 = vmul.f32 %v734, %v759
  %v803 = vmul.f32 %v735, %v759
  %v804 = vmul.f32 %v736, %v759
  %v805 = vmul.f32 %v737, %v759
  %v806 = vmul.f32 %v738, %v759
  %v807 = vmul.f32 %v739, %v759
  %v808 = vmul.f32 %v740, %v759
  %v809 = vmul.f32 %v741, %v759
  %v810 = vmul.f32 %v742, %v759
  %v811 = vmul.f32 %v743, %v759
  %v812 = vmul.f32 %v744, %v759
  %v813 = vmul.f32 %v745, %v759
  %v814 = vmul.f32 %v746, %v759
  %v815 = vmul.f32 %v747, %v759
  %v816 = vmul.f32 %v748, %v759
  %v817 = vmul.f32 %v749, %v759
  %v818 = vmul.f32 %v750, %v759
  %v819 = vmul.f32 %v751, %v759
  %v820 = vmul.f32 %v752, %v759
  %v821 = vmul.f32 %v753, %v759
  %v822 = vmul.f32 %v754, %v759
  %v823 = vmul.f32 %v755, %v759
  %v824 = vlaneseq
  %v825 = vshrl.u32 %v824, 7
  %v826 = vsub.s32 1, %v825
  %v827 = vrot.slane %v18, %v826
  %v828 = vadd.f32 %v760, %v827
  %v829 = vadd.f32 %v761, %v827
  %v830 = vadd.f32 %v762, %v827
  %v831 = vadd.f32 %v763, %v827
  %v832 = vadd.f32 %v764, %v827
  %v833 = vadd.f32 %v765, %v827
  %v834 = vadd.f32 %v766, %v827
  %v835 = vadd.f32 %v767, %v827
  %v836 = vadd.f32 %v768, %v827
  %v837 = vadd.f32 %v769, %v827
  %v838 = vadd.f32 %v770, %v827
  %v839 = vadd.f32 %v771, %v827
  %v840 = vadd.f32 %v772, %v827
  %v841 = vadd.f32 %v773, %v827
  %v842 = vadd.f32 %v774, %v827
  %v843 = vadd.f32 %v775, %v827
  %v844 = vadd.f32 %v776, %v827
  %v845 = vadd.f32 %v777, %v827
  %v846 = vadd.f32 %v778, %v827
  %v847 = vadd.f32 %v779, %v827
  %v848 = vadd.f32 %v780, %v827
  %v849 = vadd.f32 %v781, %v827
  %v850 = vadd.f32 %v782, %v827
  %v851 = vadd.f32 %v783, %v827
  %v852 = vadd.f32 %v784, %v827
  %v853 = vadd.f32 %v785, %v827
  %v854 = vadd.f32 %v786, %v827
  %v855 = vadd.f32 %v787, %v827
  %v856 = vadd.f32 %v788, %v827
  %v857 = vadd.f32 %v789, %v827
  %v858 = vadd.f32 %v790, %v827
  %v859 = vadd.f32 %v791, %v827
  %v860 = vadd.f32 %v792, %v827
  %v861 = vadd.f32 %v793, %v827
  %v862 = vadd.f32 %v794, %v827
  %v863 = vadd.f32 %v795, %v827
  %v864 = vadd.f32 %v796, %v827
  %v865 = vadd.f32 %v797, %v827
  %v866 = vadd.f32 %v798, %v827
  %v867 = vadd.f32 %v799, %v827
  %v868 = vadd.f32 %v800, %v827
  %v869 = vadd.f32 %v801, %v827
  %v870 = vadd.f32 %v802, %v827
  %v871 = vadd.f32 %v803, %v827
  %v872 = vadd.f32 %v804, %v827
  %v873 = vadd.f32 %v805, %v827
  %v874 = vadd.f32 %v806, %v827
  %v875 = vadd.f32 %v807, %v827
  %v876 = vadd.f32 %v808, %v827
  %v877 = vadd.f32 %v809, %v827
  %v878 = vadd.f32 %v810, %v827
  %v879 = vadd.f32 %v811, %v827
  %v880 = vadd.f32 %v812, %v827
  %v881 = vadd.f32 %v813, %v827
  %v882 = vadd.f32 %v814, %v827
  %v883 = vadd.f32 %v815, %v827
  %v884 = vadd.f32 %v816, %v827
  %v885 = vadd.f32 %v817, %v827
  %v886 = vadd.f32 %v818, %v827
  %v887 = vadd.f32 %v819, %v827
  %v888 = vadd.f32 %v820, %v827
  %v889 = vadd.f32 %v821, %v827
  %v890 = vadd.f32 %v822, %v827
  %v891 = vadd.f32 %v823, %v827
  %v892 = vlaneseq
  %v893 = vshrl.u32 %v892, 7
  %v894 = vsub.s32 2, %v893
  %v895 = vrot.slane %v18, %v894
  %v896 = vmul.f32 %v374, %v895
  %v897 = vmul.f32 %v377, %v895
  %v898 = vmul.f32 %v382, %v895
  %v899 = vmul.f32 %v385, %v895
  %v900 = vmul.f32 %v390, %v895
  %v901 = vmul.f32 %v393, %v895
  %v902 = vmul.f32 %v398, %v895
  %v903 = vmul.f32 %v401, %v895
  %v904 = vmul.f32 %v406, %v895
  %v905 = vmul.f32 %v409, %v895
  %v906 = vmul.f32 %v414, %v895
  %v907 = vmul.f32 %v417, %v895
  %v908 = vmul.f32 %v422, %v895
  %v909 = vmul.f32 %v425, %v895
  %v910 = vmul.f32 %v430, %v895
  %v911 = vmul.f32 %v433, %v895
  %v912 = vmul.f32 %v438, %v895
  %v913 = vmul.f32 %v441, %v895
  %v914 = vmul.f32 %v446, %v895
  %v915 = vmul.f32 %v449, %v895
  %v916 = vmul.f32 %v454, %v895
  %v917 = vmul.f32 %v457, %v895
  %v918 = vmul.f32 %v462, %v895
  %v919 = vmul.f32 %v465, %v895
  %v920 = vmul.f32 %v470, %v895
  %v921 = vmul.f32 %v473, %v895
  %v922 = vmul.f32 %v478, %v895
  %v923 = vmul.f32 %v481, %v895
  %v924 = vmul.f32 %v486, %v895
  %v925 = vmul.f32 %v489, %v895
  %v926 = vmul.f32 %v494, %v895
  %v927 = vmul.f32 %v497, %v895
  %v928 = vmul.f32 %v502, %v895
  %v929 = vmul.f32 %v505, %v895
  %v930 = vmul.f32 %v510, %v895
  %v931 = vmul.f32 %v513, %v895
  %v932 = vmul.f32 %v518, %v895
  %v933 = vmul.f32 %v521, %v895
  %v934 = vmul.f32 %v526, %v895
  %v935 = vmul.f32 %v529, %v895
  %v936 = vmul.f32 %v534, %v895
  %v937 = vmul.f32 %v537, %v895
  %v938 = vmul.f32 %v542, %v895
  %v939 = vmul.f32 %v545, %v895
  %v940 = vmul.f32 %v550, %v895
  %v941 = vmul.f32 %v553, %v895
  %v942 = vmul.f32 %v558, %v895
  %v943 = vmul.f32 %v561, %v895
  %v944 = vmul.f32 %v566, %v895
  %v945 = vmul.f32 %v569, %v895
  %v946 = vmul.f32 %v574, %v895
  %v947 = vmul.f32 %v577, %v895
  %v948 = vmul.f32 %v582, %v895
  %v949 = vmul.f32 %v585, %v895
  %v950 = vmul.f32 %v590, %v895
  %v951 = vmul.f32 %v593, %v895
  %v952 = vmul.f32 %v598, %v895
  %v953 = vmul.f32 %v601, %v895
  %v954 = vmul.f32 %v606, %v895
  %v955 = vmul.f32 %v609, %v895
  %v956 = vmul.f32 %v614, %v895
  %v957 = vmul.f32 %v617, %v895
  %v958 = vmul.f32 %v622, %v895
  %v959 = vmul.f32 %v625, %v895
  %v960 = vadd.f32 %v828, %v896
  %v961 = vadd.f32 %v829, %v897
  %v962 = vadd.f32 %v830, %v898
  %v963 = vadd.f32 %v831, %v899
  %v964 = vadd.f32 %v832, %v900
  %v965 = vadd.f32 %v833, %v901
  %v966 = vadd.f32 %v834, %v902
  %v967 = vadd.f32 %v835, %v903
  %v968 = vadd.f32 %v836, %v904
  %v969 = vadd.f32 %v837, %v905
  %v970 = vadd.f32 %v838, %v906
  %v971 = vadd.f32 %v839, %v907
  %v972 = vadd.f32 %v840, %v908
  %v973 = vadd.f32 %v841, %v909
  %v974 = vadd.f32 %v842, %v910
  %v975 = vadd.f32 %v843, %v911
  %v976 = vadd.f32 %v844, %v912
  %v977 = vadd.f32 %v845, %v913
  %v978 = vadd.f32 %v846, %v914
  %v979 = vadd.f32 %v847, %v915
  %v980 = vadd.f32 %v848, %v916
  %v981 = vadd.f32 %v849, %v917
  %v982 = vadd.f32 %v850, %v918
  %v983 = vadd.f32 %v851, %v919
  %v984 = vadd.f32 %v852, %v920
  %v985 = vadd.f32 %v853, %v921
  %v986 = vadd.f32 %v854, %v922
  %v987 = vadd.f32 %v855, %v923
  %v988 = vadd.f32 %v856, %v924
  %v989 = vadd.f32 %v857, %v925
  %v990 = vadd.f32 %v858, %v926
  %v991 = vadd.f32 %v859, %v927
  %v992 = vadd.f32 %v860, %v928
  %v993 = vadd.f32 %v861, %v929
  %v994 = vadd.f32 %v862, %v930
  %v995 = vadd.f32 %v863, %v931
  %v996 = vadd.f32 %v864, %v932
  %v997 = vadd.f32 %v865, %v933
  %v998 = vadd.f32 %v866, %v934
  %v999 = vadd.f32 %v867, %v935
  %v1000 = vadd.f32 %v868, %v936
  %v1001 = vadd.f32 %v869, %v937
  %v1002 = vadd.f32 %v870, %v938
  %v1003 = vadd.f32 %v871, %v939
  %v1004 = vadd.f32 %v872, %v940
  %v1005 = vadd.f32 %v873, %v941
  %v1006 = vadd.f32 %v874, %v942
  %v1007 = vadd.f32 %v875, %v943
  %v1008 = vadd.f32 %v876, %v944
  %v1009 = vadd.f32 %v877, %v945
  %v1010 = vadd.f32 %v878, %v946
  %v1011 = vadd.f32 %v879, %v947
  %v1012 = vadd.f32 %v880, %v948
  %v1013 = vadd.f32 %v881, %v949
  %v1014 = vadd.f32 %v882, %v950
  %v1015 = vadd.f32 %v883, %v951
  %v1016 = vadd.f32 %v884, %v952
  %v1017 = vadd.f32 %v885, %v953
  %v1018 = vadd.f32 %v886, %v954
  %v1019 = vadd.f32 %v887, %v955
  %v1020 = vadd.f32 %v888, %v956
  %v1021 = vadd.f32 %v889, %v957
  %v1022 = vadd.f32 %v890, %v958
  %v1023 = vadd.f32 %v891, %v959
  %v1024 = vlaneseq
  %v1025 = vshrl.u32 %v1024, 7
  %v1026 = vsub.s32 3, %v1025
  %v1027 = vrot.slane %v18, %v1026
  %v1028 = vadd.f32 %v960, %v1027
  %v1029 = vadd.f32 %v961, %v1027
  %v1030 = vadd.f32 %v962, %v1027
  %v1031 = vadd.f32 %v963, %v1027
  %v1032 = vadd.f32 %v964, %v1027
  %v1033 = vadd.f32 %v965, %v1027
  %v1034 = vadd.f32 %v966, %v1027
  %v1035 = vadd.f32 %v967, %v1027
  %v1036 = vadd.f32 %v968, %v1027
  %v1037 = vadd.f32 %v969, %v1027
  %v1038 = vadd.f32 %v970, %v1027
  %v1039 = vadd.f32 %v971, %v1027
  %v1040 = vadd.f32 %v972, %v1027
  %v1041 = vadd.f32 %v973, %v1027
  %v1042 = vadd.f32 %v974, %v1027
  %v1043 = vadd.f32 %v975, %v1027
  %v1044 = vadd.f32 %v976, %v1027
  %v1045 = vadd.f32 %v977, %v1027
  %v1046 = vadd.f32 %v978, %v1027
  %v1047 = vadd.f32 %v979, %v1027
  %v1048 = vadd.f32 %v980, %v1027
  %v1049 = vadd.f32 %v981, %v1027
  %v1050 = vadd.f32 %v982, %v1027
  %v1051 = vadd.f32 %v983, %v1027
  %v1052 = vadd.f32 %v984, %v1027
  %v1053 = vadd.f32 %v985, %v1027
  %v1054 = vadd.f32 %v986, %v1027
  %v1055 = vadd.f32 %v987, %v1027
  %v1056 = vadd.f32 %v988, %v1027
  %v1057 = vadd.f32 %v989, %v1027
  %v1058 = vadd.f32 %v990, %v1027
  %v1059 = vadd.f32 %v991, %v1027
  %v1060 = vadd.f32 %v992, %v1027
  %v1061 = vadd.f32 %v993, %v1027
  %v1062 = vadd.f32 %v994, %v1027
  %v1063 = vadd.f32 %v995, %v1027
  %v1064 = vadd.f32 %v996, %v1027
  %v1065 = vadd.f32 %v997, %v1027
  %v1066 = vadd.f32 %v998, %v1027
  %v1067 = vadd.f32 %v999, %v1027
  %v1068 = vadd.f32 %v1000, %v1027
  %v1069 = vadd.f32 %v1001, %v1027
  %v1070 = vadd.f32 %v1002, %v1027
  %v1071 = vadd.f32 %v1003, %v1027
  %v1072 = vadd.f32 %v1004, %v1027
  %v1073 = vadd.f32 %v1005, %v1027
  %v1074 = vadd.f32 %v1006, %v1027
  %v1075 = vadd.f32 %v1007, %v1027
  %v1076 = vadd.f32 %v1008, %v1027
  %v1077 = vadd.f32 %v1009, %v1027
  %v1078 = vadd.f32 %v1010, %v1027
  %v1079 = vadd.f32 %v1011, %v1027
  %v1080 = vadd.f32 %v1012, %v1027
  %v1081 = vadd.f32 %v1013, %v1027
  %v1082 = vadd.f32 %v1014, %v1027
  %v1083 = vadd.f32 %v1015, %v1027
  %v1084 = vadd.f32 %v1016, %v1027
  %v1085 = vadd.f32 %v1017, %v1027
  %v1086 = vadd.f32 %v1018, %v1027
  %v1087 = vadd.f32 %v1019, %v1027
  %v1088 = vadd.f32 %v1020, %v1027
  %v1089 = vadd.f32 %v1021, %v1027
  %v1090 = vadd.f32 %v1022, %v1027
  %v1091 = vadd.f32 %v1023, %v1027
  %v1092 = vmax.f32 %v1028, 0.0
  %v1093 = vmax.f32 %v1029, 0.0
  %v1094 = vmax.f32 %v1030, 0.0
  %v1095 = vmax.f32 %v1031, 0.0
  %v1096 = vmax.f32 %v1032, 0.0
  %v1097 = vmax.f32 %v1033, 0.0
  %v1098 = vmax.f32 %v1034, 0.0
  %v1099 = vmax.f32 %v1035, 0.0
  %v1100 = vmax.f32 %v1036, 0.0
  %v1101 = vmax.f32 %v1037, 0.0
  %v1102 = vmax.f32 %v1038, 0.0
  %v1103 = vmax.f32 %v1039, 0.0
  %v1104 = vmax.f32 %v1040, 0.0
  %v1105 = vmax.f32 %v1041, 0.0
  %v1106 = vmax.f32 %v1042, 0.0
  %v1107 = vmax.f32 %v1043, 0.0
  %v1108 = vmax.f32 %v1044, 0.0
  %v1109 = vmax.f32 %v1045, 0.0
  %v1110 = vmax.f32 %v1046, 0.0
  %v1111 = vmax.f32 %v1047, 0.0
  %v1112 = vmax.f32 %v1048, 0.0
  %v1113 = vmax.f32 %v1049, 0.0
  %v1114 = vmax.f32 %v1050, 0.0
  %v1115 = vmax.f32 %v1051, 0.0
  %v1116 = vmax.f32 %v1052, 0.0
  %v1117 = vmax.f32 %v1053, 0.0
  %v1118 = vmax.f32 %v1054, 0.0
  %v1119 = vmax.f32 %v1055, 0.0
  %v1120 = vmax.f32 %v1056, 0.0
  %v1121 = vmax.f32 %v1057, 0.0
  %v1122 = vmax.f32 %v1058, 0.0
  %v1123 = vmax.f32 %v1059, 0.0
  %v1124 = vmax.f32 %v1060, 0.0
  %v1125 = vmax.f32 %v1061, 0.0
  %v1126 = vmax.f32 %v1062, 0.0
  %v1127 = vmax.f32 %v1063, 0.0
  %v1128 = vmax.f32 %v1064, 0.0
  %v1129 = vmax.f32 %v1065, 0.0
  %v1130 = vmax.f32 %v1066, 0.0
  %v1131 = vmax.f32 %v1067, 0.0
  %v1132 = vmax.f32 %v1068, 0.0
  %v1133 = vmax.f32 %v1069, 0.0
  %v1134 = vmax.f32 %v1070, 0.0
  %v1135 = vmax.f32 %v1071, 0.0
  %v1136 = vmax.f32 %v1072, 0.0
  %v1137 = vmax.f32 %v1073, 0.0
  %v1138 = vmax.f32 %v1074, 0.0
  %v1139 = vmax.f32 %v1075, 0.0
  %v1140 = vmax.f32 %v1076, 0.0
  %v1141 = vmax.f32 %v1077, 0.0
  %v1142 = vmax.f32 %v1078, 0.0
  %v1143 = vmax.f32 %v1079, 0.0
  %v1144 = vmax.f32 %v1080, 0.0
  %v1145 = vmax.f32 %v1081, 0.0
  %v1146 = vmax.f32 %v1082, 0.0
  %v1147 = vmax.f32 %v1083, 0.0
  %v1148 = vmax.f32 %v1084, 0.0
  %v1149 = vmax.f32 %v1085, 0.0
  %v1150 = vmax.f32 %v1086, 0.0
  %v1151 = vmax.f32 %v1087, 0.0
  %v1152 = vmax.f32 %v1088, 0.0
  %v1153 = vmax.f32 %v1089, 0.0
  %v1154 = vmax.f32 %v1090, 0.0
  %v1155 = vmax.f32 %v1091, 0.0
  %1156 = vst [vmem:[%s4] sm:$0xff] %v1092
  %1157 = vst [vmem:[%s4 + $0x8] sm:$0xff] %v1093
  %1158 = vst [vmem:[%s4 + $0x10] sm:$0xff] %v1094
  %1159 = vst [vmem:[%s4 + $0x18] sm:$0xff] %v1095
  %1160 = vst [vmem:[%s4 + $0x20] sm:$0xff] %v1096
  %1161 = vst [vmem:[%s4 + $0x28] sm:$0xff] %v1097
  %1162 = vst [vmem:[%s4 + $0x30] sm:$0xff] %v1098
  %1163 = vst [vmem:[%s4 + $0x38] sm:$0xff] %v1099
  %1164 = vst [vmem:[%s4 + $0x40] sm:$0xff] %v1100
  %1165 = vst [vmem:[%s4 + $0x48] sm:$0xff] %v1101
  %1166 = vst [vmem:[%s4 + $0x50] sm:$0xff] %v1102
  %1167 = vst [vmem:[%s4 + $0x58] sm:$0xff] %v1103
  %1168 = vst [vmem:[%s4 + $0x60] sm:$0xff] %v1104
  %1169 = vst [vmem:[%s4 + $0x68] sm:$0xff] %v1105
  %1170 = vst [vmem:[%s4 + $0x70] sm:$0xff] %v1106
  %1171 = vst [vmem:[%s4 + $0x78] sm:$0xff] %v1107
  %1172 = vst [vmem:[%s4 + $0x80] sm:$0xff] %v1108
  %1173 = vst [vmem:[%s4 + $0x88] sm:$0xff] %v1109
  %1174 = vst [vmem:[%s4 + $0x90] sm:$0xff] %v1110
  %1175 = vst [vmem:[%s4 + $0x98] sm:$0xff] %v1111
  %1176 = vst [vmem:[%s4 + $0xa0] sm:$0xff] %v1112
  %1177 = vst [vmem:[%s4 + $0xa8] sm:$0xff] %v1113
  %1178 = vst [vmem:[%s4 + $0xb0] sm:$0xff] %v1114
  %1179 = vst [vmem:[%s4 + $0xb8] sm:$0xff] %v1115
  %1180 = vst [vmem:[%s4 + $0xc0] sm:$0xff] %v1116
  %1181 = vst [vmem:[%s4 + $0xc8] sm:$0xff] %v1117
  %1182 = vst [vmem:[%s4 + $0xd0] sm:$0xff] %v1118
  %1183 = vst [vmem:[%s4 + $0xd8] sm:$0xff] %v1119
  %1184 = vst [vmem:[%s4 + $0xe0] sm:$0xff] %v1120
  %1185 = vst [vmem:[%s4 + $0xe8] sm:$0xff] %v1121
  %1186 = vst [vmem:[%s4 + $0xf0] sm:$0xff] %v1122
  %1187 = vst [vmem:[%s4 + $0xf8] sm:$0xff] %v1123
  %1188 = vst [vmem:[%s4 + $0x100] sm:$0xff] %v1124
  %1189 = vst [vmem:[%s4 + $0x108] sm:$0xff] %v1125
  %1190 = vst [vmem:[%s4 + $0x110] sm:$0xff] %v1126
  %1191 = vst [vmem:[%s4 + $0x118] sm:$0xff] %v1127
  %1192 = vst [vmem:[%s4 + $0x120] sm:$0xff] %v1128
  %1193 = vst [vmem:[%s4 + $0x128] sm:$0xff] %v1129
  %1194 = vst [vmem:[%s4 + $0x130] sm:$0xff] %v1130
  %1195 = vst [vmem:[%s4 + $0x138] sm:$0xff] %v1131
  %1196 = vst [vmem:[%s4 + $0x140] sm:$0xff] %v1132
  %1197 = vst [vmem:[%s4 + $0x148] sm:$0xff] %v1133
  %1198 = vst [vmem:[%s4 + $0x150] sm:$0xff] %v1134
  %1199 = vst [vmem:[%s4 + $0x158] sm:$0xff] %v1135
  %1200 = vst [vmem:[%s4 + $0x160] sm:$0xff] %v1136
  %1201 = vst [vmem:[%s4 + $0x168] sm:$0xff] %v1137
  %1202 = vst [vmem:[%s4 + $0x170] sm:$0xff] %v1138
  %1203 = vst [vmem:[%s4 + $0x178] sm:$0xff] %v1139
  %1204 = vst [vmem:[%s4 + $0x180] sm:$0xff] %v1140
  %1205 = vst [vmem:[%s4 + $0x188] sm:$0xff] %v1141
  %1206 = vst [vmem:[%s4 + $0x190] sm:$0xff] %v1142
  %1207 = vst [vmem:[%s4 + $0x198] sm:$0xff] %v1143
  %1208 = vst [vmem:[%s4 + $0x1a0] sm:$0xff] %v1144
  %1209 = vst [vmem:[%s4 + $0x1a8] sm:$0xff] %v1145
  %1210 = vst [vmem:[%s4 + $0x1b0] sm:$0xff] %v1146
  %1211 = vst [vmem:[%s4 + $0x1b8] sm:$0xff] %v1147
  %1212 = vst [vmem:[%s4 + $0x1c0] sm:$0xff] %v1148
  %1213 = vst [vmem:[%s4 + $0x1c8] sm:$0xff] %v1149
  %1214 = vst [vmem:[%s4 + $0x1d0] sm:$0xff] %v1150
  %1215 = vst [vmem:[%s4 + $0x1d8] sm:$0xff] %v1151
  %1216 = vst [vmem:[%s4 + $0x1e0] sm:$0xff] %v1152
  %1217 = vst [vmem:[%s4 + $0x1e8] sm:$0xff] %v1153
  %1218 = vst [vmem:[%s4 + $0x1f0] sm:$0xff] %v1154
  %1219 = vst [vmem:[%s4 + $0x1f8] sm:$0xff] %v1155
  // Predicated region
  $region18: #{basic_block_forward.7} parent=0 // pred_check
    _
  $region19: #{basic_block_forward.7} parent=0 // pred_check_branch
    %1221 = sbr.rel (0) target = $region21
  $region20: #{basic_block_forward.7} parent=0 // pred_region
    _
  $region21: #{basic_block_forward.7} parent=0 // pred_fallthru
    _
  // Predicated region
  $region22: #{basic_block_forward.7} parent=0 // pred_check
    _
  $region23: #{basic_block_forward.7} parent=0 // pred_check_branch
    %1223 = sbr.rel (0) target = $region25
  $region24: #{basic_block_forward.7} parent=0 // pred_region
    _
  $region25: #{basic_block_forward.7} parent=0 // pred_fallthru
    _

// kernel: basic_block_forward.6
$region0: #{basic_block_forward.6}
  #allocation0 [shape = 'u32[]', space=smem, size = 0x4, offset = 0x4, fixed_abs, tag = 'smem constant byte address 0x4 - core index']
  #allocation1 [shape = 'u32[144,128]{1,0:T(1,128)}', space=vmem, size = 0x12000, scoped, tag = 'internal scratch']
  #allocation2 [shape = 'f32[256,128]{1,0:T(8,128)}', space=vmem, size = 0x20000, scoped, tag = 'scratch operand']
  %s0 = inlined_call_operand.vmem [shape: bf16[2,288,384], index: 0, kind: input, shape index: {}]
  %s1 = inlined_call_operand.vmem [shape: bf16[1152,128], index: 1, kind: input, shape index: {}]
  %s2 = inlined_call_operand.vmem [shape: bf16[512,128], index: 2, kind: input, shape index: {}]
  %s3 = inlined_call_operand.vmem [shape: bf16[128,128], index: 3, kind: input, shape index: {}]
  %s4 = inlined_call_operand.vmem [shape: bf16[512,128], index: 4, kind: output, shape index: {0}]
  %s5 = inlined_call_operand.vmem [shape: f32[16,128], index: 5, kind: output, shape index: {1}]
  %6 = xla_tuple %s4, %s5
  %s7 = sld [smem:[#allocation0]]
  $region61: #{basic_block_forward.6} parent=0
    _
  %s9 = ssub.s32 1, %s7
  %s10 = scalar_select 0, %s9, %s7
  loop: start=0, step=1, limit=4
  $region2: #{basic_block_forward.6} parent=0 // loop_pre_header
    _
  $region3: #{basic_block_forward.6} parent=0 // loop_header
    %s12 = sphi 0, %s16
    %p13 = scmp.ge.s32.totalorder %s12, 4
    %s19 = sphi 0, %s31
    %s20 = sphi 0, %s27
    %s21 = sphi 0, %s19
    %s22 = sphi 0, %s20
    %s23 = sphi 0, %s21
    %s24 = sphi 0, %s22
    %s36 = sphi 0, %s38
    %s39 = sphi 0, %s36
    %s40 = sphi 0, %s39
    %s56 = sphi 0, %s40
    %s60 = sphi 0, %s60
    %s62 = sphi 0, %s60
    %s63 = sphi 0, %s62
    %s77 = sphi 0, %s63
    %s85 = sphi 0, %s87
    %s88 = sphi 0, %s85
    %s89 = sphi 0, %s88
    %s105 = sphi 0, %s89
    %s109 = sphi 0, %s109
    %s111 = sphi 0, %s109
    %s112 = sphi 0, %s111
    %s126 = sphi 0, %s112
    %s134 = sphi 0, %s136
    %s137 = sphi 0, %s134
    %s138 = sphi 0, %s137
    %s154 = sphi 0, %s138
    %s160 = sphi 0, %s162
    %s163 = sphi 0, %s160
    %s164 = sphi 0, %s163
    %s180 = sphi 0, %s164
  $region4: #{basic_block_forward.6} parent=0 // loop_header_branch
    %15 = sbr.rel (%p13) target = $region8
  $region5: #{basic_block_forward.6} parent=0 // loop_body
    %s17 = ssub.s32 %s12, 1
    %s18 = ssub.s32 %s12, 2
    %s25 = sadd.s32 1, %s20
    %p26 = scmp.ge.s32.totalorder %s25, 1
    %s27 = scalar_select %p26, 0, %s25
    %s28 = sadd.s32 1, %s19
    %s29 = scalar_select %p26, %s28, %s19
    %p30 = scmp.ge.s32.totalorder %s29, 2
    %s31 = scalar_select %p30, 0, %s29
    %s32 = sadd.s32 %s19, %s20
    %s33 = sadd.s32 %s31, %s27
    %s34 = ssub.s32 %s32, %s33
    %p35 = scmp.eq.s32.totalorder %s34, 0
    %s37 = sadd.s32 %s36, 1
    %s38 = scalar_select %p35, %s36, %s37
    %p41 = pneg %p35
    %p42 = scmp.eq.s32.totalorder %s12, 1
    %p43 = por %p41, %p42
    %p44 = scmp.ne.s32.totalorder %s36, %s39
    %p45 = scmp.eq.s32.totalorder %s12, 0
    %p46 = por %p44, %p45
    %p47 = scmp.ne.s32.totalorder %s36, %s39
    %p48 = scmp.eq.s32.totalorder %s17, 1
    %p49 = por %p47, %p48
    %p50 = scmp.ne.s32.totalorder %s39, %s40
    %p51 = scmp.eq.s32.totalorder %s17, 0
    %p52 = por %p50, %p51
    %p53 = scmp.ne.s32.totalorder %s39, %s40
    %p54 = scmp.eq.s32.totalorder %s18, 1
    %p55 = por %p53, %p54
    %p57 = scmp.ne.s32.totalorder %s40, %s56
    %p58 = scmp.eq.s32.totalorder %s18, 0
    %p59 = por %p57, %p58
    %s61 = sadd.s32 %s60, 1
    %p64 = scmp.eq.s32.totalorder %s12, 1
    %p65 = scmp.ne.s32.totalorder %s60, %s62
    %p66 = scmp.eq.s32.totalorder %s12, 0
    %p67 = por %p65, %p66
    %p68 = scmp.ne.s32.totalorder %s60, %s62
    %p69 = scmp.eq.s32.totalorder %s17, 1
    %p70 = por %p68, %p69
    %p71 = scmp.ne.s32.totalorder %s62, %s63
    %p72 = scmp.eq.s32.totalorder %s17, 0
    %p73 = por %p71, %p72
    %p74 = scmp.ne.s32.totalorder %s62, %s63
    %p75 = scmp.eq.s32.totalorder %s18, 1
    %p76 = por %p74, %p75
    %p78 = scmp.ne.s32.totalorder %s63, %s77
    %p79 = scmp.eq.s32.totalorder %s18, 0
    %p80 = por %p78, %p79
    %s81 = sadd.s32 %s19, %s20
    %s82 = sadd.s32 %s31, %s27
    %s83 = ssub.s32 %s81, %s82
    %p84 = scmp.eq.s32.totalorder %s83, 0
    %s86 = sadd.s32 %s85, 1
    %s87 = scalar_select %p84, %s85, %s86
    %p90 = pneg %p84
    %p91 = scmp.eq.s32.totalorder %s12, 1
    %p92 = por %p90, %p91
    %p93 = scmp.ne.s32.totalorder %s85, %s88
    %p94 = scmp.eq.s32.totalorder %s12, 0
    %p95 = por %p93, %p94
    %p96 = scmp.ne.s32.totalorder %s85, %s88
    %p97 = scmp.eq.s32.totalorder %s17, 1
    %p98 = por %p96, %p97
    %p99 = scmp.ne.s32.totalorder %s88, %s89
    %p100 = scmp.eq.s32.totalorder %s17, 0
    %p101 = por %p99, %p100
    %p102 = scmp.ne.s32.totalorder %s88, %s89
    %p103 = scmp.eq.s32.totalorder %s18, 1
    %p104 = por %p102, %p103
    %p106 = scmp.ne.s32.totalorder %s89, %s105
    %p107 = scmp.eq.s32.totalorder %s18, 0
    %p108 = por %p106, %p107
    %s110 = sadd.s32 %s109, 1
    %p113 = scmp.eq.s32.totalorder %s12, 1
    %p114 = scmp.ne.s32.totalorder %s109, %s111
    %p115 = scmp.eq.s32.totalorder %s12, 0
    %p116 = por %p114, %p115
    %p117 = scmp.ne.s32.totalorder %s109, %s111
    %p118 = scmp.eq.s32.totalorder %s17, 1
    %p119 = por %p117, %p118
    %p120 = scmp.ne.s32.totalorder %s111, %s112
    %p121 = scmp.eq.s32.totalorder %s17, 0
    %p122 = por %p120, %p121
    %p123 = scmp.ne.s32.totalorder %s111, %s112
    %p124 = scmp.eq.s32.totalorder %s18, 1
    %p125 = por %p123, %p124
    %p127 = scmp.ne.s32.totalorder %s112, %s126
    %p128 = scmp.eq.s32.totalorder %s18, 0
    %p129 = por %p127, %p128
    %s130 = sadd.s32 %s19, %s20
    %s131 = sadd.s32 %s31, %s27
    %s132 = ssub.s32 %s130, %s131
    %p133 = scmp.eq.s32.totalorder %s132, 0
    %s135 = sadd.s32 %s134, 1
    %s136 = scalar_select %p133, %s134, %s135
    %p139 = pneg %p133
    %p140 = scmp.eq.s32.totalorder %s12, 1
    %p141 = por %p139, %p140
    %p142 = scmp.ne.s32.totalorder %s134, %s137
    %p143 = scmp.eq.s32.totalorder %s12, 0
    %p144 = por %p142, %p143
    %p145 = scmp.ne.s32.totalorder %s134, %s137
    %p146 = scmp.eq.s32.totalorder %s17, 1
    %p147 = por %p145, %p146
    %p148 = scmp.ne.s32.totalorder %s137, %s138
    %p149 = scmp.eq.s32.totalorder %s17, 0
    %p150 = por %p148, %p149
    %p151 = scmp.ne.s32.totalorder %s137, %s138
    %p152 = scmp.eq.s32.totalorder %s18, 1
    %p153 = por %p151, %p152
    %p155 = scmp.ne.s32.totalorder %s138, %s154
    %p156 = scmp.eq.s32.totalorder %s18, 0
    %p157 = por %p155, %p156
    %s158 = ssub.s32 %s19, %s31
    %p159 = scmp.eq.s32.totalorder %s158, 0
    %s161 = sadd.s32 %s160, 1
    %s162 = scalar_select %p159, %s160, %s161
    %p165 = pneg %p159
    %p166 = scmp.eq.s32.totalorder %s12, 1
    %p167 = por %p165, %p166
    %p168 = scmp.ne.s32.totalorder %s160, %s163
    %p169 = scmp.eq.s32.totalorder %s12, 0
    %p170 = por %p168, %p169
    %p171 = scmp.ne.s32.totalorder %s160, %s163
    %p172 = scmp.eq.s32.totalorder %s17, 1
    %p173 = por %p171, %p172
    %p174 = scmp.ne.s32.totalorder %s163, %s164
    %p175 = scmp.eq.s32.totalorder %s17, 0
    %p176 = por %p174, %p175
    %p177 = scmp.ne.s32.totalorder %s163, %s164
    %p178 = scmp.eq.s32.totalorder %s18, 1
    %p179 = por %p177, %p178
    %p181 = scmp.ne.s32.totalorder %s164, %s180
    %p182 = scmp.eq.s32.totalorder %s18, 0
    %p183 = por %p181, %p182
    %p184 = scmp.le.s32.totalorder 1, %s12
    %p185 = scmp.lt.s32.totalorder %s12, 3
    %p186 = pnand %p184, %p185
    %p187 = pneg %p186
    // Predicated region
    $region9: #{basic_block_forward.6} parent=5 // pred_check
      _
    $region10: #{basic_block_forward.6} parent=5 // pred_check_branch
      %189 = sbr.rel (%p186) target = $region12
    $region11: #{basic_block_forward.6} parent=5 // pred_region
      %s190 = ssub.s32 %s12, 1
      // Predicated region
      $region13: #{basic_block_forward.6} parent=11 // pred_check
        %p191 = pneg %p73
      $region14: #{basic_block_forward.6} parent=11 // pred_check_branch
        %193 = sbr.rel (%p191) target = $region16
      $region15: #{basic_block_forward.6} parent=11 // pred_region
        _
      $region16: #{basic_block_forward.6} parent=11 // pred_fallthru
        _
      // Predicated region
      $region17: #{basic_block_forward.6} parent=11 // pred_check
        %p194 = pneg %p122
      $region18: #{basic_block_forward.6} parent=11 // pred_check_branch
        %196 = sbr.rel (%p194) target = $region20
      $region19: #{basic_block_forward.6} parent=11 // pred_region
        _
      $region20: #{basic_block_forward.6} parent=11 // pred_fallthru
        _
    $region12: #{basic_block_forward.6} parent=5 // pred_fallthru
      _
    %p197 = scmp.lt.s32.totalorder %s12, 2
    // Predicated region
    $region21: #{basic_block_forward.6} parent=5 // pred_check
      %p198 = pneg %p197
    $region22: #{basic_block_forward.6} parent=5 // pred_check_branch
      %200 = sbr.rel (%p198) target = $region24
    $region23: #{basic_block_forward.6} parent=5 // pred_region
      // Predicated region
      $region25: #{basic_block_forward.6} parent=23 // pred_check
        %p201 = pneg %p46
      $region26: #{basic_block_forward.6} parent=23 // pred_check_branch
        %203 = sbr.rel (%p201) target = $region28
      $region27: #{basic_block_forward.6} parent=23 // pred_region
        %s204 = sadd.s32 %s19, %s20
        %p205 = scmp.lt.s32.totalorder %s204, 1
        %s206 = scalar_select %p205, %s204, 1
        %s207 = smul.addr %s206, 108
        %s208 = smul.addr %s207, 4
        %s209 = scalar_lea.vmem %s0, %s208
        %s210 = sadd.s32 %s19, %s20
      $region28: #{basic_block_forward.6} parent=23 // pred_fallthru
        _
      // Predicated region
      $region29: #{basic_block_forward.6} parent=23 // pred_check
        %p211 = pneg %p95
      $region30: #{basic_block_forward.6} parent=23 // pred_check_branch
        %213 = sbr.rel (%p211) target = $region32
      $region31: #{basic_block_forward.6} parent=23 // pred_region
        %s214 = sadd.s32 %s19, %s20
        %s215 = smul.u32 32, %s214
        %p216 = scmp.lt.s32.totalorder %s215, 63
        %s217 = scalar_select %p216, %s215, 63
        %s218 = smul.addr %s217, 4
        %s219 = scalar_lea.vmem %s2, %s218
        %s220 = sadd.s32 %s19, %s20
        %s221 = smul.u32 32, %s220
      $region32: #{basic_block_forward.6} parent=23 // pred_fallthru
        _
    $region24: #{basic_block_forward.6} parent=5 // pred_fallthru
      _
    %p222 = scmp.le.s32.totalorder 1, %s12
    %p223 = scmp.lt.s32.totalorder %s12, 3
    %p224 = pnand %p222, %p223
    %p225 = pneg %p224
    // Predicated region
    $region33: #{basic_block_forward.6} parent=5 // pred_check
      _
    $region34: #{basic_block_forward.6} parent=5 // pred_check_branch
      %227 = sbr.rel (%p224) target = $region36
    $region35: #{basic_block_forward.6} parent=5 // pred_region
      %s228 = ssub.s32 %s12, 1
      %s229 = sadd.s32 %s21, %s22
      %p230 = scmp.lt.s32.totalorder %s229, 1
      %s231 = scalar_select %p230, %s229, 1
      %s232 = smul.addr %s231, 108
      %s233 = smul.addr %s232, 4
      %s234 = scalar_lea.vmem %s0, %s233
      %p235 = pneg %p52
      %p236 = pneg %p49
      %p237 = pneg %p73
      %p238 = pneg %p70
      %s239 = sadd.s32 %s21, %s22
      %s240 = smul.u32 32, %s239
      %p241 = scmp.lt.s32.totalorder %s240, 63
      %s242 = scalar_select %p241, %s240, 63
      %s243 = smul.addr %s242, 4
      %s244 = scalar_lea.vmem %s2, %s243
      %p245 = pneg %p101
      %p246 = pneg %p98
      %p247 = pneg %p122
      %p248 = pneg %p119
      %p249 = pneg %p150
      %p250 = pneg %p147
      %s251 = sadd.s32 %s21, %s22
      %s252 = smul.u32 32, %s251
      %p253 = scmp.lt.s32.totalorder %s252, 63
      %s254 = scalar_select %p253, %s252, 63
      %s255 = smul.addr %s254, 4
      %s256 = scalar_lea.vmem %s4, %s255
      %p257 = pneg %p176
      %p258 = pneg %p173
      %p259 = scmp.lt.s32.totalorder %s21, 1
      %s260 = scalar_select %p259, %s21, 1
      %s261 = smul.addr %s260, 8
      %s262 = scalar_lea.vmem %s5, %s261
      %s263 = sadd.s32 %s21, %s22
      %p264 = scmp.lt.s32.totalorder %s263, 1
      %s265 = scalar_select %p264, %s263, 1
      %s266 = smul.addr %s265, 108
      %s267 = smul.addr %s266, 4
      %s268 = scalar_lea.vmem %s0, %s267
      %s269 = sadd.s32 %s21, %s22
      %s270 = sadd.s32 %s21, %s22
      %s271 = smul.u32 32, %s270
      %p272 = scmp.lt.s32.totalorder %s271, 63
      %s273 = scalar_select %p272, %s271, 63
      %s274 = smul.addr %s273, 4
      %s275 = scalar_lea.vmem %s2, %s274
      %s276 = sadd.s32 %s21, %s22
      %s277 = smul.u32 32, %s276
      %s278 = sadd.s32 %s21, %s22
      %s279 = smul.u32 32, %s278
      %p280 = scmp.lt.s32.totalorder %s279, 63
      %s281 = scalar_select %p280, %s279, 63
      %s282 = smul.addr %s281, 4
      %s283 = scalar_lea.vmem %s4, %s282
      %s284 = sadd.s32 %s21, %s22
      %s285 = smul.u32 32, %s284
      %p286 = scmp.lt.s32.totalorder %s21, 1
      %s287 = scalar_select %p286, %s21, 1
      %s288 = smul.addr %s287, 8
      %s289 = scalar_lea.vmem %s5, %s288
      %v291 = vld [vmem:[%s268] sm:$0xff]
      %v292 = vld [vmem:[%s268 + $0x8] sm:$0xf]
      %v293 = vld [vmem:[%s268 + $0xc] sm:$0xff]
      %v294 = vld [vmem:[%s268 + $0x14] sm:$0xf]
      %v295 = vld [vmem:[%s268 + $0x18] sm:$0xff]
      %v296 = vld [vmem:[%s268 + $0x20] sm:$0xf]
      %v297 = vld [vmem:[%s268 + $0x24] sm:$0xff]
      %v298 = vld [vmem:[%s268 + $0x2c] sm:$0xf]
      %v299 = vld [vmem:[%s268 + $0x30] sm:$0xff]
      %v300 = vld [vmem:[%s268 + $0x38] sm:$0xf]
      %v301 = vld [vmem:[%s268 + $0x3c] sm:$0xff]
      %v302 = vld [vmem:[%s268 + $0x44] sm:$0xf]
      %v303 = vld [vmem:[%s268 + $0x48] sm:$0xff]
      %v304 = vld [vmem:[%s268 + $0x50] sm:$0xf]
      %v305 = vld [vmem:[%s268 + $0x54] sm:$0xff]
      %v306 = vld [vmem:[%s268 + $0x5c] sm:$0xf]
      %v307 = vld [vmem:[%s268 + $0x60] sm:$0xff]
      %v308 = vld [vmem:[%s268 + $0x68] sm:$0xf]
      %v309 = vld [vmem:[%s268 + $0x6c] sm:$0xff]
      %v310 = vld [vmem:[%s268 + $0x74] sm:$0xf]
      %v311 = vld [vmem:[%s268 + $0x78] sm:$0xff]
      %v312 = vld [vmem:[%s268 + $0x80] sm:$0xf]
      %v313 = vld [vmem:[%s268 + $0x84] sm:$0xff]
      %v314 = vld [vmem:[%s268 + $0x8c] sm:$0xf]
      %v315 = vld [vmem:[%s268 + $0x90] sm:$0xff]
      %v316 = vld [vmem:[%s268 + $0x98] sm:$0xf]
      %v317 = vld [vmem:[%s268 + $0x9c] sm:$0xff]
      %v318 = vld [vmem:[%s268 + $0xa4] sm:$0xf]
      %v319 = vld [vmem:[%s268 + $0xa8] sm:$0xff]
      %v320 = vld [vmem:[%s268 + $0xb0] sm:$0xf]
      %v321 = vld [vmem:[%s268 + $0xb4] sm:$0xff]
      %v322 = vld [vmem:[%s268 + $0xbc] sm:$0xf]
      %v323 = vld [vmem:[%s268 + $0xc0] sm:$0xff]
      %v324 = vld [vmem:[%s268 + $0xc8] sm:$0xf]
      %v325 = vld [vmem:[%s268 + $0xcc] sm:$0xff]
      %v326 = vld [vmem:[%s268 + $0xd4] sm:$0xf]
      %v327 = vld [vmem:[%s268 + $0xd8] sm:$0xff]
      %v328 = vld [vmem:[%s268 + $0xe0] sm:$0xf]
      %v329 = vld [vmem:[%s268 + $0xe4] sm:$0xff]
      %v330 = vld [vmem:[%s268 + $0xec] sm:$0xf]
      %v331 = vld [vmem:[%s268 + $0xf0] sm:$0xff]
      %v332 = vld [vmem:[%s268 + $0xf8] sm:$0xf]
      %v333 = vld [vmem:[%s268 + $0xfc] sm:$0xff]
      %v334 = vld [vmem:[%s268 + $0x104] sm:$0xf]
      %v335 = vld [vmem:[%s268 + $0x108] sm:$0xff]
      %v336 = vld [vmem:[%s268 + $0x110] sm:$0xf]
      %v337 = vld [vmem:[%s268 + $0x114] sm:$0xff]
      %v338 = vld [vmem:[%s268 + $0x11c] sm:$0xf]
      %v339 = vld [vmem:[%s268 + $0x120] sm:$0xff]
      %v340 = vld [vmem:[%s268 + $0x128] sm:$0xf]
      %v341 = vld [vmem:[%s268 + $0x12c] sm:$0xff]
      %v342 = vld [vmem:[%s268 + $0x134] sm:$0xf]
      %v343 = vld [vmem:[%s268 + $0x138] sm:$0xff]
      %v344 = vld [vmem:[%s268 + $0x140] sm:$0xf]
      %v345 = vld [vmem:[%s268 + $0x144] sm:$0xff]
      %v346 = vld [vmem:[%s268 + $0x14c] sm:$0xf]
      %v347 = vld [vmem:[%s268 + $0x150] sm:$0xff]
      %v348 = vld [vmem:[%s268 + $0x158] sm:$0xf]
      %v349 = vld [vmem:[%s268 + $0x15c] sm:$0xff]
      %v350 = vld [vmem:[%s268 + $0x164] sm:$0xf]
      %v351 = vld [vmem:[%s268 + $0x168] sm:$0xff]
      %v352 = vld [vmem:[%s268 + $0x170] sm:$0xf]
      %v353 = vld [vmem:[%s268 + $0x174] sm:$0xff]
      %v354 = vld [vmem:[%s268 + $0x17c] sm:$0xf]
      %v355 = vld [vmem:[%s1] sm:$0xf]
      %v356 = vld [vmem:[%s1 + $0x4] sm:$0xf]
      %v357 = vld [vmem:[%s1 + $0x8] sm:$0xf]
      %v358 = vld [vmem:[%s1 + $0xc] sm:$0xf]
      %v359 = vld [vmem:[%s1 + $0x10] sm:$0xf]
      %v360 = vld [vmem:[%s1 + $0x14] sm:$0xf]
      %v361 = vld [vmem:[%s1 + $0x18] sm:$0xf]
      %v362 = vld [vmem:[%s1 + $0x1c] sm:$0xf]
      %v363 = vld [vmem:[%s1 + $0x20] sm:$0xf]
      %v364 = vld [vmem:[%s1 + $0x24] sm:$0xf]
      %v365 = vld [vmem:[%s1 + $0x28] sm:$0xf]
      %v366 = vld [vmem:[%s1 + $0x2c] sm:$0xf]
      %v367 = vld [vmem:[%s1 + $0x30] sm:$0xf]
      %v368 = vld [vmem:[%s1 + $0x34] sm:$0xf]
      %v369 = vld [vmem:[%s1 + $0x38] sm:$0xf]
      %v370 = vld [vmem:[%s1 + $0x3c] sm:$0xf]
      %v371 = vld [vmem:[%s1 + $0x40] sm:$0xf]
      %v372 = vld [vmem:[%s1 + $0x44] sm:$0xf]
      %v373 = vld [vmem:[%s1 + $0x48] sm:$0xf]
      %v374 = vld [vmem:[%s1 + $0x4c] sm:$0xf]
      %v375 = vld [vmem:[%s1 + $0x50] sm:$0xf]
      %v376 = vld [vmem:[%s1 + $0x54] sm:$0xf]
      %v377 = vld [vmem:[%s1 + $0x58] sm:$0xf]
      %v378 = vld [vmem:[%s1 + $0x5c] sm:$0xf]
      %v379 = vld [vmem:[%s1 + $0x60] sm:$0xf]
      %v380 = vld [vmem:[%s1 + $0x64] sm:$0xf]
      %v381 = vld [vmem:[%s1 + $0x68] sm:$0xf]
      %v382 = vld [vmem:[%s1 + $0x6c] sm:$0xf]
      %v383 = vld [vmem:[%s1 + $0x70] sm:$0xf]
      %v384 = vld [vmem:[%s1 + $0x74] sm:$0xf]
      %v385 = vld [vmem:[%s1 + $0x78] sm:$0xf]
      %v386 = vld [vmem:[%s1 + $0x7c] sm:$0xf]
      %v387 = vld [vmem:[%s1 + $0x80] sm:$0xf]
      %v388 = vld [vmem:[%s1 + $0x84] sm:$0xf]
      %v389 = vld [vmem:[%s1 + $0x88] sm:$0xf]
      %v390 = vld [vmem:[%s1 + $0x8c] sm:$0xf]
      %v391 = vld [vmem:[%s1 + $0x90] sm:$0xf]
      %v392 = vld [vmem:[%s1 + $0x94] sm:$0xf]
      %v393 = vld [vmem:[%s1 + $0x98] sm:$0xf]
      %v394 = vld [vmem:[%s1 + $0x9c] sm:$0xf]
      %v395 = vld [vmem:[%s1 + $0xa0] sm:$0xf]
      %v396 = vld [vmem:[%s1 + $0xa4] sm:$0xf]
      %v397 = vld [vmem:[%s1 + $0xa8] sm:$0xf]
      %v398 = vld [vmem:[%s1 + $0xac] sm:$0xf]
      %v399 = vld [vmem:[%s1 + $0xb0] sm:$0xf]
      %v400 = vld [vmem:[%s1 + $0xb4] sm:$0xf]
      %v401 = vld [vmem:[%s1 + $0xb8] sm:$0xf]
      %v402 = vld [vmem:[%s1 + $0xbc] sm:$0xf]
      %v467 = vunpack.c.l.b16 %v291
      %v468 = vunpack.c.h.b16 %v291
      %v469 = vunpack.c.l.b16 %v292
      %v470 = vunpack.c.l.b16 %v293
      %v471 = vunpack.c.h.b16 %v293
      %v472 = vunpack.c.l.b16 %v294
      %v473 = vunpack.c.l.b16 %v295
      %v474 = vunpack.c.h.b16 %v295
      %v475 = vunpack.c.l.b16 %v296
      %v476 = vunpack.c.l.b16 %v297
      %v477 = vunpack.c.h.b16 %v297
      %v478 = vunpack.c.l.b16 %v298
      %v479 = vunpack.c.l.b16 %v299
      %v480 = vunpack.c.h.b16 %v299
      %v481 = vunpack.c.l.b16 %v300
      %v482 = vunpack.c.l.b16 %v301
      %v483 = vunpack.c.h.b16 %v301
      %v484 = vunpack.c.l.b16 %v302
      %v485 = vunpack.c.l.b16 %v303
      %v486 = vunpack.c.h.b16 %v303
      %v487 = vunpack.c.l.b16 %v304
      %v488 = vunpack.c.l.b16 %v305
      %v489 = vunpack.c.h.b16 %v305
      %v490 = vunpack.c.l.b16 %v306
      %v491 = vunpack.c.l.b16 %v307
      %v492 = vunpack.c.h.b16 %v307
      %v493 = vunpack.c.l.b16 %v308
      %v494 = vunpack.c.l.b16 %v309
      %v495 = vunpack.c.h.b16 %v309
      %v496 = vunpack.c.l.b16 %v310
      %v497 = vunpack.c.l.b16 %v311
      %v498 = vunpack.c.h.b16 %v311
      %v499 = vunpack.c.l.b16 %v312
      %v500 = vunpack.c.l.b16 %v313
      %v501 = vunpack.c.h.b16 %v313
      %v502 = vunpack.c.l.b16 %v314
      %v503 = vunpack.c.l.b16 %v315
      %v504 = vunpack.c.h.b16 %v315
      %v505 = vunpack.c.l.b16 %v316
      %v506 = vunpack.c.l.b16 %v317
      %v507 = vunpack.c.h.b16 %v317
      %v508 = vunpack.c.l.b16 %v318
      %v509 = vunpack.c.l.b16 %v319
      %v510 = vunpack.c.h.b16 %v319
      %v511 = vunpack.c.l.b16 %v320
      %v512 = vunpack.c.l.b16 %v321
      %v513 = vunpack.c.h.b16 %v321
      %v514 = vunpack.c.l.b16 %v322
      %v515 = vunpack.c.l.b16 %v323
      %v516 = vunpack.c.h.b16 %v323
      %v517 = vunpack.c.l.b16 %v324
      %v518 = vunpack.c.l.b16 %v325
      %v519 = vunpack.c.h.b16 %v325
      %v520 = vunpack.c.l.b16 %v326
      %v521 = vunpack.c.l.b16 %v327
      %v522 = vunpack.c.h.b16 %v327
      %v523 = vunpack.c.l.b16 %v328
      %v524 = vunpack.c.l.b16 %v329
      %v525 = vunpack.c.h.b16 %v329
      %v526 = vunpack.c.l.b16 %v330
      %v527 = vunpack.c.l.b16 %v331
      %v528 = vunpack.c.h.b16 %v331
      %v529 = vunpack.c.l.b16 %v332
      %v530 = vunpack.c.l.b16 %v333
      %v531 = vunpack.c.h.b16 %v333
      %v532 = vunpack.c.l.b16 %v334
      %v533 = vunpack.c.l.b16 %v335
      %v534 = vunpack.c.h.b16 %v335
      %v535 = vunpack.c.l.b16 %v336
      %v536 = vunpack.c.l.b16 %v337
      %v537 = vunpack.c.h.b16 %v337
      %v538 = vunpack.c.l.b16 %v338
      %v539 = vunpack.c.l.b16 %v339
      %v540 = vunpack.c.h.b16 %v339
      %v541 = vunpack.c.l.b16 %v340
      %v542 = vunpack.c.l.b16 %v341
      %v543 = vunpack.c.h.b16 %v341
      %v544 = vunpack.c.l.b16 %v342
      %v545 = vunpack.c.l.b16 %v343
      %v546 = vunpack.c.h.b16 %v343
      %v547 = vunpack.c.l.b16 %v344
      %v548 = vunpack.c.l.b16 %v345
      %v549 = vunpack.c.h.b16 %v345
      %v550 = vunpack.c.l.b16 %v346
      %v551 = vunpack.c.l.b16 %v347
      %v552 = vunpack.c.h.b16 %v347
      %v553 = vunpack.c.l.b16 %v348
      %v554 = vunpack.c.l.b16 %v349
      %v555 = vunpack.c.h.b16 %v349
      %v556 = vunpack.c.l.b16 %v350
      %v557 = vunpack.c.l.b16 %v351
      %v558 = vunpack.c.h.b16 %v351
      %v559 = vunpack.c.l.b16 %v352
      %v560 = vunpack.c.l.b16 %v353
      %v561 = vunpack.c.h.b16 %v353
      %v562 = vunpack.c.l.b16 %v354
      %v563 = vpack.c.b16 %v470, %v467
      %v564 = vpack.c.b16 %v471, %v468
      %v565 = vpack.c.b16 %v472, %v469
      %v566 = vpack.c.b16 %v476, %v473
      %v567 = vpack.c.b16 %v477, %v474
      %v568 = vpack.c.b16 %v478, %v475
      %v569 = vpack.c.b16 %v482, %v479
      %v570 = vpack.c.b16 %v483, %v480
      %v571 = vpack.c.b16 %v484, %v481
      %v572 = vpack.c.b16 %v488, %v485
      %v573 = vpack.c.b16 %v489, %v486
      %v574 = vpack.c.b16 %v490, %v487
      %v575 = vpack.c.b16 %v494, %v491
      %v576 = vpack.c.b16 %v495, %v492
      %v577 = vpack.c.b16 %v496, %v493
      %v578 = vpack.c.b16 %v500, %v497
      %v579 = vpack.c.b16 %v501, %v498
      %v580 = vpack.c.b16 %v502, %v499
      %v581 = vpack.c.b16 %v506, %v503
      %v582 = vpack.c.b16 %v507, %v504
      %v583 = vpack.c.b16 %v508, %v505
      %v584 = vpack.c.b16 %v512, %v509
      %v585 = vpack.c.b16 %v513, %v510
      %v586 = vpack.c.b16 %v514, %v511
      %v587 = vpack.c.b16 %v518, %v515
      %v588 = vpack.c.b16 %v519, %v516
      %v589 = vpack.c.b16 %v520, %v517
      %v590 = vpack.c.b16 %v524, %v521
      %v591 = vpack.c.b16 %v525, %v522
      %v592 = vpack.c.b16 %v526, %v523
      %v593 = vpack.c.b16 %v530, %v527
      %v594 = vpack.c.b16 %v531, %v528
      %v595 = vpack.c.b16 %v532, %v529
      %v596 = vpack.c.b16 %v536, %v533
      %v597 = vpack.c.b16 %v537, %v534
      %v598 = vpack.c.b16 %v538, %v535
      %v599 = vpack.c.b16 %v542, %v539
      %v600 = vpack.c.b16 %v543, %v540
      %v601 = vpack.c.b16 %v544, %v541
      %v602 = vpack.c.b16 %v548, %v545
      %v603 = vpack.c.b16 %v549, %v546
      %v604 = vpack.c.b16 %v550, %v547
      %v605 = vpack.c.b16 %v554, %v551
      %v606 = vpack.c.b16 %v555, %v552
      %v607 = vpack.c.b16 %v556, %v553
      %v608 = vpack.c.b16 %v560, %v557
      %v609 = vpack.c.b16 %v561, %v558
      %v610 = vpack.c.b16 %v562, %v559
      %v707 = vunpack.c.l.b16 %v355
      %v708 = vunpack.c.l.b16 %v356
      %v709 = vunpack.c.l.b16 %v357
      %v710 = vunpack.c.l.b16 %v358
      %v711 = vunpack.c.l.b16 %v359
      %v712 = vunpack.c.l.b16 %v360
      %v713 = vunpack.c.l.b16 %v361
      %v714 = vunpack.c.l.b16 %v362
      %v715 = vunpack.c.l.b16 %v363
      %v716 = vunpack.c.l.b16 %v364
      %v717 = vunpack.c.l.b16 %v365
      %v718 = vunpack.c.l.b16 %v366
      %v719 = vunpack.c.l.b16 %v367
      %v720 = vunpack.c.l.b16 %v368
      %v721 = vunpack.c.l.b16 %v369
      %v722 = vunpack.c.l.b16 %v370
      %v723 = vunpack.c.l.b16 %v371
      %v724 = vunpack.c.l.b16 %v372
      %v725 = vunpack.c.l.b16 %v373
      %v726 = vunpack.c.l.b16 %v374
      %v727 = vunpack.c.l.b16 %v375
      %v728 = vunpack.c.l.b16 %v376
      %v729 = vunpack.c.l.b16 %v377
      %v730 = vunpack.c.l.b16 %v378
      %v731 = vunpack.c.l.b16 %v379
      %v732 = vunpack.c.l.b16 %v380
      %v733 = vunpack.c.l.b16 %v381
      %v734 = vunpack.c.l.b16 %v382
      %v735 = vunpack.c.l.b16 %v383
      %v736 = vunpack.c.l.b16 %v384
      %v737 = vunpack.c.l.b16 %v385
      %v738 = vunpack.c.l.b16 %v386
      %v739 = vunpack.c.l.b16 %v387
      %v740 = vunpack.c.l.b16 %v388
      %v741 = vunpack.c.l.b16 %v389
      %v742 = vunpack.c.l.b16 %v390
      %v743 = vunpack.c.l.b16 %v391
      %v744 = vunpack.c.l.b16 %v392
      %v745 = vunpack.c.l.b16 %v393
      %v746 = vunpack.c.l.b16 %v394
      %v747 = vunpack.c.l.b16 %v395
      %v748 = vunpack.c.l.b16 %v396
      %v749 = vunpack.c.l.b16 %v397
      %v750 = vunpack.c.l.b16 %v398
      %v751 = vunpack.c.l.b16 %v399
      %v752 = vunpack.c.l.b16 %v400
      %v753 = vunpack.c.l.b16 %v401
      %v754 = vunpack.c.l.b16 %v402
      %v755 = vpack.c.b16 %v708, %v707
      %v756 = vpack.c.b16 %v710, %v709
      %v757 = vpack.c.b16 %v712, %v711
      %v758 = vpack.c.b16 %v714, %v713
      %v759 = vpack.c.b16 %v716, %v715
      %v760 = vpack.c.b16 %v718, %v717
      %v761 = vpack.c.b16 %v720, %v719
      %v762 = vpack.c.b16 %v722, %v721
      %v763 = vpack.c.b16 %v724, %v723
      %v764 = vpack.c.b16 %v726, %v725
      %v765 = vpack.c.b16 %v728, %v727
      %v766 = vpack.c.b16 %v730, %v729
      %v767 = vpack.c.b16 %v732, %v731
      %v768 = vpack.c.b16 %v734, %v733
      %v769 = vpack.c.b16 %v736, %v735
      %v770 = vpack.c.b16 %v738, %v737
      %v771 = vpack.c.b16 %v740, %v739
      %v772 = vpack.c.b16 %v742, %v741
      %v773 = vpack.c.b16 %v744, %v743
      %v774 = vpack.c.b16 %v746, %v745
      %v775 = vpack.c.b16 %v748, %v747
      %v776 = vpack.c.b16 %v750, %v749
      %v777 = vpack.c.b16 %v752, %v751
      %v778 = vpack.c.b16 %v754, %v753
      %803 = vmatprep.subr.bf16.mxu0 0
      %804 = vmatpush1.bf16.msra.mxu0 %v755
      %805 = vmatprep.subr.bf16.mxu0 0
      %806 = vmatpush1.bf16.msra.mxu0 %v756
      %807 = vmatprep.subr.bf16.mxu0 0
      %808 = vmatpush1.bf16.msra.mxu0 %v757
      %809 = vmatprep.subr.bf16.mxu0 0
      %810 = vmatpush1.bf16.msra.mxu0 %v758
      %811 = vmatprep.subr.bf16.mxu0 0
      %812 = vmatpush1.bf16.msra.mxu0 %v759
      %813 = vmatprep.subr.bf16.mxu0 0
      %814 = vmatpush1.bf16.msra.mxu0 %v760
      %815 = vmatprep.subr.bf16.mxu0 0
      %816 = vmatpush1.bf16.msra.mxu0 %v761
      %817 = vmatprep.subr.bf16.mxu0 0
      %818 = vmatpush1.bf16.msra.mxu0 %v762
      %819 = vmatprep.subr.bf16.mxu0 0
      %820 = vmatpush1.bf16.msra.mxu0 %v763
      %821 = vmatprep.subr.bf16.mxu0 0
      %822 = vmatpush1.bf16.msra.mxu0 %v764
      %823 = vmatprep.subr.bf16.mxu0 0
      %824 = vmatpush1.bf16.msra.mxu0 %v765
      %825 = vmatprep.subr.bf16.mxu0 0
      %826 = vmatpush1.bf16.msra.mxu0 %v766
      %827 = vmatprep.subr.bf16.mxu0 0
      %828 = vmatpush1.bf16.msra.mxu0 %v767
      %829 = vmatprep.subr.bf16.mxu0 0
      %830 = vmatpush1.bf16.msra.mxu0 %v768
      %831 = vmatprep.subr.bf16.mxu0 0
      %832 = vmatpush1.bf16.msra.mxu0 %v769
      %833 = vmatprep.subr.bf16.mxu0 0
      %834 = vmatpush1.bf16.msra.mxu0 %v770
      %835 = vmatprep.mubr.bf16.mxu0 %v564
      %836 = vmatmul.mubr.bf16.gmra.mrb[0].mxu0 %v563
      %v837 = vpop.f32.mrb[0].mxu0
      %v838 = vadd.f32 0.0, %v837
      %v839 = vpop.f32.mrb[0].mxu0
      %v840 = vpop.f32.mrb[0].mxu0
      %v841 = vadd.f32 0.0, %v840
      %v842 = vpop.f32.mrb[0].mxu0
      %843 = vmatprep.mubr.bf16.mxu0 %v567
      %844 = vmatmul.mubr.bf16.gmra.mrb[0].mxu0 %v566
      %v845 = vpop.f32.mrb[0].mxu0
      %v846 = vadd.f32 0.0, %v845
      %v847 = vpop.f32.mrb[0].mxu0
      %v848 = vpop.f32.mrb[0].mxu0
      %v849 = vadd.f32 0.0, %v848
      %v850 = vpop.f32.mrb[0].mxu0
      %851 = vmatprep.mubr.bf16.mxu0 %v570
      %852 = vmatmul.mubr.bf16.gmra.mrb[0].mxu0 %v569
      %v853 = vpop.f32.mrb[0].mxu0
      %v854 = vadd.f32 0.0, %v853
      %v855 = vpop.f32.mrb[0].mxu0
      %v856 = vpop.f32.mrb[0].mxu0
      %v857 = vadd.f32 0.0, %v856
      %v858 = vpop.f32.mrb[0].mxu0
      %859 = vmatprep.mubr.bf16.mxu0 %v573
      %860 = vmatmul.mubr.bf16.gmra.mrb[0].mxu0 %v572
      %v861 = vpop.f32.mrb[0].mxu0
      %v862 = vadd.f32 0.0, %v861
      %v863 = vpop.f32.mrb[0].mxu0
      %v864 = vpop.f32.mrb[0].mxu0
      %v865 = vadd.f32 0.0, %v864
      %v866 = vpop.f32.mrb[0].mxu0
      %867 = vmatprep.mubr.bf16.mxu0 %v576
      %868 = vmatmul.mubr.bf16.gmra.mrb[0].mxu0 %v575
      %v869 = vpop.f32.mrb[0].mxu0
      %v870 = vadd.f32 0.0, %v869
      %v871 = vpop.f32.mrb[0].mxu0
      %v872 = vpop.f32.mrb[0].mxu0
      %v873 = vadd.f32 0.0, %v872
      %v874 = vpop.f32.mrb[0].mxu0
      %875 = vmatprep.mubr.bf16.mxu0 %v579
      %876 = vmatmul.mubr.bf16.gmra.mrb[0].mxu0 %v578
      %v877 = vpop.f32.mrb[0].mxu0
      %v878 = vadd.f32 0.0, %v877
      %v879 = vpop.f32.mrb[0].mxu0
      %v880 = vpop.f32.mrb[0].mxu0
      %v881 = vadd.f32 0.0, %v880
      %v882 = vpop.f32.mrb[0].mxu0
      %883 = vmatprep.mubr.bf16.mxu0 %v582
      %884 = vmatmul.mubr.bf16.gmra.mrb[0].mxu0 %v581
      %v885 = vpop.f32.mrb[0].mxu0
      %v886 = vadd.f32 0.0, %v885
      %v887 = vpop.f32.mrb[0].mxu0
      %v888 = vpop.f32.mrb[0].mxu0
      %v889 = vadd.f32 0.0, %v888
      %v890 = vpop.f32.mrb[0].mxu0
      %891 = vmatprep.mubr.bf16.mxu0 %v585
      %892 = vmatmul.mubr.bf16.gmra.mrb[0].mxu0 %v584
      %v893 = vpop.f32.mrb[0].mxu0
      %v894 = vadd.f32 0.0, %v893
      %v895 = vpop.f32.mrb[0].mxu0
      %v896 = vpop.f32.mrb[0].mxu0
      %v897 = vadd.f32 0.0, %v896
      %v898 = vpop.f32.mrb[0].mxu0
      %899 = vmatprep.mubr.bf16.mxu0 %v588
      %900 = vmatmul.mubr.bf16.gmra.mrb[0].mxu0 %v587
      %v901 = vpop.f32.mrb[0].mxu0
      %v902 = vadd.f32 0.0, %v901
      %v903 = vpop.f32.mrb[0].mxu0
      %v904 = vpop.f32.mrb[0].mxu0
      %v905 = vadd.f32 0.0, %v904
      %v906 = vpop.f32.mrb[0].mxu0
      %907 = vmatprep.mubr.bf16.mxu0 %v591
      %908 = vmatmul.mubr.bf16.gmra.mrb[0].mxu0 %v590
      %v909 = vpop.f32.mrb[0].mxu0
      %v910 = vadd.f32 0.0, %v909
      %v911 = vpop.f32.mrb[0].mxu0
      %v912 = vpop.f32.mrb[0].mxu0
      %v913 = vadd.f32 0.0, %v912
      %v914 = vpop.f32.mrb[0].mxu0
      %915 = vmatprep.mubr.bf16.mxu0 %v594
      %916 = vmatmul.mubr.bf16.gmra.mrb[0].mxu0 %v593
      %v917 = vpop.f32.mrb[0].mxu0
      %v918 = vadd.f32 0.0, %v917
      %v919 = vpop.f32.mrb[0].mxu0
      %v920 = vpop.f32.mrb[0].mxu0
      %v921 = vadd.f32 0.0, %v920
      %v922 = vpop.f32.mrb[0].mxu0
      %923 = vmatprep.mubr.bf16.mxu0 %v597
      %924 = vmatmul.mubr.bf16.gmra.mrb[0].mxu0 %v596
      %v925 = vpop.f32.mrb[0].mxu0
      %v926 = vadd.f32 0.0, %v925
      %v927 = vpop.f32.mrb[0].mxu0
      %v928 = vpop.f32.mrb[0].mxu0
      %v929 = vadd.f32 0.0, %v928
      %v930 = vpop.f32.mrb[0].mxu0
      %931 = vmatprep.mubr.bf16.mxu0 %v600
      %932 = vmatmul.mubr.bf16.gmra.mrb[0].mxu0 %v599
      %v933 = vpop.f32.mrb[0].mxu0
      %v934 = vadd.f32 0.0, %v933
      %v935 = vpop.f32.mrb[0].mxu0
      %v936 = vpop.f32.mrb[0].mxu0
      %v937 = vadd.f32 0.0, %v936
      %v938 = vpop.f32.mrb[0].mxu0
      %939 = vmatprep.mubr.bf16.mxu0 %v603
      %940 = vmatmul.mubr.bf16.gmra.mrb[0].mxu0 %v602
      %v941 = vpop.f32.mrb[0].mxu0
      %v942 = vadd.f32 0.0, %v941
      %v943 = vpop.f32.mrb[0].mxu0
      %v944 = vpop.f32.mrb[0].mxu0
      %v945 = vadd.f32 0.0, %v944
      %v946 = vpop.f32.mrb[0].mxu0
      %947 = vmatprep.mubr.bf16.mxu0 %v606
      %948 = vmatmul.mubr.bf16.gmra.mrb[0].mxu0 %v605
      %v949 = vpop.f32.mrb[0].mxu0
      %v950 = vadd.f32 0.0, %v949
      %v951 = vpop.f32.mrb[0].mxu0
      %v952 = vpop.f32.mrb[0].mxu0
      %v953 = vadd.f32 0.0, %v952
      %v954 = vpop.f32.mrb[0].mxu0
      %955 = vmatprep.mubr.bf16.mxu0 %v609
      %956 = vmatmul.mubr.bf16.gmra.mrb[0].mxu0 %v608
      %v957 = vpop.f32.mrb[0].mxu0
      %v958 = vadd.f32 0.0, %v957
      %v959 = vpop.f32.mrb[0].mxu0
      %v960 = vpop.f32.mrb[0].mxu0
      %v961 = vadd.f32 0.0, %v960
      %v962 = vpop.f32.mrb[0].mxu0
      %963 = vdwg.mxu0
      %964 = vmatprep.subr.bf16.mxu0 0
      %965 = vmatpush1.bf16.msra.mxu0 %v771
      %966 = vmatprep.subr.bf16.mxu0 0
      %967 = vmatpush1.bf16.msra.mxu0 %v772
      %968 = vmatprep.subr.bf16.mxu0 0
      %969 = vmatpush1.bf16.msra.mxu0 %v773
      %970 = vmatprep.subr.bf16.mxu0 0
      %971 = vmatpush1.bf16.msra.mxu0 %v774
      %972 = vmatprep.subr.bf16.mxu0 0
      %973 = vmatpush1.bf16.msra.mxu0 %v775
      %974 = vmatprep.subr.bf16.mxu0 0
      %975 = vmatpush1.bf16.msra.mxu0 %v776
      %976 = vmatprep.subr.bf16.mxu0 0
      %977 = vmatpush1.bf16.msra.mxu0 %v777
      %978 = vmatprep.subr.bf16.mxu0 0
      %979 = vmatpush1.bf16.msra.mxu0 %v778
      %980 = vmatprep.subr.bf16.mxu0 0
      %981 = vmatpush1.bf16.msra.mxu0 0
      %982 = vmatprep.subr.bf16.mxu0 0
      %983 = vmatpush1.bf16.msra.mxu0 0
      %984 = vmatprep.subr.bf16.mxu0 0
      %985 = vmatpush1.bf16.msra.mxu0 0
      %986 = vmatprep.subr.bf16.mxu0 0
      %987 = vmatpush1.bf16.msra.mxu0 0
      %988 = vmatprep.subr.bf16.mxu0 0
      %989 = vmatpush1.bf16.msra.mxu0 0
      %990 = vmatprep.subr.bf16.mxu0 0
      %991 = vmatpush1.bf16.msra.mxu0 0
      %992 = vmatprep.subr.bf16.mxu0 0
      %993 = vmatpush1.bf16.msra.mxu0 0
      %994 = vmatprep.subr.bf16.mxu0 0
      %995 = vmatpush1.bf16.msra.mxu0 0
      %996 = vmatprep.mubr.bf16.mxu0 0
      %997 = vmatmul.mubr.bf16.gmra.mrb[0].mxu0 %v565
      %v998 = vpop.f32.mrb[0].mxu0
      %v999 = vadd.f32 %v838, %v998
      %v1000 = vpop.f32.mrb[0].mxu0
      %v1001 = vpop.f32.mrb[0].mxu0
      %v1002 = vadd.f32 %v841, %v1001
      %v1003 = vpop.f32.mrb[0].mxu0
      %1004 = vmatprep.mubr.bf16.mxu0 0
      %1005 = vmatmul.mubr.bf16.gmra.mrb[0].mxu0 %v568
      %v1006 = vpop.f32.mrb[0].mxu0
      %v1007 = vadd.f32 %v846, %v1006
      %v1008 = vpop.f32.mrb[0].mxu0
      %v1009 = vpop.f32.mrb[0].mxu0
      %v1010 = vadd.f32 %v849, %v1009
      %v1011 = vpop.f32.mrb[0].mxu0
      %1012 = vmatprep.mubr.bf16.mxu0 0
      %1013 = vmatmul.mubr.bf16.gmra.mrb[0].mxu0 %v571
      %v1014 = vpop.f32.mrb[0].mxu0
      %v1015 = vadd.f32 %v854, %v1014
      %v1016 = vpop.f32.mrb[0].mxu0
      %v1017 = vpop.f32.mrb[0].mxu0
      %v1018 = vadd.f32 %v857, %v1017
      %v1019 = vpop.f32.mrb[0].mxu0
      %1020 = vmatprep.mubr.bf16.mxu0 0
      %1021 = vmatmul.mubr.bf16.gmra.mrb[0].mxu0 %v574
      %v1022 = vpop.f32.mrb[0].mxu0
      %v1023 = vadd.f32 %v862, %v1022
      %v1024 = vpop.f32.mrb[0].mxu0
      %v1025 = vpop.f32.mrb[0].mxu0
      %v1026 = vadd.f32 %v865, %v1025
      %v1027 = vpop.f32.mrb[0].mxu0
      %1028 = vmatprep.mubr.bf16.mxu0 0
      %1029 = vmatmul.mubr.bf16.gmra.mrb[0].mxu0 %v577
      %v1030 = vpop.f32.mrb[0].mxu0
      %v1031 = vadd.f32 %v870, %v1030
      %v1032 = vpop.f32.mrb[0].mxu0
      %v1033 = vpop.f32.mrb[0].mxu0
      %v1034 = vadd.f32 %v873, %v1033
      %v1035 = vpop.f32.mrb[0].mxu0
      %1036 = vmatprep.mubr.bf16.mxu0 0
      %1037 = vmatmul.mubr.bf16.gmra.mrb[0].mxu0 %v580
      %v1038 = vpop.f32.mrb[0].mxu0
      %v1039 = vadd.f32 %v878, %v1038
      %v1040 = vpop.f32.mrb[0].mxu0
      %v1041 = vpop.f32.mrb[0].mxu0
      %v1042 = vadd.f32 %v881, %v1041
      %v1043 = vpop.f32.mrb[0].mxu0
      %1044 = vmatprep.mubr.bf16.mxu0 0
      %1045 = vmatmul.mubr.bf16.gmra.mrb[0].mxu0 %v583
      %v1046 = vpop.f32.mrb[0].mxu0
      %v1047 = vadd.f32 %v886, %v1046
      %v1048 = vpop.f32.mrb[0].mxu0
      %v1049 = vpop.f32.mrb[0].mxu0
      %v1050 = vadd.f32 %v889, %v1049
      %v1051 = vpop.f32.mrb[0].mxu0
      %1052 = vmatprep.mubr.bf16.mxu0 0
      %1053 = vmatmul.mubr.bf16.gmra.mrb[0].mxu0 %v586
      %v1054 = vpop.f32.mrb[0].mxu0
      %v1055 = vadd.f32 %v894, %v1054
      %v1056 = vpop.f32.mrb[0].mxu0
      %v1057 = vpop.f32.mrb[0].mxu0
      %v1058 = vadd.f32 %v897, %v1057
      %v1059 = vpop.f32.mrb[0].mxu0
      %1060 = vmatprep.mubr.bf16.mxu0 0
      %1061 = vmatmul.mubr.bf16.gmra.mrb[0].mxu0 %v589
      %v1062 = vpop.f32.mrb[0].mxu0
      %v1063 = vadd.f32 %v902, %v1062
      %v1064 = vpop.f32.mrb[0].mxu0
      %v1065 = vpop.f32.mrb[0].mxu0
      %v1066 = vadd.f32 %v905, %v1065
      %v1067 = vpop.f32.mrb[0].mxu0
      %1068 = vmatprep.mubr.bf16.mxu0 0
      %1069 = vmatmul.mubr.bf16.gmra.mrb[0].mxu0 %v592
      %v1070 = vpop.f32.mrb[0].mxu0
      %v1071 = vadd.f32 %v910, %v1070
      %v1072 = vpop.f32.mrb[0].mxu0
      %v1073 = vpop.f32.mrb[0].mxu0
      %v1074 = vadd.f32 %v913, %v1073
      %v1075 = vpop.f32.mrb[0].mxu0
      %1076 = vmatprep.mubr.bf16.mxu0 0
      %1077 = vmatmul.mubr.bf16.gmra.mrb[0].mxu0 %v595
      %v1078 = vpop.f32.mrb[0].mxu0
      %v1079 = vadd.f32 %v918, %v1078
      %v1080 = vpop.f32.mrb[0].mxu0
      %v1081 = vpop.f32.mrb[0].mxu0
      %v1082 = vadd.f32 %v921, %v1081
      %v1083 = vpop.f32.mrb[0].mxu0
      %1084 = vmatprep.mubr.bf16.mxu0 0
      %1085 = vmatmul.mubr.bf16.gmra.mrb[0].mxu0 %v598
      %v1086 = vpop.f32.mrb[0].mxu0
      %v1087 = vadd.f32 %v926, %v1086
      %v1088 = vpop.f32.mrb[0].mxu0
      %v1089 = vpop.f32.mrb[0].mxu0
      %v1090 = vadd.f32 %v929, %v1089
      %v1091 = vpop.f32.mrb[0].mxu0
      %1092 = vmatprep.mubr.bf16.mxu0 0
      %1093 = vmatmul.mubr.bf16.gmra.mrb[0].mxu0 %v601
      %v1094 = vpop.f32.mrb[0].mxu0
      %v1095 = vadd.f32 %v934, %v1094
      %v1096 = vpop.f32.mrb[0].mxu0
      %v1097 = vpop.f32.mrb[0].mxu0
      %v1098 = vadd.f32 %v937, %v1097
      %v1099 = vpop.f32.mrb[0].mxu0
      %1100 = vmatprep.mubr.bf16.mxu0 0
      %1101 = vmatmul.mubr.bf16.gmra.mrb[0].mxu0 %v604
      %v1102 = vpop.f32.mrb[0].mxu0
      %v1103 = vadd.f32 %v942, %v1102
      %v1104 = vpop.f32.mrb[0].mxu0
      %v1105 = vpop.f32.mrb[0].mxu0
      %v1106 = vadd.f32 %v945, %v1105
      %v1107 = vpop.f32.mrb[0].mxu0
      %1108 = vmatprep.mubr.bf16.mxu0 0
      %1109 = vmatmul.mubr.bf16.gmra.mrb[0].mxu0 %v607
      %v1110 = vpop.f32.mrb[0].mxu0
      %v1111 = vadd.f32 %v950, %v1110
      %v1112 = vpop.f32.mrb[0].mxu0
      %v1113 = vpop.f32.mrb[0].mxu0
      %v1114 = vadd.f32 %v953, %v1113
      %v1115 = vpop.f32.mrb[0].mxu0
      %1116 = vmatprep.mubr.bf16.mxu0 0
      %1117 = vmatmul.mubr.bf16.gmra.mrb[0].mxu0 %v610
      %v1118 = vpop.f32.mrb[0].mxu0
      %v1119 = vadd.f32 %v958, %v1118
      %v1120 = vpop.f32.mrb[0].mxu0
      %v1121 = vpop.f32.mrb[0].mxu0
      %v1122 = vadd.f32 %v961, %v1121
      %v1123 = vpop.f32.mrb[0].mxu0
      %1124 = vdwg.mxu0
      %1125 = vst [vmem:[#allocation2] sm:$0xff] %v999
      %1126 = vst [vmem:[#allocation2 + $0x8] sm:$0xff] %v1002
      %1127 = vst [vmem:[#allocation2 + $0x10] sm:$0xff] %v1007
      %1128 = vst [vmem:[#allocation2 + $0x18] sm:$0xff] %v1010
      %1129 = vst [vmem:[#allocation2 + $0x20] sm:$0xff] %v1015
      %1130 = vst [vmem:[#allocation2 + $0x28] sm:$0xff] %v1018
      %1131 = vst [vmem:[#allocation2 + $0x30] sm:$0xff] %v1023
      %1132 = vst [vmem:[#allocation2 + $0x38] sm:$0xff] %v1026
      %1133 = vst [vmem:[#allocation2 + $0x40] sm:$0xff] %v1031
      %1134 = vst [vmem:[#allocation2 + $0x48] sm:$0xff] %v1034
      %1135 = vst [vmem:[#allocation2 + $0x50] sm:$0xff] %v1039
      %1136 = vst [vmem:[#allocation2 + $0x58] sm:$0xff] %v1042
      %1137 = vst [vmem:[#allocation2 + $0x60] sm:$0xff] %v1047
      %1138 = vst [vmem:[#allocation2 + $0x68] sm:$0xff] %v1050
      %1139 = vst [vmem:[#allocation2 + $0x70] sm:$0xff] %v1055
      %1140 = vst [vmem:[#allocation2 + $0x78] sm:$0xff] %v1058
      %1141 = vst [vmem:[#allocation2 + $0x80] sm:$0xff] %v1063
      %1142 = vst [vmem:[#allocation2 + $0x88] sm:$0xff] %v1066
      %1143 = vst [vmem:[#allocation2 + $0x90] sm:$0xff] %v1071
      %1144 = vst [vmem:[#allocation2 + $0x98] sm:$0xff] %v1074
      %1145 = vst [vmem:[#allocation2 + $0xa0] sm:$0xff] %v1079
      %1146 = vst [vmem:[#allocation2 + $0xa8] sm:$0xff] %v1082
      %1147 = vst [vmem:[#allocation2 + $0xb0] sm:$0xff] %v1087
      %1148 = vst [vmem:[#allocation2 + $0xb8] sm:$0xff] %v1090
      %1149 = vst [vmem:[#allocation2 + $0xc0] sm:$0xff] %v1095
      %1150 = vst [vmem:[#allocation2 + $0xc8] sm:$0xff] %v1098
      %1151 = vst [vmem:[#allocation2 + $0xd0] sm:$0xff] %v1103
      %1152 = vst [vmem:[#allocation2 + $0xd8] sm:$0xff] %v1106
      %1153 = vst [vmem:[#allocation2 + $0xe0] sm:$0xff] %v1111
      %1154 = vst [vmem:[#allocation2 + $0xe8] sm:$0xff] %v1114
      %1155 = vst [vmem:[#allocation2 + $0xf0] sm:$0xff] %v1119
      %1156 = vst [vmem:[#allocation2 + $0xf8] sm:$0xff] %v1122
      %v1157 = vld [vmem:[%s268 + $0x18] sm:$0xff]
      %v1158 = vld [vmem:[%s268 + $0x20] sm:$0xf]
      %v1159 = vld [vmem:[%s268 + $0x24] sm:$0xff]
      %v1160 = vld [vmem:[%s268 + $0x2c] sm:$0xf]
      %v1161 = vld [vmem:[%s268 + $0x30] sm:$0xff]
      %v1162 = vld [vmem:[%s268 + $0x38] sm:$0xf]
      %v1163 = vld [vmem:[%s268 + $0x3c] sm:$0xff]
      %v1164 = vld [vmem:[%s268 + $0x44] sm:$0xf]
      %v1165 = vld [vmem:[%s268 + $0x48] sm:$0xff]
      %v1166 = vld [vmem:[%s268 + $0x50] sm:$0xf]
      %v1167 = vld [vmem:[%s268 + $0x54] sm:$0xff]
      %v1168 = vld [vmem:[%s268 + $0x5c] sm:$0xf]
      %v1169 = vld [vmem:[%s268 + $0x60] sm:$0xff]
      %v1170 = vld [vmem:[%s268 + $0x68] sm:$0xf]
      %v1171 = vld [vmem:[%s268 + $0x6c] sm:$0xff]
      %v1172 = vld [vmem:[%s268 + $0x74] sm:$0xf]
      %v1173 = vld [vmem:[%s268 + $0x78] sm:$0xff]
      %v1174 = vld [vmem:[%s268 + $0x80] sm:$0xf]
      %v1175 = vld [vmem:[%s268 + $0x84] sm:$0xff]
      %v1176 = vld [vmem:[%s268 + $0x8c] sm:$0xf]
      %v1177 = vld [vmem:[%s268 + $0x90] sm:$0xff]
      %v1178 = vld [vmem:[%s268 + $0x98] sm:$0xf]
      %v1179 = vld [vmem:[%s268 + $0x9c] sm:$0xff]
      %v1180 = vld [vmem:[%s268 + $0xa4] sm:$0xf]
      %v1181 = vld [vmem:[%s268 + $0xa8] sm:$0xff]
      %v1182 = vld [vmem:[%s268 + $0xb0] sm:$0xf]
      %v1183 = vld [vmem:[%s268 + $0xb4] sm:$0xff]
      %v1184 = vld [vmem:[%s268 + $0xbc] sm:$0xf]
      %v1185 = vld [vmem:[%s268 + $0xc0] sm:$0xff]
      %v1186 = vld [vmem:[%s268 + $0xc8] sm:$0xf]
      %v1187 = vld [vmem:[%s268 + $0xcc] sm:$0xff]
      %v1188 = vld [vmem:[%s268 + $0xd4] sm:$0xf]
      %v1189 = vld [vmem:[%s268 + $0xd8] sm:$0xff]
      %v1190 = vld [vmem:[%s268 + $0xe0] sm:$0xf]
      %v1191 = vld [vmem:[%s268 + $0xe4] sm:$0xff]
      %v1192 = vld [vmem:[%s268 + $0xec] sm:$0xf]
      %v1193 = vld [vmem:[%s268 + $0xf0] sm:$0xff]
      %v1194 = vld [vmem:[%s268 + $0xf8] sm:$0xf]
      %v1195 = vld [vmem:[%s268 + $0xfc] sm:$0xff]
      %v1196 = vld [vmem:[%s268 + $0x104] sm:$0xf]
      %v1197 = vld [vmem:[%s268 + $0x108] sm:$0xff]
      %v1198 = vld [vmem:[%s268 + $0x110] sm:$0xf]
      %v1199 = vld [vmem:[%s268 + $0x114] sm:$0xff]
      %v1200 = vld [vmem:[%s268 + $0x11c] sm:$0xf]
      %v1201 = vld [vmem:[%s268 + $0x120] sm:$0xff]
      %v1202 = vld [vmem:[%s268 + $0x128] sm:$0xf]
      %v1203 = vld [vmem:[%s268 + $0x12c] sm:$0xff]
      %v1204 = vld [vmem:[%s268 + $0x134] sm:$0xf]
      %v1205 = vld [vmem:[%s268 + $0x138] sm:$0xff]
      %v1206 = vld [vmem:[%s268 + $0x140] sm:$0xf]
      %v1207 = vld [vmem:[%s268 + $0x144] sm:$0xff]
      %v1208 = vld [vmem:[%s268 + $0x14c] sm:$0xf]
      %v1209 = vld [vmem:[%s268 + $0x150] sm:$0xff]
      %v1210 = vld [vmem:[%s268 + $0x158] sm:$0xf]
      %v1211 = vld [vmem:[%s268 + $0x15c] sm:$0xff]
      %v1212 = vld [vmem:[%s268 + $0x164] sm:$0xf]
      %v1213 = vld [vmem:[%s268 + $0x168] sm:$0xff]
      %v1214 = vld [vmem:[%s268 + $0x170] sm:$0xf]
      %v1215 = vld [vmem:[%s268 + $0x174] sm:$0xff]
      %v1216 = vld [vmem:[%s268 + $0x17c] sm:$0xf]
      %v1217 = vld [vmem:[%s268 + $0x180] sm:$0xff]
      %v1218 = vld [vmem:[%s268 + $0x188] sm:$0xf]
      %v1219 = vld [vmem:[%s268 + $0x18c] sm:$0xff]
      %v1220 = vld [vmem:[%s268 + $0x194] sm:$0xf]
      %v1221 = vld [vmem:[%s1 + $0xc0] sm:$0xf]
      %v1222 = vld [vmem:[%s1 + $0xc4] sm:$0xf]
      %v1223 = vld [vmem:[%s1 + $0xc8] sm:$0xf]
      %v1224 = vld [vmem:[%s1 + $0xcc] sm:$0xf]
      %v1225 = vld [vmem:[%s1 + $0xd0] sm:$0xf]
      %v1226 = vld [vmem:[%s1 + $0xd4] sm:$0xf]
      %v1227 = vld [vmem:[%s1 + $0xd8] sm:$0xf]
      %v1228 = vld [vmem:[%s1 + $0xdc] sm:$0xf]
      %v1229 = vld [vmem:[%s1 + $0xe0] sm:$0xf]
      %v1230 = vld [vmem:[%s1 + $0xe4] sm:$0xf]
      %v1231 = vld [vmem:[%s1 + $0xe8] sm:$0xf]
      %v1232 = vld [vmem:[%s1 + $0xec] sm:$0xf]
      %v1233 = vld [vmem:[%s1 + $0xf0] sm:$0xf]
      %v1234 = vld [vmem:[%s1 + $0xf4] sm:$0xf]
      %v1235 = vld [vmem:[%s1 + $0xf8] sm:$0xf]
      %v1236 = vld [vmem:[%s1 + $0xfc] sm:$0xf]
      %v1237 = vld [vmem:[%s1 + $0x100] sm:$0xf]
      %v1238 = vld [vmem:[%s1 + $0x104] sm:$0xf]
      %v1239 = vld [vmem:[%s1 + $0x108] sm:$0xf]
      %v1240 = vld [vmem:[%s1 + $0x10c] sm:$0xf]
      %v1241 = vld [vmem:[%s1 + $0x110] sm:$0xf]
      %v1242 = vld [vmem:[%s1 + $0x114] sm:$0xf]
      %v1243 = vld [vmem:[%s1 + $0x118] sm:$0xf]
      %v1244 = vld [vmem:[%s1 + $0x11c] sm:$0xf]
      %v1245 = vld [vmem:[%s1 + $0x120] sm:$0xf]
      %v1246 = vld [vmem:[%s1 + $0x124] sm:$0xf]
      %v1247 = vld [vmem:[%s1 + $0x128] sm:$0xf]
      %v1248 = vld [vmem:[%s1 + $0x12c] sm:$0xf]
      %v1249 = vld [vmem:[%s1 + $0x130] sm:$0xf]
      %v1250 = vld [vmem:[%s1 + $0x134] sm:$0xf]
      %v1251 = vld [vmem:[%s1 + $0x138] sm:$0xf]
      %v1252 = vld [vmem:[%s1 + $0x13c] sm:$0xf]
      %v1253 = vld [vmem:[%s1 + $0x140] sm:$0xf]
      %v1254 = vld [vmem:[%s1 + $0x144] sm:$0xf]
      %v1255 = vld [vmem:[%s1 + $0x148] sm:$0xf]
      %v1256 = vld [vmem:[%s1 + $0x14c] sm:$0xf]
      %v1257 = vld [vmem:[%s1 + $0x150] sm:$0xf]
      %v1258 = vld [vmem:[%s1 + $0x154] sm:$0xf]
      %v1259 = vld [vmem:[%s1 + $0x158] sm:$0xf]
      %v1260 = vld [vmem:[%s1 + $0x15c] sm:$0xf]
      %v1261 = vld [vmem:[%s1 + $0x160] sm:$0xf]
      %v1262 = vld [vmem:[%s1 + $0x164] sm:$0xf]
      %v1263 = vld [vmem:[%s1 + $0x168] sm:$0xf]
      %v1264 = vld [vmem:[%s1 + $0x16c] sm:$0xf]
      %v1265 = vld [vmem:[%s1 + $0x170] sm:$0xf]
      %v1266 = vld [vmem:[%s1 + $0x174] sm:$0xf]
      %v1267 = vld [vmem:[%s1 + $0x178] sm:$0xf]
      %v1268 = vld [vmem:[%s1 + $0x17c] sm:$0xf]
      %v1333 = vunpack.c.l.b16 %v1157
      %v1334 = vunpack.c.h.b16 %v1157
      %v1335 = vunpack.c.l.b16 %v1158
      %v1336 = vunpack.c.l.b16 %v1159
      %v1337 = vunpack.c.h.b16 %v1159
      %v1338 = vunpack.c.l.b16 %v1160
      %v1339 = vunpack.c.l.b16 %v1161
      %v1340 = vunpack.c.h.b16 %v1161
      %v1341 = vunpack.c.l.b16 %v1162
      %v1342 = vunpack.c.l.b16 %v1163
      %v1343 = vunpack.c.h.b16 %v1163
      %v1344 = vunpack.c.l.b16 %v1164
      %v1345 = vunpack.c.l.b16 %v1165
      %v1346 = vunpack.c.h.b16 %v1165
      %v1347 = vunpack.c.l.b16 %v1166
      %v1348 = vunpack.c.l.b16 %v1167
      %v1349 = vunpack.c.h.b16 %v1167
      %v1350 = vunpack.c.l.b16 %v1168
      %v1351 = vunpack.c.l.b16 %v1169
      %v1352 = vunpack.c.h.b16 %v1169
      %v1353 = vunpack.c.l.b16 %v1170
      %v1354 = vunpack.c.l.b16 %v1171
      %v1355 = vunpack.c.h.b16 %v1171
      %v1356 = vunpack.c.l.b16 %v1172
      %v1357 = vunpack.c.l.b16 %v1173
      %v1358 = vunpack.c.h.b16 %v1173
      %v1359 = vunpack.c.l.b16 %v1174
      %v1360 = vunpack.c.l.b16 %v1175
      %v1361 = vunpack.c.h.b16 %v1175
      %v1362 = vunpack.c.l.b16 %v1176
      %v1363 = vunpack.c.l.b16 %v1177
      %v1364 = vunpack.c.h.b16 %v1177
      %v1365 = vunpack.c.l.b16 %v1178
      %v1366 = vunpack.c.l.b16 %v1179
      %v1367 = vunpack.c.h.b16 %v1179
      %v1368 = vunpack.c.l.b16 %v1180
      %v1369 = vunpack.c.l.b16 %v1181
      %v1370 = vunpack.c.h.b16 %v1181
      %v1371 = vunpack.c.l.b16 %v1182
      %v1372 = vunpack.c.l.b16 %v1183
      %v1373 = vunpack.c.h.b16 %v1183
      %v1374 = vunpack.c.l.b16 %v1184
      %v1375 = vunpack.c.l.b16 %v1185
      %v1376 = vunpack.c.h.b16 %v1185
      %v1377 = vunpack.c.l.b16 %v1186
      %v1378 = vunpack.c.l.b16 %v1187
      %v1379 = vunpack.c.h.b16 %v1187
      %v1380 = vunpack.c.l.b16 %v1188
      %v1381 = vunpack.c.l.b16 %v1189
      %v1382 = vunpack.c.h.b16 %v1189
      %v1383 = vunpack.c.l.b16 %v1190
      %v1384 = vunpack.c.l.b16 %v1191
      %v1385 = vunpack.c.h.b16 %v1191
      %v1386 = vunpack.c.l.b16 %v1192
      %v1387 = vunpack.c.l.b16 %v1193
      %v1388 = vunpack.c.h.b16 %v1193
      %v1389 = vunpack.c.l.b16 %v1194
      %v1390 = vunpack.c.l.b16 %v1195
      %v1391 = vunpack.c.h.b16 %v1195
      %v1392 = vunpack.c.l.b16 %v1196
      %v1393 = vunpack.c.l.b16 %v1197
      %v1394 = vunpack.c.h.b16 %v1197
      %v1395 = vunpack.c.l.b16 %v1198
      %v1396 = vunpack.c.l.b16 %v1199
      %v1397 = vunpack.c.h.b16 %v1199
      %v1398 = vunpack.c.l.b16 %v1200
      %v1399 = vunpack.c.l.b16 %v1201
      %v1400 = vunpack.c.h.b16 %v1201
      %v1401 = vunpack.c.l.b16 %v1202
      %v1402 = vunpack.c.l.b16 %v1203
      %v1403 = vunpack.c.h.b16 %v1203
      %v1404 = vunpack.c.l.b16 %v1204
      %v1405 = vunpack.c.l.b16 %v1205
      %v1406 = vunpack.c.h.b16 %v1205
      %v1407 = vunpack.c.l.b16 %v1206
      %v1408 = vunpack.c.l.b16 %v1207
      %v1409 = vunpack.c.h.b16 %v1207
      %v1410 = vunpack.c.l.b16 %v1208
      %v1411 = vunpack.c.l.b16 %v1209
      %v1412 = vunpack.c.h.b16 %v1209
      %v1413 = vunpack.c.l.b16 %v1210
      %v1414 = vunpack.c.l.b16 %v1211
      %v1415 = vunpack.c.h.b16 %v1211
      %v1416 = vunpack.c.l.b16 %v1212
      %v1417 = vunpack.c.l.b16 %v1213
      %v1418 = vunpack.c.h.b16 %v1213
      %v1419 = vunpack.c.l.b16 %v1214
      %v1420 = vunpack.c.l.b16 %v1215
      %v1421 = vunpack.c.h.b16 %v1215
      %v1422 = vunpack.c.l.b16 %v1216
      %v1423 = vunpack.c.l.b16 %v1217
      %v1424 = vunpack.c.h.b16 %v1217
      %v1425 = vunpack.c.l.b16 %v1218
      %v1426 = vunpack.c.l.b16 %v1219
      %v1427 = vunpack.c.h.b16 %v1219
      %v1428 = vunpack.c.l.b16 %v1220
      %v1429 = vpack.c.b16 %v1336, %v1333
      %v1430 = vpack.c.b16 %v1337, %v1334
      %v1431 = vpack.c.b16 %v1338, %v1335
      %v1432 = vpack.c.b16 %v1342, %v1339
      %v1433 = vpack.c.b16 %v1343, %v1340
      %v1434 = vpack.c.b16 %v1344, %v1341
      %v1435 = vpack.c.b16 %v1348, %v1345
      %v1436 = vpack.c.b16 %v1349, %v1346
      %v1437 = vpack.c.b16 %v1350, %v1347
      %v1438 = vpack.c.b16 %v1354, %v1351
      %v1439 = vpack.c.b16 %v1355, %v1352
      %v1440 = vpack.c.b16 %v1356, %v1353
      %v1441 = vpack.c.b16 %v1360, %v1357
      %v1442 = vpack.c.b16 %v1361, %v1358
      %v1443 = vpack.c.b16 %v1362, %v1359
      %v1444 = vpack.c.b16 %v1366, %v1363
      %v1445 = vpack.c.b16 %v1367, %v1364
      %v1446 = vpack.c.b16 %v1368, %v1365
      %v1447 = vpack.c.b16 %v1372, %v1369
      %v1448 = vpack.c.b16 %v1373, %v1370
      %v1449 = vpack.c.b16 %v1374, %v1371
      %v1450 = vpack.c.b16 %v1378, %v1375
      %v1451 = vpack.c.b16 %v1379, %v1376
      %v1452 = vpack.c.b16 %v1380, %v1377
      %v1453 = vpack.c.b16 %v1384, %v1381
      %v1454 = vpack.c.b16 %v1385, %v1382
      %v1455 = vpack.c.b16 %v1386, %v1383
      %v1456 = vpack.c.b16 %v1390, %v1387
      %v1457 = vpack.c.b16 %v1391, %v1388
      %v1458 = vpack.c.b16 %v1392, %v1389
      %v1459 = vpack.c.b16 %v1396, %v1393
      %v1460 = vpack.c.b16 %v1397, %v1394
      %v1461 = vpack.c.b16 %v1398, %v1395
      %v1462 = vpack.c.b16 %v1402, %v1399
      %v1463 = vpack.c.b16 %v1403, %v1400
      %v1464 = vpack.c.b16 %v1404, %v1401
      %v1465 = vpack.c.b16 %v1408, %v1405
      %v1466 = vpack.c.b16 %v1409, %v1406
      %v1467 = vpack.c.b16 %v1410, %v1407
      %v1468 = vpack.c.b16 %v1414, %v1411
      %v1469 = vpack.c.b16 %v1415, %v1412
      %v1470 = vpack.c.b16 %v1416, %v1413
      %v1471 = vpack.c.b16 %v1420, %v1417
      %v1472 = vpack.c.b16 %v1421, %v1418
      %v1473 = vpack.c.b16 %v1422, %v1419
      %v1474 = vpack.c.b16 %v1426, %v1423
      %v1475 = vpack.c.b16 %v1427, %v1424
      %v1476 = vpack.c.b16 %v1428, %v1425
      %v1573 = vunpack.c.l.b16 %v1221
      %v1574 = vunpack.c.l.b16 %v1222
      %v1575 = vunpack.c.l.b16 %v1223
      %v1576 = vunpack.c.l.b16 %v1224
      %v1577 = vunpack.c.l.b16 %v1225
      %v1578 = vunpack.c.l.b16 %v1226
      %v1579 = vunpack.c.l.b16 %v1227
      %v1580 = vunpack.c.l.b16 %v1228
      %v1581 = vunpack.c.l.b16 %v1229
      %v1582 = vunpack.c.l.b16 %v1230
      %v1583 = vunpack.c.l.b16 %v1231
      %v1584 = vunpack.c.l.b16 %v1232
      %v1585 = vunpack.c.l.b16 %v1233
      %v1586 = vunpack.c.l.b16 %v1234
      %v1587 = vunpack.c.l.b16 %v1235
      %v1588 = vunpack.c.l.b16 %v1236
      %v1589 = vunpack.c.l.b16 %v1237
      %v1590 = vunpack.c.l.b16 %v1238
      %v1591 = vunpack.c.l.b16 %v1239
      %v1592 = vunpack.c.l.b16 %v1240
      %v1593 = vunpack.c.l.b16 %v1241
      %v1594 = vunpack.c.l.b16 %v1242
      %v1595 = vunpack.c.l.b16 %v1243
      %v1596 = vunpack.c.l.b16 %v1244
      %v1597 = vunpack.c.l.b16 %v1245
      %v1598 = vunpack.c.l.b16 %v1246
      %v1599 = vunpack.c.l.b16 %v1247
      %v1600 = vunpack.c.l.b16 %v1248
      %v1601 = vunpack.c.l.b16 %v1249
      %v1602 = vunpack.c.l.b16 %v1250
      %v1603 = vunpack.c.l.b16 %v1251
      %v1604 = vunpack.c.l.b16 %v1252
      %v1605 = vunpack.c.l.b16 %v1253
      %v1606 = vunpack.c.l.b16 %v1254
      %v1607 = vunpack.c.l.b16 %v1255
      %v1608 = vunpack.c.l.b16 %v1256
      %v1609 = vunpack.c.l.b16 %v1257
      %v1610 = vunpack.c.l.b16 %v1258
      %v1611 = vunpack.c.l.b16 %v1259
      %v1612 = vunpack.c.l.b16 %v1260
      %v1613 = vunpack.c.l.b16 %v1261
      %v1614 = vunpack.c.l.b16 %v1262
      %v1615 = vunpack.c.l.b16 %v1263
      %v1616 = vunpack.c.l.b16 %v1264
      %v1617 = vunpack.c.l.b16 %v1265
      %v1618 = vunpack.c.l.b16 %v1266
      %v1619 = vunpack.c.l.b16 %v1267
      %v1620 = vunpack.c.l.b16 %v1268
      %v1621 = vpack.c.b16 %v1574, %v1573
      %v1622 = vpack.c.b16 %v1576, %v1575
      %v1623 = vpack.c.b16 %v1578, %v1577
      %v1624 = vpack.c.b16 %v1580, %v1579
      %v1625 = vpack.c.b16 %v1582, %v1581
      %v1626 = vpack.c.b16 %v1584, %v1583
      %v1627 = vpack.c.b16 %v1586, %v1585
      %v1628 = vpack.c.b16 %v1588, %v1587
      %v1629 = vpack.c.b16 %v1590, %v1589
      %v1630 = vpack.c.b16 %v1592, %v1591
      %v1631 = vpack.c.b16 %v1594, %v1593
      %v1632 = vpack.c.b16 %v1596, %v1595
      %v1633 = vpack.c.b16 %v1598, %v1597
      %v1634 = vpack.c.b16 %v1600, %v1599
      %v1635 = vpack.c.b16 %v1602, %v1601
      %v1636 = vpack.c.b16 %v1604, %v1603
      %v1637 = vpack.c.b16 %v1606, %v1605
      %v1638 = vpack.c.b16 %v1608, %v1607
      %v1639 = vpack.c.b16 %v1610, %v1609
      %v1640 = vpack.c.b16 %v1612, %v1611
      %v1641 = vpack.c.b16 %v1614, %v1613
      %v1642 = vpack.c.b16 %v1616, %v1615
      %v1643 = vpack.c.b16 %v1618, %v1617
      %v1644 = vpack.c.b16 %v1620, %v1619
      %1669 = vmatprep.subr.bf16.mxu0 0
      %1670 = vmatpush1.bf16.msra.mxu0 %v1621
      %1671 = vmatprep.subr.bf16.mxu0 0
      %1672 = vmatpush1.bf16.msra.mxu0 %v1622
      %1673 = vmatprep.subr.bf16.mxu0 0
      %1674 = vmatpush1.bf16.msra.mxu0 %v1623
      %1675 = vmatprep.subr.bf16.mxu0 0
      %1676 = vmatpush1.bf16.msra.mxu0 %v1624
      %1677 = vmatprep.subr.bf16.mxu0 0
      %1678 = vmatpush1.bf16.msra.mxu0 %v1625
      %1679 = vmatprep.subr.bf16.mxu0 0
      %1680 = vmatpush1.bf16.msra.mxu0 %v1626
      %1681 = vmatprep.subr.bf16.mxu0 0
      %1682 = vmatpush1.bf16.msra.mxu0 %v1627
      %1683 = vmatprep.subr.bf16.mxu0 0
      %1684 = vmatpush1.bf16.msra.mxu0 %v1628
      %1685 = vmatprep.subr.bf16.mxu0 0
      %1686 = vmatpush1.bf16.msra.mxu0 %v1629
      %1687 = vmatprep.subr.bf16.mxu0 0
      %1688 = vmatpush1.bf16.msra.mxu0 %v1630
      %1689 = vmatprep.subr.bf16.mxu0 0
      %1690 = vmatpush1.bf16.msra.mxu0 %v1631
      %1691 = vmatprep.subr.bf16.mxu0 0
      %1692 = vmatpush1.bf16.msra.mxu0 %v1632
      %1693 = vmatprep.subr.bf16.mxu0 0
      %1694 = vmatpush1.bf16.msra.mxu0 %v1633
      %1695 = vmatprep.subr.bf16.mxu0 0
      %1696 = vmatpush1.bf16.msra.mxu0 %v1634
      %1697 = vmatprep.subr.bf16.mxu0 0
      %1698 = vmatpush1.bf16.msra.mxu0 %v1635
      %1699 = vmatprep.subr.bf16.mxu0 0
      %1700 = vmatpush1.bf16.msra.mxu0 %v1636
      %1701 = vmatprep.mubr.bf16.mxu0 %v1430
      %1702 = vmatmul.mubr.bf16.gmra.mrb[0].mxu0 %v1429
      %v1703 = vpop.f32.mrb[0].mxu0
      %v1704 = vadd.f32 0.0, %v1703
      %v1705 = vpop.f32.mrb[0].mxu0
      %v1706 = vpop.f32.mrb[0].mxu0
      %v1707 = vadd.f32 0.0, %v1706
      %v1708 = vpop.f32.mrb[0].mxu0
      %1709 = vmatprep.mubr.bf16.mxu0 %v1433
      %1710 = vmatmul.mubr.bf16.gmra.mrb[0].mxu0 %v1432
      %v1711 = vpop.f32.mrb[0].mxu0
      %v1712 = vadd.f32 0.0, %v1711
      %v1713 = vpop.f32.mrb[0].mxu0
      %v1714 = vpop.f32.mrb[0].mxu0
      %v1715 = vadd.f32 0.0, %v1714
      %v1716 = vpop.f32.mrb[0].mxu0
      %1717 = vmatprep.mubr.bf16.mxu0 %v1436
      %1718 = vmatmul.mubr.bf16.gmra.mrb[0].mxu0 %v1435
      %v1719 = vpop.f32.mrb[0].mxu0
      %v1720 = vadd.f32 0.0, %v1719
      %v1721 = vpop.f32.mrb[0].mxu0
      %v1722 = vpop.f32.mrb[0].mxu0
      %v1723 = vadd.f32 0.0, %v1722
      %v1724 = vpop.f32.mrb[0].mxu0
      %1725 = vmatprep.mubr.bf16.mxu0 %v1439
      %1726 = vmatmul.mubr.bf16.gmra.mrb[0].mxu0 %v1438
      %v1727 = vpop.f32.mrb[0].mxu0
      %v1728 = vadd.f32 0.0, %v1727
      %v1729 = vpop.f32.mrb[0].mxu0
      %v1730 = vpop.f32.mrb[0].mxu0
      %v1731 = vadd.f32 0.0, %v1730
      %v1732 = vpop.f32.mrb[0].mxu0
      %1733 = vmatprep.mubr.bf16.mxu0 %v1442
      %1734 = vmatmul.mubr.bf16.gmra.mrb[0].mxu0 %v1441
      %v1735 = vpop.f32.mrb[0].mxu0
      %v1736 = vadd.f32 0.0, %v1735
      %v1737 = vpop.f32.mrb[0].mxu0
      %v1738 = vpop.f32.mrb[0].mxu0
      %v1739 = vadd.f32 0.0, %v1738
      %v1740 = vpop.f32.mrb[0].mxu0
      %1741 = vmatprep.mubr.bf16.mxu0 %v1445
      %1742 = vmatmul.mubr.bf16.gmra.mrb[0].mxu0 %v1444
      %v1743 = vpop.f32.mrb[0].mxu0
      %v1744 = vadd.f32 0.0, %v1743
      %v1745 = vpop.f32.mrb[0].mxu0
      %v1746 = vpop.f32.mrb[0].mxu0
      %v1747 = vadd.f32 0.0, %v1746
      %v1748 = vpop.f32.mrb[0].mxu0
      %1749 = vmatprep.mubr.bf16.mxu0 %v1448
      %1750 = vmatmul.mubr.bf16.gmra.mrb[0].mxu0 %v1447
      %v1751 = vpop.f32.mrb[0].mxu0
      %v1752 = vadd.f32 0.0, %v1751
      %v1753 = vpop.f32.mrb[0].mxu0
      %v1754 = vpop.f32.mrb[0].mxu0
      %v1755 = vadd.f32 0.0, %v1754
      %v1756 = vpop.f32.mrb[0].mxu0
      %1757 = vmatprep.mubr.bf16.mxu0 %v1451
      %1758 = vmatmul.mubr.bf16.gmra.mrb[0].mxu0 %v1450
      %v1759 = vpop.f32.mrb[0].mxu0
      %v1760 = vadd.f32 0.0, %v1759
      %v1761 = vpop.f32.mrb[0].mxu0
      %v1762 = vpop.f32.mrb[0].mxu0
      %v1763 = vadd.f32 0.0, %v1762
      %v1764 = vpop.f32.mrb[0].mxu0
      %1765 = vmatprep.mubr.bf16.mxu0 %v1454
      %1766 = vmatmul.mubr.bf16.gmra.mrb[0].mxu0 %v1453
      %v1767 = vpop.f32.mrb[0].mxu0
      %v1768 = vadd.f32 0.0, %v1767
      %v1769 = vpop.f32.mrb[0].mxu0
      %v1770 = vpop.f32.mrb[0].mxu0
      %v1771 = vadd.f32 0.0, %v1770
      %v1772 = vpop.f32.mrb[0].mxu0
      %1773 = vmatprep.mubr.bf16.mxu0 %v1457
      %1774 = vmatmul.mubr.bf16.gmra.mrb[0].mxu0 %v1456
      %v1775 = vpop.f32.mrb[0].mxu0
      %v1776 = vadd.f32 0.0, %v1775
      %v1777 = vpop.f32.mrb[0].mxu0
      %v1778 = vpop.f32.mrb[0].mxu0
      %v1779 = vadd.f32 0.0, %v1778
      %v1780 = vpop.f32.mrb[0].mxu0
      %1781 = vmatprep.mubr.bf16.mxu0 %v1460
      %1782 = vmatmul.mubr.bf16.gmra.mrb[0].mxu0 %v1459
      %v1783 = vpop.f32.mrb[0].mxu0
      %v1784 = vadd.f32 0.0, %v1783
      %v1785 = vpop.f32.mrb[0].mxu0
      %v1786 = vpop.f32.mrb[0].mxu0
      %v1787 = vadd.f32 0.0, %v1786
      %v1788 = vpop.f32.mrb[0].mxu0
      %1789 = vmatprep.mubr.bf16.mxu0 %v1463
      %1790 = vmatmul.mubr.bf16.gmra.mrb[0].mxu0 %v1462
      %v1791 = vpop.f32.mrb[0].mxu0
      %v1792 = vadd.f32 0.0, %v1791
      %v1793 = vpop.f32.mrb[0].mxu0
      %v1794 = vpop.f32.mrb[0].mxu0
      %v1795 = vadd.f32 0.0, %v1794
      %v1796 = vpop.f32.mrb[0].mxu0
      %1797 = vmatprep.mubr.bf16.mxu0 %v1466
      %1798 = vmatmul.mubr.bf16.gmra.mrb[0].mxu0 %v1465
      %v1799 = vpop.f32.mrb[0].mxu0
      %v1800 = vadd.f32 0.0, %v1799
      %v1801 = vpop.f32.mrb[0].mxu0
      %v1802 = vpop.f32.mrb[0].mxu0
      %v1803 = vadd.f32 0.0, %v1802
      %v1804 = vpop.f32.mrb[0].mxu0
      %1805 = vmatprep.mubr.bf16.mxu0 %v1469
      %1806 = vmatmul.mubr.bf16.gmra.mrb[0].mxu0 %v1468
      %v1807 = vpop.f32.mrb[0].mxu0
      %v1808 = vadd.f32 0.0, %v1807
      %v1809 = vpop.f32.mrb[0].mxu0
      %v1810 = vpop.f32.mrb[0].mxu0
      %v1811 = vadd.f32 0.0, %v1810
      %v1812 = vpop.f32.mrb[0].mxu0
      %1813 = vmatprep.mubr.bf16.mxu0 %v1472
      %1814 = vmatmul.mubr.bf16.gmra.mrb[0].mxu0 %v1471
      %v1815 = vpop.f32.mrb[0].mxu0
      %v1816 = vadd.f32 0.0, %v1815
      %v1817 = vpop.f32.mrb[0].mxu0
      %v1818 = vpop.f32.mrb[0].mxu0
      %v1819 = vadd.f32 0.0, %v1818
      %v1820 = vpop.f32.mrb[0].mxu0
      %1821 = vmatprep.mubr.bf16.mxu0 %v1475
      %1822 = vmatmul.mubr.bf16.gmra.mrb[0].mxu0 %v1474
      %v1823 = vpop.f32.mrb[0].mxu0
      %v1824 = vadd.f32 0.0, %v1823
      %v1825 = vpop.f32.mrb[0].mxu0
      %v1826 = vpop.f32.mrb[0].mxu0
      %v1827 = vadd.f32 0.0, %v1826
      %v1828 = vpop.f32.mrb[0].mxu0
      %1829 = vdwg.mxu0
      %1830 = vmatprep.subr.bf16.mxu0 0
      %1831 = vmatpush1.bf16.msra.mxu0 %v1637
      %1832 = vmatprep.subr.bf16.mxu0 0
      %1833 = vmatpush1.bf16.msra.mxu0 %v1638
      %1834 = vmatprep.subr.bf16.mxu0 0
      %1835 = vmatpush1.bf16.msra.mxu0 %v1639
      %1836 = vmatprep.subr.bf16.mxu0 0
      %1837 = vmatpush1.bf16.msra.mxu0 %v1640
      %1838 = vmatprep.subr.bf16.mxu0 0
      %1839 = vmatpush1.bf16.msra.mxu0 %v1641
      %1840 = vmatprep.subr.bf16.mxu0 0
      %1841 = vmatpush1.bf16.msra.mxu0 %v1642
      %1842 = vmatprep.subr.bf16.mxu0 0
      %1843 = vmatpush1.bf16.msra.mxu0 %v1643
      %1844 = vmatprep.subr.bf16.mxu0 0
      %1845 = vmatpush1.bf16.msra.mxu0 %v1644
      %1846 = vmatprep.subr.bf16.mxu0 0
      %1847 = vmatpush1.bf16.msra.mxu0 0
      %1848 = vmatprep.subr.bf16.mxu0 0
      %1849 = vmatpush1.bf16.msra.mxu0 0
      %1850 = vmatprep.subr.bf16.mxu0 0
      %1851 = vmatpush1.bf16.msra.mxu0 0
      %1852 = vmatprep.subr.bf16.mxu0 0
      %1853 = vmatpush1.bf16.msra.mxu0 0
      %1854 = vmatprep.subr.bf16.mxu0 0
      %1855 = vmatpush1.bf16.msra.mxu0 0
      %1856 = vmatprep.subr.bf16.mxu0 0
      %1857 = vmatpush1.bf16.msra.mxu0 0
      %1858 = vmatprep.subr.bf16.mxu0 0
      %1859 = vmatpush1.bf16.msra.mxu0 0
      %1860 = vmatprep.subr.bf16.mxu0 0
      %1861 = vmatpush1.bf16.msra.mxu0 0
      %1862 = vmatprep.mubr.bf16.mxu0 0
      %1863 = vmatmul.mubr.bf16.gmra.mrb[0].mxu0 %v1431
      %v1864 = vpop.f32.mrb[0].mxu0
      %v1865 = vadd.f32 %v1704, %v1864
      %v1866 = vpop.f32.mrb[0].mxu0
      %v1867 = vpop.f32.mrb[0].mxu0
      %v1868 = vadd.f32 %v1707, %v1867
      %v1869 = vpop.f32.mrb[0].mxu0
      %1870 = vmatprep.mubr.bf16.mxu0 0
      %1871 = vmatmul.mubr.bf16.gmra.mrb[0].mxu0 %v1434
      %v1872 = vpop.f32.mrb[0].mxu0
      %v1873 = vadd.f32 %v1712, %v1872
      %v1874 = vpop.f32.mrb[0].mxu0
      %v1875 = vpop.f32.mrb[0].mxu0
      %v1876 = vadd.f32 %v1715, %v1875
      %v1877 = vpop.f32.mrb[0].mxu0
      %1878 = vmatprep.mubr.bf16.mxu0 0
      %1879 = vmatmul.mubr.bf16.gmra.mrb[0].mxu0 %v1437
      %v1880 = vpop.f32.mrb[0].mxu0
      %v1881 = vadd.f32 %v1720, %v1880
      %v1882 = vpop.f32.mrb[0].mxu0
      %v1883 = vpop.f32.mrb[0].mxu0
      %v1884 = vadd.f32 %v1723, %v1883
      %v1885 = vpop.f32.mrb[0].mxu0
      %1886 = vmatprep.mubr.bf16.mxu0 0
      %1887 = vmatmul.mubr.bf16.gmra.mrb[0].mxu0 %v1440
      %v1888 = vpop.f32.mrb[0].mxu0
      %v1889 = vadd.f32 %v1728, %v1888
      %v1890 = vpop.f32.mrb[0].mxu0
      %v1891 = vpop.f32.mrb[0].mxu0
      %v1892 = vadd.f32 %v1731, %v1891
      %v1893 = vpop.f32.mrb[0].mxu0
      %1894 = vmatprep.mubr.bf16.mxu0 0
      %1895 = vmatmul.mubr.bf16.gmra.mrb[0].mxu0 %v1443
      %v1896 = vpop.f32.mrb[0].mxu0
      %v1897 = vadd.f32 %v1736, %v1896
      %v1898 = vpop.f32.mrb[0].mxu0
      %v1899 = vpop.f32.mrb[0].mxu0
      %v1900 = vadd.f32 %v1739, %v1899
      %v1901 = vpop.f32.mrb[0].mxu0
      %1902 = vmatprep.mubr.bf16.mxu0 0
      %1903 = vmatmul.mubr.bf16.gmra.mrb[0].mxu0 %v1446
      %v1904 = vpop.f32.mrb[0].mxu0
      %v1905 = vadd.f32 %v1744, %v1904
      %v1906 = vpop.f32.mrb[0].mxu0
      %v1907 = vpop.f32.mrb[0].mxu0
      %v1908 = vadd.f32 %v1747, %v1907
      %v1909 = vpop.f32.mrb[0].mxu0
      %1910 = vmatprep.mubr.bf16.mxu0 0
      %1911 = vmatmul.mubr.bf16.gmra.mrb[0].mxu0 %v1449
      %v1912 = vpop.f32.mrb[0].mxu0
      %v1913 = vadd.f32 %v1752, %v1912
      %v1914 = vpop.f32.mrb[0].mxu0
      %v1915 = vpop.f32.mrb[0].mxu0
      %v1916 = vadd.f32 %v1755, %v1915
      %v1917 = vpop.f32.mrb[0].mxu0
      %1918 = vmatprep.mubr.bf16.mxu0 0
      %1919 = vmatmul.mubr.bf16.gmra.mrb[0].mxu0 %v1452
      %v1920 = vpop.f32.mrb[0].mxu0
      %v1921 = vadd.f32 %v1760, %v1920
      %v1922 = vpop.f32.mrb[0].mxu0
      %v1923 = vpop.f32.mrb[0].mxu0
      %v1924 = vadd.f32 %v1763, %v1923
      %v1925 = vpop.f32.mrb[0].mxu0
      %1926 = vmatprep.mubr.bf16.mxu0 0
      %1927 = vmatmul.mubr.bf16.gmra.mrb[0].mxu0 %v1455
      %v1928 = vpop.f32.mrb[0].mxu0
      %v1929 = vadd.f32 %v1768, %v1928
      %v1930 = vpop.f32.mrb[0].mxu0
      %v1931 = vpop.f32.mrb[0].mxu0
      %v1932 = vadd.f32 %v1771, %v1931
      %v1933 = vpop.f32.mrb[0].mxu0
      %1934 = vmatprep.mubr.bf16.mxu0 0
      %1935 = vmatmul.mubr.bf16.gmra.mrb[0].mxu0 %v1458
      %v1936 = vpop.f32.mrb[0].mxu0
      %v1937 = vadd.f32 %v1776, %v1936
      %v1938 = vpop.f32.mrb[0].mxu0
      %v1939 = vpop.f32.mrb[0].mxu0
      %v1940 = vadd.f32 %v1779, %v1939
      %v1941 = vpop.f32.mrb[0].mxu0
      %1942 = vmatprep.mubr.bf16.mxu0 0
      %1943 = vmatmul.mubr.bf16.gmra.mrb[0].mxu0 %v1461
      %v1944 = vpop.f32.mrb[0].mxu0
      %v1945 = vadd.f32 %v1784, %v1944
      %v1946 = vpop.f32.mrb[0].mxu0
      %v1947 = vpop.f32.mrb[0].mxu0
      %v1948 = vadd.f32 %v1787, %v1947
      %v1949 = vpop.f32.mrb[0].mxu0
      %1950 = vmatprep.mubr.bf16.mxu0 0
      %1951 = vmatmul.mubr.bf16.gmra.mrb[0].mxu0 %v1464
      %v1952 = vpop.f32.mrb[0].mxu0
      %v1953 = vadd.f32 %v1792, %v1952
      %v1954 = vpop.f32.mrb[0].mxu0
      %v1955 = vpop.f32.mrb[0].mxu0
      %v1956 = vadd.f32 %v1795, %v1955
      %v1957 = vpop.f32.mrb[0].mxu0
      %1958 = vmatprep.mubr.bf16.mxu0 0
      %1959 = vmatmul.mubr.bf16.gmra.mrb[0].mxu0 %v1467
      %v1960 = vpop.f32.mrb[0].mxu0
      %v1961 = vadd.f32 %v1800, %v1960
      %v1962 = vpop.f32.mrb[0].mxu0
      %v1963 = vpop.f32.mrb[0].mxu0
      %v1964 = vadd.f32 %v1803, %v1963
      %v1965 = vpop.f32.mrb[0].mxu0
      %1966 = vmatprep.mubr.bf16.mxu0 0
      %1967 = vmatmul.mubr.bf16.gmra.mrb[0].mxu0 %v1470
      %v1968 = vpop.f32.mrb[0].mxu0
      %v1969 = vadd.f32 %v1808, %v1968
      %v1970 = vpop.f32.mrb[0].mxu0
      %v1971 = vpop.f32.mrb[0].mxu0
      %v1972 = vadd.f32 %v1811, %v1971
      %v1973 = vpop.f32.mrb[0].mxu0
      %1974 = vmatprep.mubr.bf16.mxu0 0
      %1975 = vmatmul.mubr.bf16.gmra.mrb[0].mxu0 %v1473
      %v1976 = vpop.f32.mrb[0].mxu0
      %v1977 = vadd.f32 %v1816, %v1976
      %v1978 = vpop.f32.mrb[0].mxu0
      %v1979 = vpop.f32.mrb[0].mxu0
      %v1980 = vadd.f32 %v1819, %v1979
      %v1981 = vpop.f32.mrb[0].mxu0
      %1982 = vmatprep.mubr.bf16.mxu0 0
      %1983 = vmatmul.mubr.bf16.gmra.mrb[0].mxu0 %v1476
      %v1984 = vpop.f32.mrb[0].mxu0
      %v1985 = vadd.f32 %v1824, %v1984
      %v1986 = vpop.f32.mrb[0].mxu0
      %v1987 = vpop.f32.mrb[0].mxu0
      %v1988 = vadd.f32 %v1827, %v1987
      %v1989 = vpop.f32.mrb[0].mxu0
      %1990 = vdwg.mxu0
      %v1991 = vld [vmem:[#allocation2] sm:$0xff]
      %v1992 = vld [vmem:[#allocation2 + $0x8] sm:$0xff]
      %v1993 = vld [vmem:[#allocation2 + $0x10] sm:$0xff]
      %v1994 = vld [vmem:[#allocation2 + $0x18] sm:$0xff]
      %v1995 = vld [vmem:[#allocation2 + $0x20] sm:$0xff]
      %v1996 = vld [vmem:[#allocation2 + $0x28] sm:$0xff]
      %v1997 = vld [vmem:[#allocation2 + $0x30] sm:$0xff]
      %v1998 = vld [vmem:[#allocation2 + $0x38] sm:$0xff]
      %v1999 = vld [vmem:[#allocation2 + $0x40] sm:$0xff]
      %v2000 = vld [vmem:[#allocation2 + $0x48] sm:$0xff]
      %v2001 = vld [vmem:[#allocation2 + $0x50] sm:$0xff]
      %v2002 = vld [vmem:[#allocation2 + $0x58] sm:$0xff]
      %v2003 = vld [vmem:[#allocation2 + $0x60] sm:$0xff]
      %v2004 = vld [vmem:[#allocation2 + $0x68] sm:$0xff]
      %v2005 = vld [vmem:[#allocation2 + $0x70] sm:$0xff]
      %v2006 = vld [vmem:[#allocation2 + $0x78] sm:$0xff]
      %v2007 = vld [vmem:[#allocation2 + $0x80] sm:$0xff]
      %v2008 = vld [vmem:[#allocation2 + $0x88] sm:$0xff]
      %v2009 = vld [vmem:[#allocation2 + $0x90] sm:$0xff]
      %v2010 = vld [vmem:[#allocation2 + $0x98] sm:$0xff]
      %v2011 = vld [vmem:[#allocation2 + $0xa0] sm:$0xff]
      %v2012 = vld [vmem:[#allocation2 + $0xa8] sm:$0xff]
      %v2013 = vld [vmem:[#allocation2 + $0xb0] sm:$0xff]
      %v2014 = vld [vmem:[#allocation2 + $0xb8] sm:$0xff]
      %v2015 = vld [vmem:[#allocation2 + $0xc0] sm:$0xff]
      %v2016 = vld [vmem:[#allocation2 + $0xc8] sm:$0xff]
      %v2017 = vld [vmem:[#allocation2 + $0xd0] sm:$0xff]
      %v2018 = vld [vmem:[#allocation2 + $0xd8] sm:$0xff]
      %v2019 = vld [vmem:[#allocation2 + $0xe0] sm:$0xff]
      %v2020 = vld [vmem:[#allocation2 + $0xe8] sm:$0xff]
      %v2021 = vld [vmem:[#allocation2 + $0xf0] sm:$0xff]
      %v2022 = vld [vmem:[#allocation2 + $0xf8] sm:$0xff]
      %v2023 = vadd.f32 %v1991, %v1865
      %v2024 = vadd.f32 %v1992, %v1868
      %v2025 = vadd.f32 %v1993, %v1873
      %v2026 = vadd.f32 %v1994, %v1876
      %v2027 = vadd.f32 %v1995, %v1881
      %v2028 = vadd.f32 %v1996, %v1884
      %v2029 = vadd.f32 %v1997, %v1889
      %v2030 = vadd.f32 %v1998, %v1892
      %v2031 = vadd.f32 %v1999, %v1897
      %v2032 = vadd.f32 %v2000, %v1900
      %v2033 = vadd.f32 %v2001, %v1905
      %v2034 = vadd.f32 %v2002, %v1908
      %v2035 = vadd.f32 %v2003, %v1913
      %v2036 = vadd.f32 %v2004, %v1916
      %v2037 = vadd.f32 %v2005, %v1921
      %v2038 = vadd.f32 %v2006, %v1924
      %v2039 = vadd.f32 %v2007, %v1929
      %v2040 = vadd.f32 %v2008, %v1932
      %v2041 = vadd.f32 %v2009, %v1937
      %v2042 = vadd.f32 %v2010, %v1940
      %v2043 = vadd.f32 %v2011, %v1945
      %v2044 = vadd.f32 %v2012, %v1948
      %v2045 = vadd.f32 %v2013, %v1953
      %v2046 = vadd.f32 %v2014, %v1956
      %v2047 = vadd.f32 %v2015, %v1961
      %v2048 = vadd.f32 %v2016, %v1964
      %v2049 = vadd.f32 %v2017, %v1969
      %v2050 = vadd.f32 %v2018, %v1972
      %v2051 = vadd.f32 %v2019, %v1977
      %v2052 = vadd.f32 %v2020, %v1980
      %v2053 = vadd.f32 %v2021, %v1985
      %v2054 = vadd.f32 %v2022, %v1988
      %2055 = vst [vmem:[#allocation2] sm:$0xff] %v2023
      %2056 = vst [vmem:[#allocation2 + $0x8] sm:$0xff] %v2024
      %2057 = vst [vmem:[#allocation2 + $0x10] sm:$0xff] %v2025
      %2058 = vst [vmem:[#allocation2 + $0x18] sm:$0xff] %v2026
      %2059 = vst [vmem:[#allocation2 + $0x20] sm:$0xff] %v2027
      %2060 = vst [vmem:[#allocation2 + $0x28] sm:$0xff] %v2028
      %2061 = vst [vmem:[#allocation2 + $0x30] sm:$0xff] %v2029
      %2062 = vst [vmem:[#allocation2 + $0x38] sm:$0xff] %v2030
      %2063 = vst [vmem:[#allocation2 + $0x40] sm:$0xff] %v2031
      %2064 = vst [vmem:[#allocation2 + $0x48] sm:$0xff] %v2032
      %2065 = vst [vmem:[#allocation2 + $0x50] sm:$0xff] %v2033
      %2066 = vst [vmem:[#allocation2 + $0x58] sm:$0xff] %v2034
      %2067 = vst [vmem:[#allocation2 + $0x60] sm:$0xff] %v2035
      %2068 = vst [vmem:[#allocation2 + $0x68] sm:$0xff] %v2036
      %2069 = vst [vmem:[#allocation2 + $0x70] sm:$0xff] %v2037
      %2070 = vst [vmem:[#allocation2 + $0x78] sm:$0xff] %v2038
      %2071 = vst [vmem:[#allocation2 + $0x80] sm:$0xff] %v2039
      %2072 = vst [vmem:[#allocation2 + $0x88] sm:$0xff] %v2040
      %2073 = vst [vmem:[#allocation2 + $0x90] sm:$0xff] %v2041
      %2074 = vst [vmem:[#allocation2 + $0x98] sm:$0xff] %v2042
      %2075 = vst [vmem:[#allocation2 + $0xa0] sm:$0xff] %v2043
      %2076 = vst [vmem:[#allocation2 + $0xa8] sm:$0xff] %v2044
      %2077 = vst [vmem:[#allocation2 + $0xb0] sm:$0xff] %v2045
      %2078 = vst [vmem:[#allocation2 + $0xb8] sm:$0xff] %v2046
      %2079 = vst [vmem:[#allocation2 + $0xc0] sm:$0xff] %v2047
      %2080 = vst [vmem:[#allocation2 + $0xc8] sm:$0xff] %v2048
      %2081 = vst [vmem:[#allocation2 + $0xd0] sm:$0xff] %v2049
      %2082 = vst [vmem:[#allocation2 + $0xd8] sm:$0xff] %v2050
      %2083 = vst [vmem:[#allocation2 + $0xe0] sm:$0xff] %v2051
      %2084 = vst [vmem:[#allocation2 + $0xe8] sm:$0xff] %v2052
      %2085 = vst [vmem:[#allocation2 + $0xf0] sm:$0xff] %v2053
      %2086 = vst [vmem:[#allocation2 + $0xf8] sm:$0xff] %v2054
      %v2087 = vld [vmem:[%s268 + $0x30] sm:$0xff]
      %v2088 = vld [vmem:[%s268 + $0x38] sm:$0xf]
      %v2089 = vld [vmem:[%s268 + $0x3c] sm:$0xff]
      %v2090 = vld [vmem:[%s268 + $0x44] sm:$0xf]
      %v2091 = vld [vmem:[%s268 + $0x48] sm:$0xff]
      %v2092 = vld [vmem:[%s268 + $0x50] sm:$0xf]
      %v2093 = vld [vmem:[%s268 + $0x54] sm:$0xff]
      %v2094 = vld [vmem:[%s268 + $0x5c] sm:$0xf]
      %v2095 = vld [vmem:[%s268 + $0x60] sm:$0xff]
      %v2096 = vld [vmem:[%s268 + $0x68] sm:$0xf]
      %v2097 = vld [vmem:[%s268 + $0x6c] sm:$0xff]
      %v2098 = vld [vmem:[%s268 + $0x74] sm:$0xf]
      %v2099 = vld [vmem:[%s268 + $0x78] sm:$0xff]
      %v2100 = vld [vmem:[%s268 + $0x80] sm:$0xf]
      %v2101 = vld [vmem:[%s268 + $0x84] sm:$0xff]
      %v2102 = vld [vmem:[%s268 + $0x8c] sm:$0xf]
      %v2103 = vld [vmem:[%s268 + $0x90] sm:$0xff]
      %v2104 = vld [vmem:[%s268 + $0x98] sm:$0xf]
      %v2105 = vld [vmem:[%s268 + $0x9c] sm:$0xff]
      %v2106 = vld [vmem:[%s268 + $0xa4] sm:$0xf]
      %v2107 = vld [vmem:[%s268 + $0xa8] sm:$0xff]
      %v2108 = vld [vmem:[%s268 + $0xb0] sm:$0xf]
      %v2109 = vld [vmem:[%s268 + $0xb4] sm:$0xff]
      %v2110 = vld [vmem:[%s268 + $0xbc] sm:$0xf]
      %v2111 = vld [vmem:[%s268 + $0xc0] sm:$0xff]
      %v2112 = vld [vmem:[%s268 + $0xc8] sm:$0xf]
      %v2113 = vld [vmem:[%s268 + $0xcc] sm:$0xff]
      %v2114 = vld [vmem:[%s268 + $0xd4] sm:$0xf]
      %v2115 = vld [vmem:[%s268 + $0xd8] sm:$0xff]
      %v2116 = vld [vmem:[%s268 + $0xe0] sm:$0xf]
      %v2117 = vld [vmem:[%s268 + $0xe4] sm:$0xff]
      %v2118 = vld [vmem:[%s268 + $0xec] sm:$0xf]
      %v2119 = vld [vmem:[%s268 + $0xf0] sm:$0xff]
      %v2120 = vld [vmem:[%s268 + $0xf8] sm:$0xf]
      %v2121 = vld [vmem:[%s268 + $0xfc] sm:$0xff]
      %v2122 = vld [vmem:[%s268 + $0x104] sm:$0xf]
      %v2123 = vld [vmem:[%s268 + $0x108] sm:$0xff]
      %v2124 = vld [vmem:[%s268 + $0x110] sm:$0xf]
      %v2125 = vld [vmem:[%s268 + $0x114] sm:$0xff]
      %v2126 = vld [vmem:[%s268 + $0x11c] sm:$0xf]
      %v2127 = vld [vmem:[%s268 + $0x120] sm:$0xff]
      %v2128 = vld [vmem:[%s268 + $0x128] sm:$0xf]
      %v2129 = vld [vmem:[%s268 + $0x12c] sm:$0xff]
      %v2130 = vld [vmem:[%s268 + $0x134] sm:$0xf]
      %v2131 = vld [vmem:[%s268 + $0x138] sm:$0xff]
      %v2132 = vld [vmem:[%s268 + $0x140] sm:$0xf]
      %v2133 = vld [vmem:[%s268 + $0x144] sm:$0xff]
      %v2134 = vld [vmem:[%s268 + $0x14c] sm:$0xf]
      %v2135 = vld [vmem:[%s268 + $0x150] sm:$0xff]
      %v2136 = vld [vmem:[%s268 + $0x158] sm:$0xf]
      %v2137 = vld [vmem:[%s268 + $0x15c] sm:$0xff]
      %v2138 = vld [vmem:[%s268 + $0x164] sm:$0xf]
      %v2139 = vld [vmem:[%s268 + $0x168] sm:$0xff]
      %v2140 = vld [vmem:[%s268 + $0x170] sm:$0xf]
      %v2141 = vld [vmem:[%s268 + $0x174] sm:$0xff]
      %v2142 = vld [vmem:[%s268 + $0x17c] sm:$0xf]
      %v2143 = vld [vmem:[%s268 + $0x180] sm:$0xff]
      %v2144 = vld [vmem:[%s268 + $0x188] sm:$0xf]
      %v2145 = vld [vmem:[%s268 + $0x18c] sm:$0xff]
      %v2146 = vld [vmem:[%s268 + $0x194] sm:$0xf]
      %v2147 = vld [vmem:[%s268 + $0x198] sm:$0xff]
      %v2148 = vld [vmem:[%s268 + $0x1a0] sm:$0xf]
      %v2149 = vld [vmem:[%s268 + $0x1a4] sm:$0xff]
      %v2150 = vld [vmem:[%s268 + $0x1ac] sm:$0xf]
      %v2151 = vld [vmem:[%s1 + $0x180] sm:$0xf]
      %v2152 = vld [vmem:[%s1 + $0x184] sm:$0xf]
      %v2153 = vld [vmem:[%s1 + $0x188] sm:$0xf]
      %v2154 = vld [vmem:[%s1 + $0x18c] sm:$0xf]
      %v2155 = vld [vmem:[%s1 + $0x190] sm:$0xf]
      %v2156 = vld [vmem:[%s1 + $0x194] sm:$0xf]
      %v2157 = vld [vmem:[%s1 + $0x198] sm:$0xf]
      %v2158 = vld [vmem:[%s1 + $0x19c] sm:$0xf]
      %v2159 = vld [vmem:[%s1 + $0x1a0] sm:$0xf]
      %v2160 = vld [vmem:[%s1 + $0x1a4] sm:$0xf]
      %v2161 = vld [vmem:[%s1 + $0x1a8] sm:$0xf]
      %v2162 = vld [vmem:[%s1 + $0x1ac] sm:$0xf]
      %v2163 = vld [vmem:[%s1 + $0x1b0] sm:$0xf]
      %v2164 = vld [vmem:[%s1 + $0x1b4] sm:$0xf]
      %v2165 = vld [vmem:[%s1 + $0x1b8] sm:$0xf]
      %v2166 = vld [vmem:[%s1 + $0x1bc] sm:$0xf]
      %v2167 = vld [vmem:[%s1 + $0x1c0] sm:$0xf]
      %v2168 = vld [vmem:[%s1 + $0x1c4] sm:$0xf]
      %v2169 = vld [vmem:[%s1 + $0x1c8] sm:$0xf]
      %v2170 = vld [vmem:[%s1 + $0x1cc] sm:$0xf]
      %v2171 = vld [vmem:[%s1 + $0x1d0] sm:$0xf]
      %v2172 = vld [vmem:[%s1 + $0x1d4] sm:$0xf]
      %v2173 = vld [vmem:[%s1 + $0x1d8] sm:$0xf]
      %v2174 = vld [vmem:[%s1 + $0x1dc] sm:$0xf]
      %v2175 = vld [vmem:[%s1 + $0x1e0] sm:$0xf]
      %v2176 = vld [vmem:[%s1 + $0x1e4] sm:$0xf]
      %v2177 = vld [vmem:[%s1 + $0x1e8] sm:$0xf]
      %v2178 = vld [vmem:[%s1 + $0x1ec] sm:$0xf]
      %v2179 = vld [vmem:[%s1 + $0x1f0] sm:$0xf]
      %v2180 = vld [vmem:[%s1 + $0x1f4] sm:$0xf]
      %v2181 = vld [vmem:[%s1 + $0x1f8] sm:$0xf]
      %v2182 = vld [vmem:[%s1 + $0x1fc] sm:$0xf]
      %v2183 = vld [vmem:[%s1 + $0x200] sm:$0xf]
      %v2184 = vld [vmem:[%s1 + $0x204] sm:$0xf]
      %v2185 = vld [vmem:[%s1 + $0x208] sm:$0xf]
      %v2186 = vld [vmem:[%s1 + $0x20c] sm:$0xf]
      %v2187 = vld [vmem:[%s1 + $0x210] sm:$0xf]
      %v2188 = vld [vmem:[%s1 + $0x214] sm:$0xf]
      %v2189 = vld [vmem:[%s1 + $0x218] sm:$0xf]
      %v2190 = vld [vmem:[%s1 + $0x21c] sm:$0xf]
      %v2191 = vld [vmem:[%s1 + $0x220] sm:$0xf]
      %v2192 = vld [vmem:[%s1 + $0x224] sm:$0xf]
      %v2193 = vld [vmem:[%s1 + $0x228] sm:$0xf]
      %v2194 = vld [vmem:[%s1 + $0x22c] sm:$0xf]
      %v2195 = vld [vmem:[%s1 + $0x230] sm:$0xf]
      %v2196 = vld [vmem:[%s1 + $0x234] sm:$0xf]
      %v2197 = vld [vmem:[%s1 + $0x238] sm:$0xf]
      %v2198 = vld [vmem:[%s1 + $0x23c] sm:$0xf]
      %v2263 = vunpack.c.l.b16 %v2087
      %v2264 = vunpack.c.h.b16 %v2087
      %v2265 = vunpack.c.l.b16 %v2088
      %v2266 = vunpack.c.l.b16 %v2089
      %v2267 = vunpack.c.h.b16 %v2089
      %v2268 = vunpack.c.l.b16 %v2090
      %v2269 = vunpack.c.l.b16 %v2091
      %v2270 = vunpack.c.h.b16 %v2091
      %v2271 = vunpack.c.l.b16 %v2092
      %v2272 = vunpack.c.l.b16 %v2093
      %v2273 = vunpack.c.h.b16 %v2093
      %v2274 = vunpack.c.l.b16 %v2094
      %v2275 = vunpack.c.l.b16 %v2095
      %v2276 = vunpack.c.h.b16 %v2095
      %v2277 = vunpack.c.l.b16 %v2096
      %v2278 = vunpack.c.l.b16 %v2097
      %v2279 = vunpack.c.h.b16 %v2097
      %v2280 = vunpack.c.l.b16 %v2098
      %v2281 = vunpack.c.l.b16 %v2099
      %v2282 = vunpack.c.h.b16 %v2099
      %v2283 = vunpack.c.l.b16 %v2100
      %v2284 = vunpack.c.l.b16 %v2101
      %v2285 = vunpack.c.h.b16 %v2101
      %v2286 = vunpack.c.l.b16 %v2102
      %v2287 = vunpack.c.l.b16 %v2103
      %v2288 = vunpack.c.h.b16 %v2103
      %v2289 = vunpack.c.l.b16 %v2104
      %v2290 = vunpack.c.l.b16 %v2105
      %v2291 = vunpack.c.h.b16 %v2105
      %v2292 = vunpack.c.l.b16 %v2106
      %v2293 = vunpack.c.l.b16 %v2107
      %v2294 = vunpack.c.h.b16 %v2107
      %v2295 = vunpack.c.l.b16 %v2108
      %v2296 = vunpack.c.l.b16 %v2109
      %v2297 = vunpack.c.h.b16 %v2109
      %v2298 = vunpack.c.l.b16 %v2110
      %v2299 = vunpack.c.l.b16 %v2111
      %v2300 = vunpack.c.h.b16 %v2111
      %v2301 = vunpack.c.l.b16 %v2112
      %v2302 = vunpack.c.l.b16 %v2113
      %v2303 = vunpack.c.h.b16 %v2113
      %v2304 = vunpack.c.l.b16 %v2114
      %v2305 = vunpack.c.l.b16 %v2115
      %v2306 = vunpack.c.h.b16 %v2115
      %v2307 = vunpack.c.l.b16 %v2116
      %v2308 = vunpack.c.l.b16 %v2117
      %v2309 = vunpack.c.h.b16 %v2117
      %v2310 = vunpack.c.l.b16 %v2118
      %v2311 = vunpack.c.l.b16 %v2119
      %v2312 = vunpack.c.h.b16 %v2119
      %v2313 = vunpack.c.l.b16 %v2120
      %v2314 = vunpack.c.l.b16 %v2121
      %v2315 = vunpack.c.h.b16 %v2121
      %v2316 = vunpack.c.l.b16 %v2122
      %v2317 = vunpack.c.l.b16 %v2123
      %v2318 = vunpack.c.h.b16 %v2123
      %v2319 = vunpack.c.l.b16 %v2124
      %v2320 = vunpack.c.l.b16 %v2125
      %v2321 = vunpack.c.h.b16 %v2125
      %v2322 = vunpack.c.l.b16 %v2126
      %v2323 = vunpack.c.l.b16 %v2127
      %v2324 = vunpack.c.h.b16 %v2127
      %v2325 = vunpack.c.l.b16 %v2128
      %v2326 = vunpack.c.l.b16 %v2129
      %v2327 = vunpack.c.h.b16 %v2129
      %v2328 = vunpack.c.l.b16 %v2130
      %v2329 = vunpack.c.l.b16 %v2131
      %v2330 = vunpack.c.h.b16 %v2131
      %v2331 = vunpack.c.l.b16 %v2132
      %v2332 = vunpack.c.l.b16 %v2133
      %v2333 = vunpack.c.h.b16 %v2133
      %v2334 = vunpack.c.l.b16 %v2134
      %v2335 = vunpack.c.l.b16 %v2135
      %v2336 = vunpack.c.h.b16 %v2135
      %v2337 = vunpack.c.l.b16 %v2136
      %v2338 = vunpack.c.l.b16 %v2137
      %v2339 = vunpack.c.h.b16 %v2137
      %v2340 = vunpack.c.l.b16 %v2138
      %v2341 = vunpack.c.l.b16 %v2139
      %v2342 = vunpack.c.h.b16 %v2139
      %v2343 = vunpack.c.l.b16 %v2140
      %v2344 = vunpack.c.l.b16 %v2141
      %v2345 = vunpack.c.h.b16 %v2141
      %v2346 = vunpack.c.l.b16 %v2142
      %v2347 = vunpack.c.l.b16 %v2143
      %v2348 = vunpack.c.h.b16 %v2143
      %v2349 = vunpack.c.l.b16 %v2144
      %v2350 = vunpack.c.l.b16 %v2145
      %v2351 = vunpack.c.h.b16 %v2145
      %v2352 = vunpack.c.l.b16 %v2146
      %v2353 = vunpack.c.l.b16 %v2147
      %v2354 = vunpack.c.h.b16 %v2147
      %v2355 = vunpack.c.l.b16 %v2148
      %v2356 = vunpack.c.l.b16 %v2149
      %v2357 = vunpack.c.h.b16 %v2149
      %v2358 = vunpack.c.l.b16 %v2150
      %v2359 = vpack.c.b16 %v2266, %v2263
      %v2360 = vpack.c.b16 %v2267, %v2264
      %v2361 = vpack.c.b16 %v2268, %v2265
      %v2362 = vpack.c.b16 %v2272, %v2269
      %v2363 = vpack.c.b16 %v2273, %v2270
      %v2364 = vpack.c.b16 %v2274, %v2271
      %v2365 = vpack.c.b16 %v2278, %v2275
      %v2366 = vpack.c.b16 %v2279, %v2276
      %v2367 = vpack.c.b16 %v2280, %v2277
      %v2368 = vpack.c.b16 %v2284, %v2281
      %v2369 = vpack.c.b16 %v2285, %v2282
      %v2370 = vpack.c.b16 %v2286, %v2283
      %v2371 = vpack.c.b16 %v2290, %v2287
      %v2372 = vpack.c.b16 %v2291, %v2288
      %v2373 = vpack.c.b16 %v2292, %v2289
      %v2374 = vpack.c.b16 %v2296, %v2293
      %v2375 = vpack.c.b16 %v2297, %v2294
      %v2376 = vpack.c.b16 %v2298, %v2295
      %v2377 = vpack.c.b16 %v2302, %v2299
      %v2378 = vpack.c.b16 %v2303, %v2300
      %v2379 = vpack.c.b16 %v2304, %v2301
      %v2380 = vpack.c.b16 %v2308, %v2305
      %v2381 = vpack.c.b16 %v2309, %v2306
      %v2382 = vpack.c.b16 %v2310, %v2307
      %v2383 = vpack.c.b16 %v2314, %v2311
      %v2384 = vpack.c.b16 %v2315, %v2312
      %v2385 = vpack.c.b16 %v2316, %v2313
      %v2386 = vpack.c.b16 %v2320, %v2317
      %v2387 = vpack.c.b16 %v2321, %v2318
      %v2388 = vpack.c.b16 %v2322, %v2319
      %v2389 = vpack.c.b16 %v2326, %v2323
      %v2390 = vpack.c.b16 %v2327, %v2324
      %v2391 = vpack.c.b16 %v2328, %v2325
      %v2392 = vpack.c.b16 %v2332, %v2329
      %v2393 = vpack.c.b16 %v2333, %v2330
      %v2394 = vpack.c.b16 %v2334, %v2331
      %v2395 = vpack.c.b16 %v2338, %v2335
      %v2396 = vpack.c.b16 %v2339, %v2336
      %v2397 = vpack.c.b16 %v2340, %v2337
      %v2398 = vpack.c.b16 %v2344, %v2341
      %v2399 = vpack.c.b16 %v2345, %v2342
      %v2400 = vpack.c.b16 %v2346, %v2343
      %v2401 = vpack.c.b16 %v2350, %v2347
      %v2402 = vpack.c.b16 %v2351, %v2348
      %v2403 = vpack.c.b16 %v2352, %v2349
      %v2404 = vpack.c.b16 %v2356, %v2353
      %v2405 = vpack.c.b16 %v2357, %v2354
      %v2406 = vpack.c.b16 %v2358, %v2355
      %v2503 = vunpack.c.l.b16 %v2151
      %v2504 = vunpack.c.l.b16 %v2152
      %v2505 = vunpack.c.l.b16 %v2153
      %v2506 = vunpack.c.l.b16 %v2154
      %v2507 = vunpack.c.l.b16 %v2155
      %v2508 = vunpack.c.l.b16 %v2156
      %v2509 = vunpack.c.l.b16 %v2157
      %v2510 = vunpack.c.l.b16 %v2158
      %v2511 = vunpack.c.l.b16 %v2159
      %v2512 = vunpack.c.l.b16 %v2160
      %v2513 = vunpack.c.l.b16 %v2161
      %v2514 = vunpack.c.l.b16 %v2162
      %v2515 = vunpack.c.l.b16 %v2163
      %v2516 = vunpack.c.l.b16 %v2164
      %v2517 = vunpack.c.l.b16 %v2165
      %v2518 = vunpack.c.l.b16 %v2166
      %v2519 = vunpack.c.l.b16 %v2167
      %v2520 = vunpack.c.l.b16 %v2168
      %v2521 = vunpack.c.l.b16 %v2169
      %v2522 = vunpack.c.l.b16 %v2170
      %v2523 = vunpack.c.l.b16 %v2171
      %v2524 = vunpack.c.l.b16 %v2172
      %v2525 = vunpack.c.l.b16 %v2173
      %v2526 = vunpack.c.l.b16 %v2174
      %v2527 = vunpack.c.l.b16 %v2175
      %v2528 = vunpack.c.l.b16 %v2176
      %v2529 = vunpack.c.l.b16 %v2177
      %v2530 = vunpack.c.l.b16 %v2178
      %v2531 = vunpack.c.l.b16 %v2179
      %v2532 = vunpack.c.l.b16 %v2180
      %v2533 = vunpack.c.l.b16 %v2181
      %v2534 = vunpack.c.l.b16 %v2182
      %v2535 = vunpack.c.l.b16 %v2183
      %v2536 = vunpack.c.l.b16 %v2184
      %v2537 = vunpack.c.l.b16 %v2185
      %v2538 = vunpack.c.l.b16 %v2186
      %v2539 = vunpack.c.l.b16 %v2187
      %v2540 = vunpack.c.l.b16 %v2188
      %v2541 = vunpack.c.l.b16 %v2189
      %v2542 = vunpack.c.l.b16 %v2190
      %v2543 = vunpack.c.l.b16 %v2191
      %v2544 = vunpack.c.l.b16 %v2192
      %v2545 = vunpack.c.l.b16 %v2193
      %v2546 = vunpack.c.l.b16 %v2194
      %v2547 = vunpack.c.l.b16 %v2195
      %v2548 = vunpack.c.l.b16 %v2196
      %v2549 = vunpack.c.l.b16 %v2197
      %v2550 = vunpack.c.l.b16 %v2198
      %v2551 = vpack.c.b16 %v2504, %v2503
      %v2552 = vpack.c.b16 %v2506, %v2505
      %v2553 = vpack.c.b16 %v2508, %v2507
      %v2554 = vpack.c.b16 %v2510, %v2509
      %v2555 = vpack.c.b16 %v2512, %v2511
      %v2556 = vpack.c.b16 %v2514, %v2513
      %v2557 = vpack.c.b16 %v2516, %v2515
      %v2558 = vpack.c.b16 %v2518, %v2517
      %v2559 = vpack.c.b16 %v2520, %v2519
      %v2560 = vpack.c.b16 %v2522, %v2521
      %v2561 = vpack.c.b16 %v2524, %v2523
      %v2562 = vpack.c.b16 %v2526, %v2525
      %v2563 = vpack.c.b16 %v2528, %v2527
      %v2564 = vpack.c.b16 %v2530, %v2529
      %v2565 = vpack.c.b16 %v2532, %v2531
      %v2566 = vpack.c.b16 %v2534, %v2533
      %v2567 = vpack.c.b16 %v2536, %v2535
      %v2568 = vpack.c.b16 %v2538, %v2537
      %v2569 = vpack.c.b16 %v2540, %v2539
      %v2570 = vpack.c.b16 %v2542, %v2541
      %v2571 = vpack.c.b16 %v2544, %v2543
      %v2572 = vpack.c.b16 %v2546, %v2545
      %v2573 = vpack.c.b16 %v2548, %v2547
      %v2574 = vpack.c.b16 %v2550, %v2549
      %2599 = vmatprep.subr.bf16.mxu0 0
      %2600 = vmatpush1.bf16.msra.mxu0 %v2551
      %2601 = vmatprep.subr.bf16.mxu0 0
      %2602 = vmatpush1.bf16.msra.mxu0 %v2552
      %2603 = vmatprep.subr.bf16.mxu0 0
      %2604 = vmatpush1.bf16.msra.mxu0 %v2553
      %2605 = vmatprep.subr.bf16.mxu0 0
      %2606 = vmatpush1.bf16.msra.mxu0 %v2554
      %2607 = vmatprep.subr.bf16.mxu0 0
      %2608 = vmatpush1.bf16.msra.mxu0 %v2555
      %2609 = vmatprep.subr.bf16.mxu0 0
      %2610 = vmatpush1.bf16.msra.mxu0 %v2556
      %2611 = vmatprep.subr.bf16.mxu0 0
      %2612 = vmatpush1.bf16.msra.mxu0 %v2557
      %2613 = vmatprep.subr.bf16.mxu0 0
      %2614 = vmatpush1.bf16.msra.mxu0 %v2558
      %2615 = vmatprep.subr.bf16.mxu0 0
      %2616 = vmatpush1.bf16.msra.mxu0 %v2559
      %2617 = vmatprep.subr.bf16.mxu0 0
      %2618 = vmatpush1.bf16.msra.mxu0 %v2560
      %2619 = vmatprep.subr.bf16.mxu0 0
      %2620 = vmatpush1.bf16.msra.mxu0 %v2561
      %2621 = vmatprep.subr.bf16.mxu0 0
      %2622 = vmatpush1.bf16.msra.mxu0 %v2562
      %2623 = vmatprep.subr.bf16.mxu0 0
      %2624 = vmatpush1.bf16.msra.mxu0 %v2563
      %2625 = vmatprep.subr.bf16.mxu0 0
      %2626 = vmatpush1.bf16.msra.mxu0 %v2564
      %2627 = vmatprep.subr.bf16.mxu0 0
      %2628 = vmatpush1.bf16.msra.mxu0 %v2565
      %2629 = vmatprep.subr.bf16.mxu0 0
      %2630 = vmatpush1.bf16.msra.mxu0 %v2566
      %2631 = vmatprep.mubr.bf16.mxu0 %v2360
      %2632 = vmatmul.mubr.bf16.gmra.mrb[0].mxu0 %v2359
      %v2633 = vpop.f32.mrb[0].mxu0
      %v2634 = vadd.f32 0.0, %v2633
      %v2635 = vpop.f32.mrb[0].mxu0
      %v2636 = vpop.f32.mrb[0].mxu0
      %v2637 = vadd.f32 0.0, %v2636
      %v2638 = vpop.f32.mrb[0].mxu0
      %2639 = vmatprep.mubr.bf16.mxu0 %v2363
      %2640 = vmatmul.mubr.bf16.gmra.mrb[0].mxu0 %v2362
      %v2641 = vpop.f32.mrb[0].mxu0
      %v2642 = vadd.f32 0.0, %v2641
      %v2643 = vpop.f32.mrb[0].mxu0
      %v2644 = vpop.f32.mrb[0].mxu0
      %v2645 = vadd.f32 0.0, %v2644
      %v2646 = vpop.f32.mrb[0].mxu0
      %2647 = vmatprep.mubr.bf16.mxu0 %v2366
      %2648 = vmatmul.mubr.bf16.gmra.mrb[0].mxu0 %v2365
      %v2649 = vpop.f32.mrb[0].mxu0
      %v2650 = vadd.f32 0.0, %v2649
      %v2651 = vpop.f32.mrb[0].mxu0
      %v2652 = vpop.f32.mrb[0].mxu0
      %v2653 = vadd.f32 0.0, %v2652
      %v2654 = vpop.f32.mrb[0].mxu0
      %2655 = vmatprep.mubr.bf16.mxu0 %v2369
      %2656 = vmatmul.mubr.bf16.gmra.mrb[0].mxu0 %v2368
      %v2657 = vpop.f32.mrb[0].mxu0
      %v2658 = vadd.f32 0.0, %v2657
      %v2659 = vpop.f32.mrb[0].mxu0
      %v2660 = vpop.f32.mrb[0].mxu0
      %v2661 = vadd.f32 0.0, %v2660
      %v2662 = vpop.f32.mrb[0].mxu0
      %2663 = vmatprep.mubr.bf16.mxu0 %v2372
      %2664 = vmatmul.mubr.bf16.gmra.mrb[0].mxu0 %v2371
      %v2665 = vpop.f32.mrb[0].mxu0
      %v2666 = vadd.f32 0.0, %v2665
      %v2667 = vpop.f32.mrb[0].mxu0
      %v2668 = vpop.f32.mrb[0].mxu0
      %v2669 = vadd.f32 0.0, %v2668
      %v2670 = vpop.f32.mrb[0].mxu0
      %2671 = vmatprep.mubr.bf16.mxu0 %v2375
      %2672 = vmatmul.mubr.bf16.gmra.mrb[0].mxu0 %v2374
      %v2673 = vpop.f32.mrb[0].mxu0
      %v2674 = vadd.f32 0.0, %v2673
      %v2675 = vpop.f32.mrb[0].mxu0
      %v2676 = vpop.f32.mrb[0].mxu0
      %v2677 = vadd.f32 0.0, %v2676
      %v2678 = vpop.f32.mrb[0].mxu0
      %2679 = vmatprep.mubr.bf16.mxu0 %v2378
      %2680 = vmatmul.mubr.bf16.gmra.mrb[0].mxu0 %v2377
      %v2681 = vpop.f32.mrb[0].mxu0
      %v2682 = vadd.f32 0.0, %v2681
      %v2683 = vpop.f32.mrb[0].mxu0
      %v2684 = vpop.f32.mrb[0].mxu0
      %v2685 = vadd.f32 0.0, %v2684
      %v2686 = vpop.f32.mrb[0].mxu0
      %2687 = vmatprep.mubr.bf16.mxu0 %v2381
      %2688 = vmatmul.mubr.bf16.gmra.mrb[0].mxu0 %v2380
      %v2689 = vpop.f32.mrb[0].mxu0
      %v2690 = vadd.f32 0.0, %v2689
      %v2691 = vpop.f32.mrb[0].mxu0
      %v2692 = vpop.f32.mrb[0].mxu0
      %v2693 = vadd.f32 0.0, %v2692
      %v2694 = vpop.f32.mrb[0].mxu0
      %2695 = vmatprep.mubr.bf16.mxu0 %v2384
      %2696 = vmatmul.mubr.bf16.gmra.mrb[0].mxu0 %v2383
      %v2697 = vpop.f32.mrb[0].mxu0
      %v2698 = vadd.f32 0.0, %v2697
      %v2699 = vpop.f32.mrb[0].mxu0
      %v2700 = vpop.f32.mrb[0].mxu0
      %v2701 = vadd.f32 0.0, %v2700
      %v2702 = vpop.f32.mrb[0].mxu0
      %2703 = vmatprep.mubr.bf16.mxu0 %v2387
      %2704 = vmatmul.mubr.bf16.gmra.mrb[0].mxu0 %v2386
      %v2705 = vpop.f32.mrb[0].mxu0
      %v2706 = vadd.f32 0.0, %v2705
      %v2707 = vpop.f32.mrb[0].mxu0
      %v2708 = vpop.f32.mrb[0].mxu0
      %v2709 = vadd.f32 0.0, %v2708
      %v2710 = vpop.f32.mrb[0].mxu0
      %2711 = vmatprep.mubr.bf16.mxu0 %v2390
      %2712 = vmatmul.mubr.bf16.gmra.mrb[0].mxu0 %v2389
      %v2713 = vpop.f32.mrb[0].mxu0
      %v2714 = vadd.f32 0.0, %v2713
      %v2715 = vpop.f32.mrb[0].mxu0
      %v2716 = vpop.f32.mrb[0].mxu0
      %v2717 = vadd.f32 0.0, %v2716
      %v2718 = vpop.f32.mrb[0].mxu0
      %2719 = vmatprep.mubr.bf16.mxu0 %v2393
      %2720 = vmatmul.mubr.bf16.gmra.mrb[0].mxu0 %v2392
      %v2721 = vpop.f32.mrb[0].mxu0
      %v2722 = vadd.f32 0.0, %v2721
      %v2723 = vpop.f32.mrb[0].mxu0
      %v2724 = vpop.f32.mrb[0].mxu0
      %v2725 = vadd.f32 0.0, %v2724
      %v2726 = vpop.f32.mrb[0].mxu0
      %2727 = vmatprep.mubr.bf16.mxu0 %v2396
      %2728 = vmatmul.mubr.bf16.gmra.mrb[0].mxu0 %v2395
      %v2729 = vpop.f32.mrb[0].mxu0
      %v2730 = vadd.f32 0.0, %v2729
      %v2731 = vpop.f32.mrb[0].mxu0
      %v2732 = vpop.f32.mrb[0].mxu0
      %v2733 = vadd.f32 0.0, %v2732
      %v2734 = vpop.f32.mrb[0].mxu0
      %2735 = vmatprep.mubr.bf16.mxu0 %v2399
      %2736 = vmatmul.mubr.bf16.gmra.mrb[0].mxu0 %v2398
      %v2737 = vpop.f32.mrb[0].mxu0
      %v2738 = vadd.f32 0.0, %v2737
      %v2739 = vpop.f32.mrb[0].mxu0
      %v2740 = vpop.f32.mrb[0].mxu0
      %v2741 = vadd.f32 0.0, %v2740
      %v2742 = vpop.f32.mrb[0].mxu0
      %2743 = vmatprep.mubr.bf16.mxu0 %v2402
      %2744 = vmatmul.mubr.bf16.gmra.mrb[0].mxu0 %v2401
      %v2745 = vpop.f32.mrb[0].mxu0
      %v2746 = vadd.f32 0.0, %v2745
      %v2747 = vpop.f32.mrb[0].mxu0
      %v2748 = vpop.f32.mrb[0].mxu0
      %v2749 = vadd.f32 0.0, %v2748
      %v2750 = vpop.f32.mrb[0].mxu0
      %2751 = vmatprep.mubr.bf16.mxu0 %v2405
      %2752 = vmatmul.mubr.bf16.gmra.mrb[0].mxu0 %v2404
      %v2753 = vpop.f32.mrb[0].mxu0
      %v2754 = vadd.f32 0.0, %v2753
      %v2755 = vpop.f32.mrb[0].mxu0
      %v2756 = vpop.f32.mrb[0].mxu0
      %v2757 = vadd.f32 0.0, %v2756
      %v2758 = vpop.f32.mrb[0].mxu0
      %2759 = vdwg.mxu0
      %2760 = vmatprep.subr.bf16.mxu0 0
      %2761 = vmatpush1.bf16.msra.mxu0 %v2567
      %2762 = vmatprep.subr.bf16.mxu0 0
      %2763 = vmatpush1.bf16.msra.mxu0 %v2568
      %2764 = vmatprep.subr.bf16.mxu0 0
      %2765 = vmatpush1.bf16.msra.mxu0 %v2569
      %2766 = vmatprep.subr.bf16.mxu0 0
      %2767 = vmatpush1.bf16.msra.mxu0 %v2570
      %2768 = vmatprep.subr.bf16.mxu0 0
      %2769 = vmatpush1.bf16.msra.mxu0 %v2571
      %2770 = vmatprep.subr.bf16.mxu0 0
      %2771 = vmatpush1.bf16.msra.mxu0 %v2572
      %2772 = vmatprep.subr.bf16.mxu0 0
      %2773 = vmatpush1.bf16.msra.mxu0 %v2573
      %2774 = vmatprep.subr.bf16.mxu0 0
      %2775 = vmatpush1.bf16.msra.mxu0 %v2574
      %2776 = vmatprep.subr.bf16.mxu0 0
      %2777 = vmatpush1.bf16.msra.mxu0 0
      %2778 = vmatprep.subr.bf16.mxu0 0
      %2779 = vmatpush1.bf16.msra.mxu0 0
      %2780 = vmatprep.subr.bf16.mxu0 0
      %2781 = vmatpush1.bf16.msra.mxu0 0
      %2782 = vmatprep.subr.bf16.mxu0 0
      %2783 = vmatpush1.bf16.msra.mxu0 0
      %2784 = vmatprep.subr.bf16.mxu0 0
      %2785 = vmatpush1.bf16.msra.mxu0 0
      %2786 = vmatprep.subr.bf16.mxu0 0
      %2787 = vmatpush1.bf16.msra.mxu0 0
      %2788 = vmatprep.subr.bf16.mxu0 0
      %2789 = vmatpush1.bf16.msra.mxu0 0
      %2790 = vmatprep.subr.bf16.mxu0 0
      %2791 = vmatpush1.bf16.msra.mxu0 0
      %2792 = vmatprep.mubr.bf16.mxu0 0
      %2793 = vmatmul.mubr.bf16.gmra.mrb[0].mxu0 %v2361
      %v2794 = vpop.f32.mrb[0].mxu0
      %v2795 = vadd.f32 %v2634, %v2794
      %v2796 = vpop.f32.mrb[0].mxu0
      %v2797 = vpop.f32.mrb[0].mxu0
      %v2798 = vadd.f32 %v2637, %v2797
      %v2799 = vpop.f32.mrb[0].mxu0
      %2800 = vmatprep.mubr.bf16.mxu0 0
      %2801 = vmatmul.mubr.bf16.gmra.mrb[0].mxu0 %v2364
      %v2802 = vpop.f32.mrb[0].mxu0
      %v2803 = vadd.f32 %v2642, %v2802
      %v2804 = vpop.f32.mrb[0].mxu0
      %v2805 = vpop.f32.mrb[0].mxu0
      %v2806 = vadd.f32 %v2645, %v2805
      %v2807 = vpop.f32.mrb[0].mxu0
      %2808 = vmatprep.mubr.bf16.mxu0 0
      %2809 = vmatmul.mubr.bf16.gmra.mrb[0].mxu0 %v2367
      %v2810 = vpop.f32.mrb[0].mxu0
      %v2811 = vadd.f32 %v2650, %v2810
      %v2812 = vpop.f32.mrb[0].mxu0
      %v2813 = vpop.f32.mrb[0].mxu0
      %v2814 = vadd.f32 %v2653, %v2813
      %v2815 = vpop.f32.mrb[0].mxu0
      %2816 = vmatprep.mubr.bf16.mxu0 0
      %2817 = vmatmul.mubr.bf16.gmra.mrb[0].mxu0 %v2370
      %v2818 = vpop.f32.mrb[0].mxu0
      %v2819 = vadd.f32 %v2658, %v2818
      %v2820 = vpop.f32.mrb[0].mxu0
      %v2821 = vpop.f32.mrb[0].mxu0
      %v2822 = vadd.f32 %v2661, %v2821
      %v2823 = vpop.f32.mrb[0].mxu0
      %2824 = vmatprep.mubr.bf16.mxu0 0
      %2825 = vmatmul.mubr.bf16.gmra.mrb[0].mxu0 %v2373
      %v2826 = vpop.f32.mrb[0].mxu0
      %v2827 = vadd.f32 %v2666, %v2826
      %v2828 = vpop.f32.mrb[0].mxu0
      %v2829 = vpop.f32.mrb[0].mxu0
      %v2830 = vadd.f32 %v2669, %v2829
      %v2831 = vpop.f32.mrb[0].mxu0
      %2832 = vmatprep.mubr.bf16.mxu0 0
      %2833 = vmatmul.mubr.bf16.gmra.mrb[0].mxu0 %v2376
      %v2834 = vpop.f32.mrb[0].mxu0
      %v2835 = vadd.f32 %v2674, %v2834
      %v2836 = vpop.f32.mrb[0].mxu0
      %v2837 = vpop.f32.mrb[0].mxu0
      %v2838 = vadd.f32 %v2677, %v2837
      %v2839 = vpop.f32.mrb[0].mxu0
      %2840 = vmatprep.mubr.bf16.mxu0 0
      %2841 = vmatmul.mubr.bf16.gmra.mrb[0].mxu0 %v2379
      %v2842 = vpop.f32.mrb[0].mxu0
      %v2843 = vadd.f32 %v2682, %v2842
      %v2844 = vpop.f32.mrb[0].mxu0
      %v2845 = vpop.f32.mrb[0].mxu0
      %v2846 = vadd.f32 %v2685, %v2845
      %v2847 = vpop.f32.mrb[0].mxu0
      %2848 = vmatprep.mubr.bf16.mxu0 0
      %2849 = vmatmul.mubr.bf16.gmra.mrb[0].mxu0 %v2382
      %v2850 = vpop.f32.mrb[0].mxu0
      %v2851 = vadd.f32 %v2690, %v2850
      %v2852 = vpop.f32.mrb[0].mxu0
      %v2853 = vpop.f32.mrb[0].mxu0
      %v2854 = vadd.f32 %v2693, %v2853
      %v2855 = vpop.f32.mrb[0].mxu0
      %2856 = vmatprep.mubr.bf16.mxu0 0
      %2857 = vmatmul.mubr.bf16.gmra.mrb[0].mxu0 %v2385
      %v2858 = vpop.f32.mrb[0].mxu0
      %v2859 = vadd.f32 %v2698, %v2858
      %v2860 = vpop.f32.mrb[0].mxu0
      %v2861 = vpop.f32.mrb[0].mxu0
      %v2862 = vadd.f32 %v2701, %v2861
      %v2863 = vpop.f32.mrb[0].mxu0
      %2864 = vmatprep.mubr.bf16.mxu0 0
      %2865 = vmatmul.mubr.bf16.gmra.mrb[0].mxu0 %v2388
      %v2866 = vpop.f32.mrb[0].mxu0
      %v2867 = vadd.f32 %v2706, %v2866
      %v2868 = vpop.f32.mrb[0].mxu0
      %v2869 = vpop.f32.mrb[0].mxu0
      %v2870 = vadd.f32 %v2709, %v2869
      %v2871 = vpop.f32.mrb[0].mxu0
      %2872 = vmatprep.mubr.bf16.mxu0 0
      %2873 = vmatmul.mubr.bf16.gmra.mrb[0].mxu0 %v2391
      %v2874 = vpop.f32.mrb[0].mxu0
      %v2875 = vadd.f32 %v2714, %v2874
      %v2876 = vpop.f32.mrb[0].mxu0
      %v2877 = vpop.f32.mrb[0].mxu0
      %v2878 = vadd.f32 %v2717, %v2877
      %v2879 = vpop.f32.mrb[0].mxu0
      %2880 = vmatprep.mubr.bf16.mxu0 0
      %2881 = vmatmul.mubr.bf16.gmra.mrb[0].mxu0 %v2394
      %v2882 = vpop.f32.mrb[0].mxu0
      %v2883 = vadd.f32 %v2722, %v2882
      %v2884 = vpop.f32.mrb[0].mxu0
      %v2885 = vpop.f32.mrb[0].mxu0
      %v2886 = vadd.f32 %v2725, %v2885
      %v2887 = vpop.f32.mrb[0].mxu0
      %2888 = vmatprep.mubr.bf16.mxu0 0
      %2889 = vmatmul.mubr.bf16.gmra.mrb[0].mxu0 %v2397
      %v2890 = vpop.f32.mrb[0].mxu0
      %v2891 = vadd.f32 %v2730, %v2890
      %v2892 = vpop.f32.mrb[0].mxu0
      %v2893 = vpop.f32.mrb[0].mxu0
      %v2894 = vadd.f32 %v2733, %v2893
      %v2895 = vpop.f32.mrb[0].mxu0
      %2896 = vmatprep.mubr.bf16.mxu0 0
      %2897 = vmatmul.mubr.bf16.gmra.mrb[0].mxu0 %v2400
      %v2898 = vpop.f32.mrb[0].mxu0
      %v2899 = vadd.f32 %v2738, %v2898
      %v2900 = vpop.f32.mrb[0].mxu0
      %v2901 = vpop.f32.mrb[0].mxu0
      %v2902 = vadd.f32 %v2741, %v2901
      %v2903 = vpop.f32.mrb[0].mxu0
      %2904 = vmatprep.mubr.bf16.mxu0 0
      %2905 = vmatmul.mubr.bf16.gmra.mrb[0].mxu0 %v2403
      %v2906 = vpop.f32.mrb[0].mxu0
      %v2907 = vadd.f32 %v2746, %v2906
      %v2908 = vpop.f32.mrb[0].mxu0
      %v2909 = vpop.f32.mrb[0].mxu0
      %v2910 = vadd.f32 %v2749, %v2909
      %v2911 = vpop.f32.mrb[0].mxu0
      %2912 = vmatprep.mubr.bf16.mxu0 0
      %2913 = vmatmul.mubr.bf16.gmra.mrb[0].mxu0 %v2406
      %v2914 = vpop.f32.mrb[0].mxu0
      %v2915 = vadd.f32 %v2754, %v2914
      %v2916 = vpop.f32.mrb[0].mxu0
      %v2917 = vpop.f32.mrb[0].mxu0
      %v2918 = vadd.f32 %v2757, %v2917
      %v2919 = vpop.f32.mrb[0].mxu0
      %2920 = vdwg.mxu0
      %v2921 = vld [vmem:[#allocation2] sm:$0xff]
      %v2922 = vld [vmem:[#allocation2 + $0x8] sm:$0xff]
      %v2923 = vld [vmem:[#allocation2 + $0x10] sm:$0xff]
      %v2924 = vld [vmem:[#allocation2 + $0x18] sm:$0xff]
      %v2925 = vld [vmem:[#allocation2 + $0x20] sm:$0xff]
      %v2926 = vld [vmem:[#allocation2 + $0x28] sm:$0xff]
      %v2927 = vld [vmem:[#allocation2 + $0x30] sm:$0xff]
      %v2928 = vld [vmem:[#allocation2 + $0x38] sm:$0xff]
      %v2929 = vld [vmem:[#allocation2 + $0x40] sm:$0xff]
      %v2930 = vld [vmem:[#allocation2 + $0x48] sm:$0xff]
      %v2931 = vld [vmem:[#allocation2 + $0x50] sm:$0xff]
      %v2932 = vld [vmem:[#allocation2 + $0x58] sm:$0xff]
      %v2933 = vld [vmem:[#allocation2 + $0x60] sm:$0xff]
      %v2934 = vld [vmem:[#allocation2 + $0x68] sm:$0xff]
      %v2935 = vld [vmem:[#allocation2 + $0x70] sm:$0xff]
      %v2936 = vld [vmem:[#allocation2 + $0x78] sm:$0xff]
      %v2937 = vld [vmem:[#allocation2 + $0x80] sm:$0xff]
      %v2938 = vld [vmem:[#allocation2 + $0x88] sm:$0xff]
      %v2939 = vld [vmem:[#allocation2 + $0x90] sm:$0xff]
      %v2940 = vld [vmem:[#allocation2 + $0x98] sm:$0xff]
      %v2941 = vld [vmem:[#allocation2 + $0xa0] sm:$0xff]
      %v2942 = vld [vmem:[#allocation2 + $0xa8] sm:$0xff]
      %v2943 = vld [vmem:[#allocation2 + $0xb0] sm:$0xff]
      %v2944 = vld [vmem:[#allocation2 + $0xb8] sm:$0xff]
      %v2945 = vld [vmem:[#allocation2 + $0xc0] sm:$0xff]
      %v2946 = vld [vmem:[#allocation2 + $0xc8] sm:$0xff]
      %v2947 = vld [vmem:[#allocation2 + $0xd0] sm:$0xff]
      %v2948 = vld [vmem:[#allocation2 + $0xd8] sm:$0xff]
      %v2949 = vld [vmem:[#allocation2 + $0xe0] sm:$0xff]
      %v2950 = vld [vmem:[#allocation2 + $0xe8] sm:$0xff]
      %v2951 = vld [vmem:[#allocation2 + $0xf0] sm:$0xff]
      %v2952 = vld [vmem:[#allocation2 + $0xf8] sm:$0xff]
      %v2953 = vadd.f32 %v2921, %v2795
      %v2954 = vadd.f32 %v2922, %v2798
      %v2955 = vadd.f32 %v2923, %v2803
      %v2956 = vadd.f32 %v2924, %v2806
      %v2957 = vadd.f32 %v2925, %v2811
      %v2958 = vadd.f32 %v2926, %v2814
      %v2959 = vadd.f32 %v2927, %v2819
      %v2960 = vadd.f32 %v2928, %v2822
      %v2961 = vadd.f32 %v2929, %v2827
      %v2962 = vadd.f32 %v2930, %v2830
      %v2963 = vadd.f32 %v2931, %v2835
      %v2964 = vadd.f32 %v2932, %v2838
      %v2965 = vadd.f32 %v2933, %v2843
      %v2966 = vadd.f32 %v2934, %v2846
      %v2967 = vadd.f32 %v2935, %v2851
      %v2968 = vadd.f32 %v2936, %v2854
      %v2969 = vadd.f32 %v2937, %v2859
      %v2970 = vadd.f32 %v2938, %v2862
      %v2971 = vadd.f32 %v2939, %v2867
      %v2972 = vadd.f32 %v2940, %v2870
      %v2973 = vadd.f32 %v2941, %v2875
      %v2974 = vadd.f32 %v2942, %v2878
      %v2975 = vadd.f32 %v2943, %v2883
      %v2976 = vadd.f32 %v2944, %v2886
      %v2977 = vadd.f32 %v2945, %v2891
      %v2978 = vadd.f32 %v2946, %v2894
      %v2979 = vadd.f32 %v2947, %v2899
      %v2980 = vadd.f32 %v2948, %v2902
      %v2981 = vadd.f32 %v2949, %v2907
      %v2982 = vadd.f32 %v2950, %v2910
      %v2983 = vadd.f32 %v2951, %v2915
      %v2984 = vadd.f32 %v2952, %v2918
      %2985 = vst [vmem:[#allocation2] sm:$0xff] %v2953
      %2986 = vst [vmem:[#allocation2 + $0x8] sm:$0xff] %v2954
      %2987 = vst [vmem:[#allocation2 + $0x10] sm:$0xff] %v2955
      %2988 = vst [vmem:[#allocation2 + $0x18] sm:$0xff] %v2956
      %2989 = vst [vmem:[#allocation2 + $0x20] sm:$0xff] %v2957
      %2990 = vst [vmem:[#allocation2 + $0x28] sm:$0xff] %v2958
      %2991 = vst [vmem:[#allocation2 + $0x30] sm:$0xff] %v2959
      %2992 = vst [vmem:[#allocation2 + $0x38] sm:$0xff] %v2960
      %2993 = vst [vmem:[#allocation2 + $0x40] sm:$0xff] %v2961
      %2994 = vst [vmem:[#allocation2 + $0x48] sm:$0xff] %v2962
      %2995 = vst [vmem:[#allocation2 + $0x50] sm:$0xff] %v2963
      %2996 = vst [vmem:[#allocation2 + $0x58] sm:$0xff] %v2964
      %2997 = vst [vmem:[#allocation2 + $0x60] sm:$0xff] %v2965
      %2998 = vst [vmem:[#allocation2 + $0x68] sm:$0xff] %v2966
      %2999 = vst [vmem:[#allocation2 + $0x70] sm:$0xff] %v2967
      %3000 = vst [vmem:[#allocation2 + $0x78] sm:$0xff] %v2968
      %3001 = vst [vmem:[#allocation2 + $0x80] sm:$0xff] %v2969
      %3002 = vst [vmem:[#allocation2 + $0x88] sm:$0xff] %v2970
      %3003 = vst [vmem:[#allocation2 + $0x90] sm:$0xff] %v2971
      %3004 = vst [vmem:[#allocation2 + $0x98] sm:$0xff] %v2972
      %3005 = vst [vmem:[#allocation2 + $0xa0] sm:$0xff] %v2973
      %3006 = vst [vmem:[#allocation2 + $0xa8] sm:$0xff] %v2974
      %3007 = vst [vmem:[#allocation2 + $0xb0] sm:$0xff] %v2975
      %3008 = vst [vmem:[#allocation2 + $0xb8] sm:$0xff] %v2976
      %3009 = vst [vmem:[#allocation2 + $0xc0] sm:$0xff] %v2977
      %3010 = vst [vmem:[#allocation2 + $0xc8] sm:$0xff] %v2978
      %3011 = vst [vmem:[#allocation2 + $0xd0] sm:$0xff] %v2979
      %3012 = vst [vmem:[#allocation2 + $0xd8] sm:$0xff] %v2980
      %3013 = vst [vmem:[#allocation2 + $0xe0] sm:$0xff] %v2981
      %3014 = vst [vmem:[#allocation2 + $0xe8] sm:$0xff] %v2982
      %3015 = vst [vmem:[#allocation2 + $0xf0] sm:$0xff] %v2983
      %3016 = vst [vmem:[#allocation2 + $0xf8] sm:$0xff] %v2984
      %v3017 = vld [vmem:[#allocation2] sm:$0xff]
      %v3018 = vld [vmem:[#allocation2 + $0x8] sm:$0xff]
      %v3019 = vld [vmem:[#allocation2 + $0x10] sm:$0xff]
      %v3020 = vld [vmem:[#allocation2 + $0x18] sm:$0xff]
      %v3021 = vld [vmem:[#allocation2 + $0x20] sm:$0xff]
      %v3022 = vld [vmem:[#allocation2 + $0x28] sm:$0xff]
      %v3023 = vld [vmem:[#allocation2 + $0x30] sm:$0xff]
      %v3024 = vld [vmem:[#allocation2 + $0x38] sm:$0xff]
      %v3025 = vld [vmem:[#allocation2 + $0x40] sm:$0xff]
      %v3026 = vld [vmem:[#allocation2 + $0x48] sm:$0xff]
      %v3027 = vld [vmem:[#allocation2 + $0x50] sm:$0xff]
      %v3028 = vld [vmem:[#allocation2 + $0x58] sm:$0xff]
      %v3029 = vld [vmem:[#allocation2 + $0x60] sm:$0xff]
      %v3030 = vld [vmem:[#allocation2 + $0x68] sm:$0xff]
      %v3031 = vld [vmem:[#allocation2 + $0x70] sm:$0xff]
      %v3032 = vld [vmem:[#allocation2 + $0x78] sm:$0xff]
      %v3033 = vld [vmem:[#allocation2 + $0x80] sm:$0xff]
      %v3034 = vld [vmem:[#allocation2 + $0x88] sm:$0xff]
      %v3035 = vld [vmem:[#allocation2 + $0x90] sm:$0xff]
      %v3036 = vld [vmem:[#allocation2 + $0x98] sm:$0xff]
      %v3037 = vld [vmem:[#allocation2 + $0xa0] sm:$0xff]
      %v3038 = vld [vmem:[#allocation2 + $0xa8] sm:$0xff]
      %v3039 = vld [vmem:[#allocation2 + $0xb0] sm:$0xff]
      %v3040 = vld [vmem:[#allocation2 + $0xb8] sm:$0xff]
      %v3041 = vld [vmem:[#allocation2 + $0xc0] sm:$0xff]
      %v3042 = vld [vmem:[#allocation2 + $0xc8] sm:$0xff]
      %v3043 = vld [vmem:[#allocation2 + $0xd0] sm:$0xff]
      %v3044 = vld [vmem:[#allocation2 + $0xd8] sm:$0xff]
      %v3045 = vld [vmem:[#allocation2 + $0xe0] sm:$0xff]
      %v3046 = vld [vmem:[#allocation2 + $0xe8] sm:$0xff]
      %v3047 = vld [vmem:[#allocation2 + $0xf0] sm:$0xff]
      %v3048 = vld [vmem:[#allocation2 + $0xf8] sm:$0xff]
      %v3049 = vld [vmem:[%s275] sm:$0xf]
      %v3050 = vld [vmem:[%s275 + $0x4] sm:$0xf]
      %v3051 = vld [vmem:[%s275 + $0x8] sm:$0xf]
      %v3052 = vld [vmem:[%s275 + $0xc] sm:$0xf]
      %v3053 = vld [vmem:[%s275 + $0x10] sm:$0xf]
      %v3054 = vld [vmem:[%s275 + $0x14] sm:$0xf]
      %v3055 = vld [vmem:[%s275 + $0x18] sm:$0xf]
      %v3056 = vld [vmem:[%s275 + $0x1c] sm:$0xf]
      %v3057 = vld [vmem:[%s275 + $0x20] sm:$0xf]
      %v3058 = vld [vmem:[%s275 + $0x24] sm:$0xf]
      %v3059 = vld [vmem:[%s275 + $0x28] sm:$0xf]
      %v3060 = vld [vmem:[%s275 + $0x2c] sm:$0xf]
      %v3061 = vld [vmem:[%s275 + $0x30] sm:$0xf]
      %v3062 = vld [vmem:[%s275 + $0x34] sm:$0xf]
      %v3063 = vld [vmem:[%s275 + $0x38] sm:$0xf]
      %v3064 = vld [vmem:[%s275 + $0x3c] sm:$0xf]
      %v3065 = vld [vmem:[%s275 + $0x40] sm:$0xf]
      %v3066 = vld [vmem:[%s275 + $0x44] sm:$0xf]
      %v3067 = vld [vmem:[%s275 + $0x48] sm:$0xf]
      %v3068 = vld [vmem:[%s275 + $0x4c] sm:$0xf]
      %v3069 = vld [vmem:[%s275 + $0x50] sm:$0xf]
      %v3070 = vld [vmem:[%s275 + $0x54] sm:$0xf]
      %v3071 = vld [vmem:[%s275 + $0x58] sm:$0xf]
      %v3072 = vld [vmem:[%s275 + $0x5c] sm:$0xf]
      %v3073 = vld [vmem:[%s275 + $0x60] sm:$0xf]
      %v3074 = vld [vmem:[%s275 + $0x64] sm:$0xf]
      %v3075 = vld [vmem:[%s275 + $0x68] sm:$0xf]
      %v3076 = vld [vmem:[%s275 + $0x6c] sm:$0xf]
      %v3077 = vld [vmem:[%s275 + $0x70] sm:$0xf]
      %v3078 = vld [vmem:[%s275 + $0x74] sm:$0xf]
      %v3079 = vld [vmem:[%s275 + $0x78] sm:$0xf]
      %v3080 = vld [vmem:[%s275 + $0x7c] sm:$0xf]
      %v3081 = vld [vmem:[%s3] sm:$0xf]
      %v3082 = vld [vmem:[%s3 + $0x4] sm:$0xf]
      %v3083 = vld [vmem:[%s3 + $0x8] sm:$0xf]
      %v3084 = vld [vmem:[%s3 + $0xc] sm:$0xf]
      %v3085 = vld [vmem:[%s3 + $0x10] sm:$0xf]
      %v3086 = vld [vmem:[%s3 + $0x14] sm:$0xf]
      %v3087 = vld [vmem:[%s3 + $0x18] sm:$0xf]
      %v3088 = vld [vmem:[%s3 + $0x1c] sm:$0xf]
      %v3089 = vld [vmem:[%s3 + $0x20] sm:$0xf]
      %v3090 = vld [vmem:[%s3 + $0x24] sm:$0xf]
      %v3091 = vld [vmem:[%s3 + $0x28] sm:$0xf]
      %v3092 = vld [vmem:[%s3 + $0x2c] sm:$0xf]
      %v3093 = vld [vmem:[%s3 + $0x30] sm:$0xf]
      %v3094 = vld [vmem:[%s3 + $0x34] sm:$0xf]
      %v3095 = vld [vmem:[%s3 + $0x38] sm:$0xf]
      %v3096 = vld [vmem:[%s3 + $0x3c] sm:$0xf]
      %v3129 = vunpack.c.l.b16 %v3049
      %v3130 = vunpack.c.l.b16 %v3050
      %v3131 = vunpack.c.l.b16 %v3051
      %v3132 = vunpack.c.l.b16 %v3052
      %v3133 = vunpack.c.l.b16 %v3053
      %v3134 = vunpack.c.l.b16 %v3054
      %v3135 = vunpack.c.l.b16 %v3055
      %v3136 = vunpack.c.l.b16 %v3056
      %v3137 = vunpack.c.l.b16 %v3057
      %v3138 = vunpack.c.l.b16 %v3058
      %v3139 = vunpack.c.l.b16 %v3059
      %v3140 = vunpack.c.l.b16 %v3060
      %v3141 = vunpack.c.l.b16 %v3061
      %v3142 = vunpack.c.l.b16 %v3062
      %v3143 = vunpack.c.l.b16 %v3063
      %v3144 = vunpack.c.l.b16 %v3064
      %v3145 = vunpack.c.l.b16 %v3065
      %v3146 = vunpack.c.l.b16 %v3066
      %v3147 = vunpack.c.l.b16 %v3067
      %v3148 = vunpack.c.l.b16 %v3068
      %v3149 = vunpack.c.l.b16 %v3069
      %v3150 = vunpack.c.l.b16 %v3070
      %v3151 = vunpack.c.l.b16 %v3071
      %v3152 = vunpack.c.l.b16 %v3072
      %v3153 = vunpack.c.l.b16 %v3073
      %v3154 = vunpack.c.l.b16 %v3074
      %v3155 = vunpack.c.l.b16 %v3075
      %v3156 = vunpack.c.l.b16 %v3076
      %v3157 = vunpack.c.l.b16 %v3077
      %v3158 = vunpack.c.l.b16 %v3078
      %v3159 = vunpack.c.l.b16 %v3079
      %v3160 = vunpack.c.l.b16 %v3080
      %v3161 = vpack.c.b16 %v3130, %v3129
      %v3162 = vpack.c.b16 %v3132, %v3131
      %v3163 = vpack.c.b16 %v3134, %v3133
      %v3164 = vpack.c.b16 %v3136, %v3135
      %v3165 = vpack.c.b16 %v3138, %v3137
      %v3166 = vpack.c.b16 %v3140, %v3139
      %v3167 = vpack.c.b16 %v3142, %v3141
      %v3168 = vpack.c.b16 %v3144, %v3143
      %v3169 = vpack.c.b16 %v3146, %v3145
      %v3170 = vpack.c.b16 %v3148, %v3147
      %v3171 = vpack.c.b16 %v3150, %v3149
      %v3172 = vpack.c.b16 %v3152, %v3151
      %v3173 = vpack.c.b16 %v3154, %v3153
      %v3174 = vpack.c.b16 %v3156, %v3155
      %v3175 = vpack.c.b16 %v3158, %v3157
      %v3176 = vpack.c.b16 %v3160, %v3159
      %v3209 = vunpack.c.l.b16 %v3081
      %v3210 = vunpack.c.l.b16 %v3082
      %v3211 = vunpack.c.l.b16 %v3083
      %v3212 = vunpack.c.l.b16 %v3084
      %v3213 = vunpack.c.l.b16 %v3085
      %v3214 = vunpack.c.l.b16 %v3086
      %v3215 = vunpack.c.l.b16 %v3087
      %v3216 = vunpack.c.l.b16 %v3088
      %v3217 = vunpack.c.l.b16 %v3089
      %v3218 = vunpack.c.l.b16 %v3090
      %v3219 = vunpack.c.l.b16 %v3091
      %v3220 = vunpack.c.l.b16 %v3092
      %v3221 = vunpack.c.l.b16 %v3093
      %v3222 = vunpack.c.l.b16 %v3094
      %v3223 = vunpack.c.l.b16 %v3095
      %v3224 = vunpack.c.l.b16 %v3096
      %v3225 = vpack.c.b16 %v3210, %v3209
      %v3226 = vpack.c.b16 %v3212, %v3211
      %v3227 = vpack.c.b16 %v3214, %v3213
      %v3228 = vpack.c.b16 %v3216, %v3215
      %v3229 = vpack.c.b16 %v3218, %v3217
      %v3230 = vpack.c.b16 %v3220, %v3219
      %v3231 = vpack.c.b16 %v3222, %v3221
      %v3232 = vpack.c.b16 %v3224, %v3223
      %3241 = vmatprep.subr.bf16.mxu0 0
      %3242 = vmatpush1.bf16.msra.mxu0 %v3225
      %3243 = vmatprep.subr.bf16.mxu0 0
      %3244 = vmatpush1.bf16.msra.mxu0 %v3226
      %3245 = vmatprep.subr.bf16.mxu0 0
      %3246 = vmatpush1.bf16.msra.mxu0 %v3227
      %3247 = vmatprep.subr.bf16.mxu0 0
      %3248 = vmatpush1.bf16.msra.mxu0 %v3228
      %3249 = vmatprep.subr.bf16.mxu0 0
      %3250 = vmatpush1.bf16.msra.mxu0 %v3229
      %3251 = vmatprep.subr.bf16.mxu0 0
      %3252 = vmatpush1.bf16.msra.mxu0 %v3230
      %3253 = vmatprep.subr.bf16.mxu0 0
      %3254 = vmatpush1.bf16.msra.mxu0 %v3231
      %3255 = vmatprep.subr.bf16.mxu0 0
      %3256 = vmatpush1.bf16.msra.mxu0 %v3232
      %3257 = vmatprep.subr.bf16.mxu0 0
      %3258 = vmatpush1.bf16.msra.mxu0 0
      %3259 = vmatprep.subr.bf16.mxu0 0
      %3260 = vmatpush1.bf16.msra.mxu0 0
      %3261 = vmatprep.subr.bf16.mxu0 0
      %3262 = vmatpush1.bf16.msra.mxu0 0
      %3263 = vmatprep.subr.bf16.mxu0 0
      %3264 = vmatpush1.bf16.msra.mxu0 0
      %3265 = vmatprep.subr.bf16.mxu0 0
      %3266 = vmatpush1.bf16.msra.mxu0 0
      %3267 = vmatprep.subr.bf16.mxu0 0
      %3268 = vmatpush1.bf16.msra.mxu0 0
      %3269 = vmatprep.subr.bf16.mxu0 0
      %3270 = vmatpush1.bf16.msra.mxu0 0
      %3271 = vmatprep.subr.bf16.mxu0 0
      %3272 = vmatpush1.bf16.msra.mxu0 0
      %3273 = vmatprep.mubr.bf16.mxu0 0
      %3274 = vmatmul.mubr.bf16.gmra.mrb[0].mxu0 %v3161
      %v3275 = vpop.f32.mrb[0].mxu0
      %v3276 = vadd.f32 0.0, %v3275
      %v3277 = vpop.f32.mrb[0].mxu0
      %v3278 = vpop.f32.mrb[0].mxu0
      %v3279 = vadd.f32 0.0, %v3278
      %v3280 = vpop.f32.mrb[0].mxu0
      %3281 = vmatprep.mubr.bf16.mxu0 0
      %3282 = vmatmul.mubr.bf16.gmra.mrb[0].mxu0 %v3162
      %v3283 = vpop.f32.mrb[0].mxu0
      %v3284 = vadd.f32 0.0, %v3283
      %v3285 = vpop.f32.mrb[0].mxu0
      %v3286 = vpop.f32.mrb[0].mxu0
      %v3287 = vadd.f32 0.0, %v3286
      %v3288 = vpop.f32.mrb[0].mxu0
      %3289 = vmatprep.mubr.bf16.mxu0 0
      %3290 = vmatmul.mubr.bf16.gmra.mrb[0].mxu0 %v3163
      %v3291 = vpop.f32.mrb[0].mxu0
      %v3292 = vadd.f32 0.0, %v3291
      %v3293 = vpop.f32.mrb[0].mxu0
      %v3294 = vpop.f32.mrb[0].mxu0
      %v3295 = vadd.f32 0.0, %v3294
      %v3296 = vpop.f32.mrb[0].mxu0
      %3297 = vmatprep.mubr.bf16.mxu0 0
      %3298 = vmatmul.mubr.bf16.gmra.mrb[0].mxu0 %v3164
      %v3299 = vpop.f32.mrb[0].mxu0
      %v3300 = vadd.f32 0.0, %v3299
      %v3301 = vpop.f32.mrb[0].mxu0
      %v3302 = vpop.f32.mrb[0].mxu0
      %v3303 = vadd.f32 0.0, %v3302
      %v3304 = vpop.f32.mrb[0].mxu0
      %3305 = vmatprep.mubr.bf16.mxu0 0
      %3306 = vmatmul.mubr.bf16.gmra.mrb[0].mxu0 %v3165
      %v3307 = vpop.f32.mrb[0].mxu0
      %v3308 = vadd.f32 0.0, %v3307
      %v3309 = vpop.f32.mrb[0].mxu0
      %v3310 = vpop.f32.mrb[0].mxu0
      %v3311 = vadd.f32 0.0, %v3310
      %v3312 = vpop.f32.mrb[0].mxu0
      %3313 = vmatprep.mubr.bf16.mxu0 0
      %3314 = vmatmul.mubr.bf16.gmra.mrb[0].mxu0 %v3166
      %v3315 = vpop.f32.mrb[0].mxu0
      %v3316 = vadd.f32 0.0, %v3315
      %v3317 = vpop.f32.mrb[0].mxu0
      %v3318 = vpop.f32.mrb[0].mxu0
      %v3319 = vadd.f32 0.0, %v3318
      %v3320 = vpop.f32.mrb[0].mxu0
      %3321 = vmatprep.mubr.bf16.mxu0 0
      %3322 = vmatmul.mubr.bf16.gmra.mrb[0].mxu0 %v3167
      %v3323 = vpop.f32.mrb[0].mxu0
      %v3324 = vadd.f32 0.0, %v3323
      %v3325 = vpop.f32.mrb[0].mxu0
      %v3326 = vpop.f32.mrb[0].mxu0
      %v3327 = vadd.f32 0.0, %v3326
      %v3328 = vpop.f32.mrb[0].mxu0
      %3329 = vmatprep.mubr.bf16.mxu0 0
      %3330 = vmatmul.mubr.bf16.gmra.mrb[0].mxu0 %v3168
      %v3331 = vpop.f32.mrb[0].mxu0
      %v3332 = vadd.f32 0.0, %v3331
      %v3333 = vpop.f32.mrb[0].mxu0
      %v3334 = vpop.f32.mrb[0].mxu0
      %v3335 = vadd.f32 0.0, %v3334
      %v3336 = vpop.f32.mrb[0].mxu0
      %3337 = vmatprep.mubr.bf16.mxu0 0
      %3338 = vmatmul.mubr.bf16.gmra.mrb[0].mxu0 %v3169
      %v3339 = vpop.f32.mrb[0].mxu0
      %v3340 = vadd.f32 0.0, %v3339
      %v3341 = vpop.f32.mrb[0].mxu0
      %v3342 = vpop.f32.mrb[0].mxu0
      %v3343 = vadd.f32 0.0, %v3342
      %v3344 = vpop.f32.mrb[0].mxu0
      %3345 = vmatprep.mubr.bf16.mxu0 0
      %3346 = vmatmul.mubr.bf16.gmra.mrb[0].mxu0 %v3170
      %v3347 = vpop.f32.mrb[0].mxu0
      %v3348 = vadd.f32 0.0, %v3347
      %v3349 = vpop.f32.mrb[0].mxu0
      %v3350 = vpop.f32.mrb[0].mxu0
      %v3351 = vadd.f32 0.0, %v3350
      %v3352 = vpop.f32.mrb[0].mxu0
      %3353 = vmatprep.mubr.bf16.mxu0 0
      %3354 = vmatmul.mubr.bf16.gmra.mrb[0].mxu0 %v3171
      %v3355 = vpop.f32.mrb[0].mxu0
      %v3356 = vadd.f32 0.0, %v3355
      %v3357 = vpop.f32.mrb[0].mxu0
      %v3358 = vpop.f32.mrb[0].mxu0
      %v3359 = vadd.f32 0.0, %v3358
      %v3360 = vpop.f32.mrb[0].mxu0
      %3361 = vmatprep.mubr.bf16.mxu0 0
      %3362 = vmatmul.mubr.bf16.gmra.mrb[0].mxu0 %v3172
      %v3363 = vpop.f32.mrb[0].mxu0
      %v3364 = vadd.f32 0.0, %v3363
      %v3365 = vpop.f32.mrb[0].mxu0
      %v3366 = vpop.f32.mrb[0].mxu0
      %v3367 = vadd.f32 0.0, %v3366
      %v3368 = vpop.f32.mrb[0].mxu0
      %3369 = vmatprep.mubr.bf16.mxu0 0
      %3370 = vmatmul.mubr.bf16.gmra.mrb[0].mxu0 %v3173
      %v3371 = vpop.f32.mrb[0].mxu0
      %v3372 = vadd.f32 0.0, %v3371
      %v3373 = vpop.f32.mrb[0].mxu0
      %v3374 = vpop.f32.mrb[0].mxu0
      %v3375 = vadd.f32 0.0, %v3374
      %v3376 = vpop.f32.mrb[0].mxu0
      %3377 = vmatprep.mubr.bf16.mxu0 0
      %3378 = vmatmul.mubr.bf16.gmra.mrb[0].mxu0 %v3174
      %v3379 = vpop.f32.mrb[0].mxu0
      %v3380 = vadd.f32 0.0, %v3379
      %v3381 = vpop.f32.mrb[0].mxu0
      %v3382 = vpop.f32.mrb[0].mxu0
      %v3383 = vadd.f32 0.0, %v3382
      %v3384 = vpop.f32.mrb[0].mxu0
      %3385 = vmatprep.mubr.bf16.mxu0 0
      %3386 = vmatmul.mubr.bf16.gmra.mrb[0].mxu0 %v3175
      %v3387 = vpop.f32.mrb[0].mxu0
      %v3388 = vadd.f32 0.0, %v3387
      %v3389 = vpop.f32.mrb[0].mxu0
      %v3390 = vpop.f32.mrb[0].mxu0
      %v3391 = vadd.f32 0.0, %v3390
      %v3392 = vpop.f32.mrb[0].mxu0
      %3393 = vmatprep.mubr.bf16.mxu0 0
      %3394 = vmatmul.mubr.bf16.gmra.mrb[0].mxu0 %v3176
      %v3395 = vpop.f32.mrb[0].mxu0
      %v3396 = vadd.f32 0.0, %v3395
      %v3397 = vpop.f32.mrb[0].mxu0
      %v3398 = vpop.f32.mrb[0].mxu0
      %v3399 = vadd.f32 0.0, %v3398
      %v3400 = vpop.f32.mrb[0].mxu0
      %3401 = vdwg.mxu0
      %v3402 = vpack.c.bf16 %v3018, %v3017
      %v3403 = vpack.c.bf16 %v3020, %v3019
      %v3404 = vpack.c.bf16 %v3022, %v3021
      %v3405 = vpack.c.bf16 %v3024, %v3023
      %v3406 = vpack.c.bf16 %v3026, %v3025
      %v3407 = vpack.c.bf16 %v3028, %v3027
      %v3408 = vpack.c.bf16 %v3030, %v3029
      %v3409 = vpack.c.bf16 %v3032, %v3031
      %v3410 = vpack.c.bf16 %v3034, %v3033
      %v3411 = vpack.c.bf16 %v3036, %v3035
      %v3412 = vpack.c.bf16 %v3038, %v3037
      %v3413 = vpack.c.bf16 %v3040, %v3039
      %v3414 = vpack.c.bf16 %v3042, %v3041
      %v3415 = vpack.c.bf16 %v3044, %v3043
      %v3416 = vpack.c.bf16 %v3046, %v3045
      %v3417 = vpack.c.bf16 %v3048, %v3047
      %v3434 = vunpack.c.l.b16 %v3402
      %v3435 = vunpack.c.h.b16 %v3402
      %v3436 = vunpack.c.l.b16 %v3403
      %v3437 = vunpack.c.h.b16 %v3403
      %v3438 = vunpack.c.l.b16 %v3404
      %v3439 = vunpack.c.h.b16 %v3404
      %v3440 = vunpack.c.l.b16 %v3405
      %v3441 = vunpack.c.h.b16 %v3405
      %v3442 = vunpack.c.l.b16 %v3406
      %v3443 = vunpack.c.h.b16 %v3406
      %v3444 = vunpack.c.l.b16 %v3407
      %v3445 = vunpack.c.h.b16 %v3407
      %v3446 = vunpack.c.l.b16 %v3408
      %v3447 = vunpack.c.h.b16 %v3408
      %v3448 = vunpack.c.l.b16 %v3409
      %v3449 = vunpack.c.h.b16 %v3409
      %v3450 = vunpack.c.l.b16 %v3410
      %v3451 = vunpack.c.h.b16 %v3410
      %v3452 = vunpack.c.l.b16 %v3411
      %v3453 = vunpack.c.h.b16 %v3411
      %v3454 = vunpack.c.l.b16 %v3412
      %v3455 = vunpack.c.h.b16 %v3412
      %v3456 = vunpack.c.l.b16 %v3413
      %v3457 = vunpack.c.h.b16 %v3413
      %v3458 = vunpack.c.l.b16 %v3414
      %v3459 = vunpack.c.h.b16 %v3414
      %v3460 = vunpack.c.l.b16 %v3415
      %v3461 = vunpack.c.h.b16 %v3415
      %v3462 = vunpack.c.l.b16 %v3416
      %v3463 = vunpack.c.h.b16 %v3416
      %v3464 = vunpack.c.l.b16 %v3417
      %v3465 = vunpack.c.h.b16 %v3417
      %v3466 = vpack.c.b16 %v3434, %v3434
      %v3467 = vpack.c.b16 %v3435, %v3435
      %v3468 = vpack.c.b16 %v3436, %v3436
      %v3469 = vpack.c.b16 %v3437, %v3437
      %v3470 = vpack.c.b16 %v3438, %v3438
      %v3471 = vpack.c.b16 %v3439, %v3439
      %v3472 = vpack.c.b16 %v3440, %v3440
      %v3473 = vpack.c.b16 %v3441, %v3441
      %v3474 = vpack.c.b16 %v3442, %v3442
      %v3475 = vpack.c.b16 %v3443, %v3443
      %v3476 = vpack.c.b16 %v3444, %v3444
      %v3477 = vpack.c.b16 %v3445, %v3445
      %v3478 = vpack.c.b16 %v3446, %v3446
      %v3479 = vpack.c.b16 %v3447, %v3447
      %v3480 = vpack.c.b16 %v3448, %v3448
      %v3481 = vpack.c.b16 %v3449, %v3449
      %v3482 = vpack.c.b16 %v3450, %v3450
      %v3483 = vpack.c.b16 %v3451, %v3451
      %v3484 = vpack.c.b16 %v3452, %v3452
      %v3485 = vpack.c.b16 %v3453, %v3453
      %v3486 = vpack.c.b16 %v3454, %v3454
      %v3487 = vpack.c.b16 %v3455, %v3455
      %v3488 = vpack.c.b16 %v3456, %v3456
      %v3489 = vpack.c.b16 %v3457, %v3457
      %v3490 = vpack.c.b16 %v3458, %v3458
      %v3491 = vpack.c.b16 %v3459, %v3459
      %v3492 = vpack.c.b16 %v3460, %v3460
      %v3493 = vpack.c.b16 %v3461, %v3461
      %v3494 = vpack.c.b16 %v3462, %v3462
      %v3495 = vpack.c.b16 %v3463, %v3463
      %v3496 = vpack.c.b16 %v3464, %v3464
      %v3497 = vpack.c.b16 %v3465, %v3465
      %3530 = vst [vmem:[%s283] sm:$0xf] %v3466
      %3531 = vst [vmem:[%s283 + $0x4] sm:$0xf] %v3467
      %3532 = vst [vmem:[%s283 + $0x8] sm:$0xf] %v3468
      %3533 = vst [vmem:[%s283 + $0xc] sm:$0xf] %v3469
      %3534 = vst [vmem:[%s283 + $0x10] sm:$0xf] %v3470
      %3535 = vst [vmem:[%s283 + $0x14] sm:$0xf] %v3471
      %3536 = vst [vmem:[%s283 + $0x18] sm:$0xf] %v3472
      %3537 = vst [vmem:[%s283 + $0x1c] sm:$0xf] %v3473
      %3538 = vst [vmem:[%s283 + $0x20] sm:$0xf] %v3474
      %3539 = vst [vmem:[%s283 + $0x24] sm:$0xf] %v3475
      %3540 = vst [vmem:[%s283 + $0x28] sm:$0xf] %v3476
      %3541 = vst [vmem:[%s283 + $0x2c] sm:$0xf] %v3477
      %3542 = vst [vmem:[%s283 + $0x30] sm:$0xf] %v3478
      %3543 = vst [vmem:[%s283 + $0x34] sm:$0xf] %v3479
      %3544 = vst [vmem:[%s283 + $0x38] sm:$0xf] %v3480
      %3545 = vst [vmem:[%s283 + $0x3c] sm:$0xf] %v3481
      %3546 = vst [vmem:[%s283 + $0x40] sm:$0xf] %v3482
      %3547 = vst [vmem:[%s283 + $0x44] sm:$0xf] %v3483
      %3548 = vst [vmem:[%s283 + $0x48] sm:$0xf] %v3484
      %3549 = vst [vmem:[%s283 + $0x4c] sm:$0xf] %v3485
      %3550 = vst [vmem:[%s283 + $0x50] sm:$0xf] %v3486
      %3551 = vst [vmem:[%s283 + $0x54] sm:$0xf] %v3487
      %3552 = vst [vmem:[%s283 + $0x58] sm:$0xf] %v3488
      %3553 = vst [vmem:[%s283 + $0x5c] sm:$0xf] %v3489
      %3554 = vst [vmem:[%s283 + $0x60] sm:$0xf] %v3490
      %3555 = vst [vmem:[%s283 + $0x64] sm:$0xf] %v3491
      %3556 = vst [vmem:[%s283 + $0x68] sm:$0xf] %v3492
      %3557 = vst [vmem:[%s283 + $0x6c] sm:$0xf] %v3493
      %3558 = vst [vmem:[%s283 + $0x70] sm:$0xf] %v3494
      %3559 = vst [vmem:[%s283 + $0x74] sm:$0xf] %v3495
      %3560 = vst [vmem:[%s283 + $0x78] sm:$0xf] %v3496
      %3561 = vst [vmem:[%s283 + $0x7c] sm:$0xf] %v3497
      %p3562 = scmp.eq.s32.totalorder %s22, 0
      // Predicated region
      $region37: #{basic_block_forward.6} parent=35 // pred_check
        %p3563 = pneg %p3562
      $region38: #{basic_block_forward.6} parent=35 // pred_check_branch
        %3565 = sbr.rel (%p3563) target = $region40
      $region39: #{basic_block_forward.6} parent=35 // pred_region
        %3566 = vst [vmem:[%s289] sm:$0xff] 0.0
      $region40: #{basic_block_forward.6} parent=35 // pred_fallthru
        _
      %v3567 = vld [vmem:[%s289] sm:$0xff]
      %v3568 = vadd.f32 %v3017, %v3018
      %v3569 = vadd.f32 %v3568, %v3019
      %v3570 = vadd.f32 %v3569, %v3020
      %v3571 = vadd.f32 %v3570, %v3021
      %v3572 = vadd.f32 %v3571, %v3022
      %v3573 = vadd.f32 %v3572, %v3023
      %v3574 = vadd.f32 %v3573, %v3024
      %v3575 = vadd.f32 %v3574, %v3025
      %v3576 = vadd.f32 %v3575, %v3026
      %v3577 = vadd.f32 %v3576, %v3027
      %v3578 = vadd.f32 %v3577, %v3028
      %v3579 = vadd.f32 %v3578, %v3029
      %v3580 = vadd.f32 %v3579, %v3030
      %v3581 = vadd.f32 %v3580, %v3031
      %v3582 = vadd.f32 %v3581, %v3032
      %v3583 = vadd.f32 %v3582, %v3033
      %v3584 = vadd.f32 %v3583, %v3034
      %v3585 = vadd.f32 %v3584, %v3035
      %v3586 = vadd.f32 %v3585, %v3036
      %v3587 = vadd.f32 %v3586, %v3037
      %v3588 = vadd.f32 %v3587, %v3038
      %v3589 = vadd.f32 %v3588, %v3039
      %v3590 = vadd.f32 %v3589, %v3040
      %v3591 = vadd.f32 %v3590, %v3041
      %v3592 = vadd.f32 %v3591, %v3042
      %v3593 = vadd.f32 %v3592, %v3043
      %v3594 = vadd.f32 %v3593, %v3044
      %v3595 = vadd.f32 %v3594, %v3045
      %v3596 = vadd.f32 %v3595, %v3046
      %v3597 = vadd.f32 %v3596, %v3047
      %v3598 = vadd.f32 %v3597, %v3048
      %v3599 = vrot.slane %v3598, 4
      %v3600 = vadd.f32 %v3598, %v3599
      %v3601 = vrot.slane %v3600, 2
      %v3602 = vadd.f32 %v3600, %v3601
      %v3603 = vrot.slane %v3602, 1
      %v3604 = vadd.f32 %v3602, %v3603
      %v3605 = vmul.f32 %v3017, %v3017
      %v3606 = vmul.f32 %v3018, %v3018
      %v3607 = vmul.f32 %v3019, %v3019
      %v3608 = vmul.f32 %v3020, %v3020
      %v3609 = vmul.f32 %v3021, %v3021
      %v3610 = vmul.f32 %v3022, %v3022
      %v3611 = vmul.f32 %v3023, %v3023
      %v3612 = vmul.f32 %v3024, %v3024
      %v3613 = vmul.f32 %v3025, %v3025
      %v3614 = vmul.f32 %v3026, %v3026
      %v3615 = vmul.f32 %v3027, %v3027
      %v3616 = vmul.f32 %v3028, %v3028
      %v3617 = vmul.f32 %v3029, %v3029
      %v3618 = vmul.f32 %v3030, %v3030
      %v3619 = vmul.f32 %v3031, %v3031
      %v3620 = vmul.f32 %v3032, %v3032
      %v3621 = vmul.f32 %v3033, %v3033
      %v3622 = vmul.f32 %v3034, %v3034
      %v3623 = vmul.f32 %v3035, %v3035
      %v3624 = vmul.f32 %v3036, %v3036
      %v3625 = vmul.f32 %v3037, %v3037
      %v3626 = vmul.f32 %v3038, %v3038
      %v3627 = vmul.f32 %v3039, %v3039
      %v3628 = vmul.f32 %v3040, %v3040
      %v3629 = vmul.f32 %v3041, %v3041
      %v3630 = vmul.f32 %v3042, %v3042
      %v3631 = vmul.f32 %v3043, %v3043
      %v3632 = vmul.f32 %v3044, %v3044
      %v3633 = vmul.f32 %v3045, %v3045
      %v3634 = vmul.f32 %v3046, %v3046
      %v3635 = vmul.f32 %v3047, %v3047
      %v3636 = vmul.f32 %v3048, %v3048
      %v3637 = vadd.f32 %v3605, %v3606
      %v3638 = vadd.f32 %v3637, %v3607
      %v3639 = vadd.f32 %v3638, %v3608
      %v3640 = vadd.f32 %v3639, %v3609
      %v3641 = vadd.f32 %v3640, %v3610
      %v3642 = vadd.f32 %v3641, %v3611
      %v3643 = vadd.f32 %v3642, %v3612
      %v3644 = vadd.f32 %v3643, %v3613
      %v3645 = vadd.f32 %v3644, %v3614
      %v3646 = vadd.f32 %v3645, %v3615
      %v3647 = vadd.f32 %v3646, %v3616
      %v3648 = vadd.f32 %v3647, %v3617
      %v3649 = vadd.f32 %v3648, %v3618
      %v3650 = vadd.f32 %v3649, %v3619
      %v3651 = vadd.f32 %v3650, %v3620
      %v3652 = vadd.f32 %v3651, %v3621
      %v3653 = vadd.f32 %v3652, %v3622
      %v3654 = vadd.f32 %v3653, %v3623
      %v3655 = vadd.f32 %v3654, %v3624
      %v3656 = vadd.f32 %v3655, %v3625
      %v3657 = vadd.f32 %v3656, %v3626
      %v3658 = vadd.f32 %v3657, %v3627
      %v3659 = vadd.f32 %v3658, %v3628
      %v3660 = vadd.f32 %v3659, %v3629
      %v3661 = vadd.f32 %v3660, %v3630
      %v3662 = vadd.f32 %v3661, %v3631
      %v3663 = vadd.f32 %v3662, %v3632
      %v3664 = vadd.f32 %v3663, %v3633
      %v3665 = vadd.f32 %v3664, %v3634
      %v3666 = vadd.f32 %v3665, %v3635
      %v3667 = vadd.f32 %v3666, %v3636
      %v3668 = vrot.slane %v3667, 4
      %v3669 = vadd.f32 %v3667, %v3668
      %v3670 = vrot.slane %v3669, 2
      %v3671 = vadd.f32 %v3669, %v3670
      %v3672 = vrot.slane %v3671, 1
      %v3673 = vadd.f32 %v3671, %v3672
      %v3674 = vadd.f32 %v3276, %v3279
      %v3675 = vadd.f32 %v3674, %v3284
      %v3676 = vadd.f32 %v3675, %v3287
      %v3677 = vadd.f32 %v3676, %v3292
      %v3678 = vadd.f32 %v3677, %v3295
      %v3679 = vadd.f32 %v3678, %v3300
      %v3680 = vadd.f32 %v3679, %v3303
      %v3681 = vadd.f32 %v3680, %v3308
      %v3682 = vadd.f32 %v3681, %v3311
      %v3683 = vadd.f32 %v3682, %v3316
      %v3684 = vadd.f32 %v3683, %v3319
      %v3685 = vadd.f32 %v3684, %v3324
      %v3686 = vadd.f32 %v3685, %v3327
      %v3687 = vadd.f32 %v3686, %v3332
      %v3688 = vadd.f32 %v3687, %v3335
      %v3689 = vadd.f32 %v3688, %v3340
      %v3690 = vadd.f32 %v3689, %v3343
      %v3691 = vadd.f32 %v3690, %v3348
      %v3692 = vadd.f32 %v3691, %v3351
      %v3693 = vadd.f32 %v3692, %v3356
      %v3694 = vadd.f32 %v3693, %v3359
      %v3695 = vadd.f32 %v3694, %v3364
      %v3696 = vadd.f32 %v3695, %v3367
      %v3697 = vadd.f32 %v3696, %v3372
      %v3698 = vadd.f32 %v3697, %v3375
      %v3699 = vadd.f32 %v3698, %v3380
      %v3700 = vadd.f32 %v3699, %v3383
      %v3701 = vadd.f32 %v3700, %v3388
      %v3702 = vadd.f32 %v3701, %v3391
      %v3703 = vadd.f32 %v3702, %v3396
      %v3704 = vadd.f32 %v3703, %v3399
      %v3705 = vrot.slane %v3704, 4
      %v3706 = vadd.f32 %v3704, %v3705
      %v3707 = vrot.slane %v3706, 2
      %v3708 = vadd.f32 %v3706, %v3707
      %v3709 = vrot.slane %v3708, 1
      %v3710 = vadd.f32 %v3708, %v3709
      %v3711 = vmul.f32 %v3276, %v3276
      %v3712 = vmul.f32 %v3279, %v3279
      %v3713 = vmul.f32 %v3284, %v3284
      %v3714 = vmul.f32 %v3287, %v3287
      %v3715 = vmul.f32 %v3292, %v3292
      %v3716 = vmul.f32 %v3295, %v3295
      %v3717 = vmul.f32 %v3300, %v3300
      %v3718 = vmul.f32 %v3303, %v3303
      %v3719 = vmul.f32 %v3308, %v3308
      %v3720 = vmul.f32 %v3311, %v3311
      %v3721 = vmul.f32 %v3316, %v3316
      %v3722 = vmul.f32 %v3319, %v3319
      %v3723 = vmul.f32 %v3324, %v3324
      %v3724 = vmul.f32 %v3327, %v3327
      %v3725 = vmul.f32 %v3332, %v3332
      %v3726 = vmul.f32 %v3335, %v3335
      %v3727 = vmul.f32 %v3340, %v3340
      %v3728 = vmul.f32 %v3343, %v3343
      %v3729 = vmul.f32 %v3348, %v3348
      %v3730 = vmul.f32 %v3351, %v3351
      %v3731 = vmul.f32 %v3356, %v3356
      %v3732 = vmul.f32 %v3359, %v3359
      %v3733 = vmul.f32 %v3364, %v3364
      %v3734 = vmul.f32 %v3367, %v3367
      %v3735 = vmul.f32 %v3372, %v3372
      %v3736 = vmul.f32 %v3375, %v3375
      %v3737 = vmul.f32 %v3380, %v3380
      %v3738 = vmul.f32 %v3383, %v3383
      %v3739 = vmul.f32 %v3388, %v3388
      %v3740 = vmul.f32 %v3391, %v3391
      %v3741 = vmul.f32 %v3396, %v3396
      %v3742 = vmul.f32 %v3399, %v3399
      %v3743 = vadd.f32 %v3711, %v3712
      %v3744 = vadd.f32 %v3743, %v3713
      %v3745 = vadd.f32 %v3744, %v3714
      %v3746 = vadd.f32 %v3745, %v3715
      %v3747 = vadd.f32 %v3746, %v3716
      %v3748 = vadd.f32 %v3747, %v3717
      %v3749 = vadd.f32 %v3748, %v3718
      %v3750 = vadd.f32 %v3749, %v3719
      %v3751 = vadd.f32 %v3750, %v3720
      %v3752 = vadd.f32 %v3751, %v3721
      %v3753 = vadd.f32 %v3752, %v3722
      %v3754 = vadd.f32 %v3753, %v3723
      %v3755 = vadd.f32 %v3754, %v3724
      %v3756 = vadd.f32 %v3755, %v3725
      %v3757 = vadd.f32 %v3756, %v3726
      %v3758 = vadd.f32 %v3757, %v3727
      %v3759 = vadd.f32 %v3758, %v3728
      %v3760 = vadd.f32 %v3759, %v3729
      %v3761 = vadd.f32 %v3760, %v3730
      %v3762 = vadd.f32 %v3761, %v3731
      %v3763 = vadd.f32 %v3762, %v3732
      %v3764 = vadd.f32 %v3763, %v3733
      %v3765 = vadd.f32 %v3764, %v3734
      %v3766 = vadd.f32 %v3765, %v3735
      %v3767 = vadd.f32 %v3766, %v3736
      %v3768 = vadd.f32 %v3767, %v3737
      %v3769 = vadd.f32 %v3768, %v3738
      %v3770 = vadd.f32 %v3769, %v3739
      %v3771 = vadd.f32 %v3770, %v3740
      %v3772 = vadd.f32 %v3771, %v3741
      %v3773 = vadd.f32 %v3772, %v3742
      %v3774 = vrot.slane %v3773, 4
      %v3775 = vadd.f32 %v3773, %v3774
      %v3776 = vrot.slane %v3775, 2
      %v3777 = vadd.f32 %v3775, %v3776
      %v3778 = vrot.slane %v3777, 1
      %v3779 = vadd.f32 %v3777, %v3778
      %vm3780 = vcmask 1040384
      %v3781 = vsel %vm3780, %v3604, %v3673
      %vm3782 = vcmask 1041408
      %v3783 = vsel %vm3782, %v3781, %v3710
      %vm3784 = vcmask 1042432
      %v3785 = vsel %vm3784, %v3783, %v3779
      %vm3786 = vcmask 1043456
      %v3787 = vsel %vm3786, %v3785, 0.0
      %v3788 = vadd.f32 %v3567, %v3787
      %3789 = vst [vmem:[%s289] sm:$0xff] %v3788
      %s3790 = sadd.s32 %s21, %s22
      %s3791 = smul.u32 32, %s3790
      %p3792 = scmp.lt.s32.totalorder %s3791, 63
      %s3793 = scalar_select %p3792, %s3791, 63
      %s3794 = smul.addr %s3793, 4
      %s3795 = scalar_lea.vmem %s4, %s3794
      %p3796 = scmp.lt.s32.totalorder %s21, 1
      %s3797 = scalar_select %p3796, %s21, 1
      %s3798 = smul.addr %s3797, 8
      %s3799 = scalar_lea.vmem %s5, %s3798
      // Predicated region
      $region41: #{basic_block_forward.6} parent=35 // pred_check
        %p3800 = pneg %p147
      $region42: #{basic_block_forward.6} parent=35 // pred_check_branch
        %3802 = sbr.rel (%p3800) target = $region44
      $region43: #{basic_block_forward.6} parent=35 // pred_region
        %s3803 = sadd.s32 %s21, %s22
        %s3804 = smul.u32 32, %s3803
      $region44: #{basic_block_forward.6} parent=35 // pred_fallthru
        _
      // Predicated region
      $region45: #{basic_block_forward.6} parent=35 // pred_check
        %p3805 = pneg %p173
      $region46: #{basic_block_forward.6} parent=35 // pred_check_branch
        %3807 = sbr.rel (%p3805) target = $region48
      $region47: #{basic_block_forward.6} parent=35 // pred_region
        _
      $region48: #{basic_block_forward.6} parent=35 // pred_fallthru
        _
    $region36: #{basic_block_forward.6} parent=5 // pred_fallthru
      _
    %p3808 = scmp.le.s32.totalorder 2, %s12
    // Predicated region
    $region49: #{basic_block_forward.6} parent=5 // pred_check
      %p3809 = pneg %p3808
    $region50: #{basic_block_forward.6} parent=5 // pred_check_branch
      %3811 = sbr.rel (%p3809) target = $region52
    $region51: #{basic_block_forward.6} parent=5 // pred_region
      %s3812 = ssub.s32 %s12, 2
      // Predicated region
      $region53: #{basic_block_forward.6} parent=51 // pred_check
        %p3813 = pneg %p153
      $region54: #{basic_block_forward.6} parent=51 // pred_check_branch
        %3815 = sbr.rel (%p3813) target = $region56
      $region55: #{basic_block_forward.6} parent=51 // pred_region
        %s3816 = sadd.s32 %s23, %s24
        %s3817 = smul.u32 32, %s3816
        %p3818 = scmp.lt.s32.totalorder %s3817, 63
        %s3819 = scalar_select %p3818, %s3817, 63
        %s3820 = smul.addr %s3819, 4
        %s3821 = scalar_lea.vmem %s4, %s3820
      $region56: #{basic_block_forward.6} parent=51 // pred_fallthru
        _
      // Predicated region
      $region57: #{basic_block_forward.6} parent=51 // pred_check
        %p3822 = pneg %p179
      $region58: #{basic_block_forward.6} parent=51 // pred_check_branch
        %3824 = sbr.rel (%p3822) target = $region60
      $region59: #{basic_block_forward.6} parent=51 // pred_region
        %p3825 = scmp.lt.s32.totalorder %s23, 1
        %s3826 = scalar_select %p3825, %s23, 1
        %s3827 = smul.addr %s3826, 8
        %s3828 = scalar_lea.vmem %s5, %s3827
      $region60: #{basic_block_forward.6} parent=51 // pred_fallthru
        _
    $region52: #{basic_block_forward.6} parent=5 // pred_fallthru
      _
  $region6: #{basic_block_forward.6} parent=0 // loop_footer
    %s16 = sadd.s32 1, %s12
  $region7: #{basic_block_forward.6} parent=0 // loop_footer_branch
    %11 = sbr.rel target = $region3
  $region8: #{basic_block_forward.6} parent=0 // loop_exit
    _

</llo_original>
